<compile_context>
chip_gen: v7x
topology: tpu7x:2x2x1
jax: 0.10.0
libtpu: 0.0.40
codegen_flags: <defaults>
</compile_context>

<pallas_src>
import functools
import math

import numpy as np
import jax
import jax.numpy as jnp
from jax.experimental import pallas as pl
from jax.experimental.pallas import tpu as pltpu

LN_EPS = 1e-6  # TODO(synk): timm/MAE uses 1e-6; torch.nn.LayerNorm default is 1e-5.
MATMUL_DTYPE = jnp.bfloat16  # TODO(synk): jnp.float32 for bit-closer parity with PyTorch.


# ----------------------------------------------------------------------------
# In-kernel helpers
# ----------------------------------------------------------------------------

def _ln(x, g, b, eps):
    mu = jnp.mean(x, axis=-1, keepdims=True)
    xc = x - mu
    var = jnp.mean(xc * xc, axis=-1, keepdims=True)
    return xc * jax.lax.rsqrt(var + eps) * g + b


def _gelu(x):
    # TODO(synk): PyTorch nn.GELU defaults to the exact erf form; tanh
    # approximation is used here for robust Mosaic lowering (EUP tanh).
    c = math.sqrt(2.0 / math.pi)
    return 0.5 * x * (1.0 + jnp.tanh(c * (x + 0.044715 * x * x * x)))


# ----------------------------------------------------------------------------
# BlockSpec helpers (grid=(B,), batch-sliced arg, resident weights)
# ----------------------------------------------------------------------------

def _batch_spec(shape):
    tail = (0,) * (len(shape) - 1)
    return pl.BlockSpec((1,) + tuple(shape[1:]), lambda b: (b,) + tail)


def _const_spec(a):
    zeros = (0,) * a.ndim
    return pl.BlockSpec(tuple(a.shape), lambda b: zeros)


# ----------------------------------------------------------------------------
# Whole-network fused MAE-ViT kernel (one pallas_call for the full forward)
# ----------------------------------------------------------------------------

def _mae_fused_kernel(
        tok_ref,
        patch_w, embed_add,
        e_ln1_g, e_ln1_b, e_qkv_w, e_qkv_b, e_proj_w, e_proj_b,
        e_ln2_g, e_ln2_b, e_fc1_w, e_fc1_b, e_fc2_w, e_fc2_b,
        norm_g, norm_b, dec_embed_w, dec_embed_add,
        d_ln1_g, d_ln1_b, d_qkv_w, d_qkv_b, d_proj_w, d_proj_b,
        d_ln2_g, d_ln2_b, d_fc1_w, d_fc1_b, d_fc2_w, d_fc2_b,
        dec_norm_g, dec_norm_b, pred_w, pred_b,
        o_ref,
        *, depth, dec_depth, num_heads, dec_num_heads, eps, mm_dtype):
    """Full MAE-ViT forward for one batch element; activation stays resident."""

    def mm(a, w):
        return jnp.dot(a.astype(mm_dtype), w.astype(mm_dtype),
                       preferred_element_type=jnp.float32)

    def run_stack(x, n_blocks, heads,
                  ln1_g, ln1_b, qkv_w, qkv_b, proj_w, proj_b,
                  ln2_g, ln2_b, fc1_w, fc1_b, fc2_w, fc2_b):
        D = x.shape[-1]
        hd = D // heads
        scale = 1.0 / math.sqrt(hd)
        # TODO(synk): switch to lax.fori_loop(unroll=True) at real MAE depths /
        # head counts so vreg live ranges stay bounded (fine at depth<=2, 2 heads).
        for d in range(n_blocks):
            # --- LN1 + fused-QKV multi-head attention ---
            h = _ln(x, ln1_g[d], ln1_b[d], eps)
            qkv = mm(h, qkv_w[d]) + qkv_b[d]              # (T, 3D), single MXU dot
            pw = proj_w[d]                                # (D, D)
            attn = jnp.zeros_like(x)
            for hh in range(heads):
                q = qkv[:, hh * hd:(hh + 1) * hd]
                k = qkv[:, D + hh * hd:D + (hh + 1) * hd]
                v = qkv[:, 2 * D + hh * hd:2 * D + (hh + 1) * hd]
                s = jax.lax.dot_general(
                    q.astype(mm_dtype), k.astype(mm_dtype),
                    (((1,), (1,)), ((), ())),
                    preferred_element_type=jnp.float32) * scale
                s = s - jnp.max(s, axis=-1, keepdims=True)
                p = jnp.exp(s)
                p = p / jnp.sum(p, axis=-1, keepdims=True)   # exact softmax normalization
                o_h = mm(p, v)                               # (T, hd)
                # concat_h(o_h) @ W_proj == sum_h o_h @ W_proj[h]
                attn = attn + mm(o_h, pw[hh * hd:(hh + 1) * hd, :])
            x = x + attn + proj_b[d]
            # --- LN2 + MLP ---
            h2 = _ln(x, ln2_g[d], ln2_b[d], eps)
            f = _gelu(mm(h2, fc1_w[d]) + fc1_b[d])
            x = x + mm(f, fc2_w[d]) + fc2_b[d]
        return x

    # Patch embed + cls/pos rows in one dot + add (row 0 of tok is zero, the
    # cls-token + pos[0] row comes in through embed_add).
    x = mm(tok_ref[0], patch_w[...]) + embed_add[...]          # (T, D)

    # Encoder blocks.
    x = run_stack(x, depth, num_heads,
                  e_ln1_g, e_ln1_b, e_qkv_w, e_qkv_b, e_proj_w, e_proj_b,
                  e_ln2_g, e_ln2_b, e_fc1_w, e_fc1_b, e_fc2_w, e_fc2_b)

    # Encoder final norm + decoder embed + decoder positional embedding.
    x = mm(_ln(x, norm_g[...], norm_b[...], eps), dec_embed_w[...]) + dec_embed_add[...]

    # Decoder blocks.
    x = run_stack(x, dec_depth, dec_num_heads,
                  d_ln1_g, d_ln1_b, d_qkv_w, d_qkv_b, d_proj_w, d_proj_b,
                  d_ln2_g, d_ln2_b, d_fc1_w, d_fc1_b, d_fc2_w, d_fc2_b)

    # Decoder final norm + pixel prediction head; drop the cls row.
    y = mm(_ln(x, dec_norm_g[...], dec_norm_b[...], eps), pred_w[...]) + pred_b[...]
    o_ref[0] = y[1:, :].astype(o_ref.dtype)


# ----------------------------------------------------------------------------
# Fused 1x1-conv + separable bilinear resize (reshape_tensor)
# ----------------------------------------------------------------------------

def _conv_resize_kernel(x_ref, awt_ref, lmat_ref, bias_ref, o_ref):
    # Width interpolation on the channel-stacked (C_in*H_in, W_in) slab, then
    # kron(conv_w, Ah) does the channel mix + height interpolation in one dot.
    t = jnp.dot(x_ref[0], awt_ref[...], preferred_element_type=jnp.float32)
    y = jnp.dot(lmat_ref[...], t, preferred_element_type=jnp.float32) + bias_ref[...]
    o_ref[0] = y.astype(o_ref.dtype)


def _interp_matrix(in_size, out_size):
    """Row-stochastic matrix matching F.interpolate(mode='bilinear', align_corners=False)."""
    A = np.zeros((out_size, in_size), dtype=np.float32)
    if in_size == out_size:
        np.fill_diagonal(A, 1.0)
        return jnp.asarray(A)
    scale = in_size / out_size
    for i in range(out_size):
        src = max((i + 0.5) * scale - 0.5, 0.0)
        i0 = min(int(math.floor(src)), in_size - 1)
        i1 = min(i0 + 1, in_size - 1)
        w1 = src - i0
        A[i, i0] += 1.0 - w1
        A[i, i1] += w1
    return jnp.asarray(A)


def conv_resize(x, w, b, out_h, out_w):
    """NCHW 1x1 conv (w:(C_out,C_in), b:(C_out,)) + bilinear resize, fused.

    out[co] = Ah @ (sum_ci w[co,ci] x[ci]) @ AwT + b[co]
            = (kron(w, Ah) @ x_flat @ AwT)[co*H_out:...] + b[co]
    (bilinear weights are row-stochastic, so the bias commutes with the resize).
    """
    B, C_in, H, W = x.shape
    C_out = w.shape[0]
    Ah = _interp_matrix(H, out_h)                      # (out_h, H)
    AwT = _interp_matrix(W, out_w).T                   # (W, out_w)
    Lmat = jnp.kron(w.astype(jnp.float32), Ah)         # (C_out*out_h, C_in*H)
    bias = jnp.repeat(b.astype(jnp.float32), out_h).reshape(C_out * out_h, 1)
    x_flat = x.reshape(B, C_in * H, W).astype(jnp.float32)   # free leading-dim merge
    out = pl.pallas_call(
        _conv_resize_kernel,
        out_shape=jax.ShapeDtypeStruct((B, C_out * out_h, out_w), jnp.float32),
        grid=(B,),
        in_specs=[pl.BlockSpec((1, C_in * H, W), lambda bb: (bb, 0, 0)),
                  _const_spec(AwT), _const_spec(Lmat), _const_spec(bias)],
        out_specs=pl.BlockSpec((1, C_out * out_h, out_w), lambda bb: (bb, 0, 0)),
        compiler_params=pltpu.CompilerParams(dimension_semantics=("parallel",)),
    )(x_flat, AwT, Lmat, bias)
    return out.reshape(B, C_out, out_h, out_w)


def reshape_tensor(x, conv_w, conv_b, target_c, target_h, target_w):
    """Equivalent of MAEforSuperResolution.reshape_tensor (conv-if-needed + bilinear)."""
    B, C, H, W = x.shape
    if C == target_c and (H, W) == (target_h, target_w):
        return x
    if C != target_c:
        w, b = conv_w, conv_b
    else:
        w = jnp.eye(C, dtype=jnp.float32)
        b = jnp.zeros((C,), jnp.float32)
    return conv_resize(x, w, b, target_h, target_w)


# ----------------------------------------------------------------------------
# Layout plumbing (pure reshapes/transposes -> left to XLA)
# ----------------------------------------------------------------------------

def patchify(x, p):
    B, C, H, W = x.shape
    h, w = H // p, W // p
    x = x.reshape(B, C, h, p, w, p).transpose(0, 2, 4, 3, 5, 1)     # (B,h,w,p,p,C)
    return x.reshape(B, h * w, p * p * C)


def unpatchify(pred, p, C, H, W):
    B = pred.shape[0]
    h, w = H // p, W // p
    x = pred.reshape(B, h, w, p, p, C).transpose(0, 5, 1, 3, 2, 4)  # (B,C,h,p,w,p)
    return x.reshape(B, C, H, W)


# ----------------------------------------------------------------------------
# MAE ViT forward (mask_ratio = 0.0) — single fused pallas_call
# ----------------------------------------------------------------------------

def mae_forward(x_img, params, cfg):
    p = cfg["patch"]
    B = x_img.shape[0]
    D, Dd = cfg["embed_dim"], cfg["dec_embed_dim"]
    eps = cfg["ln_eps"]
    mm_dtype = cfg["matmul_dtype"]

    tokens = patchify(x_img, p).astype(jnp.float32)                 # (B, L, pdim)
    L, pdim = tokens.shape[1], tokens.shape[2]

    # mask_ratio == 0.0: the MAE shuffle/unshuffle is a no-op permutation
    # (self-attention is permutation-equivariant), so it is skipped.
    # Row 0 of the padded token matrix is zero => (row0 @ patch_w) == 0; the
    # cls-token + pos[0] row is injected through `embed_add` (folds the cls
    # concat into the fused kernel, no extra HBM round-trip).
    tok_pad = jnp.pad(tokens, ((0, 0), (1, 0), (0, 0)))             # (B, T, pdim)

    embed_add = jnp.concatenate([
        (params["cls_token"][0, 0] + params["pos_embed"][0, 0]).reshape(1, D),
        params["patch_b"].reshape(1, D) + params["pos_embed"][0, 1:]], axis=0)    # (T, D)
    dec_embed_add = params["dec_embed_b"].reshape(1, Dd) + params["dec_pos_embed"][0]  # (T, Dd)

    consts = (params["patch_w"], embed_add,
              *params["enc_stack"],
              params["norm_g"].reshape(1, -1), params["norm_b"].reshape(1, -1),
              params["dec_embed_w"], dec_embed_add,
              *params["dec_stack"],
              params["dec_norm_g"].reshape(1, -1), params["dec_norm_b"].reshape(1, -1),
              params["dec_pred_w"], params["dec_pred_b"].reshape(1, -1))

    kernel = functools.partial(
        _mae_fused_kernel,
        depth=cfg["depth"], dec_depth=cfg["dec_depth"],
        num_heads=cfg["num_heads"], dec_num_heads=cfg["dec_num_heads"],
        eps=eps, mm_dtype=mm_dtype)

    # grid=(B,) keeps both TensorCores busy on v7x; with a single fused call
    # the per-step grid overhead on single-TC v5e/v6e is negligible.
    # TODO(synk): at real MAE dims set vmem_limit_bytes explicitly and tile the
    # MLP hidden dim; at this config all weights (~0.15 MB) are VMEM-resident.
    pred = pl.pallas_call(
        kernel,
        out_shape=jax.ShapeDtypeStruct((B, L, pdim), jnp.float32),
        grid=(B,),
        in_specs=[_batch_spec(tok_pad.shape)] + [_const_spec(c) for c in consts],
        out_specs=_batch_spec((B, L, pdim)),
        compiler_params=pltpu.CompilerParams(dimension_semantics=("parallel",)),
    )(tok_pad, *consts)

    mask = jnp.zeros((B, L), jnp.float32)
    return None, pred, mask


def mae_super_resolution_forward(x, params, cfg):
    """Equivalent of MAEforSuperResolution.forward.  x: (B, C_lr, H_lr, W_lr) NCHW."""
    mae_C, mae_H, mae_W = cfg["mae_C"], cfg["mae_H"], cfg["mae_W"]
    hr_C, hr_H, hr_W = cfg["HR_shape"]
    # reshape_tensor(direction='down'):
    x = reshape_tensor(x, params["conv1_w"], params["conv1_b"], mae_C, mae_H, mae_W)
    # MAE_ViT(x, mask_ratio=0.0) -> (_, pred, _) ; unpatchify
    _, pred, _ = mae_forward(x, params, cfg)
    x = unpatchify(pred, cfg["patch"], mae_C, mae_H, mae_W)
    # reshape_tensor(direction='up'):
    x = reshape_tensor(x, params["conv2_w"], params["conv2_b"], hr_C, hr_H, hr_W)
    return x


# ----------------------------------------------------------------------------
# Deterministic parameter initialization + depth-stacked weight preparation
# ----------------------------------------------------------------------------

def _init_linear(key, fan_in, fan_out, std=0.02):
    kw, kb = jax.random.split(key)
    w = jax.random.normal(kw, (fan_in, fan_out), jnp.float32) * std
    b = jax.random.normal(kb, (fan_out,), jnp.float32) * 0.01
    return w, b


def _init_block(key, dim, mlp_ratio=4):
    keys = jax.random.split(key, 4)
    bp = {
        "ln1_g": jnp.ones((dim,), jnp.float32),
        "ln1_b": jnp.zeros((dim,), jnp.float32),
        "ln2_g": jnp.ones((dim,), jnp.float32),
        "ln2_b": jnp.zeros((dim,), jnp.float32),
    }
    bp["qkv_w"], bp["qkv_b"] = _init_linear(keys[0], dim, 3 * dim)
    bp["proj_w"], bp["proj_b"] = _init_linear(keys[1], dim, dim)
    bp["fc1_w"], bp["fc1_b"] = _init_linear(keys[2], dim, mlp_ratio * dim)
    bp["fc2_w"], bp["fc2_b"] = _init_linear(keys[3], mlp_ratio * dim, dim)
    return bp


def _stack_blocks(blocks, mm_dtype):
    """Stack per-block weights along a leading depth axis (kernel indexes [d])."""
    row = lambda v: v.reshape(1, -1)
    stk = lambda fn: jnp.stack([fn(bp) for bp in blocks], axis=0)
    return (
        stk(lambda bp: row(bp["ln1_g"])),                 # (depth, 1, D)
        stk(lambda bp: row(bp["ln1_b"])),
        stk(lambda bp: bp["qkv_w"]).astype(mm_dtype),     # (depth, D, 3D)
        stk(lambda bp: row(bp["qkv_b"])),                 # (depth, 1, 3D)
        stk(lambda bp: bp["proj_w"]).astype(mm_dtype),    # (depth, D, D)
        stk(lambda bp: row(bp["proj_b"])),
        stk(lambda bp: row(bp["ln2_g"])),
        stk(lambda bp: row(bp["ln2_b"])),
        stk(lambda bp: bp["fc1_w"]).astype(mm_dtype),     # (depth, D, 4D)
        stk(lambda bp: row(bp["fc1_b"])),
        stk(lambda bp: bp["fc2_w"]).astype(mm_dtype),     # (depth, 4D, D)
        stk(lambda bp: row(bp["fc2_b"])),
    )


def init_params(key, cfg):
    C, H, W, p = cfg["mae_C"], cfg["mae_H"], cfg["mae_W"], cfg["patch"]
    D, Dd = cfg["embed_dim"], cfg["dec_embed_dim"]
    L = (H // p) * (W // p)
    pdim = p * p * C
    keys = iter(jax.random.split(key, 32))
    params = {}
    # 1x1 convs (PyTorch Conv2d weight (Cout, Cin, 1, 1) stored as (Cout, Cin)):
    params["conv1_w"] = jax.random.normal(next(keys), (C, cfg["LR_shape"][0]), jnp.float32) * 0.02
    params["conv1_b"] = jax.random.normal(next(keys), (C,), jnp.float32) * 0.01
    params["conv2_w"] = jax.random.normal(next(keys), (cfg["HR_shape"][0], C), jnp.float32) * 0.02
    params["conv2_b"] = jax.random.normal(next(keys), (cfg["HR_shape"][0],), jnp.float32) * 0.01
    # MAE encoder:
    params["patch_w"], params["patch_b"] = _init_linear(next(keys), pdim, D)
    params["cls_token"] = jax.random.normal(next(keys), (1, 1, D), jnp.float32) * 0.02
    params["pos_embed"] = jax.random.normal(next(keys), (1, L + 1, D), jnp.float32) * 0.02
    params["enc_blocks"] = [_init_block(next(keys), D) for _ in range(cfg["depth"])]
    params["norm_g"] = jnp.ones((D,), jnp.float32)
    params["norm_b"] = jnp.zeros((D,), jnp.float32)
    # MAE decoder:
    params["dec_embed_w"], params["dec_embed_b"] = _init_linear(next(keys), D, Dd)
    params["dec_pos_embed"] = jax.random.normal(next(keys), (1, L + 1, Dd), jnp.float32) * 0.02
    params["dec_blocks"] = [_init_block(next(keys), Dd) for _ in range(cfg["dec_depth"])]
    params["dec_norm_g"] = jnp.ones((Dd,), jnp.float32)
    params["dec_norm_b"] = jnp.zeros((Dd,), jnp.float32)
    params["dec_pred_w"], params["dec_pred_b"] = _init_linear(next(keys), Dd, pdim)
    return params


def prepare_params(params, cfg):
    mm_dtype = cfg["matmul_dtype"]
    pp = dict(params)
    pp["patch_w"] = params["patch_w"].astype(mm_dtype)
    pp["dec_embed_w"] = params["dec_embed_w"].astype(mm_dtype)
    pp["dec_pred_w"] = params["dec_pred_w"].astype(mm_dtype)
    pp["enc_stack"] = _stack_blocks(params["enc_blocks"], mm_dtype)
    pp["dec_stack"] = _stack_blocks(params["dec_blocks"], mm_dtype)
    del pp["enc_blocks"]
    del pp["dec_blocks"]
    return pp


# ----------------------------------------------------------------------------
# Main
# ----------------------------------------------------------------------------

if __name__ == "__main__":
    cfg = dict(
        LR_shape=(4, 12, 12),     # (C, H, W) of the LR input
        HR_shape=(1, 32, 32),     # (C, H, W) of the HR output
        mae_C=3, mae_H=16, mae_W=16, patch=4,
        embed_dim=32, num_heads=2, depth=2,
        dec_embed_dim=32, dec_num_heads=2, dec_depth=1,
        ln_eps=LN_EPS, matmul_dtype=MATMUL_DTYPE,
    )
    key = jax.random.PRNGKey(0)
    params = prepare_params(init_params(key, cfg), cfg)
    x = jax.random.normal(jax.random.fold_in(key, 123),
                          (2,) + cfg["LR_shape"], jnp.float32)   # (2, 4, 12, 12) NCHW

    run = jax.jit(functools.partial(mae_super_resolution_forward, cfg=cfg))
    out = jax.block_until_ready(run(x, params))
    assert out.shape == (2,) + cfg["HR_shape"], out.shape
    assert bool(jnp.all(jnp.isfinite(out)))
    print("KERNEL_OK")
</pallas_src>

<mosaic_0001>
module attributes {stable_mosaic.version = 11 : i64} {
  func.func @_conv_resize_kernel(%arg0: i32, %arg1: memref<1x48x12xf32, #tpu.memory_space<vmem>>, %arg2: memref<12x16xf32, #tpu.memory_space<vmem>>, %arg3: memref<48x48xf32, #tpu.memory_space<vmem>>, %arg4: memref<48x1xf32, #tpu.memory_space<vmem>>, %arg5: memref<1x48x16xf32, #tpu.memory_space<vmem>>) attributes {dimension_semantics = [#tpu.dimension_semantics<parallel>], iteration_bounds = array<i64: 2>, scalar_prefetch = 0 : i64, scratch_operands = 0 : i64, tpu.core_type = #tpu.core_type<tc>, window_params = [{transform_indices = @transform_0, window_bounds = array<i64: 1, 48, 12>}, {pipeline_mode = #tpu.pipeline_mode<synchronous>, transform_indices = @transform_1, window_bounds = array<i64: 12, 16>}, {pipeline_mode = #tpu.pipeline_mode<synchronous>, transform_indices = @transform_2, window_bounds = array<i64: 48, 48>}, {pipeline_mode = #tpu.pipeline_mode<synchronous>, transform_indices = @transform_3, window_bounds = array<i64: 48, 1>}, {transform_indices = @transform_4, window_bounds = array<i64: 1, 48, 16>}]} {
    %c0 = arith.constant 0 : index
    %c0_0 = arith.constant 0 : index
    %c0_1 = arith.constant 0 : index
    %0 = vector.load %arg1[%c0, %c0_0, %c0_1] : memref<1x48x12xf32, #tpu.memory_space<vmem>>, vector<1x48x12xf32>
    %1 = vector.shape_cast %0 : vector<1x48x12xf32> to vector<48x12xf32>
    %c0_2 = arith.constant 0 : index
    %c0_3 = arith.constant 0 : index
    %2 = vector.load %arg2[%c0_2, %c0_3] : memref<12x16xf32, #tpu.memory_space<vmem>>, vector<12x16xf32>
    %cst = arith.constant dense<0.000000e+00> : vector<48x16xf32>
    %3 = tpu.matmul %1, %2, %cst {dimension_numbers = #tpu.dot_dimension_numbers<[1], [0], [0], [1], [0, 0, 1, 1], [], []>} : vector<48x12xf32>, vector<12x16xf32>, vector<48x16xf32> -> vector<48x16xf32>
    %c0_4 = arith.constant 0 : index
    %c0_5 = arith.constant 0 : index
    %4 = vector.load %arg3[%c0_4, %c0_5] : memref<48x48xf32, #tpu.memory_space<vmem>>, vector<48x48xf32>
    %cst_6 = arith.constant dense<0.000000e+00> : vector<48x16xf32>
    %5 = tpu.matmul %4, %3, %cst_6 {dimension_numbers = #tpu.dot_dimension_numbers<[1], [0], [0], [1], [0, 0, 1, 1], [], []>} : vector<48x48xf32>, vector<48x16xf32>, vector<48x16xf32> -> vector<48x16xf32>
    %c0_7 = arith.constant 0 : index
    %c0_8 = arith.constant 0 : index
    %6 = vector.load %arg4[%c0_7, %c0_8] : memref<48x1xf32, #tpu.memory_space<vmem>>, vector<48x1xf32>
    %7 = vector.broadcast %6 : vector<48x1xf32> to vector<48x16xf32>
    %8 = arith.addf %5, %7 : vector<48x16xf32>
    %c0_9 = arith.constant 0 : index
    %c0_10 = arith.constant 0 : index
    %c0_11 = arith.constant 0 : index
    %9 = vector.load %arg5[%c0_9, %c0_10, %c0_11] : memref<1x48x16xf32, #tpu.memory_space<vmem>>, vector<1x48x16xf32>
    %10 = vector.shape_cast %9 : vector<1x48x16xf32> to vector<48x16xf32>
    %11 = vector.shape_cast %8 : vector<48x16xf32> to vector<1x48x16xf32>
    tpu.vector_store %arg5[%c0_9, %c0_10, %c0_11], %11 {strides = array<i32>} : memref<1x48x16xf32, #tpu.memory_space<vmem>>, vector<1x48x16xf32>,
    return
  }
  func.func @transform_0(%arg0: i32) -> (i32, i32, i32) {
    %c0_i32 = arith.constant 0 : i32
    %c0_i32_0 = arith.constant 0 : i32
    %c0_i32_1 = arith.constant 0 : i32
    return %arg0, %c0_i32, %c0_i32_0 : i32, i32, i32
  }
  func.func @transform_1(%arg0: i32) -> (i32, i32) {
    %c0_i32 = arith.constant 0 : i32
    %c0_i32_0 = arith.constant 0 : i32
    %c0_i32_1 = arith.constant 0 : i32
    return %c0_i32, %c0_i32_0 : i32, i32
  }
  func.func @transform_2(%arg0: i32) -> (i32, i32) {
    %c0_i32 = arith.constant 0 : i32
    %c0_i32_0 = arith.constant 0 : i32
    %c0_i32_1 = arith.constant 0 : i32
    return %c0_i32, %c0_i32_0 : i32, i32
  }
  func.func @transform_3(%arg0: i32) -> (i32, i32) {
    %c0_i32 = arith.constant 0 : i32
    %c0_i32_0 = arith.constant 0 : i32
    %c0_i32_1 = arith.constant 0 : i32
    return %c0_i32, %c0_i32_0 : i32, i32
  }
  func.func @transform_4(%arg0: i32) -> (i32, i32, i32) {
    %c0_i32 = arith.constant 0 : i32
    %c0_i32_0 = arith.constant 0 : i32
    %c0_i32_1 = arith.constant 0 : i32
    return %arg0, %c0_i32, %c0_i32_0 : i32, i32, i32
  }
}

module attributes {stable_mosaic.version = 11 : i64} {
  func.func @_mae_fused_kernel(%arg0: i32, %arg1: memref<1x17x48xf32, #tpu.memory_space<vmem>>, %arg2: memref<48x32xbf16, #tpu.memory_space<vmem>>, %arg3: memref<17x32xf32, #tpu.memory_space<vmem>>, %arg4: memref<2x1x32xf32, #tpu.memory_space<vmem>>, %arg5: memref<2x1x32xf32, #tpu.memory_space<vmem>>, %arg6: memref<2x32x96xbf16, #tpu.memory_space<vmem>>, %arg7: memref<2x1x96xf32, #tpu.memory_space<vmem>>, %arg8: memref<2x32x32xbf16, #tpu.memory_space<vmem>>, %arg9: memref<2x1x32xf32, #tpu.memory_space<vmem>>, %arg10: memref<2x1x32xf32, #tpu.memory_space<vmem>>, %arg11: memref<2x1x32xf32, #tpu.memory_space<vmem>>, %arg12: memref<2x32x128xbf16, #tpu.memory_space<vmem>>, %arg13: memref<2x1x128xf32, #tpu.memory_space<vmem>>, %arg14: memref<2x128x32xbf16, #tpu.memory_space<vmem>>, %arg15: memref<2x1x32xf32, #tpu.memory_space<vmem>>, %arg16: memref<1x32xf32, #tpu.memory_space<vmem>>, %arg17: memref<1x32xf32, #tpu.memory_space<vmem>>, %arg18: memref<32x32xbf16, #tpu.memory_space<vmem>>, %arg19: memref<17x32xf32, #tpu.memory_space<vmem>>, %arg20: memref<1x1x32xf32, #tpu.memory_space<vmem>>, %arg21: memref<1x1x32xf32, #tpu.memory_space<vmem>>, %arg22: memref<1x32x96xbf16, #tpu.memory_space<vmem>>, %arg23: memref<1x1x96xf32, #tpu.memory_space<vmem>>, %arg24: memref<1x32x32xbf16, #tpu.memory_space<vmem>>, %arg25: memref<1x1x32xf32, #tpu.memory_space<vmem>>, %arg26: memref<1x1x32xf32, #tpu.memory_space<vmem>>, %arg27: memref<1x1x32xf32, #tpu.memory_space<vmem>>, %arg28: memref<1x32x128xbf16, #tpu.memory_space<vmem>>, %arg29: memref<1x1x128xf32, #tpu.memory_space<vmem>>, %arg30: memref<1x128x32xbf16, #tpu.memory_space<vmem>>, %arg31: memref<1x1x32xf32, #tpu.memory_space<vmem>>, %arg32: memref<1x32xf32, #tpu.memory_space<vmem>>, %arg33: memref<1x32xf32, #tpu.memory_space<vmem>>, %arg34: memref<32x48xbf16, #tpu.memory_space<vmem>>, %arg35: memref<1x48xf32, #tpu.memory_space<vmem>>, %arg36: memref<1x16x48xf32, #tpu.memory_space<vmem>>) attributes {dimension_semantics = [#tpu.dimension_semantics<parallel>], iteration_bounds = array<i64: 2>, scalar_prefetch = 0 : i64, scratch_operands = 0 : i64, tpu.core_type = #tpu.core_type<tc>, window_params = [{transform_indices = @transform_0, window_bounds = array<i64: 1, 17, 48>}, {pipeline_mode = #tpu.pipeline_mode<synchronous>, transform_indices = @transform_1, window_bounds = array<i64: 48, 32>}, {pipeline_mode = #tpu.pipeline_mode<synchronous>, transform_indices = @transform_2, window_bounds = array<i64: 17, 32>}, {pipeline_mode = #tpu.pipeline_mode<synchronous>, transform_indices = @transform_3, window_bounds = array<i64: 2, 1, 32>}, {pipeline_mode = #tpu.pipeline_mode<synchronous>, transform_indices = @transform_4, window_bounds = array<i64: 2, 1, 32>}, {pipeline_mode = #tpu.pipeline_mode<synchronous>, transform_indices = @transform_5, window_bounds = array<i64: 2, 32, 96>}, {pipeline_mode = #tpu.pipeline_mode<synchronous>, transform_indices = @transform_6, window_bounds = array<i64: 2, 1, 96>}, {pipeline_mode = #tpu.pipeline_mode<synchronous>, transform_indices = @transform_7, window_bounds = array<i64: 2, 32, 32>}, {pipeline_mode = #tpu.pipeline_mode<synchronous>, transform_indices = @transform_8, window_bounds = array<i64: 2, 1, 32>}, {pipeline_mode = #tpu.pipeline_mode<synchronous>, transform_indices = @transform_9, window_bounds = array<i64: 2, 1, 32>}, {pipeline_mode = #tpu.pipeline_mode<synchronous>, transform_indices = @transform_10, window_bounds = array<i64: 2, 1, 32>}, {pipeline_mode = #tpu.pipeline_mode<synchronous>, transform_indices = @transform_11, window_bounds = array<i64: 2, 32, 128>}, {pipeline_mode = #tpu.pipeline_mode<synchronous>, transform_indices = @transform_12, window_bounds = array<i64: 2, 1, 128>}, {pipeline_mode = #tpu.pipeline_mode<synchronous>, transform_indices = @transform_13, window_bounds = array<i64: 2, 128, 32>}, {pipeline_mode = #tpu.pipeline_mode<synchronous>, transform_indices = @transform_14, window_bounds = array<i64: 2, 1, 32>}, {pipeline_mode = #tpu.pipeline_mode<synchronous>, transform_indices = @transform_15, window_bounds = array<i64: 1, 32>}, {pipeline_mode = #tpu.pipeline_mode<synchronous>, transform_indices = @transform_16, window_bounds = array<i64: 1, 32>}, {pipeline_mode = #tpu.pipeline_mode<synchronous>, transform_indices = @transform_17, window_bounds = array<i64: 32, 32>}, {pipeline_mode = #tpu.pipeline_mode<synchronous>, transform_indices = @transform_18, window_bounds = array<i64: 17, 32>}, {pipeline_mode = #tpu.pipeline_mode<synchronous>, transform_indices = @transform_19, window_bounds = array<i64: 1, 1, 32>}, {pipeline_mode = #tpu.pipeline_mode<synchronous>, transform_indices = @transform_20, window_bounds = array<i64: 1, 1, 32>}, {pipeline_mode = #tpu.pipeline_mode<synchronous>, transform_indices = @transform_21, window_bounds = array<i64: 1, 32, 96>}, {pipeline_mode = #tpu.pipeline_mode<synchronous>, transform_indices = @transform_22, window_bounds = array<i64: 1, 1, 96>}, {pipeline_mode = #tpu.pipeline_mode<synchronous>, transform_indices = @transform_23, window_bounds = array<i64: 1, 32, 32>}, {pipeline_mode = #tpu.pipeline_mode<synchronous>, transform_indices = @transform_24, window_bounds = array<i64: 1, 1, 32>}, {pipeline_mode = #tpu.pipeline_mode<synchronous>, transform_indices = @transform_25, window_bounds = array<i64: 1, 1, 32>}, {pipeline_mode = #tpu.pipeline_mode<synchronous>, transform_indices = @transform_26, window_bounds = array<i64: 1, 1, 32>}, {pipeline_mode = #tpu.pipeline_mode<synchronous>, transform_indices = @transform_27, window_bounds = array<i64: 1, 32, 128>}, {pipeline_mode = #tpu.pipeline_mode<synchronous>, transform_indices = @transform_28, window_bounds = array<i64: 1, 1, 128>}, {pipeline_mode = #tpu.pipeline_mode<synchronous>, transform_indices = @transform_29, window_bounds = array<i64: 1, 128, 32>}, {pipeline_mode = #tpu.pipeline_mode<synchronous>, transform_indices = @transform_30, window_bounds = array<i64: 1, 1, 32>}, {pipeline_mode = #tpu.pipeline_mode<synchronous>, transform_indices = @transform_31, window_bounds = array<i64: 1, 32>}, {pipeline_mode = #tpu.pipeline_mode<synchronous>, transform_indices = @transform_32, window_bounds = array<i64: 1, 32>}, {pipeline_mode = #tpu.pipeline_mode<synchronous>, transform_indices = @transform_33, window_bounds = array<i64: 32, 48>}, {pipeline_mode = #tpu.pipeline_mode<synchronous>, transform_indices = @transform_34, window_bounds = array<i64: 1, 48>}, {transform_indices = @transform_35, window_bounds = array<i64: 1, 16, 48>}]} {
    %c0 = arith.constant 0 : index
    %c0_0 = arith.constant 0 : index
    %c0_1 = arith.constant 0 : index
    %0 = vector.load %arg1[%c0, %c0_0, %c0_1] : memref<1x17x48xf32, #tpu.memory_space<vmem>>, vector<1x17x48xf32>
    %1 = vector.shape_cast %0 : vector<1x17x48xf32> to vector<17x48xf32>
    %c0_2 = arith.constant 0 : index
    %c0_3 = arith.constant 0 : index
    %2 = vector.load %arg2[%c0_2, %c0_3] : memref<48x32xbf16, #tpu.memory_space<vmem>>, vector<48x32xbf16>
    %3 = arith.truncf %1 : vector<17x48xf32> to vector<17x48xbf16>
    %cst = arith.constant dense<0.000000e+00> : vector<17x32xf32>
    %4 = tpu.matmul %3, %2, %cst {dimension_numbers = #tpu.dot_dimension_numbers<[1], [0], [0], [1], [0, 0, 1, 1], [], []>} : vector<17x48xbf16>, vector<48x32xbf16>, vector<17x32xf32> -> vector<17x32xf32>
    %c0_4 = arith.constant 0 : index
    %c0_5 = arith.constant 0 : index
    %5 = vector.load %arg3[%c0_4, %c0_5] : memref<17x32xf32, #tpu.memory_space<vmem>>, vector<17x32xf32>
    %6 = arith.addf %4, %5 : vector<17x32xf32>
    %c0_6 = arith.constant 0 : index
    %c0_7 = arith.constant 0 : index
    %c0_8 = arith.constant 0 : index
    %7 = vector.load %arg4[%c0_6, %c0_7, %c0_8] : memref<2x1x32xf32, #tpu.memory_space<vmem>>, vector<1x1x32xf32>
    %8 = vector.shape_cast %7 : vector<1x1x32xf32> to vector<1x32xf32>
    %c0_9 = arith.constant 0 : index
    %c0_10 = arith.constant 0 : index
    %c0_11 = arith.constant 0 : index
    %9 = vector.load %arg5[%c0_9, %c0_10, %c0_11] : memref<2x1x32xf32, #tpu.memory_space<vmem>>, vector<1x1x32xf32>
    %10 = vector.shape_cast %9 : vector<1x1x32xf32> to vector<1x32xf32>
    %cst_12 = arith.constant dense<0.000000e+00> : vector<17xf32>
    %11 = vector.multi_reduction <add>, %6, %cst_12 [1] : vector<17x32xf32> to vector<17xf32>
    %12 = vector.shape_cast %11 : vector<17xf32> to vector<17x1xf32>
    %cst_13 = arith.constant 3.200000e+01 : f32
    %13 = vector.broadcast %cst_13 : f32 to vector<17x1xf32>
    %14 = arith.divf %12, %13 : vector<17x1xf32>
    %15 = vector.broadcast %14 : vector<17x1xf32> to vector<17x32xf32>
    %16 = arith.subf %6, %15 : vector<17x32xf32>
    %17 = arith.mulf %16, %16 : vector<17x32xf32>
    %cst_14 = arith.constant dense<0.000000e+00> : vector<17xf32>
    %18 = vector.multi_reduction <add>, %17, %cst_14 [1] : vector<17x32xf32> to vector<17xf32>
    %19 = vector.shape_cast %18 : vector<17xf32> to vector<17x1xf32>
    %cst_15 = arith.constant 3.200000e+01 : f32
    %20 = vector.broadcast %cst_15 : f32 to vector<17x1xf32>
    %21 = arith.divf %19, %20 : vector<17x1xf32>
    %cst_16 = arith.constant 9.99999997E-7 : f32
    %22 = vector.broadcast %cst_16 : f32 to vector<17x1xf32>
    %23 = arith.addf %21, %22 : vector<17x1xf32>
    %24 = math.rsqrt %23 : vector<17x1xf32>
    %25 = vector.broadcast %24 : vector<17x1xf32> to vector<17x32xf32>
    %26 = arith.mulf %16, %25 : vector<17x32xf32>
    %27 = vector.broadcast %8 : vector<1x32xf32> to vector<17x32xf32>
    %28 = arith.mulf %26, %27 : vector<17x32xf32>
    %29 = vector.broadcast %10 : vector<1x32xf32> to vector<17x32xf32>
    %30 = arith.addf %28, %29 : vector<17x32xf32>
    %c0_17 = arith.constant 0 : index
    %c0_18 = arith.constant 0 : index
    %c0_19 = arith.constant 0 : index
    %31 = vector.load %arg6[%c0_17, %c0_18, %c0_19] : memref<2x32x96xbf16, #tpu.memory_space<vmem>>, vector<1x32x96xbf16>
    %32 = vector.shape_cast %31 : vector<1x32x96xbf16> to vector<32x96xbf16>
    %33 = arith.truncf %30 : vector<17x32xf32> to vector<17x32xbf16>
    %cst_20 = arith.constant dense<0.000000e+00> : vector<17x96xf32>
    %34 = tpu.matmul %33, %32, %cst_20 {dimension_numbers = #tpu.dot_dimension_numbers<[1], [0], [0], [1], [0, 0, 1, 1], [], []>} : vector<17x32xbf16>, vector<32x96xbf16>, vector<17x96xf32> -> vector<17x96xf32>
    %c0_21 = arith.constant 0 : index
    %c0_22 = arith.constant 0 : index
    %c0_23 = arith.constant 0 : index
    %35 = vector.load %arg7[%c0_21, %c0_22, %c0_23] : memref<2x1x96xf32, #tpu.memory_space<vmem>>, vector<1x1x96xf32>
    %36 = vector.shape_cast %35 : vector<1x1x96xf32> to vector<1x96xf32>
    %37 = vector.broadcast %36 : vector<1x96xf32> to vector<17x96xf32>
    %38 = arith.addf %34, %37 : vector<17x96xf32>
    %c0_24 = arith.constant 0 : index
    %c0_25 = arith.constant 0 : index
    %c0_26 = arith.constant 0 : index
    %39 = vector.load %arg8[%c0_24, %c0_25, %c0_26] : memref<2x32x32xbf16, #tpu.memory_space<vmem>>, vector<1x32x32xbf16>
    %40 = vector.shape_cast %39 : vector<1x32x32xbf16> to vector<32x32xbf16>
    %cst_27 = arith.constant 0.000000e+00 : f32
    %41 = vector.broadcast %cst_27 : f32 to vector<17x32xf32>
    %42 = vector.extract_strided_slice %38 {offsets = [0, 0], sizes = [17, 16], strides = [1, 1]} : vector<17x96xf32> to vector<17x16xf32>
    %43 = vector.extract_strided_slice %38 {offsets = [0, 32], sizes = [17, 16], strides = [1, 1]} : vector<17x96xf32> to vector<17x16xf32>
    %44 = vector.extract_strided_slice %38 {offsets = [0, 64], sizes = [17, 16], strides = [1, 1]} : vector<17x96xf32> to vector<17x16xf32>
    %45 = arith.truncf %42 : vector<17x16xf32> to vector<17x16xbf16>
    %46 = arith.truncf %43 : vector<17x16xf32> to vector<17x16xbf16>
    %cst_28 = arith.constant dense<0.000000e+00> : vector<17x17xf32>
    %47 = tpu.matmul %45, %46, %cst_28 {dimension_numbers = #tpu.dot_dimension_numbers<[1], [1], [0], [0], [0, 0, 1, 0], [], []>} : vector<17x16xbf16>, vector<17x16xbf16>, vector<17x17xf32> -> vector<17x17xf32>
    %cst_29 = arith.constant 2.500000e-01 : f32
    %48 = vector.broadcast %cst_29 : f32 to vector<17x17xf32>
    %49 = arith.mulf %47, %48 : vector<17x17xf32>
    %cst_30 = arith.constant dense<0xFF800000> : vector<17xf32>
    %50 = vector.multi_reduction <maximumf>, %49, %cst_30 [1] : vector<17x17xf32> to vector<17xf32>
    %51 = vector.shape_cast %50 : vector<17xf32> to vector<17x1xf32>
    %52 = vector.broadcast %51 : vector<17x1xf32> to vector<17x17xf32>
    %53 = arith.subf %49, %52 : vector<17x17xf32>
    %54 = math.exp %53 : vector<17x17xf32>
    %cst_31 = arith.constant dense<0.000000e+00> : vector<17xf32>
    %55 = vector.multi_reduction <add>, %54, %cst_31 [1] : vector<17x17xf32> to vector<17xf32>
    %56 = vector.shape_cast %55 : vector<17xf32> to vector<17x1xf32>
    %57 = vector.broadcast %56 : vector<17x1xf32> to vector<17x17xf32>
    %58 = arith.divf %54, %57 : vector<17x17xf32>
    %59 = arith.truncf %58 : vector<17x17xf32> to vector<17x17xbf16>
    %60 = arith.truncf %44 : vector<17x16xf32> to vector<17x16xbf16>
    %cst_32 = arith.constant dense<0.000000e+00> : vector<17x16xf32>
    %61 = tpu.matmul %59, %60, %cst_32 {dimension_numbers = #tpu.dot_dimension_numbers<[1], [0], [0], [1], [0, 0, 1, 1], [], []>} : vector<17x17xbf16>, vector<17x16xbf16>, vector<17x16xf32> -> vector<17x16xf32>
    %62 = vector.extract_strided_slice %40 {offsets = [0, 0], sizes = [16, 32], strides = [1, 1]} : vector<32x32xbf16> to vector<16x32xbf16>
    %63 = arith.truncf %61 : vector<17x16xf32> to vector<17x16xbf16>
    %cst_33 = arith.constant dense<0.000000e+00> : vector<17x32xf32>
    %64 = tpu.matmul %63, %62, %cst_33 {dimension_numbers = #tpu.dot_dimension_numbers<[1], [0], [0], [1], [0, 0, 1, 1], [], []>} : vector<17x16xbf16>, vector<16x32xbf16>, vector<17x32xf32> -> vector<17x32xf32>
    %65 = arith.addf %41, %64 : vector<17x32xf32>
    %66 = vector.extract_strided_slice %38 {offsets = [0, 16], sizes = [17, 16], strides = [1, 1]} : vector<17x96xf32> to vector<17x16xf32>
    %67 = vector.extract_strided_slice %38 {offsets = [0, 48], sizes = [17, 16], strides = [1, 1]} : vector<17x96xf32> to vector<17x16xf32>
    %68 = vector.extract_strided_slice %38 {offsets = [0, 80], sizes = [17, 16], strides = [1, 1]} : vector<17x96xf32> to vector<17x16xf32>
    %69 = arith.truncf %66 : vector<17x16xf32> to vector<17x16xbf16>
    %70 = arith.truncf %67 : vector<17x16xf32> to vector<17x16xbf16>
    %cst_34 = arith.constant dense<0.000000e+00> : vector<17x17xf32>
    %71 = tpu.matmul %69, %70, %cst_34 {dimension_numbers = #tpu.dot_dimension_numbers<[1], [1], [0], [0], [0, 0, 1, 0], [], []>} : vector<17x16xbf16>, vector<17x16xbf16>, vector<17x17xf32> -> vector<17x17xf32>
    %cst_35 = arith.constant 2.500000e-01 : f32
    %72 = vector.broadcast %cst_35 : f32 to vector<17x17xf32>
    %73 = arith.mulf %71, %72 : vector<17x17xf32>
    %cst_36 = arith.constant dense<0xFF800000> : vector<17xf32>
    %74 = vector.multi_reduction <maximumf>, %73, %cst_36 [1] : vector<17x17xf32> to vector<17xf32>
    %75 = vector.shape_cast %74 : vector<17xf32> to vector<17x1xf32>
    %76 = vector.broadcast %75 : vector<17x1xf32> to vector<17x17xf32>
    %77 = arith.subf %73, %76 : vector<17x17xf32>
    %78 = math.exp %77 : vector<17x17xf32>
    %cst_37 = arith.constant dense<0.000000e+00> : vector<17xf32>
    %79 = vector.multi_reduction <add>, %78, %cst_37 [1] : vector<17x17xf32> to vector<17xf32>
    %80 = vector.shape_cast %79 : vector<17xf32> to vector<17x1xf32>
    %81 = vector.broadcast %80 : vector<17x1xf32> to vector<17x17xf32>
    %82 = arith.divf %78, %81 : vector<17x17xf32>
    %83 = arith.truncf %82 : vector<17x17xf32> to vector<17x17xbf16>
    %84 = arith.truncf %68 : vector<17x16xf32> to vector<17x16xbf16>
    %cst_38 = arith.constant dense<0.000000e+00> : vector<17x16xf32>
    %85 = tpu.matmul %83, %84, %cst_38 {dimension_numbers = #tpu.dot_dimension_numbers<[1], [0], [0], [1], [0, 0, 1, 1], [], []>} : vector<17x17xbf16>, vector<17x16xbf16>, vector<17x16xf32> -> vector<17x16xf32>
    %86 = vector.extract_strided_slice %40 {offsets = [16, 0], sizes = [16, 32], strides = [1, 1]} : vector<32x32xbf16> to vector<16x32xbf16>
    %87 = arith.truncf %85 : vector<17x16xf32> to vector<17x16xbf16>
    %cst_39 = arith.constant dense<0.000000e+00> : vector<17x32xf32>
    %88 = tpu.matmul %87, %86, %cst_39 {dimension_numbers = #tpu.dot_dimension_numbers<[1], [0], [0], [1], [0, 0, 1, 1], [], []>} : vector<17x16xbf16>, vector<16x32xbf16>, vector<17x32xf32> -> vector<17x32xf32>
    %89 = arith.addf %65, %88 : vector<17x32xf32>
    %90 = arith.addf %6, %89 : vector<17x32xf32>
    %c0_40 = arith.constant 0 : index
    %c0_41 = arith.constant 0 : index
    %c0_42 = arith.constant 0 : index
    %91 = vector.load %arg9[%c0_40, %c0_41, %c0_42] : memref<2x1x32xf32, #tpu.memory_space<vmem>>, vector<1x1x32xf32>
    %92 = vector.shape_cast %91 : vector<1x1x32xf32> to vector<1x32xf32>
    %93 = vector.broadcast %92 : vector<1x32xf32> to vector<17x32xf32>
    %94 = arith.addf %90, %93 : vector<17x32xf32>
    %c0_43 = arith.constant 0 : index
    %c0_44 = arith.constant 0 : index
    %c0_45 = arith.constant 0 : index
    %95 = vector.load %arg10[%c0_43, %c0_44, %c0_45] : memref<2x1x32xf32, #tpu.memory_space<vmem>>, vector<1x1x32xf32>
    %96 = vector.shape_cast %95 : vector<1x1x32xf32> to vector<1x32xf32>
    %c0_46 = arith.constant 0 : index
    %c0_47 = arith.constant 0 : index
    %c0_48 = arith.constant 0 : index
    %97 = vector.load %arg11[%c0_46, %c0_47, %c0_48] : memref<2x1x32xf32, #tpu.memory_space<vmem>>, vector<1x1x32xf32>
    %98 = vector.shape_cast %97 : vector<1x1x32xf32> to vector<1x32xf32>
    %cst_49 = arith.constant dense<0.000000e+00> : vector<17xf32>
    %99 = vector.multi_reduction <add>, %94, %cst_49 [1] : vector<17x32xf32> to vector<17xf32>
    %100 = vector.shape_cast %99 : vector<17xf32> to vector<17x1xf32>
    %cst_50 = arith.constant 3.200000e+01 : f32
    %101 = vector.broadcast %cst_50 : f32 to vector<17x1xf32>
    %102 = arith.divf %100, %101 : vector<17x1xf32>
    %103 = vector.broadcast %102 : vector<17x1xf32> to vector<17x32xf32>
    %104 = arith.subf %94, %103 : vector<17x32xf32>
    %105 = arith.mulf %104, %104 : vector<17x32xf32>
    %cst_51 = arith.constant dense<0.000000e+00> : vector<17xf32>
    %106 = vector.multi_reduction <add>, %105, %cst_51 [1] : vector<17x32xf32> to vector<17xf32>
    %107 = vector.shape_cast %106 : vector<17xf32> to vector<17x1xf32>
    %cst_52 = arith.constant 3.200000e+01 : f32
    %108 = vector.broadcast %cst_52 : f32 to vector<17x1xf32>
    %109 = arith.divf %107, %108 : vector<17x1xf32>
    %cst_53 = arith.constant 9.99999997E-7 : f32
    %110 = vector.broadcast %cst_53 : f32 to vector<17x1xf32>
    %111 = arith.addf %109, %110 : vector<17x1xf32>
    %112 = math.rsqrt %111 : vector<17x1xf32>
    %113 = vector.broadcast %112 : vector<17x1xf32> to vector<17x32xf32>
    %114 = arith.mulf %104, %113 : vector<17x32xf32>
    %115 = vector.broadcast %96 : vector<1x32xf32> to vector<17x32xf32>
    %116 = arith.mulf %114, %115 : vector<17x32xf32>
    %117 = vector.broadcast %98 : vector<1x32xf32> to vector<17x32xf32>
    %118 = arith.addf %116, %117 : vector<17x32xf32>
    %c0_54 = arith.constant 0 : index
    %c0_55 = arith.constant 0 : index
    %c0_56 = arith.constant 0 : index
    %119 = vector.load %arg12[%c0_54, %c0_55, %c0_56] : memref<2x32x128xbf16, #tpu.memory_space<vmem>>, vector<1x32x128xbf16>
    %120 = vector.shape_cast %119 : vector<1x32x128xbf16> to vector<32x128xbf16>
    %121 = arith.truncf %118 : vector<17x32xf32> to vector<17x32xbf16>
    %cst_57 = arith.constant dense<0.000000e+00> : vector<17x128xf32>
    %122 = tpu.matmul %121, %120, %cst_57 {dimension_numbers = #tpu.dot_dimension_numbers<[1], [0], [0], [1], [0, 0, 1, 1], [], []>} : vector<17x32xbf16>, vector<32x128xbf16>, vector<17x128xf32> -> vector<17x128xf32>
    %c0_58 = arith.constant 0 : index
    %c0_59 = arith.constant 0 : index
    %c0_60 = arith.constant 0 : index
    %123 = vector.load %arg13[%c0_58, %c0_59, %c0_60] : memref<2x1x128xf32, #tpu.memory_space<vmem>>, vector<1x1x128xf32>
    %124 = vector.shape_cast %123 : vector<1x1x128xf32> to vector<1x128xf32>
    %125 = vector.broadcast %124 : vector<1x128xf32> to vector<17x128xf32>
    %126 = arith.addf %122, %125 : vector<17x128xf32>
    %cst_61 = arith.constant 5.000000e-01 : f32
    %127 = vector.broadcast %cst_61 : f32 to vector<17x128xf32>
    %128 = arith.mulf %127, %126 : vector<17x128xf32>
    %cst_62 = arith.constant 4.471500e-02 : f32
    %129 = vector.broadcast %cst_62 : f32 to vector<17x128xf32>
    %130 = arith.mulf %129, %126 : vector<17x128xf32>
    %131 = arith.mulf %130, %126 : vector<17x128xf32>
    %132 = arith.mulf %131, %126 : vector<17x128xf32>
    %133 = arith.addf %126, %132 : vector<17x128xf32>
    %cst_63 = arith.constant 0.797884583 : f32
    %134 = vector.broadcast %cst_63 : f32 to vector<17x128xf32>
    %135 = arith.mulf %134, %133 : vector<17x128xf32>
    %136 = math.tanh %135 : vector<17x128xf32>
    %cst_64 = arith.constant 1.000000e+00 : f32
    %137 = vector.broadcast %cst_64 : f32 to vector<17x128xf32>
    %138 = arith.addf %137, %136 : vector<17x128xf32>
    %139 = arith.mulf %128, %138 : vector<17x128xf32>
    %c0_65 = arith.constant 0 : index
    %c0_66 = arith.constant 0 : index
    %c0_67 = arith.constant 0 : index
    %140 = vector.load %arg14[%c0_65, %c0_66, %c0_67] : memref<2x128x32xbf16, #tpu.memory_space<vmem>>, vector<1x128x32xbf16>
    %141 = vector.shape_cast %140 : vector<1x128x32xbf16> to vector<128x32xbf16>
    %142 = arith.truncf %139 : vector<17x128xf32> to vector<17x128xbf16>
    %cst_68 = arith.constant dense<0.000000e+00> : vector<17x32xf32>
    %143 = tpu.matmul %142, %141, %cst_68 {dimension_numbers = #tpu.dot_dimension_numbers<[1], [0], [0], [1], [0, 0, 1, 1], [], []>} : vector<17x128xbf16>, vector<128x32xbf16>, vector<17x32xf32> -> vector<17x32xf32>
    %144 = arith.addf %94, %143 : vector<17x32xf32>
    %c0_69 = arith.constant 0 : index
    %c0_70 = arith.constant 0 : index
    %c0_71 = arith.constant 0 : index
    %145 = vector.load %arg15[%c0_69, %c0_70, %c0_71] : memref<2x1x32xf32, #tpu.memory_space<vmem>>, vector<1x1x32xf32>
    %146 = vector.shape_cast %145 : vector<1x1x32xf32> to vector<1x32xf32>
    %147 = vector.broadcast %146 : vector<1x32xf32> to vector<17x32xf32>
    %148 = arith.addf %144, %147 : vector<17x32xf32>
    %c1 = arith.constant 1 : index
    %c0_72 = arith.constant 0 : index
    %c0_73 = arith.constant 0 : index
    %149 = vector.load %arg4[%c1, %c0_72, %c0_73] : memref<2x1x32xf32, #tpu.memory_space<vmem>>, vector<1x1x32xf32>
    %150 = vector.shape_cast %149 : vector<1x1x32xf32> to vector<1x32xf32>
    %c1_74 = arith.constant 1 : index
    %c0_75 = arith.constant 0 : index
    %c0_76 = arith.constant 0 : index
    %151 = vector.load %arg5[%c1_74, %c0_75, %c0_76] : memref<2x1x32xf32, #tpu.memory_space<vmem>>, vector<1x1x32xf32>
    %152 = vector.shape_cast %151 : vector<1x1x32xf32> to vector<1x32xf32>
    %cst_77 = arith.constant dense<0.000000e+00> : vector<17xf32>
    %153 = vector.multi_reduction <add>, %148, %cst_77 [1] : vector<17x32xf32> to vector<17xf32>
    %154 = vector.shape_cast %153 : vector<17xf32> to vector<17x1xf32>
    %cst_78 = arith.constant 3.200000e+01 : f32
    %155 = vector.broadcast %cst_78 : f32 to vector<17x1xf32>
    %156 = arith.divf %154, %155 : vector<17x1xf32>
    %157 = vector.broadcast %156 : vector<17x1xf32> to vector<17x32xf32>
    %158 = arith.subf %148, %157 : vector<17x32xf32>
    %159 = arith.mulf %158, %158 : vector<17x32xf32>
    %cst_79 = arith.constant dense<0.000000e+00> : vector<17xf32>
    %160 = vector.multi_reduction <add>, %159, %cst_79 [1] : vector<17x32xf32> to vector<17xf32>
    %161 = vector.shape_cast %160 : vector<17xf32> to vector<17x1xf32>
    %cst_80 = arith.constant 3.200000e+01 : f32
    %162 = vector.broadcast %cst_80 : f32 to vector<17x1xf32>
    %163 = arith.divf %161, %162 : vector<17x1xf32>
    %cst_81 = arith.constant 9.99999997E-7 : f32
    %164 = vector.broadcast %cst_81 : f32 to vector<17x1xf32>
    %165 = arith.addf %163, %164 : vector<17x1xf32>
    %166 = math.rsqrt %165 : vector<17x1xf32>
    %167 = vector.broadcast %166 : vector<17x1xf32> to vector<17x32xf32>
    %168 = arith.mulf %158, %167 : vector<17x32xf32>
    %169 = vector.broadcast %150 : vector<1x32xf32> to vector<17x32xf32>
    %170 = arith.mulf %168, %169 : vector<17x32xf32>
    %171 = vector.broadcast %152 : vector<1x32xf32> to vector<17x32xf32>
    %172 = arith.addf %170, %171 : vector<17x32xf32>
    %c1_82 = arith.constant 1 : index
    %c0_83 = arith.constant 0 : index
    %c0_84 = arith.constant 0 : index
    %173 = vector.load %arg6[%c1_82, %c0_83, %c0_84] : memref<2x32x96xbf16, #tpu.memory_space<vmem>>, vector<1x32x96xbf16>
    %174 = vector.shape_cast %173 : vector<1x32x96xbf16> to vector<32x96xbf16>
    %175 = arith.truncf %172 : vector<17x32xf32> to vector<17x32xbf16>
    %cst_85 = arith.constant dense<0.000000e+00> : vector<17x96xf32>
    %176 = tpu.matmul %175, %174, %cst_85 {dimension_numbers = #tpu.dot_dimension_numbers<[1], [0], [0], [1], [0, 0, 1, 1], [], []>} : vector<17x32xbf16>, vector<32x96xbf16>, vector<17x96xf32> -> vector<17x96xf32>
    %c1_86 = arith.constant 1 : index
    %c0_87 = arith.constant 0 : index
    %c0_88 = arith.constant 0 : index
    %177 = vector.load %arg7[%c1_86, %c0_87, %c0_88] : memref<2x1x96xf32, #tpu.memory_space<vmem>>, vector<1x1x96xf32>
    %178 = vector.shape_cast %177 : vector<1x1x96xf32> to vector<1x96xf32>
    %179 = vector.broadcast %178 : vector<1x96xf32> to vector<17x96xf32>
    %180 = arith.addf %176, %179 : vector<17x96xf32>
    %c1_89 = arith.constant 1 : index
    %c0_90 = arith.constant 0 : index
    %c0_91 = arith.constant 0 : index
    %181 = vector.load %arg8[%c1_89, %c0_90, %c0_91] : memref<2x32x32xbf16, #tpu.memory_space<vmem>>, vector<1x32x32xbf16>
    %182 = vector.shape_cast %181 : vector<1x32x32xbf16> to vector<32x32xbf16>
    %cst_92 = arith.constant 0.000000e+00 : f32
    %183 = vector.broadcast %cst_92 : f32 to vector<17x32xf32>
    %184 = vector.extract_strided_slice %180 {offsets = [0, 0], sizes = [17, 16], strides = [1, 1]} : vector<17x96xf32> to vector<17x16xf32>
    %185 = vector.extract_strided_slice %180 {offsets = [0, 32], sizes = [17, 16], strides = [1, 1]} : vector<17x96xf32> to vector<17x16xf32>
    %186 = vector.extract_strided_slice %180 {offsets = [0, 64], sizes = [17, 16], strides = [1, 1]} : vector<17x96xf32> to vector<17x16xf32>
    %187 = arith.truncf %184 : vector<17x16xf32> to vector<17x16xbf16>
    %188 = arith.truncf %185 : vector<17x16xf32> to vector<17x16xbf16>
    %cst_93 = arith.constant dense<0.000000e+00> : vector<17x17xf32>
    %189 = tpu.matmul %187, %188, %cst_93 {dimension_numbers = #tpu.dot_dimension_numbers<[1], [1], [0], [0], [0, 0, 1, 0], [], []>} : vector<17x16xbf16>, vector<17x16xbf16>, vector<17x17xf32> -> vector<17x17xf32>
    %cst_94 = arith.constant 2.500000e-01 : f32
    %190 = vector.broadcast %cst_94 : f32 to vector<17x17xf32>
    %191 = arith.mulf %189, %190 : vector<17x17xf32>
    %cst_95 = arith.constant dense<0xFF800000> : vector<17xf32>
    %192 = vector.multi_reduction <maximumf>, %191, %cst_95 [1] : vector<17x17xf32> to vector<17xf32>
    %193 = vector.shape_cast %192 : vector<17xf32> to vector<17x1xf32>
    %194 = vector.broadcast %193 : vector<17x1xf32> to vector<17x17xf32>
    %195 = arith.subf %191, %194 : vector<17x17xf32>
    %196 = math.exp %195 : vector<17x17xf32>
    %cst_96 = arith.constant dense<0.000000e+00> : vector<17xf32>
    %197 = vector.multi_reduction <add>, %196, %cst_96 [1] : vector<17x17xf32> to vector<17xf32>
    %198 = vector.shape_cast %197 : vector<17xf32> to vector<17x1xf32>
    %199 = vector.broadcast %198 : vector<17x1xf32> to vector<17x17xf32>
    %200 = arith.divf %196, %199 : vector<17x17xf32>
    %201 = arith.truncf %200 : vector<17x17xf32> to vector<17x17xbf16>
    %202 = arith.truncf %186 : vector<17x16xf32> to vector<17x16xbf16>
    %cst_97 = arith.constant dense<0.000000e+00> : vector<17x16xf32>
    %203 = tpu.matmul %201, %202, %cst_97 {dimension_numbers = #tpu.dot_dimension_numbers<[1], [0], [0], [1], [0, 0, 1, 1], [], []>} : vector<17x17xbf16>, vector<17x16xbf16>, vector<17x16xf32> -> vector<17x16xf32>
    %204 = vector.extract_strided_slice %182 {offsets = [0, 0], sizes = [16, 32], strides = [1, 1]} : vector<32x32xbf16> to vector<16x32xbf16>
    %205 = arith.truncf %203 : vector<17x16xf32> to vector<17x16xbf16>
    %cst_98 = arith.constant dense<0.000000e+00> : vector<17x32xf32>
    %206 = tpu.matmul %205, %204, %cst_98 {dimension_numbers = #tpu.dot_dimension_numbers<[1], [0], [0], [1], [0, 0, 1, 1], [], []>} : vector<17x16xbf16>, vector<16x32xbf16>, vector<17x32xf32> -> vector<17x32xf32>
    %207 = arith.addf %183, %206 : vector<17x32xf32>
    %208 = vector.extract_strided_slice %180 {offsets = [0, 16], sizes = [17, 16], strides = [1, 1]} : vector<17x96xf32> to vector<17x16xf32>
    %209 = vector.extract_strided_slice %180 {offsets = [0, 48], sizes = [17, 16], strides = [1, 1]} : vector<17x96xf32> to vector<17x16xf32>
    %210 = vector.extract_strided_slice %180 {offsets = [0, 80], sizes = [17, 16], strides = [1, 1]} : vector<17x96xf32> to vector<17x16xf32>
    %211 = arith.truncf %208 : vector<17x16xf32> to vector<17x16xbf16>
    %212 = arith.truncf %209 : vector<17x16xf32> to vector<17x16xbf16>
    %cst_99 = arith.constant dense<0.000000e+00> : vector<17x17xf32>
    %213 = tpu.matmul %211, %212, %cst_99 {dimension_numbers = #tpu.dot_dimension_numbers<[1], [1], [0], [0], [0, 0, 1, 0], [], []>} : vector<17x16xbf16>, vector<17x16xbf16>, vector<17x17xf32> -> vector<17x17xf32>
    %cst_100 = arith.constant 2.500000e-01 : f32
    %214 = vector.broadcast %cst_100 : f32 to vector<17x17xf32>
    %215 = arith.mulf %213, %214 : vector<17x17xf32>
    %cst_101 = arith.constant dense<0xFF800000> : vector<17xf32>
    %216 = vector.multi_reduction <maximumf>, %215, %cst_101 [1] : vector<17x17xf32> to vector<17xf32>
    %217 = vector.shape_cast %216 : vector<17xf32> to vector<17x1xf32>
    %218 = vector.broadcast %217 : vector<17x1xf32> to vector<17x17xf32>
    %219 = arith.subf %215, %218 : vector<17x17xf32>
    %220 = math.exp %219 : vector<17x17xf32>
    %cst_102 = arith.constant dense<0.000000e+00> : vector<17xf32>
    %221 = vector.multi_reduction <add>, %220, %cst_102 [1] : vector<17x17xf32> to vector<17xf32>
    %222 = vector.shape_cast %221 : vector<17xf32> to vector<17x1xf32>
    %223 = vector.broadcast %222 : vector<17x1xf32> to vector<17x17xf32>
    %224 = arith.divf %220, %223 : vector<17x17xf32>
    %225 = arith.truncf %224 : vector<17x17xf32> to vector<17x17xbf16>
    %226 = arith.truncf %210 : vector<17x16xf32> to vector<17x16xbf16>
    %cst_103 = arith.constant dense<0.000000e+00> : vector<17x16xf32>
    %227 = tpu.matmul %225, %226, %cst_103 {dimension_numbers = #tpu.dot_dimension_numbers<[1], [0], [0], [1], [0, 0, 1, 1], [], []>} : vector<17x17xbf16>, vector<17x16xbf16>, vector<17x16xf32> -> vector<17x16xf32>
    %228 = vector.extract_strided_slice %182 {offsets = [16, 0], sizes = [16, 32], strides = [1, 1]} : vector<32x32xbf16> to vector<16x32xbf16>
    %229 = arith.truncf %227 : vector<17x16xf32> to vector<17x16xbf16>
    %cst_104 = arith.constant dense<0.000000e+00> : vector<17x32xf32>
    %230 = tpu.matmul %229, %228, %cst_104 {dimension_numbers = #tpu.dot_dimension_numbers<[1], [0], [0], [1], [0, 0, 1, 1], [], []>} : vector<17x16xbf16>, vector<16x32xbf16>, vector<17x32xf32> -> vector<17x32xf32>
    %231 = arith.addf %207, %230 : vector<17x32xf32>
    %232 = arith.addf %148, %231 : vector<17x32xf32>
    %c1_105 = arith.constant 1 : index
    %c0_106 = arith.constant 0 : index
    %c0_107 = arith.constant 0 : index
    %233 = vector.load %arg9[%c1_105, %c0_106, %c0_107] : memref<2x1x32xf32, #tpu.memory_space<vmem>>, vector<1x1x32xf32>
    %234 = vector.shape_cast %233 : vector<1x1x32xf32> to vector<1x32xf32>
    %235 = vector.broadcast %234 : vector<1x32xf32> to vector<17x32xf32>
    %236 = arith.addf %232, %235 : vector<17x32xf32>
    %c1_108 = arith.constant 1 : index
    %c0_109 = arith.constant 0 : index
    %c0_110 = arith.constant 0 : index
    %237 = vector.load %arg10[%c1_108, %c0_109, %c0_110] : memref<2x1x32xf32, #tpu.memory_space<vmem>>, vector<1x1x32xf32>
    %238 = vector.shape_cast %237 : vector<1x1x32xf32> to vector<1x32xf32>
    %c1_111 = arith.constant 1 : index
    %c0_112 = arith.constant 0 : index
    %c0_113 = arith.constant 0 : index
    %239 = vector.load %arg11[%c1_111, %c0_112, %c0_113] : memref<2x1x32xf32, #tpu.memory_space<vmem>>, vector<1x1x32xf32>
    %240 = vector.shape_cast %239 : vector<1x1x32xf32> to vector<1x32xf32>
    %cst_114 = arith.constant dense<0.000000e+00> : vector<17xf32>
    %241 = vector.multi_reduction <add>, %236, %cst_114 [1] : vector<17x32xf32> to vector<17xf32>
    %242 = vector.shape_cast %241 : vector<17xf32> to vector<17x1xf32>
    %cst_115 = arith.constant 3.200000e+01 : f32
    %243 = vector.broadcast %cst_115 : f32 to vector<17x1xf32>
    %244 = arith.divf %242, %243 : vector<17x1xf32>
    %245 = vector.broadcast %244 : vector<17x1xf32> to vector<17x32xf32>
    %246 = arith.subf %236, %245 : vector<17x32xf32>
    %247 = arith.mulf %246, %246 : vector<17x32xf32>
    %cst_116 = arith.constant dense<0.000000e+00> : vector<17xf32>
    %248 = vector.multi_reduction <add>, %247, %cst_116 [1] : vector<17x32xf32> to vector<17xf32>
    %249 = vector.shape_cast %248 : vector<17xf32> to vector<17x1xf32>
    %cst_117 = arith.constant 3.200000e+01 : f32
    %250 = vector.broadcast %cst_117 : f32 to vector<17x1xf32>
    %251 = arith.divf %249, %250 : vector<17x1xf32>
    %cst_118 = arith.constant 9.99999997E-7 : f32
    %252 = vector.broadcast %cst_118 : f32 to vector<17x1xf32>
    %253 = arith.addf %251, %252 : vector<17x1xf32>
    %254 = math.rsqrt %253 : vector<17x1xf32>
    %255 = vector.broadcast %254 : vector<17x1xf32> to vector<17x32xf32>
    %256 = arith.mulf %246, %255 : vector<17x32xf32>
    %257 = vector.broadcast %238 : vector<1x32xf32> to vector<17x32xf32>
    %258 = arith.mulf %256, %257 : vector<17x32xf32>
    %259 = vector.broadcast %240 : vector<1x32xf32> to vector<17x32xf32>
    %260 = arith.addf %258, %259 : vector<17x32xf32>
    %c1_119 = arith.constant 1 : index
    %c0_120 = arith.constant 0 : index
    %c0_121 = arith.constant 0 : index
    %261 = vector.load %arg12[%c1_119, %c0_120, %c0_121] : memref<2x32x128xbf16, #tpu.memory_space<vmem>>, vector<1x32x128xbf16>
    %262 = vector.shape_cast %261 : vector<1x32x128xbf16> to vector<32x128xbf16>
    %263 = arith.truncf %260 : vector<17x32xf32> to vector<17x32xbf16>
    %cst_122 = arith.constant dense<0.000000e+00> : vector<17x128xf32>
    %264 = tpu.matmul %263, %262, %cst_122 {dimension_numbers = #tpu.dot_dimension_numbers<[1], [0], [0], [1], [0, 0, 1, 1], [], []>} : vector<17x32xbf16>, vector<32x128xbf16>, vector<17x128xf32> -> vector<17x128xf32>
    %c1_123 = arith.constant 1 : index
    %c0_124 = arith.constant 0 : index
    %c0_125 = arith.constant 0 : index
    %265 = vector.load %arg13[%c1_123, %c0_124, %c0_125] : memref<2x1x128xf32, #tpu.memory_space<vmem>>, vector<1x1x128xf32>
    %266 = vector.shape_cast %265 : vector<1x1x128xf32> to vector<1x128xf32>
    %267 = vector.broadcast %266 : vector<1x128xf32> to vector<17x128xf32>
    %268 = arith.addf %264, %267 : vector<17x128xf32>
    %cst_126 = arith.constant 5.000000e-01 : f32
    %269 = vector.broadcast %cst_126 : f32 to vector<17x128xf32>
    %270 = arith.mulf %269, %268 : vector<17x128xf32>
    %cst_127 = arith.constant 4.471500e-02 : f32
    %271 = vector.broadcast %cst_127 : f32 to vector<17x128xf32>
    %272 = arith.mulf %271, %268 : vector<17x128xf32>
    %273 = arith.mulf %272, %268 : vector<17x128xf32>
    %274 = arith.mulf %273, %268 : vector<17x128xf32>
    %275 = arith.addf %268, %274 : vector<17x128xf32>
    %cst_128 = arith.constant 0.797884583 : f32
    %276 = vector.broadcast %cst_128 : f32 to vector<17x128xf32>
    %277 = arith.mulf %276, %275 : vector<17x128xf32>
    %278 = math.tanh %277 : vector<17x128xf32>
    %cst_129 = arith.constant 1.000000e+00 : f32
    %279 = vector.broadcast %cst_129 : f32 to vector<17x128xf32>
    %280 = arith.addf %279, %278 : vector<17x128xf32>
    %281 = arith.mulf %270, %280 : vector<17x128xf32>
    %c1_130 = arith.constant 1 : index
    %c0_131 = arith.constant 0 : index
    %c0_132 = arith.constant 0 : index
    %282 = vector.load %arg14[%c1_130, %c0_131, %c0_132] : memref<2x128x32xbf16, #tpu.memory_space<vmem>>, vector<1x128x32xbf16>
    %283 = vector.shape_cast %282 : vector<1x128x32xbf16> to vector<128x32xbf16>
    %284 = arith.truncf %281 : vector<17x128xf32> to vector<17x128xbf16>
    %cst_133 = arith.constant dense<0.000000e+00> : vector<17x32xf32>
    %285 = tpu.matmul %284, %283, %cst_133 {dimension_numbers = #tpu.dot_dimension_numbers<[1], [0], [0], [1], [0, 0, 1, 1], [], []>} : vector<17x128xbf16>, vector<128x32xbf16>, vector<17x32xf32> -> vector<17x32xf32>
    %286 = arith.addf %236, %285 : vector<17x32xf32>
    %c1_134 = arith.constant 1 : index
    %c0_135 = arith.constant 0 : index
    %c0_136 = arith.constant 0 : index
    %287 = vector.load %arg15[%c1_134, %c0_135, %c0_136] : memref<2x1x32xf32, #tpu.memory_space<vmem>>, vector<1x1x32xf32>
    %288 = vector.shape_cast %287 : vector<1x1x32xf32> to vector<1x32xf32>
    %289 = vector.broadcast %288 : vector<1x32xf32> to vector<17x32xf32>
    %290 = arith.addf %286, %289 : vector<17x32xf32>
    %c0_137 = arith.constant 0 : index
    %c0_138 = arith.constant 0 : index
    %291 = vector.load %arg16[%c0_137, %c0_138] : memref<1x32xf32, #tpu.memory_space<vmem>>, vector<1x32xf32>
    %c0_139 = arith.constant 0 : index
    %c0_140 = arith.constant 0 : index
    %292 = vector.load %arg17[%c0_139, %c0_140] : memref<1x32xf32, #tpu.memory_space<vmem>>, vector<1x32xf32>
    %cst_141 = arith.constant dense<0.000000e+00> : vector<17xf32>
    %293 = vector.multi_reduction <add>, %290, %cst_141 [1] : vector<17x32xf32> to vector<17xf32>
    %294 = vector.shape_cast %293 : vector<17xf32> to vector<17x1xf32>
    %cst_142 = arith.constant 3.200000e+01 : f32
    %295 = vector.broadcast %cst_142 : f32 to vector<17x1xf32>
    %296 = arith.divf %294, %295 : vector<17x1xf32>
    %297 = vector.broadcast %296 : vector<17x1xf32> to vector<17x32xf32>
    %298 = arith.subf %290, %297 : vector<17x32xf32>
    %299 = arith.mulf %298, %298 : vector<17x32xf32>
    %cst_143 = arith.constant dense<0.000000e+00> : vector<17xf32>
    %300 = vector.multi_reduction <add>, %299, %cst_143 [1] : vector<17x32xf32> to vector<17xf32>
    %301 = vector.shape_cast %300 : vector<17xf32> to vector<17x1xf32>
    %cst_144 = arith.constant 3.200000e+01 : f32
    %302 = vector.broadcast %cst_144 : f32 to vector<17x1xf32>
    %303 = arith.divf %301, %302 : vector<17x1xf32>
    %cst_145 = arith.constant 9.99999997E-7 : f32
    %304 = vector.broadcast %cst_145 : f32 to vector<17x1xf32>
    %305 = arith.addf %303, %304 : vector<17x1xf32>
    %306 = math.rsqrt %305 : vector<17x1xf32>
    %307 = vector.broadcast %306 : vector<17x1xf32> to vector<17x32xf32>
    %308 = arith.mulf %298, %307 : vector<17x32xf32>
    %309 = vector.broadcast %291 : vector<1x32xf32> to vector<17x32xf32>
    %310 = arith.mulf %308, %309 : vector<17x32xf32>
    %311 = vector.broadcast %292 : vector<1x32xf32> to vector<17x32xf32>
    %312 = arith.addf %310, %311 : vector<17x32xf32>
    %c0_146 = arith.constant 0 : index
    %c0_147 = arith.constant 0 : index
    %313 = vector.load %arg18[%c0_146, %c0_147] : memref<32x32xbf16, #tpu.memory_space<vmem>>, vector<32x32xbf16>
    %314 = arith.truncf %312 : vector<17x32xf32> to vector<17x32xbf16>
    %cst_148 = arith.constant dense<0.000000e+00> : vector<17x32xf32>
    %315 = tpu.matmul %314, %313, %cst_148 {dimension_numbers = #tpu.dot_dimension_numbers<[1], [0], [0], [1], [0, 0, 1, 1], [], []>} : vector<17x32xbf16>, vector<32x32xbf16>, vector<17x32xf32> -> vector<17x32xf32>
    %c0_149 = arith.constant 0 : index
    %c0_150 = arith.constant 0 : index
    %316 = vector.load %arg19[%c0_149, %c0_150] : memref<17x32xf32, #tpu.memory_space<vmem>>, vector<17x32xf32>
    %317 = arith.addf %315, %316 : vector<17x32xf32>
    %c0_151 = arith.constant 0 : index
    %c0_152 = arith.constant 0 : index
    %c0_153 = arith.constant 0 : index
    %318 = vector.load %arg20[%c0_151, %c0_152, %c0_153] : memref<1x1x32xf32, #tpu.memory_space<vmem>>, vector<1x1x32xf32>
    %319 = vector.shape_cast %318 : vector<1x1x32xf32> to vector<1x32xf32>
    %c0_154 = arith.constant 0 : index
    %c0_155 = arith.constant 0 : index
    %c0_156 = arith.constant 0 : index
    %320 = vector.load %arg21[%c0_154, %c0_155, %c0_156] : memref<1x1x32xf32, #tpu.memory_space<vmem>>, vector<1x1x32xf32>
    %321 = vector.shape_cast %320 : vector<1x1x32xf32> to vector<1x32xf32>
    %cst_157 = arith.constant dense<0.000000e+00> : vector<17xf32>
    %322 = vector.multi_reduction <add>, %317, %cst_157 [1] : vector<17x32xf32> to vector<17xf32>
    %323 = vector.shape_cast %322 : vector<17xf32> to vector<17x1xf32>
    %cst_158 = arith.constant 3.200000e+01 : f32
    %324 = vector.broadcast %cst_158 : f32 to vector<17x1xf32>
    %325 = arith.divf %323, %324 : vector<17x1xf32>
    %326 = vector.broadcast %325 : vector<17x1xf32> to vector<17x32xf32>
    %327 = arith.subf %317, %326 : vector<17x32xf32>
    %328 = arith.mulf %327, %327 : vector<17x32xf32>
    %cst_159 = arith.constant dense<0.000000e+00> : vector<17xf32>
    %329 = vector.multi_reduction <add>, %328, %cst_159 [1] : vector<17x32xf32> to vector<17xf32>
    %330 = vector.shape_cast %329 : vector<17xf32> to vector<17x1xf32>
    %cst_160 = arith.constant 3.200000e+01 : f32
    %331 = vector.broadcast %cst_160 : f32 to vector<17x1xf32>
    %332 = arith.divf %330, %331 : vector<17x1xf32>
    %cst_161 = arith.constant 9.99999997E-7 : f32
    %333 = vector.broadcast %cst_161 : f32 to vector<17x1xf32>
    %334 = arith.addf %332, %333 : vector<17x1xf32>
    %335 = math.rsqrt %334 : vector<17x1xf32>
    %336 = vector.broadcast %335 : vector<17x1xf32> to vector<17x32xf32>
    %337 = arith.mulf %327, %336 : vector<17x32xf32>
    %338 = vector.broadcast %319 : vector<1x32xf32> to vector<17x32xf32>
    %339 = arith.mulf %337, %338 : vector<17x32xf32>
    %340 = vector.broadcast %321 : vector<1x32xf32> to vector<17x32xf32>
    %341 = arith.addf %339, %340 : vector<17x32xf32>
    %c0_162 = arith.constant 0 : index
    %c0_163 = arith.constant 0 : index
    %c0_164 = arith.constant 0 : index
    %342 = vector.load %arg22[%c0_162, %c0_163, %c0_164] : memref<1x32x96xbf16, #tpu.memory_space<vmem>>, vector<1x32x96xbf16>
    %343 = vector.shape_cast %342 : vector<1x32x96xbf16> to vector<32x96xbf16>
    %344 = arith.truncf %341 : vector<17x32xf32> to vector<17x32xbf16>
    %cst_165 = arith.constant dense<0.000000e+00> : vector<17x96xf32>
    %345 = tpu.matmul %344, %343, %cst_165 {dimension_numbers = #tpu.dot_dimension_numbers<[1], [0], [0], [1], [0, 0, 1, 1], [], []>} : vector<17x32xbf16>, vector<32x96xbf16>, vector<17x96xf32> -> vector<17x96xf32>
    %c0_166 = arith.constant 0 : index
    %c0_167 = arith.constant 0 : index
    %c0_168 = arith.constant 0 : index
    %346 = vector.load %arg23[%c0_166, %c0_167, %c0_168] : memref<1x1x96xf32, #tpu.memory_space<vmem>>, vector<1x1x96xf32>
    %347 = vector.shape_cast %346 : vector<1x1x96xf32> to vector<1x96xf32>
    %348 = vector.broadcast %347 : vector<1x96xf32> to vector<17x96xf32>
    %349 = arith.addf %345, %348 : vector<17x96xf32>
    %c0_169 = arith.constant 0 : index
    %c0_170 = arith.constant 0 : index
    %c0_171 = arith.constant 0 : index
    %350 = vector.load %arg24[%c0_169, %c0_170, %c0_171] : memref<1x32x32xbf16, #tpu.memory_space<vmem>>, vector<1x32x32xbf16>
    %351 = vector.shape_cast %350 : vector<1x32x32xbf16> to vector<32x32xbf16>
    %cst_172 = arith.constant 0.000000e+00 : f32
    %352 = vector.broadcast %cst_172 : f32 to vector<17x32xf32>
    %353 = vector.extract_strided_slice %349 {offsets = [0, 0], sizes = [17, 16], strides = [1, 1]} : vector<17x96xf32> to vector<17x16xf32>
    %354 = vector.extract_strided_slice %349 {offsets = [0, 32], sizes = [17, 16], strides = [1, 1]} : vector<17x96xf32> to vector<17x16xf32>
    %355 = vector.extract_strided_slice %349 {offsets = [0, 64], sizes = [17, 16], strides = [1, 1]} : vector<17x96xf32> to vector<17x16xf32>
    %356 = arith.truncf %353 : vector<17x16xf32> to vector<17x16xbf16>
    %357 = arith.truncf %354 : vector<17x16xf32> to vector<17x16xbf16>
    %cst_173 = arith.constant dense<0.000000e+00> : vector<17x17xf32>
    %358 = tpu.matmul %356, %357, %cst_173 {dimension_numbers = #tpu.dot_dimension_numbers<[1], [1], [0], [0], [0, 0, 1, 0], [], []>} : vector<17x16xbf16>, vector<17x16xbf16>, vector<17x17xf32> -> vector<17x17xf32>
    %cst_174 = arith.constant 2.500000e-01 : f32
    %359 = vector.broadcast %cst_174 : f32 to vector<17x17xf32>
    %360 = arith.mulf %358, %359 : vector<17x17xf32>
    %cst_175 = arith.constant dense<0xFF800000> : vector<17xf32>
    %361 = vector.multi_reduction <maximumf>, %360, %cst_175 [1] : vector<17x17xf32> to vector<17xf32>
    %362 = vector.shape_cast %361 : vector<17xf32> to vector<17x1xf32>
    %363 = vector.broadcast %362 : vector<17x1xf32> to vector<17x17xf32>
    %364 = arith.subf %360, %363 : vector<17x17xf32>
    %365 = math.exp %364 : vector<17x17xf32>
    %cst_176 = arith.constant dense<0.000000e+00> : vector<17xf32>
    %366 = vector.multi_reduction <add>, %365, %cst_176 [1] : vector<17x17xf32> to vector<17xf32>
    %367 = vector.shape_cast %366 : vector<17xf32> to vector<17x1xf32>
    %368 = vector.broadcast %367 : vector<17x1xf32> to vector<17x17xf32>
    %369 = arith.divf %365, %368 : vector<17x17xf32>
    %370 = arith.truncf %369 : vector<17x17xf32> to vector<17x17xbf16>
    %371 = arith.truncf %355 : vector<17x16xf32> to vector<17x16xbf16>
    %cst_177 = arith.constant dense<0.000000e+00> : vector<17x16xf32>
    %372 = tpu.matmul %370, %371, %cst_177 {dimension_numbers = #tpu.dot_dimension_numbers<[1], [0], [0], [1], [0, 0, 1, 1], [], []>} : vector<17x17xbf16>, vector<17x16xbf16>, vector<17x16xf32> -> vector<17x16xf32>
    %373 = vector.extract_strided_slice %351 {offsets = [0, 0], sizes = [16, 32], strides = [1, 1]} : vector<32x32xbf16> to vector<16x32xbf16>
    %374 = arith.truncf %372 : vector<17x16xf32> to vector<17x16xbf16>
    %cst_178 = arith.constant dense<0.000000e+00> : vector<17x32xf32>
    %375 = tpu.matmul %374, %373, %cst_178 {dimension_numbers = #tpu.dot_dimension_numbers<[1], [0], [0], [1], [0, 0, 1, 1], [], []>} : vector<17x16xbf16>, vector<16x32xbf16>, vector<17x32xf32> -> vector<17x32xf32>
    %376 = arith.addf %352, %375 : vector<17x32xf32>
    %377 = vector.extract_strided_slice %349 {offsets = [0, 16], sizes = [17, 16], strides = [1, 1]} : vector<17x96xf32> to vector<17x16xf32>
    %378 = vector.extract_strided_slice %349 {offsets = [0, 48], sizes = [17, 16], strides = [1, 1]} : vector<17x96xf32> to vector<17x16xf32>
    %379 = vector.extract_strided_slice %349 {offsets = [0, 80], sizes = [17, 16], strides = [1, 1]} : vector<17x96xf32> to vector<17x16xf32>
    %380 = arith.truncf %377 : vector<17x16xf32> to vector<17x16xbf16>
    %381 = arith.truncf %378 : vector<17x16xf32> to vector<17x16xbf16>
    %cst_179 = arith.constant dense<0.000000e+00> : vector<17x17xf32>
    %382 = tpu.matmul %380, %381, %cst_179 {dimension_numbers = #tpu.dot_dimension_numbers<[1], [1], [0], [0], [0, 0, 1, 0], [], []>} : vector<17x16xbf16>, vector<17x16xbf16>, vector<17x17xf32> -> vector<17x17xf32>
    %cst_180 = arith.constant 2.500000e-01 : f32
    %383 = vector.broadcast %cst_180 : f32 to vector<17x17xf32>
    %384 = arith.mulf %382, %383 : vector<17x17xf32>
    %cst_181 = arith.constant dense<0xFF800000> : vector<17xf32>
    %385 = vector.multi_reduction <maximumf>, %384, %cst_181 [1] : vector<17x17xf32> to vector<17xf32>
    %386 = vector.shape_cast %385 : vector<17xf32> to vector<17x1xf32>
    %387 = vector.broadcast %386 : vector<17x1xf32> to vector<17x17xf32>
    %388 = arith.subf %384, %387 : vector<17x17xf32>
    %389 = math.exp %388 : vector<17x17xf32>
    %cst_182 = arith.constant dense<0.000000e+00> : vector<17xf32>
    %390 = vector.multi_reduction <add>, %389, %cst_182 [1] : vector<17x17xf32> to vector<17xf32>
    %391 = vector.shape_cast %390 : vector<17xf32> to vector<17x1xf32>
    %392 = vector.broadcast %391 : vector<17x1xf32> to vector<17x17xf32>
    %393 = arith.divf %389, %392 : vector<17x17xf32>
    %394 = arith.truncf %393 : vector<17x17xf32> to vector<17x17xbf16>
    %395 = arith.truncf %379 : vector<17x16xf32> to vector<17x16xbf16>
    %cst_183 = arith.constant dense<0.000000e+00> : vector<17x16xf32>
    %396 = tpu.matmul %394, %395, %cst_183 {dimension_numbers = #tpu.dot_dimension_numbers<[1], [0], [0], [1], [0, 0, 1, 1], [], []>} : vector<17x17xbf16>, vector<17x16xbf16>, vector<17x16xf32> -> vector<17x16xf32>
    %397 = vector.extract_strided_slice %351 {offsets = [16, 0], sizes = [16, 32], strides = [1, 1]} : vector<32x32xbf16> to vector<16x32xbf16>
    %398 = arith.truncf %396 : vector<17x16xf32> to vector<17x16xbf16>
    %cst_184 = arith.constant dense<0.000000e+00> : vector<17x32xf32>
    %399 = tpu.matmul %398, %397, %cst_184 {dimension_numbers = #tpu.dot_dimension_numbers<[1], [0], [0], [1], [0, 0, 1, 1], [], []>} : vector<17x16xbf16>, vector<16x32xbf16>, vector<17x32xf32> -> vector<17x32xf32>
    %400 = arith.addf %376, %399 : vector<17x32xf32>
    %401 = arith.addf %317, %400 : vector<17x32xf32>
    %c0_185 = arith.constant 0 : index
    %c0_186 = arith.constant 0 : index
    %c0_187 = arith.constant 0 : index
    %402 = vector.load %arg25[%c0_185, %c0_186, %c0_187] : memref<1x1x32xf32, #tpu.memory_space<vmem>>, vector<1x1x32xf32>
    %403 = vector.shape_cast %402 : vector<1x1x32xf32> to vector<1x32xf32>
    %404 = vector.broadcast %403 : vector<1x32xf32> to vector<17x32xf32>
    %405 = arith.addf %401, %404 : vector<17x32xf32>
    %c0_188 = arith.constant 0 : index
    %c0_189 = arith.constant 0 : index
    %c0_190 = arith.constant 0 : index
    %406 = vector.load %arg26[%c0_188, %c0_189, %c0_190] : memref<1x1x32xf32, #tpu.memory_space<vmem>>, vector<1x1x32xf32>
    %407 = vector.shape_cast %406 : vector<1x1x32xf32> to vector<1x32xf32>
    %c0_191 = arith.constant 0 : index
    %c0_192 = arith.constant 0 : index
    %c0_193 = arith.constant 0 : index
    %408 = vector.load %arg27[%c0_191, %c0_192, %c0_193] : memref<1x1x32xf32, #tpu.memory_space<vmem>>, vector<1x1x32xf32>
    %409 = vector.shape_cast %408 : vector<1x1x32xf32> to vector<1x32xf32>
    %cst_194 = arith.constant dense<0.000000e+00> : vector<17xf32>
    %410 = vector.multi_reduction <add>, %405, %cst_194 [1] : vector<17x32xf32> to vector<17xf32>
    %411 = vector.shape_cast %410 : vector<17xf32> to vector<17x1xf32>
    %cst_195 = arith.constant 3.200000e+01 : f32
    %412 = vector.broadcast %cst_195 : f32 to vector<17x1xf32>
    %413 = arith.divf %411, %412 : vector<17x1xf32>
    %414 = vector.broadcast %413 : vector<17x1xf32> to vector<17x32xf32>
    %415 = arith.subf %405, %414 : vector<17x32xf32>
    %416 = arith.mulf %415, %415 : vector<17x32xf32>
    %cst_196 = arith.constant dense<0.000000e+00> : vector<17xf32>
    %417 = vector.multi_reduction <add>, %416, %cst_196 [1] : vector<17x32xf32> to vector<17xf32>
    %418 = vector.shape_cast %417 : vector<17xf32> to vector<17x1xf32>
    %cst_197 = arith.constant 3.200000e+01 : f32
    %419 = vector.broadcast %cst_197 : f32 to vector<17x1xf32>
    %420 = arith.divf %418, %419 : vector<17x1xf32>
    %cst_198 = arith.constant 9.99999997E-7 : f32
    %421 = vector.broadcast %cst_198 : f32 to vector<17x1xf32>
    %422 = arith.addf %420, %421 : vector<17x1xf32>
    %423 = math.rsqrt %422 : vector<17x1xf32>
    %424 = vector.broadcast %423 : vector<17x1xf32> to vector<17x32xf32>
    %425 = arith.mulf %415, %424 : vector<17x32xf32>
    %426 = vector.broadcast %407 : vector<1x32xf32> to vector<17x32xf32>
    %427 = arith.mulf %425, %426 : vector<17x32xf32>
    %428 = vector.broadcast %409 : vector<1x32xf32> to vector<17x32xf32>
    %429 = arith.addf %427, %428 : vector<17x32xf32>
    %c0_199 = arith.constant 0 : index
    %c0_200 = arith.constant 0 : index
    %c0_201 = arith.constant 0 : index
    %430 = vector.load %arg28[%c0_199, %c0_200, %c0_201] : memref<1x32x128xbf16, #tpu.memory_space<vmem>>, vector<1x32x128xbf16>
    %431 = vector.shape_cast %430 : vector<1x32x128xbf16> to vector<32x128xbf16>
    %432 = arith.truncf %429 : vector<17x32xf32> to vector<17x32xbf16>
    %cst_202 = arith.constant dense<0.000000e+00> : vector<17x128xf32>
    %433 = tpu.matmul %432, %431, %cst_202 {dimension_numbers = #tpu.dot_dimension_numbers<[1], [0], [0], [1], [0, 0, 1, 1], [], []>} : vector<17x32xbf16>, vector<32x128xbf16>, vector<17x128xf32> -> vector<17x128xf32>
    %c0_203 = arith.constant 0 : index
    %c0_204 = arith.constant 0 : index
    %c0_205 = arith.constant 0 : index
    %434 = vector.load %arg29[%c0_203, %c0_204, %c0_205] : memref<1x1x128xf32, #tpu.memory_space<vmem>>, vector<1x1x128xf32>
    %435 = vector.shape_cast %434 : vector<1x1x128xf32> to vector<1x128xf32>
    %436 = vector.broadcast %435 : vector<1x128xf32> to vector<17x128xf32>
    %437 = arith.addf %433, %436 : vector<17x128xf32>
    %cst_206 = arith.constant 5.000000e-01 : f32
    %438 = vector.broadcast %cst_206 : f32 to vector<17x128xf32>
    %439 = arith.mulf %438, %437 : vector<17x128xf32>
    %cst_207 = arith.constant 4.471500e-02 : f32
    %440 = vector.broadcast %cst_207 : f32 to vector<17x128xf32>
    %441 = arith.mulf %440, %437 : vector<17x128xf32>
    %442 = arith.mulf %441, %437 : vector<17x128xf32>
    %443 = arith.mulf %442, %437 : vector<17x128xf32>
    %444 = arith.addf %437, %443 : vector<17x128xf32>
    %cst_208 = arith.constant 0.797884583 : f32
    %445 = vector.broadcast %cst_208 : f32 to vector<17x128xf32>
    %446 = arith.mulf %445, %444 : vector<17x128xf32>
    %447 = math.tanh %446 : vector<17x128xf32>
    %cst_209 = arith.constant 1.000000e+00 : f32
    %448 = vector.broadcast %cst_209 : f32 to vector<17x128xf32>
    %449 = arith.addf %448, %447 : vector<17x128xf32>
    %450 = arith.mulf %439, %449 : vector<17x128xf32>
    %c0_210 = arith.constant 0 : index
    %c0_211 = arith.constant 0 : index
    %c0_212 = arith.constant 0 : index
    %451 = vector.load %arg30[%c0_210, %c0_211, %c0_212] : memref<1x128x32xbf16, #tpu.memory_space<vmem>>, vector<1x128x32xbf16>
    %452 = vector.shape_cast %451 : vector<1x128x32xbf16> to vector<128x32xbf16>
    %453 = arith.truncf %450 : vector<17x128xf32> to vector<17x128xbf16>
    %cst_213 = arith.constant dense<0.000000e+00> : vector<17x32xf32>
    %454 = tpu.matmul %453, %452, %cst_213 {dimension_numbers = #tpu.dot_dimension_numbers<[1], [0], [0], [1], [0, 0, 1, 1], [], []>} : vector<17x128xbf16>, vector<128x32xbf16>, vector<17x32xf32> -> vector<17x32xf32>
    %455 = arith.addf %405, %454 : vector<17x32xf32>
    %c0_214 = arith.constant 0 : index
    %c0_215 = arith.constant 0 : index
    %c0_216 = arith.constant 0 : index
    %456 = vector.load %arg31[%c0_214, %c0_215, %c0_216] : memref<1x1x32xf32, #tpu.memory_space<vmem>>, vector<1x1x32xf32>
    %457 = vector.shape_cast %456 : vector<1x1x32xf32> to vector<1x32xf32>
    %458 = vector.broadcast %457 : vector<1x32xf32> to vector<17x32xf32>
    %459 = arith.addf %455, %458 : vector<17x32xf32>
    %c0_217 = arith.constant 0 : index
    %c0_218 = arith.constant 0 : index
    %460 = vector.load %arg32[%c0_217, %c0_218] : memref<1x32xf32, #tpu.memory_space<vmem>>, vector<1x32xf32>
    %c0_219 = arith.constant 0 : index
    %c0_220 = arith.constant 0 : index
    %461 = vector.load %arg33[%c0_219, %c0_220] : memref<1x32xf32, #tpu.memory_space<vmem>>, vector<1x32xf32>
    %cst_221 = arith.constant dense<0.000000e+00> : vector<17xf32>
    %462 = vector.multi_reduction <add>, %459, %cst_221 [1] : vector<17x32xf32> to vector<17xf32>
    %463 = vector.shape_cast %462 : vector<17xf32> to vector<17x1xf32>
    %cst_222 = arith.constant 3.200000e+01 : f32
    %464 = vector.broadcast %cst_222 : f32 to vector<17x1xf32>
    %465 = arith.divf %463, %464 : vector<17x1xf32>
    %466 = vector.broadcast %465 : vector<17x1xf32> to vector<17x32xf32>
    %467 = arith.subf %459, %466 : vector<17x32xf32>
    %468 = arith.mulf %467, %467 : vector<17x32xf32>
    %cst_223 = arith.constant dense<0.000000e+00> : vector<17xf32>
    %469 = vector.multi_reduction <add>, %468, %cst_223 [1] : vector<17x32xf32> to vector<17xf32>
    %470 = vector.shape_cast %469 : vector<17xf32> to vector<17x1xf32>
    %cst_224 = arith.constant 3.200000e+01 : f32
    %471 = vector.broadcast %cst_224 : f32 to vector<17x1xf32>
    %472 = arith.divf %470, %471 : vector<17x1xf32>
    %cst_225 = arith.constant 9.99999997E-7 : f32
    %473 = vector.broadcast %cst_225 : f32 to vector<17x1xf32>
    %474 = arith.addf %472, %473 : vector<17x1xf32>
    %475 = math.rsqrt %474 : vector<17x1xf32>
    %476 = vector.broadcast %475 : vector<17x1xf32> to vector<17x32xf32>
    %477 = arith.mulf %467, %476 : vector<17x32xf32>
    %478 = vector.broadcast %460 : vector<1x32xf32> to vector<17x32xf32>
    %479 = arith.mulf %477, %478 : vector<17x32xf32>
    %480 = vector.broadcast %461 : vector<1x32xf32> to vector<17x32xf32>
    %481 = arith.addf %479, %480 : vector<17x32xf32>
    %c0_226 = arith.constant 0 : index
    %c0_227 = arith.constant 0 : index
    %482 = vector.load %arg34[%c0_226, %c0_227] : memref<32x48xbf16, #tpu.memory_space<vmem>>, vector<32x48xbf16>
    %483 = arith.truncf %481 : vector<17x32xf32> to vector<17x32xbf16>
    %cst_228 = arith.constant dense<0.000000e+00> : vector<17x48xf32>
    %484 = tpu.matmul %483, %482, %cst_228 {dimension_numbers = #tpu.dot_dimension_numbers<[1], [0], [0], [1], [0, 0, 1, 1], [], []>} : vector<17x32xbf16>, vector<32x48xbf16>, vector<17x48xf32> -> vector<17x48xf32>
    %c0_229 = arith.constant 0 : index
    %c0_230 = arith.constant 0 : index
    %485 = vector.load %arg35[%c0_229, %c0_230] : memref<1x48xf32, #tpu.memory_space<vmem>>, vector<1x48xf32>
    %486 = vector.broadcast %485 : vector<1x48xf32> to vector<17x48xf32>
    %487 = arith.addf %484, %486 : vector<17x48xf32>
    %488 = vector.extract_strided_slice %487 {offsets = [1, 0], sizes = [16, 48], strides = [1, 1]} : vector<17x48xf32> to vector<16x48xf32>
    %c0_231 = arith.constant 0 : index
    %c0_232 = arith.constant 0 : index
    %c0_233 = arith.constant 0 : index
    %489 = vector.load %arg36[%c0_231, %c0_232, %c0_233] : memref<1x16x48xf32, #tpu.memory_space<vmem>>, vector<1x16x48xf32>
    %490 = vector.shape_cast %489 : vector<1x16x48xf32> to vector<16x48xf32>
    %491 = vector.shape_cast %488 : vector<16x48xf32> to vector<1x16x48xf32>
    tpu.vector_store %arg36[%c0_231, %c0_232, %c0_233], %491 {strides = array<i32>} : memref<1x16x48xf32, #tpu.memory_space<vmem>>, vector<1x16x48xf32>,
    return
  }
  func.func @transform_0(%arg0: i32) -> (i32, i32, i32) {
    %c0_i32 = arith.constant 0 : i32
    %c0_i32_0 = arith.constant 0 : i32
    %c0_i32_1 = arith.constant 0 : i32
    return %arg0, %c0_i32, %c0_i32_0 : i32, i32, i32
  }
  func.func @transform_1(%arg0: i32) -> (i32, i32) {
    %c0_i32 = arith.constant 0 : i32
    %c0_i32_0 = arith.constant 0 : i32
    %c0_i32_1 = arith.constant 0 : i32
    return %c0_i32, %c0_i32_0 : i32, i32
  }
  func.func @transform_2(%arg0: i32) -> (i32, i32) {
    %c0_i32 = arith.constant 0 : i32
    %c0_i32_0 = arith.constant 0 : i32
    %c0_i32_1 = arith.constant 0 : i32
    return %c0_i32, %c0_i32_0 : i32, i32
  }
  func.func @transform_3(%arg0: i32) -> (i32, i32, i32) {
    %c0_i32 = arith.constant 0 : i32
    %c0_i32_0 = arith.constant 0 : i32
    %c0_i32_1 = arith.constant 0 : i32
    %c0_i32_2 = arith.constant 0 : i32
    return %c0_i32, %c0_i32_0, %c0_i32_1 : i32, i32, i32
  }
  func.func @transform_4(%arg0: i32) -> (i32, i32, i32) {
    %c0_i32 = arith.constant 0 : i32
    %c0_i32_0 = arith.constant 0 : i32
    %c0_i32_1 = arith.constant 0 : i32
    %c0_i32_2 = arith.constant 0 : i32
    return %c0_i32, %c0_i32_0, %c0_i32_1 : i32, i32, i32
  }
  func.func @transform_5(%arg0: i32) -> (i32, i32, i32) {
    %c0_i32 = arith.constant 0 : i32
    %c0_i32_0 = arith.constant 0 : i32
    %c0_i32_1 = arith.constant 0 : i32
    %c0_i32_2 = arith.constant 0 : i32
    return %c0_i32, %c0_i32_0, %c0_i32_1 : i32, i32, i32
  }
  func.func @transform_6(%arg0: i32) -> (i32, i32, i32) {
    %c0_i32 = arith.constant 0 : i32
    %c0_i32_0 = arith.constant 0 : i32
    %c0_i32_1 = arith.constant 0 : i32
    %c0_i32_2 = arith.constant 0 : i32
    return %c0_i32, %c0_i32_0, %c0_i32_1 : i32, i32, i32
  }
  func.func @transform_7(%arg0: i32) -> (i32, i32, i32) {
    %c0_i32 = arith.constant 0 : i32
    %c0_i32_0 = arith.constant 0 : i32
    %c0_i32_1 = arith.constant 0 : i32
    %c0_i32_2 = arith.constant 0 : i32
    return %c0_i32, %c0_i32_0, %c0_i32_1 : i32, i32, i32
  }
  func.func @transform_8(%arg0: i32) -> (i32, i32, i32) {
    %c0_i32 = arith.constant 0 : i32
    %c0_i32_0 = arith.constant 0 : i32
    %c0_i32_1 = arith.constant 0 : i32
    %c0_i32_2 = arith.constant 0 : i32
    return %c0_i32, %c0_i32_0, %c0_i32_1 : i32, i32, i32
  }
  func.func @transform_9(%arg0: i32) -> (i32, i32, i32) {
    %c0_i32 = arith.constant 0 : i32
    %c0_i32_0 = arith.constant 0 : i32
    %c0_i32_1 = arith.constant 0 : i32
    %c0_i32_2 = arith.constant 0 : i32
    return %c0_i32, %c0_i32_0, %c0_i32_1 : i32, i32, i32
  }
  func.func @transform_10(%arg0: i32) -> (i32, i32, i32) {
    %c0_i32 = arith.constant 0 : i32
    %c0_i32_0 = arith.constant 0 : i32
    %c0_i32_1 = arith.constant 0 : i32
    %c0_i32_2 = arith.constant 0 : i32
    return %c0_i32, %c0_i32_0, %c0_i32_1 : i32, i32, i32
  }
  func.func @transform_11(%arg0: i32) -> (i32, i32, i32) {
    %c0_i32 = arith.constant 0 : i32
    %c0_i32_0 = arith.constant 0 : i32
    %c0_i32_1 = arith.constant 0 : i32
    %c0_i32_2 = arith.constant 0 : i32
    return %c0_i32, %c0_i32_0, %c0_i32_1 : i32, i32, i32
  }
  func.func @transform_12(%arg0: i32) -> (i32, i32, i32) {
    %c0_i32 = arith.constant 0 : i32
    %c0_i32_0 = arith.constant 0 : i32
    %c0_i32_1 = arith.constant 0 : i32
    %c0_i32_2 = arith.constant 0 : i32
    return %c0_i32, %c0_i32_0, %c0_i32_1 : i32, i32, i32
  }
  func.func @transform_13(%arg0: i32) -> (i32, i32, i32) {
    %c0_i32 = arith.constant 0 : i32
    %c0_i32_0 = arith.constant 0 : i32
    %c0_i32_1 = arith.constant 0 : i32
    %c0_i32_2 = arith.constant 0 : i32
    return %c0_i32, %c0_i32_0, %c0_i32_1 : i32, i32, i32
  }
  func.func @transform_14(%arg0: i32) -> (i32, i32, i32) {
    %c0_i32 = arith.constant 0 : i32
    %c0_i32_0 = arith.constant 0 : i32
    %c0_i32_1 = arith.constant 0 : i32
    %c0_i32_2 = arith.constant 0 : i32
    return %c0_i32, %c0_i32_0, %c0_i32_1 : i32, i32, i32
  }
  func.func @transform_15(%arg0: i32) -> (i32, i32) {
    %c0_i32 = arith.constant 0 : i32
    %c0_i32_0 = arith.constant 0 : i32
    %c0_i32_1 = arith.constant 0 : i32
    return %c0_i32, %c0_i32_0 : i32, i32
  }
  func.func @transform_16(%arg0: i32) -> (i32, i32) {
    %c0_i32 = arith.constant 0 : i32
    %c0_i32_0 = arith.constant 0 : i32
    %c0_i32_1 = arith.constant 0 : i32
    return %c0_i32, %c0_i32_0 : i32, i32
  }
  func.func @transform_17(%arg0: i32) -> (i32, i32) {
    %c0_i32 = arith.constant 0 : i32
    %c0_i32_0 = arith.constant 0 : i32
    %c0_i32_1 = arith.constant 0 : i32
    return %c0_i32, %c0_i32_0 : i32, i32
  }
  func.func @transform_18(%arg0: i32) -> (i32, i32) {
    %c0_i32 = arith.constant 0 : i32
    %c0_i32_0 = arith.constant 0 : i32
    %c0_i32_1 = arith.constant 0 : i32
    return %c0_i32, %c0_i32_0 : i32, i32
  }
  func.func @transform_19(%arg0: i32) -> (i32, i32, i32) {
    %c0_i32 = arith.constant 0 : i32
    %c0_i32_0 = arith.constant 0 : i32
    %c0_i32_1 = arith.constant 0 : i32
    %c0_i32_2 = arith.constant 0 : i32
    return %c0_i32, %c0_i32_0, %c0_i32_1 : i32, i32, i32
  }
  func.func @transform_20(%arg0: i32) -> (i32, i32, i32) {
    %c0_i32 = arith.constant 0 : i32
    %c0_i32_0 = arith.constant 0 : i32
    %c0_i32_1 = arith.constant 0 : i32
    %c0_i32_2 = arith.constant 0 : i32
    return %c0_i32, %c0_i32_0, %c0_i32_1 : i32, i32, i32
  }
  func.func @transform_21(%arg0: i32) -> (i32, i32, i32) {
    %c0_i32 = arith.constant 0 : i32
    %c0_i32_0 = arith.constant 0 : i32
    %c0_i32_1 = arith.constant 0 : i32
    %c0_i32_2 = arith.constant 0 : i32
    return %c0_i32, %c0_i32_0, %c0_i32_1 : i32, i32, i32
  }
  func.func @transform_22(%arg0: i32) -> (i32, i32, i32) {
    %c0_i32 = arith.constant 0 : i32
    %c0_i32_0 = arith.constant 0 : i32
    %c0_i32_1 = arith.constant 0 : i32
    %c0_i32_2 = arith.constant 0 : i32
    return %c0_i32, %c0_i32_0, %c0_i32_1 : i32, i32, i32
  }
  func.func @transform_23(%arg0: i32) -> (i32, i32, i32) {
    %c0_i32 = arith.constant 0 : i32
    %c0_i32_0 = arith.constant 0 : i32
    %c0_i32_1 = arith.constant 0 : i32
    %c0_i32_2 = arith.constant 0 : i32
    return %c0_i32, %c0_i32_0, %c0_i32_1 : i32, i32, i32
  }
  func.func @transform_24(%arg0: i32) -> (i32, i32, i32) {
    %c0_i32 = arith.constant 0 : i32
    %c0_i32_0 = arith.constant 0 : i32
    %c0_i32_1 = arith.constant 0 : i32
    %c0_i32_2 = arith.constant 0 : i32
    return %c0_i32, %c0_i32_0, %c0_i32_1 : i32, i32, i32
  }
  func.func @transform_25(%arg0: i32) -> (i32, i32, i32) {
    %c0_i32 = arith.constant 0 : i32
    %c0_i32_0 = arith.constant 0 : i32
    %c0_i32_1 = arith.constant 0 : i32
    %c0_i32_2 = arith.constant 0 : i32
    return %c0_i32, %c0_i32_0, %c0_i32_1 : i32, i32, i32
  }
  func.func @transform_26(%arg0: i32) -> (i32, i32, i32) {
    %c0_i32 = arith.constant 0 : i32
    %c0_i32_0 = arith.constant 0 : i32
    %c0_i32_1 = arith.constant 0 : i32
    %c0_i32_2 = arith.constant 0 : i32
    return %c0_i32, %c0_i32_0, %c0_i32_1 : i32, i32, i32
  }
  func.func @transform_27(%arg0: i32) -> (i32, i32, i32) {
    %c0_i32 = arith.constant 0 : i32
    %c0_i32_0 = arith.constant 0 : i32
    %c0_i32_1 = arith.constant 0 : i32
    %c0_i32_2 = arith.constant 0 : i32
    return %c0_i32, %c0_i32_0, %c0_i32_1 : i32, i32, i32
  }
  func.func @transform_28(%arg0: i32) -> (i32, i32, i32) {
    %c0_i32 = arith.constant 0 : i32
    %c0_i32_0 = arith.constant 0 : i32
    %c0_i32_1 = arith.constant 0 : i32
    %c0_i32_2 = arith.constant 0 : i32
    return %c0_i32, %c0_i32_0, %c0_i32_1 : i32, i32, i32
  }
  func.func @transform_29(%arg0: i32) -> (i32, i32, i32) {
    %c0_i32 = arith.constant 0 : i32
    %c0_i32_0 = arith.constant 0 : i32
    %c0_i32_1 = arith.constant 0 : i32
    %c0_i32_2 = arith.constant 0 : i32
    return %c0_i32, %c0_i32_0, %c0_i32_1 : i32, i32, i32
  }
  func.func @transform_30(%arg0: i32) -> (i32, i32, i32) {
    %c0_i32 = arith.constant 0 : i32
    %c0_i32_0 = arith.constant 0 : i32
    %c0_i32_1 = arith.constant 0 : i32
    %c0_i32_2 = arith.constant 0 : i32
    return %c0_i32, %c0_i32_0, %c0_i32_1 : i32, i32, i32
  }
  func.func @transform_31(%arg0: i32) -> (i32, i32) {
    %c0_i32 = arith.constant 0 : i32
    %c0_i32_0 = arith.constant 0 : i32
    %c0_i32_1 = arith.constant 0 : i32
    return %c0_i32, %c0_i32_0 : i32, i32
  }
  func.func @transform_32(%arg0: i32) -> (i32, i32) {
    %c0_i32 = arith.constant 0 : i32
    %c0_i32_0 = arith.constant 0 : i32
    %c0_i32_1 = arith.constant 0 : i32
    return %c0_i32, %c0_i32_0 : i32, i32
  }
  func.func @transform_33(%arg0: i32) -> (i32, i32) {
    %c0_i32 = arith.constant 0 : i32
    %c0_i32_0 = arith.constant 0 : i32
    %c0_i32_1 = arith.constant 0 : i32
    return %c0_i32, %c0_i32_0 : i32, i32
  }
  func.func @transform_34(%arg0: i32) -> (i32, i32) {
    %c0_i32 = arith.constant 0 : i32
    %c0_i32_0 = arith.constant 0 : i32
    %c0_i32_1 = arith.constant 0 : i32
    return %c0_i32, %c0_i32_0 : i32, i32
  }
  func.func @transform_35(%arg0: i32) -> (i32, i32, i32) {
    %c0_i32 = arith.constant 0 : i32
    %c0_i32_0 = arith.constant 0 : i32
    %c0_i32_1 = arith.constant 0 : i32
    return %arg0, %c0_i32, %c0_i32_0 : i32, i32, i32
  }
}

module attributes {stable_mosaic.version = 11 : i64} {
  func.func @_conv_resize_kernel(%arg0: i32, %arg1: memref<1x48x16xf32, #tpu.memory_space<vmem>>, %arg2: memref<16x32xf32, #tpu.memory_space<vmem>>, %arg3: memref<32x48xf32, #tpu.memory_space<vmem>>, %arg4: memref<32x1xf32, #tpu.memory_space<vmem>>, %arg5: memref<1x32x32xf32, #tpu.memory_space<vmem>>) attributes {dimension_semantics = [#tpu.dimension_semantics<parallel>], iteration_bounds = array<i64: 2>, scalar_prefetch = 0 : i64, scratch_operands = 0 : i64, tpu.core_type = #tpu.core_type<tc>, window_params = [{transform_indices = @transform_0, window_bounds = array<i64: 1, 48, 16>}, {pipeline_mode = #tpu.pipeline_mode<synchronous>, transform_indices = @transform_1, window_bounds = array<i64: 16, 32>}, {pipeline_mode = #tpu.pipeline_mode<synchronous>, transform_indices = @transform_2, window_bounds = array<i64: 32, 48>}, {pipeline_mode = #tpu.pipeline_mode<synchronous>, transform_indices = @transform_3, window_bounds = array<i64: 32, 1>}, {transform_indices = @transform_4, window_bounds = array<i64: 1, 32, 32>}]} {
    %c0 = arith.constant 0 : index
    %c0_0 = arith.constant 0 : index
    %c0_1 = arith.constant 0 : index
    %0 = vector.load %arg1[%c0, %c0_0, %c0_1] : memref<1x48x16xf32, #tpu.memory_space<vmem>>, vector<1x48x16xf32>
    %1 = vector.shape_cast %0 : vector<1x48x16xf32> to vector<48x16xf32>
    %c0_2 = arith.constant 0 : index
    %c0_3 = arith.constant 0 : index
    %2 = vector.load %arg2[%c0_2, %c0_3] : memref<16x32xf32, #tpu.memory_space<vmem>>, vector<16x32xf32>
    %cst = arith.constant dense<0.000000e+00> : vector<48x32xf32>
    %3 = tpu.matmul %1, %2, %cst {dimension_numbers = #tpu.dot_dimension_numbers<[1], [0], [0], [1], [0, 0, 1, 1], [], []>} : vector<48x16xf32>, vector<16x32xf32>, vector<48x32xf32> -> vector<48x32xf32>
    %c0_4 = arith.constant 0 : index
    %c0_5 = arith.constant 0 : index
    %4 = vector.load %arg3[%c0_4, %c0_5] : memref<32x48xf32, #tpu.memory_space<vmem>>, vector<32x48xf32>
    %cst_6 = arith.constant dense<0.000000e+00> : vector<32x32xf32>
    %5 = tpu.matmul %4, %3, %cst_6 {dimension_numbers = #tpu.dot_dimension_numbers<[1], [0], [0], [1], [0, 0, 1, 1], [], []>} : vector<32x48xf32>, vector<48x32xf32>, vector<32x32xf32> -> vector<32x32xf32>
    %c0_7 = arith.constant 0 : index
    %c0_8 = arith.constant 0 : index
    %6 = vector.load %arg4[%c0_7, %c0_8] : memref<32x1xf32, #tpu.memory_space<vmem>>, vector<32x1xf32>
    %7 = vector.broadcast %6 : vector<32x1xf32> to vector<32x32xf32>
    %8 = arith.addf %5, %7 : vector<32x32xf32>
    %c0_9 = arith.constant 0 : index
    %c0_10 = arith.constant 0 : index
    %c0_11 = arith.constant 0 : index
    %9 = vector.load %arg5[%c0_9, %c0_10, %c0_11] : memref<1x32x32xf32, #tpu.memory_space<vmem>>, vector<1x32x32xf32>
    %10 = vector.shape_cast %9 : vector<1x32x32xf32> to vector<32x32xf32>
    %11 = vector.shape_cast %8 : vector<32x32xf32> to vector<1x32x32xf32>
    tpu.vector_store %arg5[%c0_9, %c0_10, %c0_11], %11 {strides = array<i32>} : memref<1x32x32xf32, #tpu.memory_space<vmem>>, vector<1x32x32xf32>,
    return
  }
  func.func @transform_0(%arg0: i32) -> (i32, i32, i32) {
    %c0_i32 = arith.constant 0 : i32
    %c0_i32_0 = arith.constant 0 : i32
    %c0_i32_1 = arith.constant 0 : i32
    return %arg0, %c0_i32, %c0_i32_0 : i32, i32, i32
  }
  func.func @transform_1(%arg0: i32) -> (i32, i32) {
    %c0_i32 = arith.constant 0 : i32
    %c0_i32_0 = arith.constant 0 : i32
    %c0_i32_1 = arith.constant 0 : i32
    return %c0_i32, %c0_i32_0 : i32, i32
  }
  func.func @transform_2(%arg0: i32) -> (i32, i32) {
    %c0_i32 = arith.constant 0 : i32
    %c0_i32_0 = arith.constant 0 : i32
    %c0_i32_1 = arith.constant 0 : i32
    return %c0_i32, %c0_i32_0 : i32, i32
  }
  func.func @transform_3(%arg0: i32) -> (i32, i32) {
    %c0_i32 = arith.constant 0 : i32
    %c0_i32_0 = arith.constant 0 : i32
    %c0_i32_1 = arith.constant 0 : i32
    return %c0_i32, %c0_i32_0 : i32, i32
  }
  func.func @transform_4(%arg0: i32) -> (i32, i32, i32) {
    %c0_i32 = arith.constant 0 : i32
    %c0_i32_0 = arith.constant 0 : i32
    %c0_i32_1 = arith.constant 0 : i32
    return %arg0, %c0_i32, %c0_i32_0 : i32, i32, i32
  }
}

</mosaic_0001>

<llo_original>
// kernel: mae_super_resolution_forward.3
$region0: #{mae_super_resolution_forward.3}
  #allocation0 [shape = 'u32[]', space=smem, size = 0x4, offset = 0x4, fixed_abs, tag = 'smem constant byte address 0x4 - core index']
  #allocation1 [shape = 'u32[144,128]{1,0:T(1,128)}', space=vmem, size = 0x12000, scoped, tag = 'internal scratch']
  %s0 = inlined_call_operand.vmem [shape: f32[2,48,12], index: 0, kind: input, shape index: {}]
  %s1 = inlined_call_operand.vmem [shape: f32[12,16], index: 1, kind: input, shape index: {}]
  %s2 = inlined_call_operand.vmem [shape: f32[48,48], index: 2, kind: input, shape index: {}]
  %s3 = inlined_call_operand.vmem [shape: f32[48,1], index: 3, kind: input, shape index: {}]
  %s4 = inlined_call_operand.vmem [shape: f32[2,48,16], index: 4, kind: output, shape index: {}]
  %s5 = sld [smem:[#allocation0]]
  $region49: #{mae_super_resolution_forward.3} parent=0
    _
  %s7 = ssub.s32 1, %s5
  %s8 = scalar_select 0, %s7, %s5
  loop: start=0, step=1, limit=4
  $region2: #{mae_super_resolution_forward.3} parent=0 // loop_pre_header
    _
  $region3: #{mae_super_resolution_forward.3} parent=0 // loop_header
    %s10 = sphi 0, %s14
    %p11 = scmp.ge.s32.totalorder %s10, 4
    %s20 = sphi 0, %s22
    %s23 = sphi 0, %s20
    %s24 = sphi 0, %s23
    %s40 = sphi 0, %s24
    %s44 = sphi 0, %s44
    %s46 = sphi 0, %s44
    %s47 = sphi 0, %s46
    %s61 = sphi 0, %s47
    %s65 = sphi 0, %s65
    %s67 = sphi 0, %s65
    %s68 = sphi 0, %s67
    %s82 = sphi 0, %s68
    %s86 = sphi 0, %s86
    %s88 = sphi 0, %s86
    %s89 = sphi 0, %s88
    %s103 = sphi 0, %s89
    %s109 = sphi 0, %s111
    %s112 = sphi 0, %s109
    %s113 = sphi 0, %s112
    %s129 = sphi 0, %s113
  $region4: #{mae_super_resolution_forward.3} parent=0 // loop_header_branch
    %13 = sbr.rel (%p11) target = $region8
  $region5: #{mae_super_resolution_forward.3} parent=0 // loop_body
    %s15 = ssub.s32 %s10, 1
    %s16 = ssub.s32 %s10, 2
    %s17 = sadd.s32 %s10, 1
    %s18 = ssub.s32 %s10, %s17
    %p19 = scmp.eq.s32.totalorder %s18, 0
    %s21 = sadd.s32 %s20, 1
    %s22 = scalar_select %p19, %s20, %s21
    %p25 = pneg %p19
    %p26 = scmp.eq.s32.totalorder %s10, 1
    %p27 = por %p25, %p26
    %p28 = scmp.ne.s32.totalorder %s20, %s23
    %p29 = scmp.eq.s32.totalorder %s10, 0
    %p30 = por %p28, %p29
    %p31 = scmp.ne.s32.totalorder %s20, %s23
    %p32 = scmp.eq.s32.totalorder %s15, 1
    %p33 = por %p31, %p32
    %p34 = scmp.ne.s32.totalorder %s23, %s24
    %p35 = scmp.eq.s32.totalorder %s15, 0
    %p36 = por %p34, %p35
    %p37 = scmp.ne.s32.totalorder %s23, %s24
    %p38 = scmp.eq.s32.totalorder %s16, 1
    %p39 = por %p37, %p38
    %p41 = scmp.ne.s32.totalorder %s24, %s40
    %p42 = scmp.eq.s32.totalorder %s16, 0
    %p43 = por %p41, %p42
    %s45 = sadd.s32 %s44, 1
    %p48 = scmp.eq.s32.totalorder %s10, 1
    %p49 = scmp.ne.s32.totalorder %s44, %s46
    %p50 = scmp.eq.s32.totalorder %s10, 0
    %p51 = por %p49, %p50
    %p52 = scmp.ne.s32.totalorder %s44, %s46
    %p53 = scmp.eq.s32.totalorder %s15, 1
    %p54 = por %p52, %p53
    %p55 = scmp.ne.s32.totalorder %s46, %s47
    %p56 = scmp.eq.s32.totalorder %s15, 0
    %p57 = por %p55, %p56
    %p58 = scmp.ne.s32.totalorder %s46, %s47
    %p59 = scmp.eq.s32.totalorder %s16, 1
    %p60 = por %p58, %p59
    %p62 = scmp.ne.s32.totalorder %s47, %s61
    %p63 = scmp.eq.s32.totalorder %s16, 0
    %p64 = por %p62, %p63
    %s66 = sadd.s32 %s65, 1
    %p69 = scmp.eq.s32.totalorder %s10, 1
    %p70 = scmp.ne.s32.totalorder %s65, %s67
    %p71 = scmp.eq.s32.totalorder %s10, 0
    %p72 = por %p70, %p71
    %p73 = scmp.ne.s32.totalorder %s65, %s67
    %p74 = scmp.eq.s32.totalorder %s15, 1
    %p75 = por %p73, %p74
    %p76 = scmp.ne.s32.totalorder %s67, %s68
    %p77 = scmp.eq.s32.totalorder %s15, 0
    %p78 = por %p76, %p77
    %p79 = scmp.ne.s32.totalorder %s67, %s68
    %p80 = scmp.eq.s32.totalorder %s16, 1
    %p81 = por %p79, %p80
    %p83 = scmp.ne.s32.totalorder %s68, %s82
    %p84 = scmp.eq.s32.totalorder %s16, 0
    %p85 = por %p83, %p84
    %s87 = sadd.s32 %s86, 1
    %p90 = scmp.eq.s32.totalorder %s10, 1
    %p91 = scmp.ne.s32.totalorder %s86, %s88
    %p92 = scmp.eq.s32.totalorder %s10, 0
    %p93 = por %p91, %p92
    %p94 = scmp.ne.s32.totalorder %s86, %s88
    %p95 = scmp.eq.s32.totalorder %s15, 1
    %p96 = por %p94, %p95
    %p97 = scmp.ne.s32.totalorder %s88, %s89
    %p98 = scmp.eq.s32.totalorder %s15, 0
    %p99 = por %p97, %p98
    %p100 = scmp.ne.s32.totalorder %s88, %s89
    %p101 = scmp.eq.s32.totalorder %s16, 1
    %p102 = por %p100, %p101
    %p104 = scmp.ne.s32.totalorder %s89, %s103
    %p105 = scmp.eq.s32.totalorder %s16, 0
    %p106 = por %p104, %p105
    %s107 = ssub.s32 %s10, %s17
    %p108 = scmp.eq.s32.totalorder %s107, 0
    %s110 = sadd.s32 %s109, 1
    %s111 = scalar_select %p108, %s109, %s110
    %p114 = pneg %p108
    %p115 = scmp.eq.s32.totalorder %s10, 1
    %p116 = por %p114, %p115
    %p117 = scmp.ne.s32.totalorder %s109, %s112
    %p118 = scmp.eq.s32.totalorder %s10, 0
    %p119 = por %p117, %p118
    %p120 = scmp.ne.s32.totalorder %s109, %s112
    %p121 = scmp.eq.s32.totalorder %s15, 1
    %p122 = por %p120, %p121
    %p123 = scmp.ne.s32.totalorder %s112, %s113
    %p124 = scmp.eq.s32.totalorder %s15, 0
    %p125 = por %p123, %p124
    %p126 = scmp.ne.s32.totalorder %s112, %s113
    %p127 = scmp.eq.s32.totalorder %s16, 1
    %p128 = por %p126, %p127
    %p130 = scmp.ne.s32.totalorder %s113, %s129
    %p131 = scmp.eq.s32.totalorder %s16, 0
    %p132 = por %p130, %p131
    %p133 = scmp.le.s32.totalorder 1, %s10
    %p134 = scmp.lt.s32.totalorder %s10, 3
    %p135 = pnand %p133, %p134
    %p136 = pneg %p135
    // Predicated region
    $region9: #{mae_super_resolution_forward.3} parent=5 // pred_check
      _
    $region10: #{mae_super_resolution_forward.3} parent=5 // pred_check_branch
      %138 = sbr.rel (%p135) target = $region12
    $region11: #{mae_super_resolution_forward.3} parent=5 // pred_region
      %s139 = ssub.s32 %s10, 1
      // Predicated region
      $region13: #{mae_super_resolution_forward.3} parent=11 // pred_check
        %p140 = pneg %p57
      $region14: #{mae_super_resolution_forward.3} parent=11 // pred_check_branch
        %142 = sbr.rel (%p140) target = $region16
      $region15: #{mae_super_resolution_forward.3} parent=11 // pred_region
        _
      $region16: #{mae_super_resolution_forward.3} parent=11 // pred_fallthru
        _
      // Predicated region
      $region17: #{mae_super_resolution_forward.3} parent=11 // pred_check
        %p143 = pneg %p78
      $region18: #{mae_super_resolution_forward.3} parent=11 // pred_check_branch
        %145 = sbr.rel (%p143) target = $region20
      $region19: #{mae_super_resolution_forward.3} parent=11 // pred_region
        _
      $region20: #{mae_super_resolution_forward.3} parent=11 // pred_fallthru
        _
      // Predicated region
      $region21: #{mae_super_resolution_forward.3} parent=11 // pred_check
        %p146 = pneg %p99
      $region22: #{mae_super_resolution_forward.3} parent=11 // pred_check_branch
        %148 = sbr.rel (%p146) target = $region24
      $region23: #{mae_super_resolution_forward.3} parent=11 // pred_region
        _
      $region24: #{mae_super_resolution_forward.3} parent=11 // pred_fallthru
        _
    $region12: #{mae_super_resolution_forward.3} parent=5 // pred_fallthru
      _
    %p149 = scmp.lt.s32.totalorder %s10, 2
    // Predicated region
    $region25: #{mae_super_resolution_forward.3} parent=5 // pred_check
      %p150 = pneg %p149
    $region26: #{mae_super_resolution_forward.3} parent=5 // pred_check_branch
      %152 = sbr.rel (%p150) target = $region28
    $region27: #{mae_super_resolution_forward.3} parent=5 // pred_region
      // Predicated region
      $region29: #{mae_super_resolution_forward.3} parent=27 // pred_check
        %p153 = pneg %p30
      $region30: #{mae_super_resolution_forward.3} parent=27 // pred_check_branch
        %155 = sbr.rel (%p153) target = $region32
      $region31: #{mae_super_resolution_forward.3} parent=27 // pred_region
        %p156 = scmp.lt.s32.totalorder %s10, 1
        %s157 = scalar_select %p156, %s10, 1
        %s158 = smul.addr %s157, 6
        %s159 = smul.addr %s158, 8
        %s160 = scalar_lea.vmem %s0, %s159
      $region32: #{mae_super_resolution_forward.3} parent=27 // pred_fallthru
        _
    $region28: #{mae_super_resolution_forward.3} parent=5 // pred_fallthru
      _
    %p161 = scmp.le.s32.totalorder 1, %s10
    %p162 = scmp.lt.s32.totalorder %s10, 3
    %p163 = pnand %p161, %p162
    %p164 = pneg %p163
    // Predicated region
    $region33: #{mae_super_resolution_forward.3} parent=5 // pred_check
      _
    $region34: #{mae_super_resolution_forward.3} parent=5 // pred_check_branch
      %166 = sbr.rel (%p163) target = $region36
    $region35: #{mae_super_resolution_forward.3} parent=5 // pred_region
      %s167 = ssub.s32 %s10, 1
      %p168 = scmp.lt.s32.totalorder %s15, 1
      %s169 = scalar_select %p168, %s15, 1
      %s170 = smul.addr %s169, 6
      %s171 = smul.addr %s170, 8
      %s172 = scalar_lea.vmem %s0, %s171
      %p173 = pneg %p36
      %p174 = pneg %p33
      %p175 = pneg %p57
      %p176 = pneg %p54
      %p177 = pneg %p78
      %p178 = pneg %p75
      %p179 = pneg %p99
      %p180 = pneg %p96
      %p181 = pneg %p125
      %p182 = pneg %p122
      %p183 = scmp.lt.s32.totalorder %s15, 1
      %s184 = scalar_select %p183, %s15, 1
      %s185 = smul.addr %s184, 6
      %s186 = smul.addr %s185, 8
      %s187 = scalar_lea.vmem %s4, %s186
      %p188 = scmp.lt.s32.totalorder %s15, 1
      %s189 = scalar_select %p188, %s15, 1
      %s190 = smul.addr %s189, 6
      %s191 = smul.addr %s190, 8
      %s192 = scalar_lea.vmem %s0, %s191
      %p193 = scmp.lt.s32.totalorder %s15, 1
      %s194 = scalar_select %p193, %s15, 1
      %s195 = smul.addr %s194, 6
      %s196 = smul.addr %s195, 8
      %s197 = scalar_lea.vmem %s4, %s196
      %v198 = vld [vmem:[%s192] sm:$0xff]
      %v199 = vld [vmem:[%s192 + $0x8] sm:$0xff]
      %v200 = vld [vmem:[%s192 + $0x10] sm:$0xff]
      %v201 = vld [vmem:[%s192 + $0x18] sm:$0xff]
      %v202 = vld [vmem:[%s192 + $0x20] sm:$0xff]
      %v203 = vld [vmem:[%s192 + $0x28] sm:$0xff]
      %v204 = vld [vmem:[%s1] sm:$0xff]
      %v205 = vld [vmem:[%s1 + $0x8] sm:$0xf]
      %vm206 = vcmask 97280
      %v208 = vsel %vm206, %v198, 0
      %v211 = vsel %vm206, %v199, 0
      %v214 = vsel %vm206, %v200, 0
      %v217 = vsel %vm206, %v201, 0
      %v220 = vsel %vm206, %v202, 0
      %v223 = vsel %vm206, %v203, 0
      %vm225 = vcmask 1043456
      %v227 = vsel %vm225, %v205, 0
      %229 = vmatprep.subr.mxu0 0.0
      %230 = vmatpush1.msra.mxu0 %v204
      %231 = vmatprep.subr.mxu0 0.0
      %232 = vmatpush1.msra.mxu0 %v227
      %233 = vmatprep.subr.mxu0 0.0
      %234 = vmatpush1.msra.mxu0 0.0
      %235 = vmatprep.subr.mxu0 0.0
      %236 = vmatpush1.msra.mxu0 0.0
      %237 = vmatprep.subr.mxu0 0.0
      %238 = vmatpush1.msra.mxu0 0.0
      %239 = vmatprep.subr.mxu0 0.0
      %240 = vmatpush1.msra.mxu0 0.0
      %241 = vmatprep.subr.mxu0 0.0
      %242 = vmatpush1.msra.mxu0 0.0
      %243 = vmatprep.subr.mxu0 0.0
      %244 = vmatpush1.msra.mxu0 0.0
      %245 = vmatprep.subr.mxu0 0.0
      %246 = vmatpush1.msra.mxu0 0.0
      %247 = vmatprep.subr.mxu0 0.0
      %248 = vmatpush1.msra.mxu0 0.0
      %249 = vmatprep.subr.mxu0 0.0
      %250 = vmatpush1.msra.mxu0 0.0
      %251 = vmatprep.subr.mxu0 0.0
      %252 = vmatpush1.msra.mxu0 0.0
      %253 = vmatprep.subr.mxu0 0.0
      %254 = vmatpush1.msra.mxu0 0.0
      %255 = vmatprep.subr.mxu0 0.0
      %256 = vmatpush1.msra.mxu0 0.0
      %257 = vmatprep.subr.mxu0 0.0
      %258 = vmatpush1.msra.mxu0 0.0
      %259 = vmatprep.subr.mxu0 0.0
      %260 = vmatpush1.msra.mxu0 0.0
      %261 = vmatprep.subr.mxu0 0.0
      %262 = vmatpush1.msra.mxu0 0.0
      %263 = vmatprep.subr.mxu0 0.0
      %264 = vmatpush1.msra.mxu0 0.0
      %265 = vmatprep.subr.mxu0 0.0
      %266 = vmatpush1.msra.mxu0 0.0
      %267 = vmatprep.subr.mxu0 0.0
      %268 = vmatpush1.msra.mxu0 0.0
      %269 = vmatprep.subr.mxu0 0.0
      %270 = vmatpush1.msra.mxu0 0.0
      %271 = vmatprep.subr.mxu0 0.0
      %272 = vmatpush1.msra.mxu0 0.0
      %273 = vmatprep.subr.mxu0 0.0
      %274 = vmatpush1.msra.mxu0 0.0
      %275 = vmatprep.subr.mxu0 0.0
      %276 = vmatpush1.msra.mxu0 0.0
      %277 = vmatprep.subr.mxu0 0.0
      %278 = vmatpush1.msra.mxu0 0.0
      %279 = vmatprep.subr.mxu0 0.0
      %280 = vmatpush1.msra.mxu0 0.0
      %281 = vmatprep.subr.mxu0 0.0
      %282 = vmatpush1.msra.mxu0 0.0
      %283 = vmatprep.subr.mxu0 0.0
      %284 = vmatpush1.msra.mxu0 0.0
      %285 = vmatprep.subr.mxu0 0.0
      %286 = vmatpush1.msra.mxu0 0.0
      %287 = vmatprep.subr.mxu0 0.0
      %288 = vmatpush1.msra.mxu0 0.0
      %289 = vmatprep.subr.mxu0 0.0
      %290 = vmatpush1.msra.mxu0 0.0
      %291 = vmatprep.subr.mxu0 0.0
      %292 = vmatpush1.msra.mxu0 0.0
      %293 = vmatprep.mubr.f32.mxu0 0.0
      %294 = vmatmul.mubr.f32.gmra.mrb[0].mxu0 %v208
      %v295 = vpop.f32.mrb[0].mxu0
      %v296 = vadd.f32 0.0, %v295
      %v297 = vpop.f32.mrb[0].mxu0
      %298 = vmatprep.mubr.f32.mxu0 0.0
      %299 = vmatmul.mubr.f32.gmra.mrb[0].mxu0 %v211
      %v300 = vpop.f32.mrb[0].mxu0
      %v301 = vadd.f32 0.0, %v300
      %v302 = vpop.f32.mrb[0].mxu0
      %303 = vmatprep.mubr.f32.mxu0 0.0
      %304 = vmatmul.mubr.f32.gmra.mrb[0].mxu0 %v214
      %v305 = vpop.f32.mrb[0].mxu0
      %v306 = vadd.f32 0.0, %v305
      %v307 = vpop.f32.mrb[0].mxu0
      %308 = vmatprep.mubr.f32.mxu0 0.0
      %309 = vmatmul.mubr.f32.gmra.mrb[0].mxu0 %v217
      %v310 = vpop.f32.mrb[0].mxu0
      %v311 = vadd.f32 0.0, %v310
      %v312 = vpop.f32.mrb[0].mxu0
      %313 = vmatprep.mubr.f32.mxu0 0.0
      %314 = vmatmul.mubr.f32.gmra.mrb[0].mxu0 %v220
      %v315 = vpop.f32.mrb[0].mxu0
      %v316 = vadd.f32 0.0, %v315
      %v317 = vpop.f32.mrb[0].mxu0
      %318 = vmatprep.mubr.f32.mxu0 0.0
      %319 = vmatmul.mubr.f32.gmra.mrb[0].mxu0 %v223
      %v320 = vpop.f32.mrb[0].mxu0
      %v321 = vadd.f32 0.0, %v320
      %v322 = vpop.f32.mrb[0].mxu0
      %323 = vdwg.mxu0
      %v324 = vld [vmem:[%s2] sm:$0xff]
      %v325 = vld [vmem:[%s2 + $0x8] sm:$0xff]
      %v326 = vld [vmem:[%s2 + $0x10] sm:$0xff]
      %v327 = vld [vmem:[%s2 + $0x18] sm:$0xff]
      %v328 = vld [vmem:[%s2 + $0x20] sm:$0xff]
      %v329 = vld [vmem:[%s2 + $0x28] sm:$0xff]
      %v330 = vld [vmem:[%s3] sm:$0xff]
      %v331 = vld [vmem:[%s3 + $0x8] sm:$0xff]
      %v332 = vld [vmem:[%s3 + $0x10] sm:$0xff]
      %v333 = vld [vmem:[%s3 + $0x18] sm:$0xff]
      %v334 = vld [vmem:[%s3 + $0x20] sm:$0xff]
      %v335 = vld [vmem:[%s3 + $0x28] sm:$0xff]
      %337 = vset.pattern.permute.xlu0 0
      %338 = vperm.xlu0 %337, %v330
      %v339 = vpop.permute.xlu0 %338
      %342 = vset.pattern.permute.xlu0 0
      %343 = vperm.xlu0 %342, %v331
      %v344 = vpop.permute.xlu0 %343
      %347 = vset.pattern.permute.xlu0 0
      %348 = vperm.xlu0 %347, %v332
      %v349 = vpop.permute.xlu0 %348
      %352 = vset.pattern.permute.xlu0 0
      %353 = vperm.xlu0 %352, %v333
      %v354 = vpop.permute.xlu0 %353
      %357 = vset.pattern.permute.xlu0 0
      %358 = vperm.xlu0 %357, %v334
      %v359 = vpop.permute.xlu0 %358
      %362 = vset.pattern.permute.xlu0 0
      %363 = vperm.xlu0 %362, %v335
      %v364 = vpop.permute.xlu0 %363
      %vm366 = vcmask 392192
      %v368 = vsel %vm366, %v324, 0
      %v371 = vsel %vm366, %v325, 0
      %v374 = vsel %vm366, %v326, 0
      %v377 = vsel %vm366, %v327, 0
      %v380 = vsel %vm366, %v328, 0
      %v383 = vsel %vm366, %v329, 0
      %385 = vmatprep.subr.mxu0 0.0
      %386 = vmatpush1.msra.mxu0 %v296
      %387 = vmatprep.subr.mxu0 0.0
      %388 = vmatpush1.msra.mxu0 %v301
      %389 = vmatprep.subr.mxu0 0.0
      %390 = vmatpush1.msra.mxu0 %v306
      %391 = vmatprep.subr.mxu0 0.0
      %392 = vmatpush1.msra.mxu0 %v311
      %393 = vmatprep.subr.mxu0 0.0
      %394 = vmatpush1.msra.mxu0 %v316
      %395 = vmatprep.subr.mxu0 0.0
      %396 = vmatpush1.msra.mxu0 %v321
      %397 = vmatprep.subr.mxu0 0.0
      %398 = vmatpush1.msra.mxu0 0.0
      %399 = vmatprep.subr.mxu0 0.0
      %400 = vmatpush1.msra.mxu0 0.0
      %401 = vmatprep.subr.mxu0 0.0
      %402 = vmatpush1.msra.mxu0 0.0
      %403 = vmatprep.subr.mxu0 0.0
      %404 = vmatpush1.msra.mxu0 0.0
      %405 = vmatprep.subr.mxu0 0.0
      %406 = vmatpush1.msra.mxu0 0.0
      %407 = vmatprep.subr.mxu0 0.0
      %408 = vmatpush1.msra.mxu0 0.0
      %409 = vmatprep.subr.mxu0 0.0
      %410 = vmatpush1.msra.mxu0 0.0
      %411 = vmatprep.subr.mxu0 0.0
      %412 = vmatpush1.msra.mxu0 0.0
      %413 = vmatprep.subr.mxu0 0.0
      %414 = vmatpush1.msra.mxu0 0.0
      %415 = vmatprep.subr.mxu0 0.0
      %416 = vmatpush1.msra.mxu0 0.0
      %417 = vmatprep.subr.mxu0 0.0
      %418 = vmatpush1.msra.mxu0 0.0
      %419 = vmatprep.subr.mxu0 0.0
      %420 = vmatpush1.msra.mxu0 0.0
      %421 = vmatprep.subr.mxu0 0.0
      %422 = vmatpush1.msra.mxu0 0.0
      %423 = vmatprep.subr.mxu0 0.0
      %424 = vmatpush1.msra.mxu0 0.0
      %425 = vmatprep.subr.mxu0 0.0
      %426 = vmatpush1.msra.mxu0 0.0
      %427 = vmatprep.subr.mxu0 0.0
      %428 = vmatpush1.msra.mxu0 0.0
      %429 = vmatprep.subr.mxu0 0.0
      %430 = vmatpush1.msra.mxu0 0.0
      %431 = vmatprep.subr.mxu0 0.0
      %432 = vmatpush1.msra.mxu0 0.0
      %433 = vmatprep.subr.mxu0 0.0
      %434 = vmatpush1.msra.mxu0 0.0
      %435 = vmatprep.subr.mxu0 0.0
      %436 = vmatpush1.msra.mxu0 0.0
      %437 = vmatprep.subr.mxu0 0.0
      %438 = vmatpush1.msra.mxu0 0.0
      %439 = vmatprep.subr.mxu0 0.0
      %440 = vmatpush1.msra.mxu0 0.0
      %441 = vmatprep.subr.mxu0 0.0
      %442 = vmatpush1.msra.mxu0 0.0
      %443 = vmatprep.subr.mxu0 0.0
      %444 = vmatpush1.msra.mxu0 0.0
      %445 = vmatprep.subr.mxu0 0.0
      %446 = vmatpush1.msra.mxu0 0.0
      %447 = vmatprep.subr.mxu0 0.0
      %448 = vmatpush1.msra.mxu0 0.0
      %449 = vmatprep.mubr.f32.mxu0 0.0
      %450 = vmatmul.mubr.f32.gmra.mrb[0].mxu0 %v368
      %v451 = vpop.f32.mrb[0].mxu0
      %v452 = vadd.f32 %v339, %v451
      %v453 = vpop.f32.mrb[0].mxu0
      %454 = vmatprep.mubr.f32.mxu0 0.0
      %455 = vmatmul.mubr.f32.gmra.mrb[0].mxu0 %v371
      %v456 = vpop.f32.mrb[0].mxu0
      %v457 = vadd.f32 %v344, %v456
      %v458 = vpop.f32.mrb[0].mxu0
      %459 = vmatprep.mubr.f32.mxu0 0.0
      %460 = vmatmul.mubr.f32.gmra.mrb[0].mxu0 %v374
      %v461 = vpop.f32.mrb[0].mxu0
      %v462 = vadd.f32 %v349, %v461
      %v463 = vpop.f32.mrb[0].mxu0
      %464 = vmatprep.mubr.f32.mxu0 0.0
      %465 = vmatmul.mubr.f32.gmra.mrb[0].mxu0 %v377
      %v466 = vpop.f32.mrb[0].mxu0
      %v467 = vadd.f32 %v354, %v466
      %v468 = vpop.f32.mrb[0].mxu0
      %469 = vmatprep.mubr.f32.mxu0 0.0
      %470 = vmatmul.mubr.f32.gmra.mrb[0].mxu0 %v380
      %v471 = vpop.f32.mrb[0].mxu0
      %v472 = vadd.f32 %v359, %v471
      %v473 = vpop.f32.mrb[0].mxu0
      %474 = vmatprep.mubr.f32.mxu0 0.0
      %475 = vmatmul.mubr.f32.gmra.mrb[0].mxu0 %v383
      %v476 = vpop.f32.mrb[0].mxu0
      %v477 = vadd.f32 %v364, %v476
      %v478 = vpop.f32.mrb[0].mxu0
      %479 = vdwg.mxu0
      %vm480 = vcmask 130048
      %481 = vst.msk [vmem:[%s197] sm:$0xff] %vm480, %v452
      %482 = vst.msk [vmem:[%s197 + $0x8] sm:$0xff] %vm480, %v457
      %483 = vst.msk [vmem:[%s197 + $0x10] sm:$0xff] %vm480, %v462
      %484 = vst.msk [vmem:[%s197 + $0x18] sm:$0xff] %vm480, %v467
      %485 = vst.msk [vmem:[%s197 + $0x20] sm:$0xff] %vm480, %v472
      %486 = vst.msk [vmem:[%s197 + $0x28] sm:$0xff] %vm480, %v477
      %p487 = scmp.lt.s32.totalorder %s15, 1
      %s488 = scalar_select %p487, %s15, 1
      %s489 = smul.addr %s488, 6
      %s490 = smul.addr %s489, 8
      %s491 = scalar_lea.vmem %s4, %s490
      // Predicated region
      $region37: #{mae_super_resolution_forward.3} parent=35 // pred_check
        %p492 = pneg %p122
      $region38: #{mae_super_resolution_forward.3} parent=35 // pred_check_branch
        %494 = sbr.rel (%p492) target = $region40
      $region39: #{mae_super_resolution_forward.3} parent=35 // pred_region
        _
      $region40: #{mae_super_resolution_forward.3} parent=35 // pred_fallthru
        _
    $region36: #{mae_super_resolution_forward.3} parent=5 // pred_fallthru
      _
    %p495 = scmp.le.s32.totalorder 2, %s10
    // Predicated region
    $region41: #{mae_super_resolution_forward.3} parent=5 // pred_check
      %p496 = pneg %p495
    $region42: #{mae_super_resolution_forward.3} parent=5 // pred_check_branch
      %498 = sbr.rel (%p496) target = $region44
    $region43: #{mae_super_resolution_forward.3} parent=5 // pred_region
      %s499 = ssub.s32 %s10, 2
      // Predicated region
      $region45: #{mae_super_resolution_forward.3} parent=43 // pred_check
        %p500 = pneg %p128
      $region46: #{mae_super_resolution_forward.3} parent=43 // pred_check_branch
        %502 = sbr.rel (%p500) target = $region48
      $region47: #{mae_super_resolution_forward.3} parent=43 // pred_region
        %p503 = scmp.lt.s32.totalorder %s16, 1
        %s504 = scalar_select %p503, %s16, 1
        %s505 = smul.addr %s504, 6
        %s506 = smul.addr %s505, 8
        %s507 = scalar_lea.vmem %s4, %s506
      $region48: #{mae_super_resolution_forward.3} parent=43 // pred_fallthru
        _
    $region44: #{mae_super_resolution_forward.3} parent=5 // pred_fallthru
      _
  $region6: #{mae_super_resolution_forward.3} parent=0 // loop_footer
    %s14 = sadd.s32 1, %s10
  $region7: #{mae_super_resolution_forward.3} parent=0 // loop_footer_branch
    %9 = sbr.rel target = $region3
  $region8: #{mae_super_resolution_forward.3} parent=0 // loop_exit
    _

// kernel: mae_super_resolution_forward.5
$region0: #{mae_super_resolution_forward.5}
  #allocation0 [shape = 'u32[]', space=smem, size = 0x4, offset = 0x4, fixed_abs, tag = 'smem constant byte address 0x4 - core index']
  #allocation1 [shape = 'u32[144,128]{1,0:T(1,128)}', space=vmem, size = 0x12000, scoped, tag = 'internal scratch']
  %s0 = inlined_call_operand.vmem [shape: f32[2,48,16], index: 0, kind: input, shape index: {}]
  %s1 = inlined_call_operand.vmem [shape: f32[16,32], index: 1, kind: input, shape index: {}]
  %s2 = inlined_call_operand.vmem [shape: f32[32,48], index: 2, kind: input, shape index: {}]
  %s3 = inlined_call_operand.vmem [shape: f32[32,1], index: 3, kind: input, shape index: {}]
  %s4 = inlined_call_operand.hbm [shape: f32[2,32,32], index: 4, kind: output, shape index: {}]
  %s5 = sld [smem:[#allocation0]]
  $region49: #{mae_super_resolution_forward.5} parent=0
    _
  %s7 = ssub.s32 1, %s5
  %s8 = scalar_select 0, %s7, %s5
  $region1: #{mae_super_resolution_forward.5} parent=0
    #allocation2 [shape = 'u8[32768]{0}', space=vmem, size = 0x8000, scoped, tag = 'output window, operand 0']
    #allocation3 [shape = 's32[2]{0}', space=sflag, size = 0x8, scoped, tag = 'scoped memory for mae_super_resolution_forward.5']
    %9 = vsyncpa [#allocation3], 0
    %s10 = scalar_lea.sflag [#allocation3], 1
    %11 = vsyncpa %s10, 0
    loop: start=0, step=1, limit=4
    $region2: #{mae_super_resolution_forward.5} parent=1 // loop_pre_header
      _
    $region3: #{mae_super_resolution_forward.5} parent=1 // loop_header
      %s13 = sphi 0, %s17
      %p14 = scmp.ge.s32.totalorder %s13, 4
      %s23 = sphi 0, %s25
      %s26 = sphi 0, %s23
      %s27 = sphi 0, %s26
      %s43 = sphi 0, %s27
      %s47 = sphi 0, %s47
      %s49 = sphi 0, %s47
      %s50 = sphi 0, %s49
      %s64 = sphi 0, %s50
      %s68 = sphi 0, %s68
      %s70 = sphi 0, %s68
      %s71 = sphi 0, %s70
      %s85 = sphi 0, %s71
      %s89 = sphi 0, %s89
      %s91 = sphi 0, %s89
      %s92 = sphi 0, %s91
      %s106 = sphi 0, %s92
      %s112 = sphi 0, %s114
      %s115 = sphi 0, %s112
      %s116 = sphi 0, %s115
      %s132 = sphi 0, %s116
    $region4: #{mae_super_resolution_forward.5} parent=1 // loop_header_branch
      %16 = sbr.rel (%p14) target = $region8
    $region5: #{mae_super_resolution_forward.5} parent=1 // loop_body
      %s18 = ssub.s32 %s13, 1
      %s19 = ssub.s32 %s13, 2
      %s20 = sadd.s32 %s13, 1
      %s21 = ssub.s32 %s13, %s20
      %p22 = scmp.eq.s32.totalorder %s21, 0
      %s24 = sadd.s32 %s23, 1
      %s25 = scalar_select %p22, %s23, %s24
      %p28 = pneg %p22
      %p29 = scmp.eq.s32.totalorder %s13, 1
      %p30 = por %p28, %p29
      %p31 = scmp.ne.s32.totalorder %s23, %s26
      %p32 = scmp.eq.s32.totalorder %s13, 0
      %p33 = por %p31, %p32
      %p34 = scmp.ne.s32.totalorder %s23, %s26
      %p35 = scmp.eq.s32.totalorder %s18, 1
      %p36 = por %p34, %p35
      %p37 = scmp.ne.s32.totalorder %s26, %s27
      %p38 = scmp.eq.s32.totalorder %s18, 0
      %p39 = por %p37, %p38
      %p40 = scmp.ne.s32.totalorder %s26, %s27
      %p41 = scmp.eq.s32.totalorder %s19, 1
      %p42 = por %p40, %p41
      %p44 = scmp.ne.s32.totalorder %s27, %s43
      %p45 = scmp.eq.s32.totalorder %s19, 0
      %p46 = por %p44, %p45
      %s48 = sadd.s32 %s47, 1
      %p51 = scmp.eq.s32.totalorder %s13, 1
      %p52 = scmp.ne.s32.totalorder %s47, %s49
      %p53 = scmp.eq.s32.totalorder %s13, 0
      %p54 = por %p52, %p53
      %p55 = scmp.ne.s32.totalorder %s47, %s49
      %p56 = scmp.eq.s32.totalorder %s18, 1
      %p57 = por %p55, %p56
      %p58 = scmp.ne.s32.totalorder %s49, %s50
      %p59 = scmp.eq.s32.totalorder %s18, 0
      %p60 = por %p58, %p59
      %p61 = scmp.ne.s32.totalorder %s49, %s50
      %p62 = scmp.eq.s32.totalorder %s19, 1
      %p63 = por %p61, %p62
      %p65 = scmp.ne.s32.totalorder %s50, %s64
      %p66 = scmp.eq.s32.totalorder %s19, 0
      %p67 = por %p65, %p66
      %s69 = sadd.s32 %s68, 1
      %p72 = scmp.eq.s32.totalorder %s13, 1
      %p73 = scmp.ne.s32.totalorder %s68, %s70
      %p74 = scmp.eq.s32.totalorder %s13, 0
      %p75 = por %p73, %p74
      %p76 = scmp.ne.s32.totalorder %s68, %s70
      %p77 = scmp.eq.s32.totalorder %s18, 1
      %p78 = por %p76, %p77
      %p79 = scmp.ne.s32.totalorder %s70, %s71
      %p80 = scmp.eq.s32.totalorder %s18, 0
      %p81 = por %p79, %p80
      %p82 = scmp.ne.s32.totalorder %s70, %s71
      %p83 = scmp.eq.s32.totalorder %s19, 1
      %p84 = por %p82, %p83
      %p86 = scmp.ne.s32.totalorder %s71, %s85
      %p87 = scmp.eq.s32.totalorder %s19, 0
      %p88 = por %p86, %p87
      %s90 = sadd.s32 %s89, 1
      %p93 = scmp.eq.s32.totalorder %s13, 1
      %p94 = scmp.ne.s32.totalorder %s89, %s91
      %p95 = scmp.eq.s32.totalorder %s13, 0
      %p96 = por %p94, %p95
      %p97 = scmp.ne.s32.totalorder %s89, %s91
      %p98 = scmp.eq.s32.totalorder %s18, 1
      %p99 = por %p97, %p98
      %p100 = scmp.ne.s32.totalorder %s91, %s92
      %p101 = scmp.eq.s32.totalorder %s18, 0
      %p102 = por %p100, %p101
      %p103 = scmp.ne.s32.totalorder %s91, %s92
      %p104 = scmp.eq.s32.totalorder %s19, 1
      %p105 = por %p103, %p104
      %p107 = scmp.ne.s32.totalorder %s92, %s106
      %p108 = scmp.eq.s32.totalorder %s19, 0
      %p109 = por %p107, %p108
      %s110 = ssub.s32 %s13, %s20
      %p111 = scmp.eq.s32.totalorder %s110, 0
      %s113 = sadd.s32 %s112, 1
      %s114 = scalar_select %p111, %s112, %s113
      %p117 = pneg %p111
      %p118 = scmp.eq.s32.totalorder %s13, 1
      %p119 = por %p117, %p118
      %p120 = scmp.ne.s32.totalorder %s112, %s115
      %p121 = scmp.eq.s32.totalorder %s13, 0
      %p122 = por %p120, %p121
      %p123 = scmp.ne.s32.totalorder %s112, %s115
      %p124 = scmp.eq.s32.totalorder %s18, 1
      %p125 = por %p123, %p124
      %p126 = scmp.ne.s32.totalorder %s115, %s116
      %p127 = scmp.eq.s32.totalorder %s18, 0
      %p128 = por %p126, %p127
      %p129 = scmp.ne.s32.totalorder %s115, %s116
      %p130 = scmp.eq.s32.totalorder %s19, 1
      %p131 = por %p129, %p130
      %p133 = scmp.ne.s32.totalorder %s116, %s132
      %p134 = scmp.eq.s32.totalorder %s19, 0
      %p135 = por %p133, %p134
      %p136 = scmp.le.s32.totalorder 1, %s13
      %p137 = scmp.lt.s32.totalorder %s13, 3
      %p138 = pnand %p136, %p137
      %p139 = pneg %p138
      // Predicated region
      $region9: #{mae_super_resolution_forward.5} parent=5 // pred_check
        _
      $region10: #{mae_super_resolution_forward.5} parent=5 // pred_check_branch
        %141 = sbr.rel (%p138) target = $region12
      $region11: #{mae_super_resolution_forward.5} parent=5 // pred_region
        %s142 = ssub.s32 %s13, 1
        // Predicated region
        $region13: #{mae_super_resolution_forward.5} parent=11 // pred_check
          %p143 = pneg %p60
        $region14: #{mae_super_resolution_forward.5} parent=11 // pred_check_branch
          %145 = sbr.rel (%p143) target = $region16
        $region15: #{mae_super_resolution_forward.5} parent=11 // pred_region
          _
        $region16: #{mae_super_resolution_forward.5} parent=11 // pred_fallthru
          _
        // Predicated region
        $region17: #{mae_super_resolution_forward.5} parent=11 // pred_check
          %p146 = pneg %p81
        $region18: #{mae_super_resolution_forward.5} parent=11 // pred_check_branch
          %148 = sbr.rel (%p146) target = $region20
        $region19: #{mae_super_resolution_forward.5} parent=11 // pred_region
          _
        $region20: #{mae_super_resolution_forward.5} parent=11 // pred_fallthru
          _
        // Predicated region
        $region21: #{mae_super_resolution_forward.5} parent=11 // pred_check
          %p149 = pneg %p102
        $region22: #{mae_super_resolution_forward.5} parent=11 // pred_check_branch
          %151 = sbr.rel (%p149) target = $region24
        $region23: #{mae_super_resolution_forward.5} parent=11 // pred_region
          _
        $region24: #{mae_super_resolution_forward.5} parent=11 // pred_fallthru
          _
      $region12: #{mae_super_resolution_forward.5} parent=5 // pred_fallthru
        _
      %p152 = scmp.lt.s32.totalorder %s13, 2
      // Predicated region
      $region25: #{mae_super_resolution_forward.5} parent=5 // pred_check
        %p153 = pneg %p152
      $region26: #{mae_super_resolution_forward.5} parent=5 // pred_check_branch
        %155 = sbr.rel (%p153) target = $region28
      $region27: #{mae_super_resolution_forward.5} parent=5 // pred_region
        // Predicated region
        $region29: #{mae_super_resolution_forward.5} parent=27 // pred_check
          %p156 = pneg %p33
        $region30: #{mae_super_resolution_forward.5} parent=27 // pred_check_branch
          %158 = sbr.rel (%p156) target = $region32
        $region31: #{mae_super_resolution_forward.5} parent=27 // pred_region
          %p159 = scmp.lt.s32.totalorder %s13, 1
          %s160 = scalar_select %p159, %s13, 1
          %s161 = smul.addr %s160, 6
          %s162 = smul.addr %s161, 8
          %s163 = scalar_lea.vmem %s0, %s162
        $region32: #{mae_super_resolution_forward.5} parent=27 // pred_fallthru
          _
      $region28: #{mae_super_resolution_forward.5} parent=5 // pred_fallthru
        _
      %p164 = scmp.le.s32.totalorder 1, %s13
      %p165 = scmp.lt.s32.totalorder %s13, 3
      %p166 = pnand %p164, %p165
      %p167 = pneg %p166
      // Predicated region
      $region33: #{mae_super_resolution_forward.5} parent=5 // pred_check
        _
      $region34: #{mae_super_resolution_forward.5} parent=5 // pred_check_branch
        %169 = sbr.rel (%p166) target = $region36
      $region35: #{mae_super_resolution_forward.5} parent=5 // pred_region
        %s170 = ssub.s32 %s13, 1
        %p171 = scmp.lt.s32.totalorder %s18, 1
        %s172 = scalar_select %p171, %s18, 1
        %s173 = smul.addr %s172, 6
        %s174 = smul.addr %s173, 8
        %s175 = scalar_lea.vmem %s0, %s174
        %p176 = pneg %p39
        %p177 = pneg %p36
        %p178 = pneg %p60
        %p179 = pneg %p57
        %p180 = pneg %p81
        %p181 = pneg %p78
        %p182 = pneg %p102
        %p183 = pneg %p99
        %p184 = pneg %p128
        %p185 = pneg %p125
        %s186 = sand.u32 %s115, 1
        %s187 = scalar_lea.sflag [#allocation3], %s186
        %s188 = sand.u32 %s115, 1
        %s189 = smul.addr %s188, 32
        %s190 = scalar_lea.vmem [#allocation2], %s189
        %p191 = scmp.lt.s32.totalorder %s18, 1
        %s192 = scalar_select %p191, %s18, 1
        %s193 = smul.addr %s192, 6
        %s194 = smul.addr %s193, 8
        %s195 = scalar_lea.vmem %s0, %s194
        %v196 = vld [vmem:[%s195] sm:$0xff]
        %v197 = vld [vmem:[%s195 + $0x8] sm:$0xff]
        %v198 = vld [vmem:[%s195 + $0x10] sm:$0xff]
        %v199 = vld [vmem:[%s195 + $0x18] sm:$0xff]
        %v200 = vld [vmem:[%s195 + $0x20] sm:$0xff]
        %v201 = vld [vmem:[%s195 + $0x28] sm:$0xff]
        %v202 = vld [vmem:[%s1] sm:$0xff]
        %v203 = vld [vmem:[%s1 + $0x8] sm:$0xff]
        %vm204 = vcmask 130048
        %v206 = vsel %vm204, %v196, 0
        %v209 = vsel %vm204, %v197, 0
        %v212 = vsel %vm204, %v198, 0
        %v215 = vsel %vm204, %v199, 0
        %v218 = vsel %vm204, %v200, 0
        %v221 = vsel %vm204, %v201, 0
        %223 = vmatprep.subr.mxu0 0.0
        %224 = vmatpush1.msra.mxu0 %v202
        %225 = vmatprep.subr.mxu0 0.0
        %226 = vmatpush1.msra.mxu0 %v203
        %227 = vmatprep.subr.mxu0 0.0
        %228 = vmatpush1.msra.mxu0 0.0
        %229 = vmatprep.subr.mxu0 0.0
        %230 = vmatpush1.msra.mxu0 0.0
        %231 = vmatprep.subr.mxu0 0.0
        %232 = vmatpush1.msra.mxu0 0.0
        %233 = vmatprep.subr.mxu0 0.0
        %234 = vmatpush1.msra.mxu0 0.0
        %235 = vmatprep.subr.mxu0 0.0
        %236 = vmatpush1.msra.mxu0 0.0
        %237 = vmatprep.subr.mxu0 0.0
        %238 = vmatpush1.msra.mxu0 0.0
        %239 = vmatprep.subr.mxu0 0.0
        %240 = vmatpush1.msra.mxu0 0.0
        %241 = vmatprep.subr.mxu0 0.0
        %242 = vmatpush1.msra.mxu0 0.0
        %243 = vmatprep.subr.mxu0 0.0
        %244 = vmatpush1.msra.mxu0 0.0
        %245 = vmatprep.subr.mxu0 0.0
        %246 = vmatpush1.msra.mxu0 0.0
        %247 = vmatprep.subr.mxu0 0.0
        %248 = vmatpush1.msra.mxu0 0.0
        %249 = vmatprep.subr.mxu0 0.0
        %250 = vmatpush1.msra.mxu0 0.0
        %251 = vmatprep.subr.mxu0 0.0
        %252 = vmatpush1.msra.mxu0 0.0
        %253 = vmatprep.subr.mxu0 0.0
        %254 = vmatpush1.msra.mxu0 0.0
        %255 = vmatprep.subr.mxu0 0.0
        %256 = vmatpush1.msra.mxu0 0.0
        %257 = vmatprep.subr.mxu0 0.0
        %258 = vmatpush1.msra.mxu0 0.0
        %259 = vmatprep.subr.mxu0 0.0
        %260 = vmatpush1.msra.mxu0 0.0
        %261 = vmatprep.subr.mxu0 0.0
        %262 = vmatpush1.msra.mxu0 0.0
        %263 = vmatprep.subr.mxu0 0.0
        %264 = vmatpush1.msra.mxu0 0.0
        %265 = vmatprep.subr.mxu0 0.0
        %266 = vmatpush1.msra.mxu0 0.0
        %267 = vmatprep.subr.mxu0 0.0
        %268 = vmatpush1.msra.mxu0 0.0
        %269 = vmatprep.subr.mxu0 0.0
        %270 = vmatpush1.msra.mxu0 0.0
        %271 = vmatprep.subr.mxu0 0.0
        %272 = vmatpush1.msra.mxu0 0.0
        %273 = vmatprep.subr.mxu0 0.0
        %274 = vmatpush1.msra.mxu0 0.0
        %275 = vmatprep.subr.mxu0 0.0
        %276 = vmatpush1.msra.mxu0 0.0
        %277 = vmatprep.subr.mxu0 0.0
        %278 = vmatpush1.msra.mxu0 0.0
        %279 = vmatprep.subr.mxu0 0.0
        %280 = vmatpush1.msra.mxu0 0.0
        %281 = vmatprep.subr.mxu0 0.0
        %282 = vmatpush1.msra.mxu0 0.0
        %283 = vmatprep.subr.mxu0 0.0
        %284 = vmatpush1.msra.mxu0 0.0
        %285 = vmatprep.subr.mxu0 0.0
        %286 = vmatpush1.msra.mxu0 0.0
        %287 = vmatprep.mubr.f32.mxu0 0.0
        %288 = vmatmul.mubr.f32.gmra.mrb[0].mxu0 %v206
        %v289 = vpop.f32.mrb[0].mxu0
        %v290 = vadd.f32 0.0, %v289
        %v291 = vpop.f32.mrb[0].mxu0
        %292 = vmatprep.mubr.f32.mxu0 0.0
        %293 = vmatmul.mubr.f32.gmra.mrb[0].mxu0 %v209
        %v294 = vpop.f32.mrb[0].mxu0
        %v295 = vadd.f32 0.0, %v294
        %v296 = vpop.f32.mrb[0].mxu0
        %297 = vmatprep.mubr.f32.mxu0 0.0
        %298 = vmatmul.mubr.f32.gmra.mrb[0].mxu0 %v212
        %v299 = vpop.f32.mrb[0].mxu0
        %v300 = vadd.f32 0.0, %v299
        %v301 = vpop.f32.mrb[0].mxu0
        %302 = vmatprep.mubr.f32.mxu0 0.0
        %303 = vmatmul.mubr.f32.gmra.mrb[0].mxu0 %v215
        %v304 = vpop.f32.mrb[0].mxu0
        %v305 = vadd.f32 0.0, %v304
        %v306 = vpop.f32.mrb[0].mxu0
        %307 = vmatprep.mubr.f32.mxu0 0.0
        %308 = vmatmul.mubr.f32.gmra.mrb[0].mxu0 %v218
        %v309 = vpop.f32.mrb[0].mxu0
        %v310 = vadd.f32 0.0, %v309
        %v311 = vpop.f32.mrb[0].mxu0
        %312 = vmatprep.mubr.f32.mxu0 0.0
        %313 = vmatmul.mubr.f32.gmra.mrb[0].mxu0 %v221
        %v314 = vpop.f32.mrb[0].mxu0
        %v315 = vadd.f32 0.0, %v314
        %v316 = vpop.f32.mrb[0].mxu0
        %317 = vdwg.mxu0
        %v318 = vld [vmem:[%s2] sm:$0xff]
        %v319 = vld [vmem:[%s2 + $0x8] sm:$0xff]
        %v320 = vld [vmem:[%s2 + $0x10] sm:$0xff]
        %v321 = vld [vmem:[%s2 + $0x18] sm:$0xff]
        %v322 = vld [vmem:[%s3] sm:$0xff]
        %v323 = vld [vmem:[%s3 + $0x8] sm:$0xff]
        %v324 = vld [vmem:[%s3 + $0x10] sm:$0xff]
        %v325 = vld [vmem:[%s3 + $0x18] sm:$0xff]
        %327 = vset.pattern.permute.xlu0 0
        %328 = vperm.xlu0 %327, %v322
        %v329 = vpop.permute.xlu0 %328
        %332 = vset.pattern.permute.xlu0 0
        %333 = vperm.xlu0 %332, %v323
        %v334 = vpop.permute.xlu0 %333
        %337 = vset.pattern.permute.xlu0 0
        %338 = vperm.xlu0 %337, %v324
        %v339 = vpop.permute.xlu0 %338
        %342 = vset.pattern.permute.xlu0 0
        %343 = vperm.xlu0 %342, %v325
        %v344 = vpop.permute.xlu0 %343
        %vm346 = vcmask 392192
        %v348 = vsel %vm346, %v318, 0
        %v351 = vsel %vm346, %v319, 0
        %v354 = vsel %vm346, %v320, 0
        %v357 = vsel %vm346, %v321, 0
        %359 = vmatprep.subr.mxu0 0.0
        %360 = vmatpush1.msra.mxu0 %v290
        %361 = vmatprep.subr.mxu0 0.0
        %362 = vmatpush1.msra.mxu0 %v295
        %363 = vmatprep.subr.mxu0 0.0
        %364 = vmatpush1.msra.mxu0 %v300
        %365 = vmatprep.subr.mxu0 0.0
        %366 = vmatpush1.msra.mxu0 %v305
        %367 = vmatprep.subr.mxu0 0.0
        %368 = vmatpush1.msra.mxu0 %v310
        %369 = vmatprep.subr.mxu0 0.0
        %370 = vmatpush1.msra.mxu0 %v315
        %371 = vmatprep.subr.mxu0 0.0
        %372 = vmatpush1.msra.mxu0 0.0
        %373 = vmatprep.subr.mxu0 0.0
        %374 = vmatpush1.msra.mxu0 0.0
        %375 = vmatprep.subr.mxu0 0.0
        %376 = vmatpush1.msra.mxu0 0.0
        %377 = vmatprep.subr.mxu0 0.0
        %378 = vmatpush1.msra.mxu0 0.0
        %379 = vmatprep.subr.mxu0 0.0
        %380 = vmatpush1.msra.mxu0 0.0
        %381 = vmatprep.subr.mxu0 0.0
        %382 = vmatpush1.msra.mxu0 0.0
        %383 = vmatprep.subr.mxu0 0.0
        %384 = vmatpush1.msra.mxu0 0.0
        %385 = vmatprep.subr.mxu0 0.0
        %386 = vmatpush1.msra.mxu0 0.0
        %387 = vmatprep.subr.mxu0 0.0
        %388 = vmatpush1.msra.mxu0 0.0
        %389 = vmatprep.subr.mxu0 0.0
        %390 = vmatpush1.msra.mxu0 0.0
        %391 = vmatprep.subr.mxu0 0.0
        %392 = vmatpush1.msra.mxu0 0.0
        %393 = vmatprep.subr.mxu0 0.0
        %394 = vmatpush1.msra.mxu0 0.0
        %395 = vmatprep.subr.mxu0 0.0
        %396 = vmatpush1.msra.mxu0 0.0
        %397 = vmatprep.subr.mxu0 0.0
        %398 = vmatpush1.msra.mxu0 0.0
        %399 = vmatprep.subr.mxu0 0.0
        %400 = vmatpush1.msra.mxu0 0.0
        %401 = vmatprep.subr.mxu0 0.0
        %402 = vmatpush1.msra.mxu0 0.0
        %403 = vmatprep.subr.mxu0 0.0
        %404 = vmatpush1.msra.mxu0 0.0
        %405 = vmatprep.subr.mxu0 0.0
        %406 = vmatpush1.msra.mxu0 0.0
        %407 = vmatprep.subr.mxu0 0.0
        %408 = vmatpush1.msra.mxu0 0.0
        %409 = vmatprep.subr.mxu0 0.0
        %410 = vmatpush1.msra.mxu0 0.0
        %411 = vmatprep.subr.mxu0 0.0
        %412 = vmatpush1.msra.mxu0 0.0
        %413 = vmatprep.subr.mxu0 0.0
        %414 = vmatpush1.msra.mxu0 0.0
        %415 = vmatprep.subr.mxu0 0.0
        %416 = vmatpush1.msra.mxu0 0.0
        %417 = vmatprep.subr.mxu0 0.0
        %418 = vmatpush1.msra.mxu0 0.0
        %419 = vmatprep.subr.mxu0 0.0
        %420 = vmatpush1.msra.mxu0 0.0
        %421 = vmatprep.subr.mxu0 0.0
        %422 = vmatpush1.msra.mxu0 0.0
        %423 = vmatprep.mubr.f32.mxu0 0.0
        %424 = vmatmul.mubr.f32.gmra.mrb[0].mxu0 %v348
        %v425 = vpop.f32.mrb[0].mxu0
        %v426 = vadd.f32 %v329, %v425
        %v427 = vpop.f32.mrb[0].mxu0
        %428 = vmatprep.mubr.f32.mxu0 0.0
        %429 = vmatmul.mubr.f32.gmra.mrb[0].mxu0 %v351
        %v430 = vpop.f32.mrb[0].mxu0
        %v431 = vadd.f32 %v334, %v430
        %v432 = vpop.f32.mrb[0].mxu0
        %433 = vmatprep.mubr.f32.mxu0 0.0
        %434 = vmatmul.mubr.f32.gmra.mrb[0].mxu0 %v354
        %v435 = vpop.f32.mrb[0].mxu0
        %v436 = vadd.f32 %v339, %v435
        %v437 = vpop.f32.mrb[0].mxu0
        %438 = vmatprep.mubr.f32.mxu0 0.0
        %439 = vmatmul.mubr.f32.gmra.mrb[0].mxu0 %v357
        %v440 = vpop.f32.mrb[0].mxu0
        %v441 = vadd.f32 %v344, %v440
        %v442 = vpop.f32.mrb[0].mxu0
        %443 = vdwg.mxu0
        %vm444 = vcmask 261120
        %445 = vst.msk [vmem:[%s190] sm:$0xff] %vm444, %v426
        %446 = vst.msk [vmem:[%s190 + $0x8] sm:$0xff] %vm444, %v431
        %447 = vst.msk [vmem:[%s190 + $0x10] sm:$0xff] %vm444, %v436
        %448 = vst.msk [vmem:[%s190 + $0x18] sm:$0xff] %vm444, %v441
        %s449 = sand.u32 %s115, 1
        %s450 = scalar_lea.sflag [#allocation3], %s449
        %s451 = sand.u32 %s115, 1
        %s452 = smul.addr %s451, 32
        %s453 = scalar_lea.vmem [#allocation2], %s452
        // Predicated region
        $region37: #{mae_super_resolution_forward.5} parent=35 // pred_check
          %p454 = pneg %p125
        $region38: #{mae_super_resolution_forward.5} parent=35 // pred_check_branch
          %456 = sbr.rel (%p454) target = $region40
        $region39: #{mae_super_resolution_forward.5} parent=35 // pred_region
          %s458 = ssub.s32 512, 512
          %459 = vsyncadd %s450, %s458
          %s460 = smul.addr %s18, 4
          %s461 = smul.addr %s460, 128
          %s462 = scalar_lea.hbm %s4, %s461
          %s463 = sshll.u32 %s453, 4
          %s464 = int_to_ptr.vmem [resolvable:$true] %s463
          %469 = dma.vmem_to_hbm [thread:$0]  %s464, 512, %s462, %s450, 128, 128, 8
        $region40: #{mae_super_resolution_forward.5} parent=35 // pred_fallthru
          _
      $region36: #{mae_super_resolution_forward.5} parent=5 // pred_fallthru
        _
      %p470 = scmp.le.s32.totalorder 2, %s13
      // Predicated region
      $region41: #{mae_super_resolution_forward.5} parent=5 // pred_check
        %p471 = pneg %p470
      $region42: #{mae_super_resolution_forward.5} parent=5 // pred_check_branch
        %473 = sbr.rel (%p471) target = $region44
      $region43: #{mae_super_resolution_forward.5} parent=5 // pred_region
        %s474 = ssub.s32 %s13, 2
        // Predicated region
        $region45: #{mae_super_resolution_forward.5} parent=43 // pred_check
          %p475 = pneg %p131
        $region46: #{mae_super_resolution_forward.5} parent=43 // pred_check_branch
          %477 = sbr.rel (%p475) target = $region48
        $region47: #{mae_super_resolution_forward.5} parent=43 // pred_region
          %s478 = sand.u32 %s116, 1
          %s479 = scalar_lea.sflag [#allocation3], %s478
          %s480 = sand.u32 %s116, 1
          %s481 = smul.addr %s480, 32
          %s482 = scalar_lea.vmem [#allocation2], %s481
          %483 = dma.done %s479, 512
        $region48: #{mae_super_resolution_forward.5} parent=43 // pred_fallthru
          _
      $region44: #{mae_super_resolution_forward.5} parent=5 // pred_fallthru
        _
    $region6: #{mae_super_resolution_forward.5} parent=1 // loop_footer
      %s17 = sadd.s32 1, %s13
    $region7: #{mae_super_resolution_forward.5} parent=1 // loop_footer_branch
      %12 = sbr.rel target = $region3
    $region8: #{mae_super_resolution_forward.5} parent=1 // loop_exit
      _
    %484 = vsyncpa [#allocation3], 1
    %s485 = scalar_lea.sflag [#allocation3], 1
    %486 = vsyncpa %s485, 1

// kernel: mae_super_resolution_forward.4
$region0: #{mae_super_resolution_forward.4}
  #allocation0 [shape = 'u32[]', space=smem, size = 0x4, offset = 0x4, fixed_abs, tag = 'smem constant byte address 0x4 - core index']
  #allocation1 [shape = 'u32[144,128]{1,0:T(1,128)}', space=vmem, size = 0x12000, scoped, tag = 'internal scratch']
  %s0 = inlined_call_operand.smem [shape: u32[36], index: -1, kind: input, shape index: {}]
  %s1 = sld [smem:[%s0]]
  %s2 = scalar_lea.smem %s0, 1
  %s3 = sld [smem:[%s2]]
  %s4 = scalar_lea.smem %s0, 2
  %s5 = sld [smem:[%s4]]
  %s6 = scalar_lea.smem %s0, 3
  %s7 = sld [smem:[%s6]]
  %s8 = scalar_lea.smem %s0, 4
  %s9 = sld [smem:[%s8]]
  %s10 = scalar_lea.smem %s0, 5
  %s11 = sld [smem:[%s10]]
  %s12 = scalar_lea.smem %s0, 6
  %s13 = sld [smem:[%s12]]
  %s14 = scalar_lea.smem %s0, 7
  %s15 = sld [smem:[%s14]]
  %s16 = scalar_lea.smem %s0, 8
  %s17 = sld [smem:[%s16]]
  %s18 = scalar_lea.smem %s0, 9
  %s19 = sld [smem:[%s18]]
  %s20 = scalar_lea.smem %s0, 10
  %s21 = sld [smem:[%s20]]
  %s22 = scalar_lea.smem %s0, 11
  %s23 = sld [smem:[%s22]]
  %s24 = scalar_lea.smem %s0, 12
  %s25 = sld [smem:[%s24]]
  %s26 = scalar_lea.smem %s0, 13
  %s27 = sld [smem:[%s26]]
  %s28 = scalar_lea.smem %s0, 14
  %s29 = sld [smem:[%s28]]
  %s30 = scalar_lea.smem %s0, 15
  %s31 = sld [smem:[%s30]]
  %s32 = scalar_lea.smem %s0, 16
  %s33 = sld [smem:[%s32]]
  %s34 = scalar_lea.smem %s0, 17
  %s35 = sld [smem:[%s34]]
  %s36 = scalar_lea.smem %s0, 18
  %s37 = sld [smem:[%s36]]
  %s38 = scalar_lea.smem %s0, 19
  %s39 = sld [smem:[%s38]]
  %s40 = scalar_lea.smem %s0, 20
  %s41 = sld [smem:[%s40]]
  %s42 = scalar_lea.smem %s0, 21
  %s43 = sld [smem:[%s42]]
  %s44 = scalar_lea.smem %s0, 22
  %s45 = sld [smem:[%s44]]
  %s46 = scalar_lea.smem %s0, 23
  %s47 = sld [smem:[%s46]]
  %s48 = scalar_lea.smem %s0, 24
  %s49 = sld [smem:[%s48]]
  %s50 = scalar_lea.smem %s0, 25
  %s51 = sld [smem:[%s50]]
  %s52 = scalar_lea.smem %s0, 26
  %s53 = sld [smem:[%s52]]
  %s54 = scalar_lea.smem %s0, 27
  %s55 = sld [smem:[%s54]]
  %s56 = scalar_lea.smem %s0, 28
  %s57 = sld [smem:[%s56]]
  %s58 = scalar_lea.smem %s0, 29
  %s59 = sld [smem:[%s58]]
  %s60 = scalar_lea.smem %s0, 30
  %s61 = sld [smem:[%s60]]
  %s62 = scalar_lea.smem %s0, 31
  %s63 = sld [smem:[%s62]]
  %s64 = scalar_lea.smem %s0, 32
  %s65 = sld [smem:[%s64]]
  %s66 = scalar_lea.smem %s0, 33
  %s67 = sld [smem:[%s66]]
  %s68 = scalar_lea.smem %s0, 34
  %s69 = sld [smem:[%s68]]
  %s70 = scalar_lea.smem %s0, 35
  %s71 = sld [smem:[%s70]]
  %s72 = sld [smem:[#allocation0]]
  $region173: #{mae_super_resolution_forward.4} parent=0
    _
  %s74 = ssub.s32 1, %s72
  %s75 = scalar_select 0, %s74, %s72
  loop: start=0, step=1, limit=4
  $region2: #{mae_super_resolution_forward.4} parent=0 // loop_pre_header
    _
  $region3: #{mae_super_resolution_forward.4} parent=0 // loop_header
    %s77 = sphi 0, %s81
    %p78 = scmp.ge.s32.totalorder %s77, 4
    %s87 = sphi 0, %s89
    %s90 = sphi 0, %s87
    %s91 = sphi 0, %s90
    %s107 = sphi 0, %s91
    %s111 = sphi 0, %s111
    %s113 = sphi 0, %s111
    %s114 = sphi 0, %s113
    %s128 = sphi 0, %s114
    %s132 = sphi 0, %s132
    %s134 = sphi 0, %s132
    %s135 = sphi 0, %s134
    %s149 = sphi 0, %s135
    %s153 = sphi 0, %s153
    %s155 = sphi 0, %s153
    %s156 = sphi 0, %s155
    %s170 = sphi 0, %s156
    %s174 = sphi 0, %s174
    %s176 = sphi 0, %s174
    %s177 = sphi 0, %s176
    %s191 = sphi 0, %s177
    %s195 = sphi 0, %s195
    %s197 = sphi 0, %s195
    %s198 = sphi 0, %s197
    %s212 = sphi 0, %s198
    %s216 = sphi 0, %s216
    %s218 = sphi 0, %s216
    %s219 = sphi 0, %s218
    %s233 = sphi 0, %s219
    %s237 = sphi 0, %s237
    %s239 = sphi 0, %s237
    %s240 = sphi 0, %s239
    %s254 = sphi 0, %s240
    %s258 = sphi 0, %s258
    %s260 = sphi 0, %s258
    %s261 = sphi 0, %s260
    %s275 = sphi 0, %s261
    %s279 = sphi 0, %s279
    %s281 = sphi 0, %s279
    %s282 = sphi 0, %s281
    %s296 = sphi 0, %s282
    %s300 = sphi 0, %s300
    %s302 = sphi 0, %s300
    %s303 = sphi 0, %s302
    %s317 = sphi 0, %s303
    %s321 = sphi 0, %s321
    %s323 = sphi 0, %s321
    %s324 = sphi 0, %s323
    %s338 = sphi 0, %s324
    %s342 = sphi 0, %s342
    %s344 = sphi 0, %s342
    %s345 = sphi 0, %s344
    %s359 = sphi 0, %s345
    %s363 = sphi 0, %s363
    %s365 = sphi 0, %s363
    %s366 = sphi 0, %s365
    %s380 = sphi 0, %s366
    %s384 = sphi 0, %s384
    %s386 = sphi 0, %s384
    %s387 = sphi 0, %s386
    %s401 = sphi 0, %s387
    %s405 = sphi 0, %s405
    %s407 = sphi 0, %s405
    %s408 = sphi 0, %s407
    %s422 = sphi 0, %s408
    %s426 = sphi 0, %s426
    %s428 = sphi 0, %s426
    %s429 = sphi 0, %s428
    %s443 = sphi 0, %s429
    %s447 = sphi 0, %s447
    %s449 = sphi 0, %s447
    %s450 = sphi 0, %s449
    %s464 = sphi 0, %s450
    %s468 = sphi 0, %s468
    %s470 = sphi 0, %s468
    %s471 = sphi 0, %s470
    %s485 = sphi 0, %s471
    %s489 = sphi 0, %s489
    %s491 = sphi 0, %s489
    %s492 = sphi 0, %s491
    %s506 = sphi 0, %s492
    %s510 = sphi 0, %s510
    %s512 = sphi 0, %s510
    %s513 = sphi 0, %s512
    %s527 = sphi 0, %s513
    %s531 = sphi 0, %s531
    %s533 = sphi 0, %s531
    %s534 = sphi 0, %s533
    %s548 = sphi 0, %s534
    %s552 = sphi 0, %s552
    %s554 = sphi 0, %s552
    %s555 = sphi 0, %s554
    %s569 = sphi 0, %s555
    %s573 = sphi 0, %s573
    %s575 = sphi 0, %s573
    %s576 = sphi 0, %s575
    %s590 = sphi 0, %s576
    %s594 = sphi 0, %s594
    %s596 = sphi 0, %s594
    %s597 = sphi 0, %s596
    %s611 = sphi 0, %s597
    %s615 = sphi 0, %s615
    %s617 = sphi 0, %s615
    %s618 = sphi 0, %s617
    %s632 = sphi 0, %s618
    %s636 = sphi 0, %s636
    %s638 = sphi 0, %s636
    %s639 = sphi 0, %s638
    %s653 = sphi 0, %s639
    %s657 = sphi 0, %s657
    %s659 = sphi 0, %s657
    %s660 = sphi 0, %s659
    %s674 = sphi 0, %s660
    %s678 = sphi 0, %s678
    %s680 = sphi 0, %s678
    %s681 = sphi 0, %s680
    %s695 = sphi 0, %s681
    %s699 = sphi 0, %s699
    %s701 = sphi 0, %s699
    %s702 = sphi 0, %s701
    %s716 = sphi 0, %s702
    %s720 = sphi 0, %s720
    %s722 = sphi 0, %s720
    %s723 = sphi 0, %s722
    %s737 = sphi 0, %s723
    %s741 = sphi 0, %s741
    %s743 = sphi 0, %s741
    %s744 = sphi 0, %s743
    %s758 = sphi 0, %s744
    %s762 = sphi 0, %s762
    %s764 = sphi 0, %s762
    %s765 = sphi 0, %s764
    %s779 = sphi 0, %s765
    %s783 = sphi 0, %s783
    %s785 = sphi 0, %s783
    %s786 = sphi 0, %s785
    %s800 = sphi 0, %s786
    %s804 = sphi 0, %s804
    %s806 = sphi 0, %s804
    %s807 = sphi 0, %s806
    %s821 = sphi 0, %s807
    %s827 = sphi 0, %s829
    %s830 = sphi 0, %s827
    %s831 = sphi 0, %s830
    %s847 = sphi 0, %s831
  $region4: #{mae_super_resolution_forward.4} parent=0 // loop_header_branch
    %80 = sbr.rel (%p78) target = $region8
  $region5: #{mae_super_resolution_forward.4} parent=0 // loop_body
    %s82 = ssub.s32 %s77, 1
    %s83 = ssub.s32 %s77, 2
    %s84 = sadd.s32 %s77, 1
    %s85 = ssub.s32 %s77, %s84
    %p86 = scmp.eq.s32.totalorder %s85, 0
    %s88 = sadd.s32 %s87, 1
    %s89 = scalar_select %p86, %s87, %s88
    %p92 = pneg %p86
    %p93 = scmp.eq.s32.totalorder %s77, 1
    %p94 = por %p92, %p93
    %p95 = scmp.ne.s32.totalorder %s87, %s90
    %p96 = scmp.eq.s32.totalorder %s77, 0
    %p97 = por %p95, %p96
    %p98 = scmp.ne.s32.totalorder %s87, %s90
    %p99 = scmp.eq.s32.totalorder %s82, 1
    %p100 = por %p98, %p99
    %p101 = scmp.ne.s32.totalorder %s90, %s91
    %p102 = scmp.eq.s32.totalorder %s82, 0
    %p103 = por %p101, %p102
    %p104 = scmp.ne.s32.totalorder %s90, %s91
    %p105 = scmp.eq.s32.totalorder %s83, 1
    %p106 = por %p104, %p105
    %p108 = scmp.ne.s32.totalorder %s91, %s107
    %p109 = scmp.eq.s32.totalorder %s83, 0
    %p110 = por %p108, %p109
    %s112 = sadd.s32 %s111, 1
    %p115 = scmp.eq.s32.totalorder %s77, 1
    %p116 = scmp.ne.s32.totalorder %s111, %s113
    %p117 = scmp.eq.s32.totalorder %s77, 0
    %p118 = por %p116, %p117
    %p119 = scmp.ne.s32.totalorder %s111, %s113
    %p120 = scmp.eq.s32.totalorder %s82, 1
    %p121 = por %p119, %p120
    %p122 = scmp.ne.s32.totalorder %s113, %s114
    %p123 = scmp.eq.s32.totalorder %s82, 0
    %p124 = por %p122, %p123
    %p125 = scmp.ne.s32.totalorder %s113, %s114
    %p126 = scmp.eq.s32.totalorder %s83, 1
    %p127 = por %p125, %p126
    %p129 = scmp.ne.s32.totalorder %s114, %s128
    %p130 = scmp.eq.s32.totalorder %s83, 0
    %p131 = por %p129, %p130
    %s133 = sadd.s32 %s132, 1
    %p136 = scmp.eq.s32.totalorder %s77, 1
    %p137 = scmp.ne.s32.totalorder %s132, %s134
    %p138 = scmp.eq.s32.totalorder %s77, 0
    %p139 = por %p137, %p138
    %p140 = scmp.ne.s32.totalorder %s132, %s134
    %p141 = scmp.eq.s32.totalorder %s82, 1
    %p142 = por %p140, %p141
    %p143 = scmp.ne.s32.totalorder %s134, %s135
    %p144 = scmp.eq.s32.totalorder %s82, 0
    %p145 = por %p143, %p144
    %p146 = scmp.ne.s32.totalorder %s134, %s135
    %p147 = scmp.eq.s32.totalorder %s83, 1
    %p148 = por %p146, %p147
    %p150 = scmp.ne.s32.totalorder %s135, %s149
    %p151 = scmp.eq.s32.totalorder %s83, 0
    %p152 = por %p150, %p151
    %s154 = sadd.s32 %s153, 1
    %p157 = scmp.eq.s32.totalorder %s77, 1
    %p158 = scmp.ne.s32.totalorder %s153, %s155
    %p159 = scmp.eq.s32.totalorder %s77, 0
    %p160 = por %p158, %p159
    %p161 = scmp.ne.s32.totalorder %s153, %s155
    %p162 = scmp.eq.s32.totalorder %s82, 1
    %p163 = por %p161, %p162
    %p164 = scmp.ne.s32.totalorder %s155, %s156
    %p165 = scmp.eq.s32.totalorder %s82, 0
    %p166 = por %p164, %p165
    %p167 = scmp.ne.s32.totalorder %s155, %s156
    %p168 = scmp.eq.s32.totalorder %s83, 1
    %p169 = por %p167, %p168
    %p171 = scmp.ne.s32.totalorder %s156, %s170
    %p172 = scmp.eq.s32.totalorder %s83, 0
    %p173 = por %p171, %p172
    %s175 = sadd.s32 %s174, 1
    %p178 = scmp.eq.s32.totalorder %s77, 1
    %p179 = scmp.ne.s32.totalorder %s174, %s176
    %p180 = scmp.eq.s32.totalorder %s77, 0
    %p181 = por %p179, %p180
    %p182 = scmp.ne.s32.totalorder %s174, %s176
    %p183 = scmp.eq.s32.totalorder %s82, 1
    %p184 = por %p182, %p183
    %p185 = scmp.ne.s32.totalorder %s176, %s177
    %p186 = scmp.eq.s32.totalorder %s82, 0
    %p187 = por %p185, %p186
    %p188 = scmp.ne.s32.totalorder %s176, %s177
    %p189 = scmp.eq.s32.totalorder %s83, 1
    %p190 = por %p188, %p189
    %p192 = scmp.ne.s32.totalorder %s177, %s191
    %p193 = scmp.eq.s32.totalorder %s83, 0
    %p194 = por %p192, %p193
    %s196 = sadd.s32 %s195, 1
    %p199 = scmp.eq.s32.totalorder %s77, 1
    %p200 = scmp.ne.s32.totalorder %s195, %s197
    %p201 = scmp.eq.s32.totalorder %s77, 0
    %p202 = por %p200, %p201
    %p203 = scmp.ne.s32.totalorder %s195, %s197
    %p204 = scmp.eq.s32.totalorder %s82, 1
    %p205 = por %p203, %p204
    %p206 = scmp.ne.s32.totalorder %s197, %s198
    %p207 = scmp.eq.s32.totalorder %s82, 0
    %p208 = por %p206, %p207
    %p209 = scmp.ne.s32.totalorder %s197, %s198
    %p210 = scmp.eq.s32.totalorder %s83, 1
    %p211 = por %p209, %p210
    %p213 = scmp.ne.s32.totalorder %s198, %s212
    %p214 = scmp.eq.s32.totalorder %s83, 0
    %p215 = por %p213, %p214
    %s217 = sadd.s32 %s216, 1
    %p220 = scmp.eq.s32.totalorder %s77, 1
    %p221 = scmp.ne.s32.totalorder %s216, %s218
    %p222 = scmp.eq.s32.totalorder %s77, 0
    %p223 = por %p221, %p222
    %p224 = scmp.ne.s32.totalorder %s216, %s218
    %p225 = scmp.eq.s32.totalorder %s82, 1
    %p226 = por %p224, %p225
    %p227 = scmp.ne.s32.totalorder %s218, %s219
    %p228 = scmp.eq.s32.totalorder %s82, 0
    %p229 = por %p227, %p228
    %p230 = scmp.ne.s32.totalorder %s218, %s219
    %p231 = scmp.eq.s32.totalorder %s83, 1
    %p232 = por %p230, %p231
    %p234 = scmp.ne.s32.totalorder %s219, %s233
    %p235 = scmp.eq.s32.totalorder %s83, 0
    %p236 = por %p234, %p235
    %s238 = sadd.s32 %s237, 1
    %p241 = scmp.eq.s32.totalorder %s77, 1
    %p242 = scmp.ne.s32.totalorder %s237, %s239
    %p243 = scmp.eq.s32.totalorder %s77, 0
    %p244 = por %p242, %p243
    %p245 = scmp.ne.s32.totalorder %s237, %s239
    %p246 = scmp.eq.s32.totalorder %s82, 1
    %p247 = por %p245, %p246
    %p248 = scmp.ne.s32.totalorder %s239, %s240
    %p249 = scmp.eq.s32.totalorder %s82, 0
    %p250 = por %p248, %p249
    %p251 = scmp.ne.s32.totalorder %s239, %s240
    %p252 = scmp.eq.s32.totalorder %s83, 1
    %p253 = por %p251, %p252
    %p255 = scmp.ne.s32.totalorder %s240, %s254
    %p256 = scmp.eq.s32.totalorder %s83, 0
    %p257 = por %p255, %p256
    %s259 = sadd.s32 %s258, 1
    %p262 = scmp.eq.s32.totalorder %s77, 1
    %p263 = scmp.ne.s32.totalorder %s258, %s260
    %p264 = scmp.eq.s32.totalorder %s77, 0
    %p265 = por %p263, %p264
    %p266 = scmp.ne.s32.totalorder %s258, %s260
    %p267 = scmp.eq.s32.totalorder %s82, 1
    %p268 = por %p266, %p267
    %p269 = scmp.ne.s32.totalorder %s260, %s261
    %p270 = scmp.eq.s32.totalorder %s82, 0
    %p271 = por %p269, %p270
    %p272 = scmp.ne.s32.totalorder %s260, %s261
    %p273 = scmp.eq.s32.totalorder %s83, 1
    %p274 = por %p272, %p273
    %p276 = scmp.ne.s32.totalorder %s261, %s275
    %p277 = scmp.eq.s32.totalorder %s83, 0
    %p278 = por %p276, %p277
    %s280 = sadd.s32 %s279, 1
    %p283 = scmp.eq.s32.totalorder %s77, 1
    %p284 = scmp.ne.s32.totalorder %s279, %s281
    %p285 = scmp.eq.s32.totalorder %s77, 0
    %p286 = por %p284, %p285
    %p287 = scmp.ne.s32.totalorder %s279, %s281
    %p288 = scmp.eq.s32.totalorder %s82, 1
    %p289 = por %p287, %p288
    %p290 = scmp.ne.s32.totalorder %s281, %s282
    %p291 = scmp.eq.s32.totalorder %s82, 0
    %p292 = por %p290, %p291
    %p293 = scmp.ne.s32.totalorder %s281, %s282
    %p294 = scmp.eq.s32.totalorder %s83, 1
    %p295 = por %p293, %p294
    %p297 = scmp.ne.s32.totalorder %s282, %s296
    %p298 = scmp.eq.s32.totalorder %s83, 0
    %p299 = por %p297, %p298
    %s301 = sadd.s32 %s300, 1
    %p304 = scmp.eq.s32.totalorder %s77, 1
    %p305 = scmp.ne.s32.totalorder %s300, %s302
    %p306 = scmp.eq.s32.totalorder %s77, 0
    %p307 = por %p305, %p306
    %p308 = scmp.ne.s32.totalorder %s300, %s302
    %p309 = scmp.eq.s32.totalorder %s82, 1
    %p310 = por %p308, %p309
    %p311 = scmp.ne.s32.totalorder %s302, %s303
    %p312 = scmp.eq.s32.totalorder %s82, 0
    %p313 = por %p311, %p312
    %p314 = scmp.ne.s32.totalorder %s302, %s303
    %p315 = scmp.eq.s32.totalorder %s83, 1
    %p316 = por %p314, %p315
    %p318 = scmp.ne.s32.totalorder %s303, %s317
    %p319 = scmp.eq.s32.totalorder %s83, 0
    %p320 = por %p318, %p319
    %s322 = sadd.s32 %s321, 1
    %p325 = scmp.eq.s32.totalorder %s77, 1
    %p326 = scmp.ne.s32.totalorder %s321, %s323
    %p327 = scmp.eq.s32.totalorder %s77, 0
    %p328 = por %p326, %p327
    %p329 = scmp.ne.s32.totalorder %s321, %s323
    %p330 = scmp.eq.s32.totalorder %s82, 1
    %p331 = por %p329, %p330
    %p332 = scmp.ne.s32.totalorder %s323, %s324
    %p333 = scmp.eq.s32.totalorder %s82, 0
    %p334 = por %p332, %p333
    %p335 = scmp.ne.s32.totalorder %s323, %s324
    %p336 = scmp.eq.s32.totalorder %s83, 1
    %p337 = por %p335, %p336
    %p339 = scmp.ne.s32.totalorder %s324, %s338
    %p340 = scmp.eq.s32.totalorder %s83, 0
    %p341 = por %p339, %p340
    %s343 = sadd.s32 %s342, 1
    %p346 = scmp.eq.s32.totalorder %s77, 1
    %p347 = scmp.ne.s32.totalorder %s342, %s344
    %p348 = scmp.eq.s32.totalorder %s77, 0
    %p349 = por %p347, %p348
    %p350 = scmp.ne.s32.totalorder %s342, %s344
    %p351 = scmp.eq.s32.totalorder %s82, 1
    %p352 = por %p350, %p351
    %p353 = scmp.ne.s32.totalorder %s344, %s345
    %p354 = scmp.eq.s32.totalorder %s82, 0
    %p355 = por %p353, %p354
    %p356 = scmp.ne.s32.totalorder %s344, %s345
    %p357 = scmp.eq.s32.totalorder %s83, 1
    %p358 = por %p356, %p357
    %p360 = scmp.ne.s32.totalorder %s345, %s359
    %p361 = scmp.eq.s32.totalorder %s83, 0
    %p362 = por %p360, %p361
    %s364 = sadd.s32 %s363, 1
    %p367 = scmp.eq.s32.totalorder %s77, 1
    %p368 = scmp.ne.s32.totalorder %s363, %s365
    %p369 = scmp.eq.s32.totalorder %s77, 0
    %p370 = por %p368, %p369
    %p371 = scmp.ne.s32.totalorder %s363, %s365
    %p372 = scmp.eq.s32.totalorder %s82, 1
    %p373 = por %p371, %p372
    %p374 = scmp.ne.s32.totalorder %s365, %s366
    %p375 = scmp.eq.s32.totalorder %s82, 0
    %p376 = por %p374, %p375
    %p377 = scmp.ne.s32.totalorder %s365, %s366
    %p378 = scmp.eq.s32.totalorder %s83, 1
    %p379 = por %p377, %p378
    %p381 = scmp.ne.s32.totalorder %s366, %s380
    %p382 = scmp.eq.s32.totalorder %s83, 0
    %p383 = por %p381, %p382
    %s385 = sadd.s32 %s384, 1
    %p388 = scmp.eq.s32.totalorder %s77, 1
    %p389 = scmp.ne.s32.totalorder %s384, %s386
    %p390 = scmp.eq.s32.totalorder %s77, 0
    %p391 = por %p389, %p390
    %p392 = scmp.ne.s32.totalorder %s384, %s386
    %p393 = scmp.eq.s32.totalorder %s82, 1
    %p394 = por %p392, %p393
    %p395 = scmp.ne.s32.totalorder %s386, %s387
    %p396 = scmp.eq.s32.totalorder %s82, 0
    %p397 = por %p395, %p396
    %p398 = scmp.ne.s32.totalorder %s386, %s387
    %p399 = scmp.eq.s32.totalorder %s83, 1
    %p400 = por %p398, %p399
    %p402 = scmp.ne.s32.totalorder %s387, %s401
    %p403 = scmp.eq.s32.totalorder %s83, 0
    %p404 = por %p402, %p403
    %s406 = sadd.s32 %s405, 1
    %p409 = scmp.eq.s32.totalorder %s77, 1
    %p410 = scmp.ne.s32.totalorder %s405, %s407
    %p411 = scmp.eq.s32.totalorder %s77, 0
    %p412 = por %p410, %p411
    %p413 = scmp.ne.s32.totalorder %s405, %s407
    %p414 = scmp.eq.s32.totalorder %s82, 1
    %p415 = por %p413, %p414
    %p416 = scmp.ne.s32.totalorder %s407, %s408
    %p417 = scmp.eq.s32.totalorder %s82, 0
    %p418 = por %p416, %p417
    %p419 = scmp.ne.s32.totalorder %s407, %s408
    %p420 = scmp.eq.s32.totalorder %s83, 1
    %p421 = por %p419, %p420
    %p423 = scmp.ne.s32.totalorder %s408, %s422
    %p424 = scmp.eq.s32.totalorder %s83, 0
    %p425 = por %p423, %p424
    %s427 = sadd.s32 %s426, 1
    %p430 = scmp.eq.s32.totalorder %s77, 1
    %p431 = scmp.ne.s32.totalorder %s426, %s428
    %p432 = scmp.eq.s32.totalorder %s77, 0
    %p433 = por %p431, %p432
    %p434 = scmp.ne.s32.totalorder %s426, %s428
    %p435 = scmp.eq.s32.totalorder %s82, 1
    %p436 = por %p434, %p435
    %p437 = scmp.ne.s32.totalorder %s428, %s429
    %p438 = scmp.eq.s32.totalorder %s82, 0
    %p439 = por %p437, %p438
    %p440 = scmp.ne.s32.totalorder %s428, %s429
    %p441 = scmp.eq.s32.totalorder %s83, 1
    %p442 = por %p440, %p441
    %p444 = scmp.ne.s32.totalorder %s429, %s443
    %p445 = scmp.eq.s32.totalorder %s83, 0
    %p446 = por %p444, %p445
    %s448 = sadd.s32 %s447, 1
    %p451 = scmp.eq.s32.totalorder %s77, 1
    %p452 = scmp.ne.s32.totalorder %s447, %s449
    %p453 = scmp.eq.s32.totalorder %s77, 0
    %p454 = por %p452, %p453
    %p455 = scmp.ne.s32.totalorder %s447, %s449
    %p456 = scmp.eq.s32.totalorder %s82, 1
    %p457 = por %p455, %p456
    %p458 = scmp.ne.s32.totalorder %s449, %s450
    %p459 = scmp.eq.s32.totalorder %s82, 0
    %p460 = por %p458, %p459
    %p461 = scmp.ne.s32.totalorder %s449, %s450
    %p462 = scmp.eq.s32.totalorder %s83, 1
    %p463 = por %p461, %p462
    %p465 = scmp.ne.s32.totalorder %s450, %s464
    %p466 = scmp.eq.s32.totalorder %s83, 0
    %p467 = por %p465, %p466
    %s469 = sadd.s32 %s468, 1
    %p472 = scmp.eq.s32.totalorder %s77, 1
    %p473 = scmp.ne.s32.totalorder %s468, %s470
    %p474 = scmp.eq.s32.totalorder %s77, 0
    %p475 = por %p473, %p474
    %p476 = scmp.ne.s32.totalorder %s468, %s470
    %p477 = scmp.eq.s32.totalorder %s82, 1
    %p478 = por %p476, %p477
    %p479 = scmp.ne.s32.totalorder %s470, %s471
    %p480 = scmp.eq.s32.totalorder %s82, 0
    %p481 = por %p479, %p480
    %p482 = scmp.ne.s32.totalorder %s470, %s471
    %p483 = scmp.eq.s32.totalorder %s83, 1
    %p484 = por %p482, %p483
    %p486 = scmp.ne.s32.totalorder %s471, %s485
    %p487 = scmp.eq.s32.totalorder %s83, 0
    %p488 = por %p486, %p487
    %s490 = sadd.s32 %s489, 1
    %p493 = scmp.eq.s32.totalorder %s77, 1
    %p494 = scmp.ne.s32.totalorder %s489, %s491
    %p495 = scmp.eq.s32.totalorder %s77, 0
    %p496 = por %p494, %p495
    %p497 = scmp.ne.s32.totalorder %s489, %s491
    %p498 = scmp.eq.s32.totalorder %s82, 1
    %p499 = por %p497, %p498
    %p500 = scmp.ne.s32.totalorder %s491, %s492
    %p501 = scmp.eq.s32.totalorder %s82, 0
    %p502 = por %p500, %p501
    %p503 = scmp.ne.s32.totalorder %s491, %s492
    %p504 = scmp.eq.s32.totalorder %s83, 1
    %p505 = por %p503, %p504
    %p507 = scmp.ne.s32.totalorder %s492, %s506
    %p508 = scmp.eq.s32.totalorder %s83, 0
    %p509 = por %p507, %p508
    %s511 = sadd.s32 %s510, 1
    %p514 = scmp.eq.s32.totalorder %s77, 1
    %p515 = scmp.ne.s32.totalorder %s510, %s512
    %p516 = scmp.eq.s32.totalorder %s77, 0
    %p517 = por %p515, %p516
    %p518 = scmp.ne.s32.totalorder %s510, %s512
    %p519 = scmp.eq.s32.totalorder %s82, 1
    %p520 = por %p518, %p519
    %p521 = scmp.ne.s32.totalorder %s512, %s513
    %p522 = scmp.eq.s32.totalorder %s82, 0
    %p523 = por %p521, %p522
    %p524 = scmp.ne.s32.totalorder %s512, %s513
    %p525 = scmp.eq.s32.totalorder %s83, 1
    %p526 = por %p524, %p525
    %p528 = scmp.ne.s32.totalorder %s513, %s527
    %p529 = scmp.eq.s32.totalorder %s83, 0
    %p530 = por %p528, %p529
    %s532 = sadd.s32 %s531, 1
    %p535 = scmp.eq.s32.totalorder %s77, 1
    %p536 = scmp.ne.s32.totalorder %s531, %s533
    %p537 = scmp.eq.s32.totalorder %s77, 0
    %p538 = por %p536, %p537
    %p539 = scmp.ne.s32.totalorder %s531, %s533
    %p540 = scmp.eq.s32.totalorder %s82, 1
    %p541 = por %p539, %p540
    %p542 = scmp.ne.s32.totalorder %s533, %s534
    %p543 = scmp.eq.s32.totalorder %s82, 0
    %p544 = por %p542, %p543
    %p545 = scmp.ne.s32.totalorder %s533, %s534
    %p546 = scmp.eq.s32.totalorder %s83, 1
    %p547 = por %p545, %p546
    %p549 = scmp.ne.s32.totalorder %s534, %s548
    %p550 = scmp.eq.s32.totalorder %s83, 0
    %p551 = por %p549, %p550
    %s553 = sadd.s32 %s552, 1
    %p556 = scmp.eq.s32.totalorder %s77, 1
    %p557 = scmp.ne.s32.totalorder %s552, %s554
    %p558 = scmp.eq.s32.totalorder %s77, 0
    %p559 = por %p557, %p558
    %p560 = scmp.ne.s32.totalorder %s552, %s554
    %p561 = scmp.eq.s32.totalorder %s82, 1
    %p562 = por %p560, %p561
    %p563 = scmp.ne.s32.totalorder %s554, %s555
    %p564 = scmp.eq.s32.totalorder %s82, 0
    %p565 = por %p563, %p564
    %p566 = scmp.ne.s32.totalorder %s554, %s555
    %p567 = scmp.eq.s32.totalorder %s83, 1
    %p568 = por %p566, %p567
    %p570 = scmp.ne.s32.totalorder %s555, %s569
    %p571 = scmp.eq.s32.totalorder %s83, 0
    %p572 = por %p570, %p571
    %s574 = sadd.s32 %s573, 1
    %p577 = scmp.eq.s32.totalorder %s77, 1
    %p578 = scmp.ne.s32.totalorder %s573, %s575
    %p579 = scmp.eq.s32.totalorder %s77, 0
    %p580 = por %p578, %p579
    %p581 = scmp.ne.s32.totalorder %s573, %s575
    %p582 = scmp.eq.s32.totalorder %s82, 1
    %p583 = por %p581, %p582
    %p584 = scmp.ne.s32.totalorder %s575, %s576
    %p585 = scmp.eq.s32.totalorder %s82, 0
    %p586 = por %p584, %p585
    %p587 = scmp.ne.s32.totalorder %s575, %s576
    %p588 = scmp.eq.s32.totalorder %s83, 1
    %p589 = por %p587, %p588
    %p591 = scmp.ne.s32.totalorder %s576, %s590
    %p592 = scmp.eq.s32.totalorder %s83, 0
    %p593 = por %p591, %p592
    %s595 = sadd.s32 %s594, 1
    %p598 = scmp.eq.s32.totalorder %s77, 1
    %p599 = scmp.ne.s32.totalorder %s594, %s596
    %p600 = scmp.eq.s32.totalorder %s77, 0
    %p601 = por %p599, %p600
    %p602 = scmp.ne.s32.totalorder %s594, %s596
    %p603 = scmp.eq.s32.totalorder %s82, 1
    %p604 = por %p602, %p603
    %p605 = scmp.ne.s32.totalorder %s596, %s597
    %p606 = scmp.eq.s32.totalorder %s82, 0
    %p607 = por %p605, %p606
    %p608 = scmp.ne.s32.totalorder %s596, %s597
    %p609 = scmp.eq.s32.totalorder %s83, 1
    %p610 = por %p608, %p609
    %p612 = scmp.ne.s32.totalorder %s597, %s611
    %p613 = scmp.eq.s32.totalorder %s83, 0
    %p614 = por %p612, %p613
    %s616 = sadd.s32 %s615, 1
    %p619 = scmp.eq.s32.totalorder %s77, 1
    %p620 = scmp.ne.s32.totalorder %s615, %s617
    %p621 = scmp.eq.s32.totalorder %s77, 0
    %p622 = por %p620, %p621
    %p623 = scmp.ne.s32.totalorder %s615, %s617
    %p624 = scmp.eq.s32.totalorder %s82, 1
    %p625 = por %p623, %p624
    %p626 = scmp.ne.s32.totalorder %s617, %s618
    %p627 = scmp.eq.s32.totalorder %s82, 0
    %p628 = por %p626, %p627
    %p629 = scmp.ne.s32.totalorder %s617, %s618
    %p630 = scmp.eq.s32.totalorder %s83, 1
    %p631 = por %p629, %p630
    %p633 = scmp.ne.s32.totalorder %s618, %s632
    %p634 = scmp.eq.s32.totalorder %s83, 0
    %p635 = por %p633, %p634
    %s637 = sadd.s32 %s636, 1
    %p640 = scmp.eq.s32.totalorder %s77, 1
    %p641 = scmp.ne.s32.totalorder %s636, %s638
    %p642 = scmp.eq.s32.totalorder %s77, 0
    %p643 = por %p641, %p642
    %p644 = scmp.ne.s32.totalorder %s636, %s638
    %p645 = scmp.eq.s32.totalorder %s82, 1
    %p646 = por %p644, %p645
    %p647 = scmp.ne.s32.totalorder %s638, %s639
    %p648 = scmp.eq.s32.totalorder %s82, 0
    %p649 = por %p647, %p648
    %p650 = scmp.ne.s32.totalorder %s638, %s639
    %p651 = scmp.eq.s32.totalorder %s83, 1
    %p652 = por %p650, %p651
    %p654 = scmp.ne.s32.totalorder %s639, %s653
    %p655 = scmp.eq.s32.totalorder %s83, 0
    %p656 = por %p654, %p655
    %s658 = sadd.s32 %s657, 1
    %p661 = scmp.eq.s32.totalorder %s77, 1
    %p662 = scmp.ne.s32.totalorder %s657, %s659
    %p663 = scmp.eq.s32.totalorder %s77, 0
    %p664 = por %p662, %p663
    %p665 = scmp.ne.s32.totalorder %s657, %s659
    %p666 = scmp.eq.s32.totalorder %s82, 1
    %p667 = por %p665, %p666
    %p668 = scmp.ne.s32.totalorder %s659, %s660
    %p669 = scmp.eq.s32.totalorder %s82, 0
    %p670 = por %p668, %p669
    %p671 = scmp.ne.s32.totalorder %s659, %s660
    %p672 = scmp.eq.s32.totalorder %s83, 1
    %p673 = por %p671, %p672
    %p675 = scmp.ne.s32.totalorder %s660, %s674
    %p676 = scmp.eq.s32.totalorder %s83, 0
    %p677 = por %p675, %p676
    %s679 = sadd.s32 %s678, 1
    %p682 = scmp.eq.s32.totalorder %s77, 1
    %p683 = scmp.ne.s32.totalorder %s678, %s680
    %p684 = scmp.eq.s32.totalorder %s77, 0
    %p685 = por %p683, %p684
    %p686 = scmp.ne.s32.totalorder %s678, %s680
    %p687 = scmp.eq.s32.totalorder %s82, 1
    %p688 = por %p686, %p687
    %p689 = scmp.ne.s32.totalorder %s680, %s681
    %p690 = scmp.eq.s32.totalorder %s82, 0
    %p691 = por %p689, %p690
    %p692 = scmp.ne.s32.totalorder %s680, %s681
    %p693 = scmp.eq.s32.totalorder %s83, 1
    %p694 = por %p692, %p693
    %p696 = scmp.ne.s32.totalorder %s681, %s695
    %p697 = scmp.eq.s32.totalorder %s83, 0
    %p698 = por %p696, %p697
    %s700 = sadd.s32 %s699, 1
    %p703 = scmp.eq.s32.totalorder %s77, 1
    %p704 = scmp.ne.s32.totalorder %s699, %s701
    %p705 = scmp.eq.s32.totalorder %s77, 0
    %p706 = por %p704, %p705
    %p707 = scmp.ne.s32.totalorder %s699, %s701
    %p708 = scmp.eq.s32.totalorder %s82, 1
    %p709 = por %p707, %p708
    %p710 = scmp.ne.s32.totalorder %s701, %s702
    %p711 = scmp.eq.s32.totalorder %s82, 0
    %p712 = por %p710, %p711
    %p713 = scmp.ne.s32.totalorder %s701, %s702
    %p714 = scmp.eq.s32.totalorder %s83, 1
    %p715 = por %p713, %p714
    %p717 = scmp.ne.s32.totalorder %s702, %s716
    %p718 = scmp.eq.s32.totalorder %s83, 0
    %p719 = por %p717, %p718
    %s721 = sadd.s32 %s720, 1
    %p724 = scmp.eq.s32.totalorder %s77, 1
    %p725 = scmp.ne.s32.totalorder %s720, %s722
    %p726 = scmp.eq.s32.totalorder %s77, 0
    %p727 = por %p725, %p726
    %p728 = scmp.ne.s32.totalorder %s720, %s722
    %p729 = scmp.eq.s32.totalorder %s82, 1
    %p730 = por %p728, %p729
    %p731 = scmp.ne.s32.totalorder %s722, %s723
    %p732 = scmp.eq.s32.totalorder %s82, 0
    %p733 = por %p731, %p732
    %p734 = scmp.ne.s32.totalorder %s722, %s723
    %p735 = scmp.eq.s32.totalorder %s83, 1
    %p736 = por %p734, %p735
    %p738 = scmp.ne.s32.totalorder %s723, %s737
    %p739 = scmp.eq.s32.totalorder %s83, 0
    %p740 = por %p738, %p739
    %s742 = sadd.s32 %s741, 1
    %p745 = scmp.eq.s32.totalorder %s77, 1
    %p746 = scmp.ne.s32.totalorder %s741, %s743
    %p747 = scmp.eq.s32.totalorder %s77, 0
    %p748 = por %p746, %p747
    %p749 = scmp.ne.s32.totalorder %s741, %s743
    %p750 = scmp.eq.s32.totalorder %s82, 1
    %p751 = por %p749, %p750
    %p752 = scmp.ne.s32.totalorder %s743, %s744
    %p753 = scmp.eq.s32.totalorder %s82, 0
    %p754 = por %p752, %p753
    %p755 = scmp.ne.s32.totalorder %s743, %s744
    %p756 = scmp.eq.s32.totalorder %s83, 1
    %p757 = por %p755, %p756
    %p759 = scmp.ne.s32.totalorder %s744, %s758
    %p760 = scmp.eq.s32.totalorder %s83, 0
    %p761 = por %p759, %p760
    %s763 = sadd.s32 %s762, 1
    %p766 = scmp.eq.s32.totalorder %s77, 1
    %p767 = scmp.ne.s32.totalorder %s762, %s764
    %p768 = scmp.eq.s32.totalorder %s77, 0
    %p769 = por %p767, %p768
    %p770 = scmp.ne.s32.totalorder %s762, %s764
    %p771 = scmp.eq.s32.totalorder %s82, 1
    %p772 = por %p770, %p771
    %p773 = scmp.ne.s32.totalorder %s764, %s765
    %p774 = scmp.eq.s32.totalorder %s82, 0
    %p775 = por %p773, %p774
    %p776 = scmp.ne.s32.totalorder %s764, %s765
    %p777 = scmp.eq.s32.totalorder %s83, 1
    %p778 = por %p776, %p777
    %p780 = scmp.ne.s32.totalorder %s765, %s779
    %p781 = scmp.eq.s32.totalorder %s83, 0
    %p782 = por %p780, %p781
    %s784 = sadd.s32 %s783, 1
    %p787 = scmp.eq.s32.totalorder %s77, 1
    %p788 = scmp.ne.s32.totalorder %s783, %s785
    %p789 = scmp.eq.s32.totalorder %s77, 0
    %p790 = por %p788, %p789
    %p791 = scmp.ne.s32.totalorder %s783, %s785
    %p792 = scmp.eq.s32.totalorder %s82, 1
    %p793 = por %p791, %p792
    %p794 = scmp.ne.s32.totalorder %s785, %s786
    %p795 = scmp.eq.s32.totalorder %s82, 0
    %p796 = por %p794, %p795
    %p797 = scmp.ne.s32.totalorder %s785, %s786
    %p798 = scmp.eq.s32.totalorder %s83, 1
    %p799 = por %p797, %p798
    %p801 = scmp.ne.s32.totalorder %s786, %s800
    %p802 = scmp.eq.s32.totalorder %s83, 0
    %p803 = por %p801, %p802
    %s805 = sadd.s32 %s804, 1
    %p808 = scmp.eq.s32.totalorder %s77, 1
    %p809 = scmp.ne.s32.totalorder %s804, %s806
    %p810 = scmp.eq.s32.totalorder %s77, 0
    %p811 = por %p809, %p810
    %p812 = scmp.ne.s32.totalorder %s804, %s806
    %p813 = scmp.eq.s32.totalorder %s82, 1
    %p814 = por %p812, %p813
    %p815 = scmp.ne.s32.totalorder %s806, %s807
    %p816 = scmp.eq.s32.totalorder %s82, 0
    %p817 = por %p815, %p816
    %p818 = scmp.ne.s32.totalorder %s806, %s807
    %p819 = scmp.eq.s32.totalorder %s83, 1
    %p820 = por %p818, %p819
    %p822 = scmp.ne.s32.totalorder %s807, %s821
    %p823 = scmp.eq.s32.totalorder %s83, 0
    %p824 = por %p822, %p823
    %s825 = ssub.s32 %s77, %s84
    %p826 = scmp.eq.s32.totalorder %s825, 0
    %s828 = sadd.s32 %s827, 1
    %s829 = scalar_select %p826, %s827, %s828
    %p832 = pneg %p826
    %p833 = scmp.eq.s32.totalorder %s77, 1
    %p834 = por %p832, %p833
    %p835 = scmp.ne.s32.totalorder %s827, %s830
    %p836 = scmp.eq.s32.totalorder %s77, 0
    %p837 = por %p835, %p836
    %p838 = scmp.ne.s32.totalorder %s827, %s830
    %p839 = scmp.eq.s32.totalorder %s82, 1
    %p840 = por %p838, %p839
    %p841 = scmp.ne.s32.totalorder %s830, %s831
    %p842 = scmp.eq.s32.totalorder %s82, 0
    %p843 = por %p841, %p842
    %p844 = scmp.ne.s32.totalorder %s830, %s831
    %p845 = scmp.eq.s32.totalorder %s83, 1
    %p846 = por %p844, %p845
    %p848 = scmp.ne.s32.totalorder %s831, %s847
    %p849 = scmp.eq.s32.totalorder %s83, 0
    %p850 = por %p848, %p849
    %p851 = scmp.le.s32.totalorder 1, %s77
    %p852 = scmp.lt.s32.totalorder %s77, 3
    %p853 = pnand %p851, %p852
    %p854 = pneg %p853
    // Predicated region
    $region9: #{mae_super_resolution_forward.4} parent=5 // pred_check
      _
    $region10: #{mae_super_resolution_forward.4} parent=5 // pred_check_branch
      %856 = sbr.rel (%p853) target = $region12
    $region11: #{mae_super_resolution_forward.4} parent=5 // pred_region
      %s857 = ssub.s32 %s77, 1
      // Predicated region
      $region13: #{mae_super_resolution_forward.4} parent=11 // pred_check
        %p858 = pneg %p124
      $region14: #{mae_super_resolution_forward.4} parent=11 // pred_check_branch
        %860 = sbr.rel (%p858) target = $region16
      $region15: #{mae_super_resolution_forward.4} parent=11 // pred_region
        _
      $region16: #{mae_super_resolution_forward.4} parent=11 // pred_fallthru
        _
      // Predicated region
      $region17: #{mae_super_resolution_forward.4} parent=11 // pred_check
        %p861 = pneg %p145
      $region18: #{mae_super_resolution_forward.4} parent=11 // pred_check_branch
        %863 = sbr.rel (%p861) target = $region20
      $region19: #{mae_super_resolution_forward.4} parent=11 // pred_region
        _
      $region20: #{mae_super_resolution_forward.4} parent=11 // pred_fallthru
        _
      // Predicated region
      $region21: #{mae_super_resolution_forward.4} parent=11 // pred_check
        %p864 = pneg %p166
      $region22: #{mae_super_resolution_forward.4} parent=11 // pred_check_branch
        %866 = sbr.rel (%p864) target = $region24
      $region23: #{mae_super_resolution_forward.4} parent=11 // pred_region
        _
      $region24: #{mae_super_resolution_forward.4} parent=11 // pred_fallthru
        _
      // Predicated region
      $region25: #{mae_super_resolution_forward.4} parent=11 // pred_check
        %p867 = pneg %p187
      $region26: #{mae_super_resolution_forward.4} parent=11 // pred_check_branch
        %869 = sbr.rel (%p867) target = $region28
      $region27: #{mae_super_resolution_forward.4} parent=11 // pred_region
        _
      $region28: #{mae_super_resolution_forward.4} parent=11 // pred_fallthru
        _
      // Predicated region
      $region29: #{mae_super_resolution_forward.4} parent=11 // pred_check
        %p870 = pneg %p208
      $region30: #{mae_super_resolution_forward.4} parent=11 // pred_check_branch
        %872 = sbr.rel (%p870) target = $region32
      $region31: #{mae_super_resolution_forward.4} parent=11 // pred_region
        _
      $region32: #{mae_super_resolution_forward.4} parent=11 // pred_fallthru
        _
      // Predicated region
      $region33: #{mae_super_resolution_forward.4} parent=11 // pred_check
        %p873 = pneg %p229
      $region34: #{mae_super_resolution_forward.4} parent=11 // pred_check_branch
        %875 = sbr.rel (%p873) target = $region36
      $region35: #{mae_super_resolution_forward.4} parent=11 // pred_region
        _
      $region36: #{mae_super_resolution_forward.4} parent=11 // pred_fallthru
        _
      // Predicated region
      $region37: #{mae_super_resolution_forward.4} parent=11 // pred_check
        %p876 = pneg %p250
      $region38: #{mae_super_resolution_forward.4} parent=11 // pred_check_branch
        %878 = sbr.rel (%p876) target = $region40
      $region39: #{mae_super_resolution_forward.4} parent=11 // pred_region
        _
      $region40: #{mae_super_resolution_forward.4} parent=11 // pred_fallthru
        _
      // Predicated region
      $region41: #{mae_super_resolution_forward.4} parent=11 // pred_check
        %p879 = pneg %p271
      $region42: #{mae_super_resolution_forward.4} parent=11 // pred_check_branch
        %881 = sbr.rel (%p879) target = $region44
      $region43: #{mae_super_resolution_forward.4} parent=11 // pred_region
        _
      $region44: #{mae_super_resolution_forward.4} parent=11 // pred_fallthru
        _
      // Predicated region
      $region45: #{mae_super_resolution_forward.4} parent=11 // pred_check
        %p882 = pneg %p292
      $region46: #{mae_super_resolution_forward.4} parent=11 // pred_check_branch
        %884 = sbr.rel (%p882) target = $region48
      $region47: #{mae_super_resolution_forward.4} parent=11 // pred_region
        _
      $region48: #{mae_super_resolution_forward.4} parent=11 // pred_fallthru
        _
      // Predicated region
      $region49: #{mae_super_resolution_forward.4} parent=11 // pred_check
        %p885 = pneg %p313
      $region50: #{mae_super_resolution_forward.4} parent=11 // pred_check_branch
        %887 = sbr.rel (%p885) target = $region52
      $region51: #{mae_super_resolution_forward.4} parent=11 // pred_region
        _
      $region52: #{mae_super_resolution_forward.4} parent=11 // pred_fallthru
        _
      // Predicated region
      $region53: #{mae_super_resolution_forward.4} parent=11 // pred_check
        %p888 = pneg %p334
      $region54: #{mae_super_resolution_forward.4} parent=11 // pred_check_branch
        %890 = sbr.rel (%p888) target = $region56
      $region55: #{mae_super_resolution_forward.4} parent=11 // pred_region
        _
      $region56: #{mae_super_resolution_forward.4} parent=11 // pred_fallthru
        _
      // Predicated region
      $region57: #{mae_super_resolution_forward.4} parent=11 // pred_check
        %p891 = pneg %p355
      $region58: #{mae_super_resolution_forward.4} parent=11 // pred_check_branch
        %893 = sbr.rel (%p891) target = $region60
      $region59: #{mae_super_resolution_forward.4} parent=11 // pred_region
        _
      $region60: #{mae_super_resolution_forward.4} parent=11 // pred_fallthru
        _
      // Predicated region
      $region61: #{mae_super_resolution_forward.4} parent=11 // pred_check
        %p894 = pneg %p376
      $region62: #{mae_super_resolution_forward.4} parent=11 // pred_check_branch
        %896 = sbr.rel (%p894) target = $region64
      $region63: #{mae_super_resolution_forward.4} parent=11 // pred_region
        _
      $region64: #{mae_super_resolution_forward.4} parent=11 // pred_fallthru
        _
      // Predicated region
      $region65: #{mae_super_resolution_forward.4} parent=11 // pred_check
        %p897 = pneg %p397
      $region66: #{mae_super_resolution_forward.4} parent=11 // pred_check_branch
        %899 = sbr.rel (%p897) target = $region68
      $region67: #{mae_super_resolution_forward.4} parent=11 // pred_region
        _
      $region68: #{mae_super_resolution_forward.4} parent=11 // pred_fallthru
        _
      // Predicated region
      $region69: #{mae_super_resolution_forward.4} parent=11 // pred_check
        %p900 = pneg %p418
      $region70: #{mae_super_resolution_forward.4} parent=11 // pred_check_branch
        %902 = sbr.rel (%p900) target = $region72
      $region71: #{mae_super_resolution_forward.4} parent=11 // pred_region
        _
      $region72: #{mae_super_resolution_forward.4} parent=11 // pred_fallthru
        _
      // Predicated region
      $region73: #{mae_super_resolution_forward.4} parent=11 // pred_check
        %p903 = pneg %p439
      $region74: #{mae_super_resolution_forward.4} parent=11 // pred_check_branch
        %905 = sbr.rel (%p903) target = $region76
      $region75: #{mae_super_resolution_forward.4} parent=11 // pred_region
        _
      $region76: #{mae_super_resolution_forward.4} parent=11 // pred_fallthru
        _
      // Predicated region
      $region77: #{mae_super_resolution_forward.4} parent=11 // pred_check
        %p906 = pneg %p460
      $region78: #{mae_super_resolution_forward.4} parent=11 // pred_check_branch
        %908 = sbr.rel (%p906) target = $region80
      $region79: #{mae_super_resolution_forward.4} parent=11 // pred_region
        _
      $region80: #{mae_super_resolution_forward.4} parent=11 // pred_fallthru
        _
      // Predicated region
      $region81: #{mae_super_resolution_forward.4} parent=11 // pred_check
        %p909 = pneg %p481
      $region82: #{mae_super_resolution_forward.4} parent=11 // pred_check_branch
        %911 = sbr.rel (%p909) target = $region84
      $region83: #{mae_super_resolution_forward.4} parent=11 // pred_region
        _
      $region84: #{mae_super_resolution_forward.4} parent=11 // pred_fallthru
        _
      // Predicated region
      $region85: #{mae_super_resolution_forward.4} parent=11 // pred_check
        %p912 = pneg %p502
      $region86: #{mae_super_resolution_forward.4} parent=11 // pred_check_branch
        %914 = sbr.rel (%p912) target = $region88
      $region87: #{mae_super_resolution_forward.4} parent=11 // pred_region
        _
      $region88: #{mae_super_resolution_forward.4} parent=11 // pred_fallthru
        _
      // Predicated region
      $region89: #{mae_super_resolution_forward.4} parent=11 // pred_check
        %p915 = pneg %p523
      $region90: #{mae_super_resolution_forward.4} parent=11 // pred_check_branch
        %917 = sbr.rel (%p915) target = $region92
      $region91: #{mae_super_resolution_forward.4} parent=11 // pred_region
        _
      $region92: #{mae_super_resolution_forward.4} parent=11 // pred_fallthru
        _
      // Predicated region
      $region93: #{mae_super_resolution_forward.4} parent=11 // pred_check
        %p918 = pneg %p544
      $region94: #{mae_super_resolution_forward.4} parent=11 // pred_check_branch
        %920 = sbr.rel (%p918) target = $region96
      $region95: #{mae_super_resolution_forward.4} parent=11 // pred_region
        _
      $region96: #{mae_super_resolution_forward.4} parent=11 // pred_fallthru
        _
      // Predicated region
      $region97: #{mae_super_resolution_forward.4} parent=11 // pred_check
        %p921 = pneg %p565
      $region98: #{mae_super_resolution_forward.4} parent=11 // pred_check_branch
        %923 = sbr.rel (%p921) target = $region100
      $region99: #{mae_super_resolution_forward.4} parent=11 // pred_region
        _
      $region100: #{mae_super_resolution_forward.4} parent=11 // pred_fallthru
        _
      // Predicated region
      $region101: #{mae_super_resolution_forward.4} parent=11 // pred_check
        %p924 = pneg %p586
      $region102: #{mae_super_resolution_forward.4} parent=11 // pred_check_branch
        %926 = sbr.rel (%p924) target = $region104
      $region103: #{mae_super_resolution_forward.4} parent=11 // pred_region
        _
      $region104: #{mae_super_resolution_forward.4} parent=11 // pred_fallthru
        _
      // Predicated region
      $region105: #{mae_super_resolution_forward.4} parent=11 // pred_check
        %p927 = pneg %p607
      $region106: #{mae_super_resolution_forward.4} parent=11 // pred_check_branch
        %929 = sbr.rel (%p927) target = $region108
      $region107: #{mae_super_resolution_forward.4} parent=11 // pred_region
        _
      $region108: #{mae_super_resolution_forward.4} parent=11 // pred_fallthru
        _
      // Predicated region
      $region109: #{mae_super_resolution_forward.4} parent=11 // pred_check
        %p930 = pneg %p628
      $region110: #{mae_super_resolution_forward.4} parent=11 // pred_check_branch
        %932 = sbr.rel (%p930) target = $region112
      $region111: #{mae_super_resolution_forward.4} parent=11 // pred_region
        _
      $region112: #{mae_super_resolution_forward.4} parent=11 // pred_fallthru
        _
      // Predicated region
      $region113: #{mae_super_resolution_forward.4} parent=11 // pred_check
        %p933 = pneg %p649
      $region114: #{mae_super_resolution_forward.4} parent=11 // pred_check_branch
        %935 = sbr.rel (%p933) target = $region116
      $region115: #{mae_super_resolution_forward.4} parent=11 // pred_region
        _
      $region116: #{mae_super_resolution_forward.4} parent=11 // pred_fallthru
        _
      // Predicated region
      $region117: #{mae_super_resolution_forward.4} parent=11 // pred_check
        %p936 = pneg %p670
      $region118: #{mae_super_resolution_forward.4} parent=11 // pred_check_branch
        %938 = sbr.rel (%p936) target = $region120
      $region119: #{mae_super_resolution_forward.4} parent=11 // pred_region
        _
      $region120: #{mae_super_resolution_forward.4} parent=11 // pred_fallthru
        _
      // Predicated region
      $region121: #{mae_super_resolution_forward.4} parent=11 // pred_check
        %p939 = pneg %p691
      $region122: #{mae_super_resolution_forward.4} parent=11 // pred_check_branch
        %941 = sbr.rel (%p939) target = $region124
      $region123: #{mae_super_resolution_forward.4} parent=11 // pred_region
        _
      $region124: #{mae_super_resolution_forward.4} parent=11 // pred_fallthru
        _
      // Predicated region
      $region125: #{mae_super_resolution_forward.4} parent=11 // pred_check
        %p942 = pneg %p712
      $region126: #{mae_super_resolution_forward.4} parent=11 // pred_check_branch
        %944 = sbr.rel (%p942) target = $region128
      $region127: #{mae_super_resolution_forward.4} parent=11 // pred_region
        _
      $region128: #{mae_super_resolution_forward.4} parent=11 // pred_fallthru
        _
      // Predicated region
      $region129: #{mae_super_resolution_forward.4} parent=11 // pred_check
        %p945 = pneg %p733
      $region130: #{mae_super_resolution_forward.4} parent=11 // pred_check_branch
        %947 = sbr.rel (%p945) target = $region132
      $region131: #{mae_super_resolution_forward.4} parent=11 // pred_region
        _
      $region132: #{mae_super_resolution_forward.4} parent=11 // pred_fallthru
        _
      // Predicated region
      $region133: #{mae_super_resolution_forward.4} parent=11 // pred_check
        %p948 = pneg %p754
      $region134: #{mae_super_resolution_forward.4} parent=11 // pred_check_branch
        %950 = sbr.rel (%p948) target = $region136
      $region135: #{mae_super_resolution_forward.4} parent=11 // pred_region
        _
      $region136: #{mae_super_resolution_forward.4} parent=11 // pred_fallthru
        _
      // Predicated region
      $region137: #{mae_super_resolution_forward.4} parent=11 // pred_check
        %p951 = pneg %p775
      $region138: #{mae_super_resolution_forward.4} parent=11 // pred_check_branch
        %953 = sbr.rel (%p951) target = $region140
      $region139: #{mae_super_resolution_forward.4} parent=11 // pred_region
        _
      $region140: #{mae_super_resolution_forward.4} parent=11 // pred_fallthru
        _
      // Predicated region
      $region141: #{mae_super_resolution_forward.4} parent=11 // pred_check
        %p954 = pneg %p796
      $region142: #{mae_super_resolution_forward.4} parent=11 // pred_check_branch
        %956 = sbr.rel (%p954) target = $region144
      $region143: #{mae_super_resolution_forward.4} parent=11 // pred_region
        _
      $region144: #{mae_super_resolution_forward.4} parent=11 // pred_fallthru
        _
      // Predicated region
      $region145: #{mae_super_resolution_forward.4} parent=11 // pred_check
        %p957 = pneg %p817
      $region146: #{mae_super_resolution_forward.4} parent=11 // pred_check_branch
        %959 = sbr.rel (%p957) target = $region148
      $region147: #{mae_super_resolution_forward.4} parent=11 // pred_region
        _
      $region148: #{mae_super_resolution_forward.4} parent=11 // pred_fallthru
        _
    $region12: #{mae_super_resolution_forward.4} parent=5 // pred_fallthru
      _
    %p960 = scmp.lt.s32.totalorder %s77, 2
    // Predicated region
    $region149: #{mae_super_resolution_forward.4} parent=5 // pred_check
      %p961 = pneg %p960
    $region150: #{mae_super_resolution_forward.4} parent=5 // pred_check_branch
      %963 = sbr.rel (%p961) target = $region152
    $region151: #{mae_super_resolution_forward.4} parent=5 // pred_region
      // Predicated region
      $region153: #{mae_super_resolution_forward.4} parent=151 // pred_check
        %p964 = pneg %p97
      $region154: #{mae_super_resolution_forward.4} parent=151 // pred_check_branch
        %966 = sbr.rel (%p964) target = $region156
      $region155: #{mae_super_resolution_forward.4} parent=151 // pred_region
        %p967 = scmp.lt.s32.totalorder %s77, 1
        %s968 = scalar_select %p967, %s77, 1
        %s969 = smul.addr %s968, 3
        %s970 = smul.addr %s969, 8
        %s971 = scalar_lea.vmem %s1, %s970
      $region156: #{mae_super_resolution_forward.4} parent=151 // pred_fallthru
        _
    $region152: #{mae_super_resolution_forward.4} parent=5 // pred_fallthru
      _
    %p972 = scmp.le.s32.totalorder 1, %s77
    %p973 = scmp.lt.s32.totalorder %s77, 3
    %p974 = pnand %p972, %p973
    %p975 = pneg %p974
    // Predicated region
    $region157: #{mae_super_resolution_forward.4} parent=5 // pred_check
      _
    $region158: #{mae_super_resolution_forward.4} parent=5 // pred_check_branch
      %977 = sbr.rel (%p974) target = $region160
    $region159: #{mae_super_resolution_forward.4} parent=5 // pred_region
      %s978 = ssub.s32 %s77, 1
      %p979 = scmp.lt.s32.totalorder %s82, 1
      %s980 = scalar_select %p979, %s82, 1
      %s981 = smul.addr %s980, 3
      %s982 = smul.addr %s981, 8
      %s983 = scalar_lea.vmem %s1, %s982
      %p984 = pneg %p103
      %p985 = pneg %p100
      %p986 = pneg %p124
      %p987 = pneg %p121
      %p988 = pneg %p145
      %p989 = pneg %p142
      %p990 = pneg %p166
      %p991 = pneg %p163
      %p992 = pneg %p187
      %p993 = pneg %p184
      %p994 = pneg %p208
      %p995 = pneg %p205
      %p996 = pneg %p229
      %p997 = pneg %p226
      %p998 = pneg %p250
      %p999 = pneg %p247
      %p1000 = pneg %p271
      %p1001 = pneg %p268
      %p1002 = pneg %p292
      %p1003 = pneg %p289
      %p1004 = pneg %p313
      %p1005 = pneg %p310
      %p1006 = pneg %p334
      %p1007 = pneg %p331
      %p1008 = pneg %p355
      %p1009 = pneg %p352
      %p1010 = pneg %p376
      %p1011 = pneg %p373
      %p1012 = pneg %p397
      %p1013 = pneg %p394
      %p1014 = pneg %p418
      %p1015 = pneg %p415
      %p1016 = pneg %p439
      %p1017 = pneg %p436
      %p1018 = pneg %p460
      %p1019 = pneg %p457
      %p1020 = pneg %p481
      %p1021 = pneg %p478
      %p1022 = pneg %p502
      %p1023 = pneg %p499
      %p1024 = pneg %p523
      %p1025 = pneg %p520
      %p1026 = pneg %p544
      %p1027 = pneg %p541
      %p1028 = pneg %p565
      %p1029 = pneg %p562
      %p1030 = pneg %p586
      %p1031 = pneg %p583
      %p1032 = pneg %p607
      %p1033 = pneg %p604
      %p1034 = pneg %p628
      %p1035 = pneg %p625
      %p1036 = pneg %p649
      %p1037 = pneg %p646
      %p1038 = pneg %p670
      %p1039 = pneg %p667
      %p1040 = pneg %p691
      %p1041 = pneg %p688
      %p1042 = pneg %p712
      %p1043 = pneg %p709
      %p1044 = pneg %p733
      %p1045 = pneg %p730
      %p1046 = pneg %p754
      %p1047 = pneg %p751
      %p1048 = pneg %p775
      %p1049 = pneg %p772
      %p1050 = pneg %p796
      %p1051 = pneg %p793
      %p1052 = pneg %p817
      %p1053 = pneg %p814
      %p1054 = pneg %p843
      %p1055 = pneg %p840
      %p1056 = scmp.lt.s32.totalorder %s82, 1
      %s1057 = scalar_select %p1056, %s82, 1
      %s1058 = smul.addr %s1057, 2
      %s1059 = smul.addr %s1058, 8
      %s1060 = scalar_lea.vmem %s71, %s1059
      %p1061 = scmp.lt.s32.totalorder %s82, 1
      %s1062 = scalar_select %p1061, %s82, 1
      %s1063 = smul.addr %s1062, 3
      %s1064 = smul.addr %s1063, 8
      %s1065 = scalar_lea.vmem %s1, %s1064
      %p1066 = scmp.lt.s32.totalorder %s82, 1
      %s1067 = scalar_select %p1066, %s82, 1
      %s1068 = smul.addr %s1067, 2
      %s1069 = smul.addr %s1068, 8
      %s1070 = scalar_lea.vmem %s71, %s1069
      %v1072 = vld [vmem:[%s1065] sm:$0xff]
      %v1073 = vld [vmem:[%s1065 + $0x8] sm:$0xff]
      %v1074 = vld [vmem:[%s1065 + $0x10] sm:$0x1]
      %v1075 = vld [vmem:[%s3] sm:$0xf]
      %v1076 = vld [vmem:[%s3 + $0x4] sm:$0xf]
      %v1077 = vld [vmem:[%s3 + $0x8] sm:$0xf]
      %v1078 = vld [vmem:[%s3 + $0xc] sm:$0xf]
      %v1079 = vld [vmem:[%s3 + $0x10] sm:$0xf]
      %v1080 = vld [vmem:[%s3 + $0x14] sm:$0xf]
      %v1081 = vpack.c.bf16 %v1073, %v1072
      %v1082 = vpack.c.bf16 %v1074, %v1074
      %v1083 = vld [vmem:[%s5] sm:$0xff]
      %v1084 = vld [vmem:[%s5 + $0x8] sm:$0xff]
      %v1085 = vld [vmem:[%s5 + $0x10] sm:$0x1]
      %v1092 = vunpack.c.l.b16 %v1075
      %v1093 = vunpack.c.l.b16 %v1076
      %v1094 = vunpack.c.l.b16 %v1077
      %v1095 = vunpack.c.l.b16 %v1078
      %v1096 = vunpack.c.l.b16 %v1079
      %v1097 = vunpack.c.l.b16 %v1080
      %v1098 = vpack.c.b16 %v1093, %v1092
      %v1099 = vpack.c.b16 %v1095, %v1094
      %v1100 = vpack.c.b16 %v1097, %v1096
      %vm1104 = vcmask 392192
      %v1106 = vsel %vm1104, %v1081, 0
      %v1109 = vsel %vm1104, %v1082, 0
      %1111 = vmatprep.subr.bf16.mxu0 0
      %1112 = vmatpush1.bf16.msra.mxu0 %v1098
      %1113 = vmatprep.subr.bf16.mxu0 0
      %1114 = vmatpush1.bf16.msra.mxu0 %v1099
      %1115 = vmatprep.subr.bf16.mxu0 0
      %1116 = vmatpush1.bf16.msra.mxu0 %v1100
      %1117 = vmatprep.subr.bf16.mxu0 0
      %1118 = vmatpush1.bf16.msra.mxu0 0
      %1119 = vmatprep.subr.bf16.mxu0 0
      %1120 = vmatpush1.bf16.msra.mxu0 0
      %1121 = vmatprep.subr.bf16.mxu0 0
      %1122 = vmatpush1.bf16.msra.mxu0 0
      %1123 = vmatprep.subr.bf16.mxu0 0
      %1124 = vmatpush1.bf16.msra.mxu0 0
      %1125 = vmatprep.subr.bf16.mxu0 0
      %1126 = vmatpush1.bf16.msra.mxu0 0
      %1127 = vmatprep.subr.bf16.mxu0 0
      %1128 = vmatpush1.bf16.msra.mxu0 0
      %1129 = vmatprep.subr.bf16.mxu0 0
      %1130 = vmatpush1.bf16.msra.mxu0 0
      %1131 = vmatprep.subr.bf16.mxu0 0
      %1132 = vmatpush1.bf16.msra.mxu0 0
      %1133 = vmatprep.subr.bf16.mxu0 0
      %1134 = vmatpush1.bf16.msra.mxu0 0
      %1135 = vmatprep.subr.bf16.mxu0 0
      %1136 = vmatpush1.bf16.msra.mxu0 0
      %1137 = vmatprep.subr.bf16.mxu0 0
      %1138 = vmatpush1.bf16.msra.mxu0 0
      %1139 = vmatprep.subr.bf16.mxu0 0
      %1140 = vmatpush1.bf16.msra.mxu0 0
      %1141 = vmatprep.subr.bf16.mxu0 0
      %1142 = vmatpush1.bf16.msra.mxu0 0
      %1143 = vmatprep.mubr.bf16.mxu0 0
      %1144 = vmatmul.mubr.bf16.gmra.mrb[0].mxu0 %v1106
      %v1145 = vpop.f32.mrb[0].mxu0
      %v1146 = vadd.f32 %v1083, %v1145
      %v1147 = vpop.f32.mrb[0].mxu0
      %v1148 = vpop.f32.mrb[0].mxu0
      %v1149 = vadd.f32 %v1084, %v1148
      %v1150 = vpop.f32.mrb[0].mxu0
      %1151 = vmatprep.mubr.bf16.mxu0 0
      %1152 = vmatmul.mubr.bf16.gmra.mrb[0].mxu0 %v1109
      %v1153 = vpop.f32.mrb[0].mxu0
      %v1154 = vadd.f32 %v1085, %v1153
      %v1155 = vpop.f32.mrb[0].mxu0
      %v1156 = vpop.f32.mrb[0].mxu0
      %v1157 = vpop.f32.mrb[0].mxu0
      %1158 = vdwg.mxu0
      %v1159 = vld [vmem:[%s7] sm:$0x1]
      %v1160 = vld [vmem:[%s9] sm:$0x1]
      %vm1161 = vcmask 261120
      %v1162 = vsel %vm1161, %v1146, 0.0
      %1163 = vadd.xlane.f32.xlu0 %v1162
      %v1164 = vpop.xlane.xlu0 %1163
      %v1165 = vsel %vm1161, %v1149, 0.0
      %1166 = vadd.xlane.f32.xlu0 %v1165
      %v1167 = vpop.xlane.xlu0 %1166
      %vm1168 = vcmask 253952
      %v1169 = vsel %vm1168, %v1154, 0.0
      %1170 = vadd.xlane.f32.xlu0 %v1169
      %v1171 = vpop.xlane.xlu0 %1170
      %v1172 = vrcp.pop 32.0
      %v1173 = vmul.f32 %v1164, %v1172
      %v1174 = vmul.f32 %v1167, %v1172
      %v1175 = vmul.f32 %v1171, %v1172
      %v1176 = vsub.f32 %v1146, %v1173
      %v1177 = vsub.f32 %v1149, %v1174
      %v1178 = vsub.f32 %v1154, %v1175
      %v1179 = vmul.f32 %v1176, %v1176
      %v1180 = vmul.f32 %v1177, %v1177
      %v1181 = vmul.f32 %v1178, %v1178
      %v1182 = vsel %vm1161, %v1179, 0.0
      %1183 = vadd.xlane.f32.xlu0 %v1182
      %v1184 = vpop.xlane.xlu0 %1183
      %v1185 = vsel %vm1161, %v1180, 0.0
      %1186 = vadd.xlane.f32.xlu0 %v1185
      %v1187 = vpop.xlane.xlu0 %1186
      %v1188 = vsel %vm1168, %v1181, 0.0
      %1189 = vadd.xlane.f32.xlu0 %v1188
      %v1190 = vpop.xlane.xlu0 %1189
      %v1191 = vmul.f32 %v1184, %v1172
      %v1192 = vmul.f32 %v1187, %v1172
      %v1193 = vmul.f32 %v1190, %v1172
      %v1194 = vadd.f32 %v1191, 1e-06
      %v1195 = vadd.f32 %v1192, 1e-06
      %v1196 = vadd.f32 %v1193, 1e-06
      %v1197 = vrsqrt.pop %v1194
      %v1198 = vrsqrt.pop %v1195
      %v1199 = vrsqrt.pop %v1196
      %v1200 = vmul.f32 %v1176, %v1197
      %v1201 = vmul.f32 %v1177, %v1198
      %v1202 = vmul.f32 %v1178, %v1199
      %v1204 = vlaneseq
      %v1205 = vshrl.u32 %v1204, 7
      %v1206 = vsub.s32 0, %v1205
      %v1207 = vrot.slane %v1159, %v1206
      %v1209 = vmul.f32 %v1200, %v1207
      %v1210 = vmul.f32 %v1201, %v1207
      %v1211 = vmul.f32 %v1202, %v1207
      %v1213 = vlaneseq
      %v1214 = vshrl.u32 %v1213, 7
      %v1215 = vsub.s32 0, %v1214
      %v1216 = vrot.slane %v1160, %v1215
      %v1218 = vadd.f32 %v1209, %v1216
      %v1219 = vadd.f32 %v1210, %v1216
      %v1220 = vadd.f32 %v1211, %v1216
      %v1221 = vld [vmem:[%s11] sm:$0xf]
      %v1222 = vld [vmem:[%s11 + $0x4] sm:$0xf]
      %v1223 = vld [vmem:[%s11 + $0x8] sm:$0xf]
      %v1224 = vld [vmem:[%s11 + $0xc] sm:$0xf]
      %v1225 = vpack.c.bf16 %v1219, %v1218
      %v1226 = vpack.c.bf16 %v1220, %v1220
      %v1227 = vld [vmem:[%s13] sm:$0x1]
      %v1229 = vlaneseq
      %v1230 = vshrl.u32 %v1229, 7
      %v1231 = vsub.s32 0, %v1230
      %v1232 = vrot.slane %v1227, %v1231
      %v1238 = vunpack.c.l.b16 %v1221
      %v1239 = vunpack.c.l.b16 %v1222
      %v1240 = vunpack.c.l.b16 %v1223
      %v1241 = vunpack.c.l.b16 %v1224
      %v1242 = vpack.c.b16 %v1239, %v1238
      %v1243 = vpack.c.b16 %v1241, %v1240
      %v1247 = vsel %vm1161, %v1225, 0
      %v1250 = vsel %vm1161, %v1226, 0
      %1252 = vmatprep.subr.bf16.mxu0 0
      %1253 = vmatpush1.bf16.msra.mxu0 %v1242
      %1254 = vmatprep.subr.bf16.mxu0 0
      %1255 = vmatpush1.bf16.msra.mxu0 %v1243
      %1256 = vmatprep.subr.bf16.mxu0 0
      %1257 = vmatpush1.bf16.msra.mxu0 0
      %1258 = vmatprep.subr.bf16.mxu0 0
      %1259 = vmatpush1.bf16.msra.mxu0 0
      %1260 = vmatprep.subr.bf16.mxu0 0
      %1261 = vmatpush1.bf16.msra.mxu0 0
      %1262 = vmatprep.subr.bf16.mxu0 0
      %1263 = vmatpush1.bf16.msra.mxu0 0
      %1264 = vmatprep.subr.bf16.mxu0 0
      %1265 = vmatpush1.bf16.msra.mxu0 0
      %1266 = vmatprep.subr.bf16.mxu0 0
      %1267 = vmatpush1.bf16.msra.mxu0 0
      %1268 = vmatprep.subr.bf16.mxu0 0
      %1269 = vmatpush1.bf16.msra.mxu0 0
      %1270 = vmatprep.subr.bf16.mxu0 0
      %1271 = vmatpush1.bf16.msra.mxu0 0
      %1272 = vmatprep.subr.bf16.mxu0 0
      %1273 = vmatpush1.bf16.msra.mxu0 0
      %1274 = vmatprep.subr.bf16.mxu0 0
      %1275 = vmatpush1.bf16.msra.mxu0 0
      %1276 = vmatprep.subr.bf16.mxu0 0
      %1277 = vmatpush1.bf16.msra.mxu0 0
      %1278 = vmatprep.subr.bf16.mxu0 0
      %1279 = vmatpush1.bf16.msra.mxu0 0
      %1280 = vmatprep.subr.bf16.mxu0 0
      %1281 = vmatpush1.bf16.msra.mxu0 0
      %1282 = vmatprep.subr.bf16.mxu0 0
      %1283 = vmatpush1.bf16.msra.mxu0 0
      %1284 = vmatprep.mubr.bf16.mxu0 0
      %1285 = vmatmul.mubr.bf16.gmra.mrb[0].mxu0 %v1247
      %v1286 = vpop.f32.mrb[0].mxu0
      %v1287 = vadd.f32 %v1232, %v1286
      %v1288 = vpop.f32.mrb[0].mxu0
      %v1289 = vpop.f32.mrb[0].mxu0
      %v1290 = vadd.f32 %v1232, %v1289
      %v1291 = vpop.f32.mrb[0].mxu0
      %1292 = vmatprep.mubr.bf16.mxu0 0
      %1293 = vmatmul.mubr.bf16.gmra.mrb[0].mxu0 %v1250
      %v1294 = vpop.f32.mrb[0].mxu0
      %v1295 = vadd.f32 %v1232, %v1294
      %v1296 = vpop.f32.mrb[0].mxu0
      %v1297 = vpop.f32.mrb[0].mxu0
      %v1298 = vpop.f32.mrb[0].mxu0
      %1299 = vdwg.mxu0
      %v1300 = vld [vmem:[%s15] sm:$0xf]
      %v1301 = vld [vmem:[%s15 + $0x4] sm:$0xf]
      %v1302 = vld [vmem:[%s15 + $0x8] sm:$0xf]
      %v1303 = vld [vmem:[%s15 + $0xc] sm:$0xf]
      %v1304 = vpack.c.bf16 %v1290, %v1287
      %v1305 = vpack.c.bf16 %v1295, %v1295
      %1308 = vrot.lane.b32.xlu0 %v1304, 96
      %v1309 = vpop.permute.xlu0 %1308
      %1310 = vrot.lane.b32.xlu0 %v1305, 96
      %v1311 = vpop.permute.xlu0 %1310
      %vm1312 = vcmask 130048
      %v1314 = vsel %vm1312, %v1304, 0
      %v1317 = vsel %vm1312, %v1305, 0
      %v1320 = vsel %vm1312, %v1309, 0
      %v1323 = vsel %vm1312, %v1311, 0
      %1325 = vmatprep.subr.bf16.mxu0 0
      %1326 = vmatpush1.bf16.xpose.msra.mxu0 %v1320
      %1327 = vmatprep.subr.bf16.mxu0 0
      %1328 = vmatpush1.bf16.xpose.msra.mxu0 %v1323
      %1329 = vmatprep.subr.bf16.mxu0 0
      %1330 = vmatpush1.bf16.xpose.msra.mxu0 0
      %1331 = vmatprep.subr.bf16.mxu0 0
      %1332 = vmatpush1.bf16.xpose.msra.mxu0 0
      %1333 = vmatprep.subr.bf16.mxu0 0
      %1334 = vmatpush1.bf16.xpose.msra.mxu0 0
      %1335 = vmatprep.subr.bf16.mxu0 0
      %1336 = vmatpush1.bf16.xpose.msra.mxu0 0
      %1337 = vmatprep.subr.bf16.mxu0 0
      %1338 = vmatpush1.bf16.xpose.msra.mxu0 0
      %1339 = vmatprep.subr.bf16.mxu0 0
      %1340 = vmatpush1.bf16.xpose.msra.mxu0 0
      %1341 = vmatprep.subr.bf16.mxu0 0
      %1342 = vmatpush1.bf16.xpose.msra.mxu0 0
      %1343 = vmatprep.subr.bf16.mxu0 0
      %1344 = vmatpush1.bf16.xpose.msra.mxu0 0
      %1345 = vmatprep.subr.bf16.mxu0 0
      %1346 = vmatpush1.bf16.xpose.msra.mxu0 0
      %1347 = vmatprep.subr.bf16.mxu0 0
      %1348 = vmatpush1.bf16.xpose.msra.mxu0 0
      %1349 = vmatprep.subr.bf16.mxu0 0
      %1350 = vmatpush1.bf16.xpose.msra.mxu0 0
      %1351 = vmatprep.subr.bf16.mxu0 0
      %1352 = vmatpush1.bf16.xpose.msra.mxu0 0
      %1353 = vmatprep.subr.bf16.mxu0 0
      %1354 = vmatpush1.bf16.xpose.msra.mxu0 0
      %1355 = vmatprep.subr.bf16.mxu0 0
      %1356 = vmatpush1.bf16.xpose.msra.mxu0 0
      %1357 = vmatprep.mubr.bf16.mxu0 0
      %1358 = vmatmul.mubr.bf16.gmra.mrb[0].mxu0 %v1314
      %v1359 = vpop.f32.mrb[0].mxu0
      %v1360 = vadd.f32 0.0, %v1359
      %v1361 = vpop.f32.mrb[0].mxu0
      %v1362 = vpop.f32.mrb[0].mxu0
      %v1363 = vadd.f32 0.0, %v1362
      %v1364 = vpop.f32.mrb[0].mxu0
      %1365 = vmatprep.mubr.bf16.mxu0 0
      %1366 = vmatmul.mubr.bf16.gmra.mrb[0].mxu0 %v1317
      %v1367 = vpop.f32.mrb[0].mxu0
      %v1368 = vadd.f32 0.0, %v1367
      %v1369 = vpop.f32.mrb[0].mxu0
      %v1370 = vpop.f32.mrb[0].mxu0
      %v1371 = vpop.f32.mrb[0].mxu0
      %1372 = vdwg.mxu0
      %v1373 = vmul.f32 %v1360, 0.25
      %v1374 = vmul.f32 %v1363, 0.25
      %v1375 = vmul.f32 %v1368, 0.25
      %vm1376 = vcmask 138240
      %v1377 = vsel %vm1376, %v1373, -inf
      %1378 = vmax.xlane.f32.xlu0 %v1377
      %v1379 = vpop.xlane.xlu0 %1378
      %v1380 = vsel %vm1376, %v1374, -inf
      %1381 = vmax.xlane.f32.xlu0 %v1380
      %v1382 = vpop.xlane.xlu0 %1381
      %vm1383 = vcmask 131072
      %v1384 = vsel %vm1383, %v1375, -inf
      %1385 = vmax.xlane.f32.xlu0 %v1384
      %v1386 = vpop.xlane.xlu0 %1385
      %v1387 = vsub.f32 %v1373, %v1379
      %v1388 = vsub.f32 %v1374, %v1382
      %v1389 = vsub.f32 %v1375, %v1386
      %v1390 = vmul.f32 %v1387, 1.442695
      %v1391 = vpow.pop %v1390
      %v1392 = vmul.f32 %v1388, 1.442695
      %v1393 = vpow.pop %v1392
      %v1394 = vmul.f32 %v1389, 1.442695
      %v1395 = vpow.pop %v1394
      %v1396 = vsel %vm1376, %v1391, 0.0
      %1397 = vadd.xlane.f32.xlu0 %v1396
      %v1398 = vpop.xlane.xlu0 %1397
      %v1399 = vsel %vm1376, %v1393, 0.0
      %1400 = vadd.xlane.f32.xlu0 %v1399
      %v1401 = vpop.xlane.xlu0 %1400
      %v1402 = vsel %vm1383, %v1395, 0.0
      %1403 = vadd.xlane.f32.xlu0 %v1402
      %v1404 = vpop.xlane.xlu0 %1403
      %v1405 = vrcp.pop %v1398
      %v1406 = vmul.f32 %v1391, %v1405
      %v1407 = vrcp.pop %v1401
      %v1408 = vmul.f32 %v1393, %v1407
      %v1409 = vrcp.pop %v1404
      %v1410 = vmul.f32 %v1395, %v1409
      %v1411 = vpack.c.bf16 %v1408, %v1406
      %v1412 = vpack.c.bf16 %v1410, %v1410
      %1413 = vrot.lane.b32.xlu0 %v1304, 64
      %v1414 = vpop.permute.xlu0 %1413
      %1415 = vrot.lane.b32.xlu0 %v1305, 64
      %v1416 = vpop.permute.xlu0 %1415
      %v1419 = vsel %vm1376, %v1411, 0
      %v1422 = vsel %vm1376, %v1412, 0
      %vm1424 = vcmask 1040384
      %v1425 = vsel 0, 4294967295, 65535
      %v1426 = vsel %vm1424, %v1425, 0
      %v1428 = vand.u32 %v1416, %v1426
      %1430 = vmatprep.subr.bf16.mxu0 0
      %1431 = vmatpush1.bf16.msra.mxu0 %v1414
      %1432 = vmatprep.subr.bf16.mxu0 0
      %1433 = vmatpush1.bf16.msra.mxu0 %v1428
      %1434 = vmatprep.subr.bf16.mxu0 0
      %1435 = vmatpush1.bf16.msra.mxu0 0
      %1436 = vmatprep.subr.bf16.mxu0 0
      %1437 = vmatpush1.bf16.msra.mxu0 0
      %1438 = vmatprep.subr.bf16.mxu0 0
      %1439 = vmatpush1.bf16.msra.mxu0 0
      %1440 = vmatprep.subr.bf16.mxu0 0
      %1441 = vmatpush1.bf16.msra.mxu0 0
      %1442 = vmatprep.subr.bf16.mxu0 0
      %1443 = vmatpush1.bf16.msra.mxu0 0
      %1444 = vmatprep.subr.bf16.mxu0 0
      %1445 = vmatpush1.bf16.msra.mxu0 0
      %1446 = vmatprep.subr.bf16.mxu0 0
      %1447 = vmatpush1.bf16.msra.mxu0 0
      %1448 = vmatprep.subr.bf16.mxu0 0
      %1449 = vmatpush1.bf16.msra.mxu0 0
      %1450 = vmatprep.subr.bf16.mxu0 0
      %1451 = vmatpush1.bf16.msra.mxu0 0
      %1452 = vmatprep.subr.bf16.mxu0 0
      %1453 = vmatpush1.bf16.msra.mxu0 0
      %1454 = vmatprep.subr.bf16.mxu0 0
      %1455 = vmatpush1.bf16.msra.mxu0 0
      %1456 = vmatprep.subr.bf16.mxu0 0
      %1457 = vmatpush1.bf16.msra.mxu0 0
      %1458 = vmatprep.subr.bf16.mxu0 0
      %1459 = vmatpush1.bf16.msra.mxu0 0
      %1460 = vmatprep.subr.bf16.mxu0 0
      %1461 = vmatpush1.bf16.msra.mxu0 0
      %1462 = vmatprep.mubr.bf16.mxu0 0
      %1463 = vmatmul.mubr.bf16.gmra.mrb[0].mxu0 %v1419
      %v1464 = vpop.f32.mrb[0].mxu0
      %v1465 = vadd.f32 0.0, %v1464
      %v1466 = vpop.f32.mrb[0].mxu0
      %v1467 = vpop.f32.mrb[0].mxu0
      %v1468 = vadd.f32 0.0, %v1467
      %v1469 = vpop.f32.mrb[0].mxu0
      %1470 = vmatprep.mubr.bf16.mxu0 0
      %1471 = vmatmul.mubr.bf16.gmra.mrb[0].mxu0 %v1422
      %v1472 = vpop.f32.mrb[0].mxu0
      %v1473 = vadd.f32 0.0, %v1472
      %v1474 = vpop.f32.mrb[0].mxu0
      %v1475 = vpop.f32.mrb[0].mxu0
      %v1476 = vpop.f32.mrb[0].mxu0
      %1477 = vdwg.mxu0
      %v1478 = vpack.c.bf16 %v1468, %v1465
      %v1479 = vpack.c.bf16 %v1473, %v1473
      %1480 = vrot.lane.b32.xlu0 %v1304, 112
      %v1481 = vpop.permute.xlu0 %1480
      %1482 = vrot.lane.b32.xlu0 %v1305, 112
      %v1483 = vpop.permute.xlu0 %1482
      %1484 = vrot.lane.b32.xlu0 %v1304, 80
      %v1485 = vpop.permute.xlu0 %1484
      %1486 = vrot.lane.b32.xlu0 %v1305, 80
      %v1487 = vpop.permute.xlu0 %1486
      %v1489 = vsel %vm1312, %v1481, 0
      %v1492 = vsel %vm1312, %v1483, 0
      %v1495 = vsel %vm1312, %v1485, 0
      %v1498 = vsel %vm1312, %v1487, 0
      %1500 = vmatprep.subr.bf16.mxu0 0
      %1501 = vmatpush1.bf16.xpose.msra.mxu0 %v1495
      %1502 = vmatprep.subr.bf16.mxu0 0
      %1503 = vmatpush1.bf16.xpose.msra.mxu0 %v1498
      %1504 = vmatprep.subr.bf16.mxu0 0
      %1505 = vmatpush1.bf16.xpose.msra.mxu0 0
      %1506 = vmatprep.subr.bf16.mxu0 0
      %1507 = vmatpush1.bf16.xpose.msra.mxu0 0
      %1508 = vmatprep.subr.bf16.mxu0 0
      %1509 = vmatpush1.bf16.xpose.msra.mxu0 0
      %1510 = vmatprep.subr.bf16.mxu0 0
      %1511 = vmatpush1.bf16.xpose.msra.mxu0 0
      %1512 = vmatprep.subr.bf16.mxu0 0
      %1513 = vmatpush1.bf16.xpose.msra.mxu0 0
      %1514 = vmatprep.subr.bf16.mxu0 0
      %1515 = vmatpush1.bf16.xpose.msra.mxu0 0
      %1516 = vmatprep.subr.bf16.mxu0 0
      %1517 = vmatpush1.bf16.xpose.msra.mxu0 0
      %1518 = vmatprep.subr.bf16.mxu0 0
      %1519 = vmatpush1.bf16.xpose.msra.mxu0 0
      %1520 = vmatprep.subr.bf16.mxu0 0
      %1521 = vmatpush1.bf16.xpose.msra.mxu0 0
      %1522 = vmatprep.subr.bf16.mxu0 0
      %1523 = vmatpush1.bf16.xpose.msra.mxu0 0
      %1524 = vmatprep.subr.bf16.mxu0 0
      %1525 = vmatpush1.bf16.xpose.msra.mxu0 0
      %1526 = vmatprep.subr.bf16.mxu0 0
      %1527 = vmatpush1.bf16.xpose.msra.mxu0 0
      %1528 = vmatprep.subr.bf16.mxu0 0
      %1529 = vmatpush1.bf16.xpose.msra.mxu0 0
      %1530 = vmatprep.subr.bf16.mxu0 0
      %1531 = vmatpush1.bf16.xpose.msra.mxu0 0
      %1532 = vmatprep.mubr.bf16.mxu0 0
      %1533 = vmatmul.mubr.bf16.gmra.mrb[0].mxu0 %v1489
      %v1534 = vpop.f32.mrb[0].mxu0
      %v1535 = vadd.f32 0.0, %v1534
      %v1536 = vpop.f32.mrb[0].mxu0
      %v1537 = vpop.f32.mrb[0].mxu0
      %v1538 = vadd.f32 0.0, %v1537
      %v1539 = vpop.f32.mrb[0].mxu0
      %1540 = vmatprep.mubr.bf16.mxu0 0
      %1541 = vmatmul.mubr.bf16.gmra.mrb[0].mxu0 %v1492
      %v1542 = vpop.f32.mrb[0].mxu0
      %v1543 = vadd.f32 0.0, %v1542
      %v1544 = vpop.f32.mrb[0].mxu0
      %v1545 = vpop.f32.mrb[0].mxu0
      %v1546 = vpop.f32.mrb[0].mxu0
      %1547 = vdwg.mxu0
      %v1548 = vmul.f32 %v1535, 0.25
      %v1549 = vmul.f32 %v1538, 0.25
      %v1550 = vmul.f32 %v1543, 0.25
      %v1551 = vsel %vm1376, %v1548, -inf
      %1552 = vmax.xlane.f32.xlu0 %v1551
      %v1553 = vpop.xlane.xlu0 %1552
      %v1554 = vsel %vm1376, %v1549, -inf
      %1555 = vmax.xlane.f32.xlu0 %v1554
      %v1556 = vpop.xlane.xlu0 %1555
      %v1557 = vsel %vm1383, %v1550, -inf
      %1558 = vmax.xlane.f32.xlu0 %v1557
      %v1559 = vpop.xlane.xlu0 %1558
      %v1560 = vsub.f32 %v1548, %v1553
      %v1561 = vsub.f32 %v1549, %v1556
      %v1562 = vsub.f32 %v1550, %v1559
      %v1563 = vmul.f32 %v1560, 1.442695
      %v1564 = vpow.pop %v1563
      %v1565 = vmul.f32 %v1561, 1.442695
      %v1566 = vpow.pop %v1565
      %v1567 = vmul.f32 %v1562, 1.442695
      %v1568 = vpow.pop %v1567
      %v1569 = vsel %vm1376, %v1564, 0.0
      %1570 = vadd.xlane.f32.xlu0 %v1569
      %v1571 = vpop.xlane.xlu0 %1570
      %v1572 = vsel %vm1376, %v1566, 0.0
      %1573 = vadd.xlane.f32.xlu0 %v1572
      %v1574 = vpop.xlane.xlu0 %1573
      %v1575 = vsel %vm1383, %v1568, 0.0
      %1576 = vadd.xlane.f32.xlu0 %v1575
      %v1577 = vpop.xlane.xlu0 %1576
      %v1578 = vrcp.pop %v1571
      %v1579 = vmul.f32 %v1564, %v1578
      %v1580 = vrcp.pop %v1574
      %v1581 = vmul.f32 %v1566, %v1580
      %v1582 = vrcp.pop %v1577
      %v1583 = vmul.f32 %v1568, %v1582
      %v1584 = vpack.c.bf16 %v1581, %v1579
      %v1585 = vpack.c.bf16 %v1583, %v1583
      %1586 = vrot.lane.b32.xlu0 %v1304, 48
      %v1587 = vpop.permute.xlu0 %1586
      %1588 = vrot.lane.b32.xlu0 %v1305, 48
      %v1589 = vpop.permute.xlu0 %1588
      %v1592 = vsel %vm1376, %v1584, 0
      %v1595 = vsel %vm1376, %v1585, 0
      %v1598 = vand.u32 %v1589, %v1426
      %1600 = vmatprep.subr.bf16.mxu0 0
      %1601 = vmatpush1.bf16.msra.mxu0 %v1587
      %1602 = vmatprep.subr.bf16.mxu0 0
      %1603 = vmatpush1.bf16.msra.mxu0 %v1598
      %1604 = vmatprep.subr.bf16.mxu0 0
      %1605 = vmatpush1.bf16.msra.mxu0 0
      %1606 = vmatprep.subr.bf16.mxu0 0
      %1607 = vmatpush1.bf16.msra.mxu0 0
      %1608 = vmatprep.subr.bf16.mxu0 0
      %1609 = vmatpush1.bf16.msra.mxu0 0
      %1610 = vmatprep.subr.bf16.mxu0 0
      %1611 = vmatpush1.bf16.msra.mxu0 0
      %1612 = vmatprep.subr.bf16.mxu0 0
      %1613 = vmatpush1.bf16.msra.mxu0 0
      %1614 = vmatprep.subr.bf16.mxu0 0
      %1615 = vmatpush1.bf16.msra.mxu0 0
      %1616 = vmatprep.subr.bf16.mxu0 0
      %1617 = vmatpush1.bf16.msra.mxu0 0
      %1618 = vmatprep.subr.bf16.mxu0 0
      %1619 = vmatpush1.bf16.msra.mxu0 0
      %1620 = vmatprep.subr.bf16.mxu0 0
      %1621 = vmatpush1.bf16.msra.mxu0 0
      %1622 = vmatprep.subr.bf16.mxu0 0
      %1623 = vmatpush1.bf16.msra.mxu0 0
      %1624 = vmatprep.subr.bf16.mxu0 0
      %1625 = vmatpush1.bf16.msra.mxu0 0
      %1626 = vmatprep.subr.bf16.mxu0 0
      %1627 = vmatpush1.bf16.msra.mxu0 0
      %1628 = vmatprep.subr.bf16.mxu0 0
      %1629 = vmatpush1.bf16.msra.mxu0 0
      %1630 = vmatprep.subr.bf16.mxu0 0
      %1631 = vmatpush1.bf16.msra.mxu0 0
      %1632 = vmatprep.mubr.bf16.mxu0 0
      %1633 = vmatmul.mubr.bf16.gmra.mrb[0].mxu0 %v1592
      %v1634 = vpop.f32.mrb[0].mxu0
      %v1635 = vadd.f32 0.0, %v1634
      %v1636 = vpop.f32.mrb[0].mxu0
      %v1637 = vpop.f32.mrb[0].mxu0
      %v1638 = vadd.f32 0.0, %v1637
      %v1639 = vpop.f32.mrb[0].mxu0
      %1640 = vmatprep.mubr.bf16.mxu0 0
      %1641 = vmatmul.mubr.bf16.gmra.mrb[0].mxu0 %v1595
      %v1642 = vpop.f32.mrb[0].mxu0
      %v1643 = vadd.f32 0.0, %v1642
      %v1644 = vpop.f32.mrb[0].mxu0
      %v1645 = vpop.f32.mrb[0].mxu0
      %v1646 = vpop.f32.mrb[0].mxu0
      %1647 = vdwg.mxu0
      %v1648 = vpack.c.bf16 %v1638, %v1635
      %v1649 = vpack.c.bf16 %v1643, %v1643
      %v1652 = vunpack.c.l.b16 %v1302
      %v1653 = vunpack.c.l.b16 %v1303
      %v1654 = vpack.c.b16 %v1653, %v1652
      %v1657 = vsel %vm1312, %v1648, 0
      %v1660 = vsel %vm1312, %v1649, 0
      %1662 = vmatprep.subr.bf16.mxu0 0
      %1663 = vmatpush1.bf16.msra.mxu0 %v1654
      %1664 = vmatprep.subr.bf16.mxu0 0
      %1665 = vmatpush1.bf16.msra.mxu0 0
      %1666 = vmatprep.subr.bf16.mxu0 0
      %1667 = vmatpush1.bf16.msra.mxu0 0
      %1668 = vmatprep.subr.bf16.mxu0 0
      %1669 = vmatpush1.bf16.msra.mxu0 0
      %1670 = vmatprep.subr.bf16.mxu0 0
      %1671 = vmatpush1.bf16.msra.mxu0 0
      %1672 = vmatprep.subr.bf16.mxu0 0
      %1673 = vmatpush1.bf16.msra.mxu0 0
      %1674 = vmatprep.subr.bf16.mxu0 0
      %1675 = vmatpush1.bf16.msra.mxu0 0
      %1676 = vmatprep.subr.bf16.mxu0 0
      %1677 = vmatpush1.bf16.msra.mxu0 0
      %1678 = vmatprep.subr.bf16.mxu0 0
      %1679 = vmatpush1.bf16.msra.mxu0 0
      %1680 = vmatprep.subr.bf16.mxu0 0
      %1681 = vmatpush1.bf16.msra.mxu0 0
      %1682 = vmatprep.subr.bf16.mxu0 0
      %1683 = vmatpush1.bf16.msra.mxu0 0
      %1684 = vmatprep.subr.bf16.mxu0 0
      %1685 = vmatpush1.bf16.msra.mxu0 0
      %1686 = vmatprep.subr.bf16.mxu0 0
      %1687 = vmatpush1.bf16.msra.mxu0 0
      %1688 = vmatprep.subr.bf16.mxu0 0
      %1689 = vmatpush1.bf16.msra.mxu0 0
      %1690 = vmatprep.subr.bf16.mxu0 0
      %1691 = vmatpush1.bf16.msra.mxu0 0
      %1692 = vmatprep.subr.bf16.mxu0 0
      %1693 = vmatpush1.bf16.msra.mxu0 0
      %1694 = vmatprep.mubr.bf16.mxu0 0
      %1695 = vmatmul.mubr.bf16.gmra.mrb[0].mxu0 %v1657
      %v1696 = vpop.f32.mrb[0].mxu0
      %v1697 = vadd.f32 0.0, %v1696
      %v1698 = vpop.f32.mrb[0].mxu0
      %v1699 = vpop.f32.mrb[0].mxu0
      %v1700 = vadd.f32 0.0, %v1699
      %v1701 = vpop.f32.mrb[0].mxu0
      %1702 = vmatprep.mubr.bf16.mxu0 0
      %1703 = vmatmul.mubr.bf16.gmra.mrb[0].mxu0 %v1660
      %v1704 = vpop.f32.mrb[0].mxu0
      %v1705 = vadd.f32 0.0, %v1704
      %v1706 = vpop.f32.mrb[0].mxu0
      %v1707 = vpop.f32.mrb[0].mxu0
      %v1708 = vpop.f32.mrb[0].mxu0
      %1709 = vdwg.mxu0
      %v1712 = vunpack.c.l.b16 %v1300
      %v1713 = vunpack.c.l.b16 %v1301
      %v1714 = vpack.c.b16 %v1713, %v1712
      %v1717 = vsel %vm1312, %v1478, 0
      %v1720 = vsel %vm1312, %v1479, 0
      %1722 = vmatprep.subr.bf16.mxu0 0
      %1723 = vmatpush1.bf16.msra.mxu0 %v1714
      %1724 = vmatprep.subr.bf16.mxu0 0
      %1725 = vmatpush1.bf16.msra.mxu0 0
      %1726 = vmatprep.subr.bf16.mxu0 0
      %1727 = vmatpush1.bf16.msra.mxu0 0
      %1728 = vmatprep.subr.bf16.mxu0 0
      %1729 = vmatpush1.bf16.msra.mxu0 0
      %1730 = vmatprep.subr.bf16.mxu0 0
      %1731 = vmatpush1.bf16.msra.mxu0 0
      %1732 = vmatprep.subr.bf16.mxu0 0
      %1733 = vmatpush1.bf16.msra.mxu0 0
      %1734 = vmatprep.subr.bf16.mxu0 0
      %1735 = vmatpush1.bf16.msra.mxu0 0
      %1736 = vmatprep.subr.bf16.mxu0 0
      %1737 = vmatpush1.bf16.msra.mxu0 0
      %1738 = vmatprep.subr.bf16.mxu0 0
      %1739 = vmatpush1.bf16.msra.mxu0 0
      %1740 = vmatprep.subr.bf16.mxu0 0
      %1741 = vmatpush1.bf16.msra.mxu0 0
      %1742 = vmatprep.subr.bf16.mxu0 0
      %1743 = vmatpush1.bf16.msra.mxu0 0
      %1744 = vmatprep.subr.bf16.mxu0 0
      %1745 = vmatpush1.bf16.msra.mxu0 0
      %1746 = vmatprep.subr.bf16.mxu0 0
      %1747 = vmatpush1.bf16.msra.mxu0 0
      %1748 = vmatprep.subr.bf16.mxu0 0
      %1749 = vmatpush1.bf16.msra.mxu0 0
      %1750 = vmatprep.subr.bf16.mxu0 0
      %1751 = vmatpush1.bf16.msra.mxu0 0
      %1752 = vmatprep.subr.bf16.mxu0 0
      %1753 = vmatpush1.bf16.msra.mxu0 0
      %1754 = vmatprep.mubr.bf16.mxu0 0
      %1755 = vmatmul.mubr.bf16.gmra.mrb[0].mxu0 %v1717
      %v1756 = vpop.f32.mrb[0].mxu0
      %v1757 = vadd.f32 %v1697, %v1756
      %v1758 = vpop.f32.mrb[0].mxu0
      %v1759 = vpop.f32.mrb[0].mxu0
      %v1760 = vadd.f32 %v1700, %v1759
      %v1761 = vpop.f32.mrb[0].mxu0
      %1762 = vmatprep.mubr.bf16.mxu0 0
      %1763 = vmatmul.mubr.bf16.gmra.mrb[0].mxu0 %v1720
      %v1764 = vpop.f32.mrb[0].mxu0
      %v1765 = vadd.f32 %v1705, %v1764
      %v1766 = vpop.f32.mrb[0].mxu0
      %v1767 = vpop.f32.mrb[0].mxu0
      %v1768 = vpop.f32.mrb[0].mxu0
      %1769 = vdwg.mxu0
      %v1770 = vadd.f32 %v1146, %v1757
      %v1771 = vadd.f32 %v1149, %v1760
      %v1772 = vadd.f32 %v1154, %v1765
      %v1773 = vld [vmem:[%s17] sm:$0x1]
      %v1775 = vlaneseq
      %v1776 = vshrl.u32 %v1775, 7
      %v1777 = vsub.s32 0, %v1776
      %v1778 = vrot.slane %v1773, %v1777
      %v1780 = vadd.f32 %v1770, %v1778
      %v1781 = vadd.f32 %v1771, %v1778
      %v1782 = vadd.f32 %v1772, %v1778
      %v1783 = vld [vmem:[%s19] sm:$0x1]
      %v1784 = vld [vmem:[%s21] sm:$0x1]
      %v1785 = vsel %vm1161, %v1780, 0.0
      %1786 = vadd.xlane.f32.xlu0 %v1785
      %v1787 = vpop.xlane.xlu0 %1786
      %v1788 = vsel %vm1161, %v1781, 0.0
      %1789 = vadd.xlane.f32.xlu0 %v1788
      %v1790 = vpop.xlane.xlu0 %1789
      %v1791 = vsel %vm1168, %v1782, 0.0
      %1792 = vadd.xlane.f32.xlu0 %v1791
      %v1793 = vpop.xlane.xlu0 %1792
      %v1794 = vmul.f32 %v1787, %v1172
      %v1795 = vmul.f32 %v1790, %v1172
      %v1796 = vmul.f32 %v1793, %v1172
      %v1797 = vsub.f32 %v1780, %v1794
      %v1798 = vsub.f32 %v1781, %v1795
      %v1799 = vsub.f32 %v1782, %v1796
      %v1800 = vmul.f32 %v1797, %v1797
      %v1801 = vmul.f32 %v1798, %v1798
      %v1802 = vmul.f32 %v1799, %v1799
      %v1803 = vsel %vm1161, %v1800, 0.0
      %1804 = vadd.xlane.f32.xlu0 %v1803
      %v1805 = vpop.xlane.xlu0 %1804
      %v1806 = vsel %vm1161, %v1801, 0.0
      %1807 = vadd.xlane.f32.xlu0 %v1806
      %v1808 = vpop.xlane.xlu0 %1807
      %v1809 = vsel %vm1168, %v1802, 0.0
      %1810 = vadd.xlane.f32.xlu0 %v1809
      %v1811 = vpop.xlane.xlu0 %1810
      %v1812 = vmul.f32 %v1805, %v1172
      %v1813 = vmul.f32 %v1808, %v1172
      %v1814 = vmul.f32 %v1811, %v1172
      %v1815 = vadd.f32 %v1812, 1e-06
      %v1816 = vadd.f32 %v1813, 1e-06
      %v1817 = vadd.f32 %v1814, 1e-06
      %v1818 = vrsqrt.pop %v1815
      %v1819 = vrsqrt.pop %v1816
      %v1820 = vrsqrt.pop %v1817
      %v1821 = vmul.f32 %v1797, %v1818
      %v1822 = vmul.f32 %v1798, %v1819
      %v1823 = vmul.f32 %v1799, %v1820
      %v1825 = vlaneseq
      %v1826 = vshrl.u32 %v1825, 7
      %v1827 = vsub.s32 0, %v1826
      %v1828 = vrot.slane %v1783, %v1827
      %v1830 = vmul.f32 %v1821, %v1828
      %v1831 = vmul.f32 %v1822, %v1828
      %v1832 = vmul.f32 %v1823, %v1828
      %v1834 = vlaneseq
      %v1835 = vshrl.u32 %v1834, 7
      %v1836 = vsub.s32 0, %v1835
      %v1837 = vrot.slane %v1784, %v1836
      %v1839 = vadd.f32 %v1830, %v1837
      %v1840 = vadd.f32 %v1831, %v1837
      %v1841 = vadd.f32 %v1832, %v1837
      %v1842 = vld [vmem:[%s23] sm:$0xf]
      %v1843 = vld [vmem:[%s23 + $0x4] sm:$0xf]
      %v1844 = vld [vmem:[%s23 + $0x8] sm:$0xf]
      %v1845 = vld [vmem:[%s23 + $0xc] sm:$0xf]
      %v1846 = vpack.c.bf16 %v1840, %v1839
      %v1847 = vpack.c.bf16 %v1841, %v1841
      %v1848 = vld [vmem:[%s25] sm:$0x1]
      %v1850 = vlaneseq
      %v1851 = vshrl.u32 %v1850, 7
      %v1852 = vsub.s32 0, %v1851
      %v1853 = vrot.slane %v1848, %v1852
      %v1859 = vunpack.c.l.b16 %v1842
      %v1860 = vunpack.c.l.b16 %v1843
      %v1861 = vunpack.c.l.b16 %v1844
      %v1862 = vunpack.c.l.b16 %v1845
      %v1863 = vpack.c.b16 %v1860, %v1859
      %v1864 = vpack.c.b16 %v1862, %v1861
      %v1868 = vsel %vm1161, %v1846, 0
      %v1871 = vsel %vm1161, %v1847, 0
      %1873 = vmatprep.subr.bf16.mxu0 0
      %1874 = vmatpush1.bf16.msra.mxu0 %v1863
      %1875 = vmatprep.subr.bf16.mxu0 0
      %1876 = vmatpush1.bf16.msra.mxu0 %v1864
      %1877 = vmatprep.subr.bf16.mxu0 0
      %1878 = vmatpush1.bf16.msra.mxu0 0
      %1879 = vmatprep.subr.bf16.mxu0 0
      %1880 = vmatpush1.bf16.msra.mxu0 0
      %1881 = vmatprep.subr.bf16.mxu0 0
      %1882 = vmatpush1.bf16.msra.mxu0 0
      %1883 = vmatprep.subr.bf16.mxu0 0
      %1884 = vmatpush1.bf16.msra.mxu0 0
      %1885 = vmatprep.subr.bf16.mxu0 0
      %1886 = vmatpush1.bf16.msra.mxu0 0
      %1887 = vmatprep.subr.bf16.mxu0 0
      %1888 = vmatpush1.bf16.msra.mxu0 0
      %1889 = vmatprep.subr.bf16.mxu0 0
      %1890 = vmatpush1.bf16.msra.mxu0 0
      %1891 = vmatprep.subr.bf16.mxu0 0
      %1892 = vmatpush1.bf16.msra.mxu0 0
      %1893 = vmatprep.subr.bf16.mxu0 0
      %1894 = vmatpush1.bf16.msra.mxu0 0
      %1895 = vmatprep.subr.bf16.mxu0 0
      %1896 = vmatpush1.bf16.msra.mxu0 0
      %1897 = vmatprep.subr.bf16.mxu0 0
      %1898 = vmatpush1.bf16.msra.mxu0 0
      %1899 = vmatprep.subr.bf16.mxu0 0
      %1900 = vmatpush1.bf16.msra.mxu0 0
      %1901 = vmatprep.subr.bf16.mxu0 0
      %1902 = vmatpush1.bf16.msra.mxu0 0
      %1903 = vmatprep.subr.bf16.mxu0 0
      %1904 = vmatpush1.bf16.msra.mxu0 0
      %1905 = vmatprep.mubr.bf16.mxu0 0
      %1906 = vmatmul.mubr.bf16.gmra.mrb[0].mxu0 %v1868
      %v1907 = vpop.f32.mrb[0].mxu0
      %v1908 = vadd.f32 %v1853, %v1907
      %v1909 = vpop.f32.mrb[0].mxu0
      %v1910 = vpop.f32.mrb[0].mxu0
      %v1911 = vadd.f32 %v1853, %v1910
      %v1912 = vpop.f32.mrb[0].mxu0
      %1913 = vmatprep.mubr.bf16.mxu0 0
      %1914 = vmatmul.mubr.bf16.gmra.mrb[0].mxu0 %v1871
      %v1915 = vpop.f32.mrb[0].mxu0
      %v1916 = vadd.f32 %v1853, %v1915
      %v1917 = vpop.f32.mrb[0].mxu0
      %v1918 = vpop.f32.mrb[0].mxu0
      %v1919 = vpop.f32.mrb[0].mxu0
      %1920 = vdwg.mxu0
      %v1921 = vmul.f32 %v1908, 0.5
      %v1922 = vmul.f32 %v1911, 0.5
      %v1923 = vmul.f32 %v1916, 0.5
      %v1924 = vmul.f32 %v1908, 0.044715
      %v1925 = vmul.f32 %v1911, 0.044715
      %v1926 = vmul.f32 %v1916, 0.044715
      %v1927 = vmul.f32 %v1924, %v1908
      %v1928 = vmul.f32 %v1925, %v1911
      %v1929 = vmul.f32 %v1926, %v1916
      %v1930 = vmul.f32 %v1927, %v1908
      %v1931 = vmul.f32 %v1928, %v1911
      %v1932 = vmul.f32 %v1929, %v1916
      %v1933 = vadd.f32 %v1908, %v1930
      %v1934 = vadd.f32 %v1911, %v1931
      %v1935 = vadd.f32 %v1916, %v1932
      %v1936 = vmul.f32 %v1933, 0.7978846
      %v1937 = vmul.f32 %v1934, 0.7978846
      %v1938 = vmul.f32 %v1935, 0.7978846
      %v1939 = vtanh.pop %v1936
      %v1940 = vtanh.pop %v1937
      %v1941 = vtanh.pop %v1938
      %v1942 = vadd.f32 %v1939, 1.0
      %v1943 = vadd.f32 %v1940, 1.0
      %v1944 = vadd.f32 %v1941, 1.0
      %v1945 = vmul.f32 %v1921, %v1942
      %v1946 = vmul.f32 %v1922, %v1943
      %v1947 = vmul.f32 %v1923, %v1944
      %v1948 = vld [vmem:[%s27] sm:$0xf]
      %v1949 = vld [vmem:[%s27 + $0x4] sm:$0xf]
      %v1950 = vld [vmem:[%s27 + $0x8] sm:$0xf]
      %v1951 = vld [vmem:[%s27 + $0xc] sm:$0xf]
      %v1952 = vld [vmem:[%s27 + $0x10] sm:$0xf]
      %v1953 = vld [vmem:[%s27 + $0x14] sm:$0xf]
      %v1954 = vld [vmem:[%s27 + $0x18] sm:$0xf]
      %v1955 = vld [vmem:[%s27 + $0x1c] sm:$0xf]
      %v1956 = vld [vmem:[%s27 + $0x20] sm:$0xf]
      %v1957 = vld [vmem:[%s27 + $0x24] sm:$0xf]
      %v1958 = vld [vmem:[%s27 + $0x28] sm:$0xf]
      %v1959 = vld [vmem:[%s27 + $0x2c] sm:$0xf]
      %v1960 = vld [vmem:[%s27 + $0x30] sm:$0xf]
      %v1961 = vld [vmem:[%s27 + $0x34] sm:$0xf]
      %v1962 = vld [vmem:[%s27 + $0x38] sm:$0xf]
      %v1963 = vld [vmem:[%s27 + $0x3c] sm:$0xf]
      %v1964 = vpack.c.bf16 %v1946, %v1945
      %v1965 = vpack.c.bf16 %v1947, %v1947
      %v1982 = vunpack.c.l.b16 %v1948
      %v1983 = vunpack.c.l.b16 %v1949
      %v1984 = vunpack.c.l.b16 %v1950
      %v1985 = vunpack.c.l.b16 %v1951
      %v1986 = vunpack.c.l.b16 %v1952
      %v1987 = vunpack.c.l.b16 %v1953
      %v1988 = vunpack.c.l.b16 %v1954
      %v1989 = vunpack.c.l.b16 %v1955
      %v1990 = vunpack.c.l.b16 %v1956
      %v1991 = vunpack.c.l.b16 %v1957
      %v1992 = vunpack.c.l.b16 %v1958
      %v1993 = vunpack.c.l.b16 %v1959
      %v1994 = vunpack.c.l.b16 %v1960
      %v1995 = vunpack.c.l.b16 %v1961
      %v1996 = vunpack.c.l.b16 %v1962
      %v1997 = vunpack.c.l.b16 %v1963
      %v1998 = vpack.c.b16 %v1983, %v1982
      %v1999 = vpack.c.b16 %v1985, %v1984
      %v2000 = vpack.c.b16 %v1987, %v1986
      %v2001 = vpack.c.b16 %v1989, %v1988
      %v2002 = vpack.c.b16 %v1991, %v1990
      %v2003 = vpack.c.b16 %v1993, %v1992
      %v2004 = vpack.c.b16 %v1995, %v1994
      %v2005 = vpack.c.b16 %v1997, %v1996
      %2014 = vmatprep.subr.bf16.mxu0 0
      %2015 = vmatpush1.bf16.msra.mxu0 %v1998
      %2016 = vmatprep.subr.bf16.mxu0 0
      %2017 = vmatpush1.bf16.msra.mxu0 %v1999
      %2018 = vmatprep.subr.bf16.mxu0 0
      %2019 = vmatpush1.bf16.msra.mxu0 %v2000
      %2020 = vmatprep.subr.bf16.mxu0 0
      %2021 = vmatpush1.bf16.msra.mxu0 %v2001
      %2022 = vmatprep.subr.bf16.mxu0 0
      %2023 = vmatpush1.bf16.msra.mxu0 %v2002
      %2024 = vmatprep.subr.bf16.mxu0 0
      %2025 = vmatpush1.bf16.msra.mxu0 %v2003
      %2026 = vmatprep.subr.bf16.mxu0 0
      %2027 = vmatpush1.bf16.msra.mxu0 %v2004
      %2028 = vmatprep.subr.bf16.mxu0 0
      %2029 = vmatpush1.bf16.msra.mxu0 %v2005
      %2030 = vmatprep.subr.bf16.mxu0 0
      %2031 = vmatpush1.bf16.msra.mxu0 0
      %2032 = vmatprep.subr.bf16.mxu0 0
      %2033 = vmatpush1.bf16.msra.mxu0 0
      %2034 = vmatprep.subr.bf16.mxu0 0
      %2035 = vmatpush1.bf16.msra.mxu0 0
      %2036 = vmatprep.subr.bf16.mxu0 0
      %2037 = vmatpush1.bf16.msra.mxu0 0
      %2038 = vmatprep.subr.bf16.mxu0 0
      %2039 = vmatpush1.bf16.msra.mxu0 0
      %2040 = vmatprep.subr.bf16.mxu0 0
      %2041 = vmatpush1.bf16.msra.mxu0 0
      %2042 = vmatprep.subr.bf16.mxu0 0
      %2043 = vmatpush1.bf16.msra.mxu0 0
      %2044 = vmatprep.subr.bf16.mxu0 0
      %2045 = vmatpush1.bf16.msra.mxu0 0
      %2046 = vmatprep.mubr.bf16.mxu0 0
      %2047 = vmatmul.mubr.bf16.gmra.mrb[0].mxu0 %v1964
      %v2048 = vpop.f32.mrb[0].mxu0
      %v2049 = vadd.f32 0.0, %v2048
      %v2050 = vpop.f32.mrb[0].mxu0
      %v2051 = vpop.f32.mrb[0].mxu0
      %v2052 = vadd.f32 0.0, %v2051
      %v2053 = vpop.f32.mrb[0].mxu0
      %2054 = vmatprep.mubr.bf16.mxu0 0
      %2055 = vmatmul.mubr.bf16.gmra.mrb[0].mxu0 %v1965
      %v2056 = vpop.f32.mrb[0].mxu0
      %v2057 = vadd.f32 0.0, %v2056
      %v2058 = vpop.f32.mrb[0].mxu0
      %v2059 = vpop.f32.mrb[0].mxu0
      %v2060 = vpop.f32.mrb[0].mxu0
      %2061 = vdwg.mxu0
      %v2062 = vadd.f32 %v1780, %v2049
      %v2063 = vadd.f32 %v1781, %v2052
      %v2064 = vadd.f32 %v1782, %v2057
      %v2065 = vld [vmem:[%s29] sm:$0x1]
      %v2067 = vlaneseq
      %v2068 = vshrl.u32 %v2067, 7
      %v2069 = vsub.s32 0, %v2068
      %v2070 = vrot.slane %v2065, %v2069
      %v2072 = vadd.f32 %v2062, %v2070
      %v2073 = vadd.f32 %v2063, %v2070
      %v2074 = vadd.f32 %v2064, %v2070
      %s2075 = scalar_lea.vmem %s7, 1
      %v2076 = vld [vmem:[%s2075] sm:$0x1]
      %s2077 = scalar_lea.vmem %s9, 1
      %v2078 = vld [vmem:[%s2077] sm:$0x1]
      %v2079 = vsel %vm1161, %v2072, 0.0
      %2080 = vadd.xlane.f32.xlu0 %v2079
      %v2081 = vpop.xlane.xlu0 %2080
      %v2082 = vsel %vm1161, %v2073, 0.0
      %2083 = vadd.xlane.f32.xlu0 %v2082
      %v2084 = vpop.xlane.xlu0 %2083
      %v2085 = vsel %vm1168, %v2074, 0.0
      %2086 = vadd.xlane.f32.xlu0 %v2085
      %v2087 = vpop.xlane.xlu0 %2086
      %v2088 = vmul.f32 %v2081, %v1172
      %v2089 = vmul.f32 %v2084, %v1172
      %v2090 = vmul.f32 %v2087, %v1172
      %v2091 = vsub.f32 %v2072, %v2088
      %v2092 = vsub.f32 %v2073, %v2089
      %v2093 = vsub.f32 %v2074, %v2090
      %v2094 = vmul.f32 %v2091, %v2091
      %v2095 = vmul.f32 %v2092, %v2092
      %v2096 = vmul.f32 %v2093, %v2093
      %v2097 = vsel %vm1161, %v2094, 0.0
      %2098 = vadd.xlane.f32.xlu0 %v2097
      %v2099 = vpop.xlane.xlu0 %2098
      %v2100 = vsel %vm1161, %v2095, 0.0
      %2101 = vadd.xlane.f32.xlu0 %v2100
      %v2102 = vpop.xlane.xlu0 %2101
      %v2103 = vsel %vm1168, %v2096, 0.0
      %2104 = vadd.xlane.f32.xlu0 %v2103
      %v2105 = vpop.xlane.xlu0 %2104
      %v2106 = vmul.f32 %v2099, %v1172
      %v2107 = vmul.f32 %v2102, %v1172
      %v2108 = vmul.f32 %v2105, %v1172
      %v2109 = vadd.f32 %v2106, 1e-06
      %v2110 = vadd.f32 %v2107, 1e-06
      %v2111 = vadd.f32 %v2108, 1e-06
      %v2112 = vrsqrt.pop %v2109
      %v2113 = vrsqrt.pop %v2110
      %v2114 = vrsqrt.pop %v2111
      %v2115 = vmul.f32 %v2091, %v2112
      %v2116 = vmul.f32 %v2092, %v2113
      %v2117 = vmul.f32 %v2093, %v2114
      %v2119 = vlaneseq
      %v2120 = vshrl.u32 %v2119, 7
      %v2121 = vsub.s32 0, %v2120
      %v2122 = vrot.slane %v2076, %v2121
      %v2124 = vmul.f32 %v2115, %v2122
      %v2125 = vmul.f32 %v2116, %v2122
      %v2126 = vmul.f32 %v2117, %v2122
      %v2128 = vlaneseq
      %v2129 = vshrl.u32 %v2128, 7
      %v2130 = vsub.s32 0, %v2129
      %v2131 = vrot.slane %v2078, %v2130
      %v2133 = vadd.f32 %v2124, %v2131
      %v2134 = vadd.f32 %v2125, %v2131
      %v2135 = vadd.f32 %v2126, %v2131
      %s2136 = scalar_lea.vmem %s11, 16
      %v2137 = vld [vmem:[%s2136] sm:$0xf]
      %v2138 = vld [vmem:[%s2136 + $0x4] sm:$0xf]
      %v2139 = vld [vmem:[%s2136 + $0x8] sm:$0xf]
      %v2140 = vld [vmem:[%s2136 + $0xc] sm:$0xf]
      %v2141 = vpack.c.bf16 %v2134, %v2133
      %v2142 = vpack.c.bf16 %v2135, %v2135
      %s2143 = scalar_lea.vmem %s13, 1
      %v2144 = vld [vmem:[%s2143] sm:$0x1]
      %v2146 = vlaneseq
      %v2147 = vshrl.u32 %v2146, 7
      %v2148 = vsub.s32 0, %v2147
      %v2149 = vrot.slane %v2144, %v2148
      %v2155 = vunpack.c.l.b16 %v2137
      %v2156 = vunpack.c.l.b16 %v2138
      %v2157 = vunpack.c.l.b16 %v2139
      %v2158 = vunpack.c.l.b16 %v2140
      %v2159 = vpack.c.b16 %v2156, %v2155
      %v2160 = vpack.c.b16 %v2158, %v2157
      %v2164 = vsel %vm1161, %v2141, 0
      %v2167 = vsel %vm1161, %v2142, 0
      %2169 = vmatprep.subr.bf16.mxu0 0
      %2170 = vmatpush1.bf16.msra.mxu0 %v2159
      %2171 = vmatprep.subr.bf16.mxu0 0
      %2172 = vmatpush1.bf16.msra.mxu0 %v2160
      %2173 = vmatprep.subr.bf16.mxu0 0
      %2174 = vmatpush1.bf16.msra.mxu0 0
      %2175 = vmatprep.subr.bf16.mxu0 0
      %2176 = vmatpush1.bf16.msra.mxu0 0
      %2177 = vmatprep.subr.bf16.mxu0 0
      %2178 = vmatpush1.bf16.msra.mxu0 0
      %2179 = vmatprep.subr.bf16.mxu0 0
      %2180 = vmatpush1.bf16.msra.mxu0 0
      %2181 = vmatprep.subr.bf16.mxu0 0
      %2182 = vmatpush1.bf16.msra.mxu0 0
      %2183 = vmatprep.subr.bf16.mxu0 0
      %2184 = vmatpush1.bf16.msra.mxu0 0
      %2185 = vmatprep.subr.bf16.mxu0 0
      %2186 = vmatpush1.bf16.msra.mxu0 0
      %2187 = vmatprep.subr.bf16.mxu0 0
      %2188 = vmatpush1.bf16.msra.mxu0 0
      %2189 = vmatprep.subr.bf16.mxu0 0
      %2190 = vmatpush1.bf16.msra.mxu0 0
      %2191 = vmatprep.subr.bf16.mxu0 0
      %2192 = vmatpush1.bf16.msra.mxu0 0
      %2193 = vmatprep.subr.bf16.mxu0 0
      %2194 = vmatpush1.bf16.msra.mxu0 0
      %2195 = vmatprep.subr.bf16.mxu0 0
      %2196 = vmatpush1.bf16.msra.mxu0 0
      %2197 = vmatprep.subr.bf16.mxu0 0
      %2198 = vmatpush1.bf16.msra.mxu0 0
      %2199 = vmatprep.subr.bf16.mxu0 0
      %2200 = vmatpush1.bf16.msra.mxu0 0
      %2201 = vmatprep.mubr.bf16.mxu0 0
      %2202 = vmatmul.mubr.bf16.gmra.mrb[0].mxu0 %v2164
      %v2203 = vpop.f32.mrb[0].mxu0
      %v2204 = vadd.f32 %v2149, %v2203
      %v2205 = vpop.f32.mrb[0].mxu0
      %v2206 = vpop.f32.mrb[0].mxu0
      %v2207 = vadd.f32 %v2149, %v2206
      %v2208 = vpop.f32.mrb[0].mxu0
      %2209 = vmatprep.mubr.bf16.mxu0 0
      %2210 = vmatmul.mubr.bf16.gmra.mrb[0].mxu0 %v2167
      %v2211 = vpop.f32.mrb[0].mxu0
      %v2212 = vadd.f32 %v2149, %v2211
      %v2213 = vpop.f32.mrb[0].mxu0
      %v2214 = vpop.f32.mrb[0].mxu0
      %v2215 = vpop.f32.mrb[0].mxu0
      %2216 = vdwg.mxu0
      %s2217 = scalar_lea.vmem %s15, 16
      %v2218 = vld [vmem:[%s2217] sm:$0xf]
      %v2219 = vld [vmem:[%s2217 + $0x4] sm:$0xf]
      %v2220 = vld [vmem:[%s2217 + $0x8] sm:$0xf]
      %v2221 = vld [vmem:[%s2217 + $0xc] sm:$0xf]
      %v2222 = vpack.c.bf16 %v2207, %v2204
      %v2223 = vpack.c.bf16 %v2212, %v2212
      %2226 = vrot.lane.b32.xlu0 %v2222, 96
      %v2227 = vpop.permute.xlu0 %2226
      %2228 = vrot.lane.b32.xlu0 %v2223, 96
      %v2229 = vpop.permute.xlu0 %2228
      %v2231 = vsel %vm1312, %v2222, 0
      %v2234 = vsel %vm1312, %v2223, 0
      %v2237 = vsel %vm1312, %v2227, 0
      %v2240 = vsel %vm1312, %v2229, 0
      %2242 = vmatprep.subr.bf16.mxu0 0
      %2243 = vmatpush1.bf16.xpose.msra.mxu0 %v2237
      %2244 = vmatprep.subr.bf16.mxu0 0
      %2245 = vmatpush1.bf16.xpose.msra.mxu0 %v2240
      %2246 = vmatprep.subr.bf16.mxu0 0
      %2247 = vmatpush1.bf16.xpose.msra.mxu0 0
      %2248 = vmatprep.subr.bf16.mxu0 0
      %2249 = vmatpush1.bf16.xpose.msra.mxu0 0
      %2250 = vmatprep.subr.bf16.mxu0 0
      %2251 = vmatpush1.bf16.xpose.msra.mxu0 0
      %2252 = vmatprep.subr.bf16.mxu0 0
      %2253 = vmatpush1.bf16.xpose.msra.mxu0 0
      %2254 = vmatprep.subr.bf16.mxu0 0
      %2255 = vmatpush1.bf16.xpose.msra.mxu0 0
      %2256 = vmatprep.subr.bf16.mxu0 0
      %2257 = vmatpush1.bf16.xpose.msra.mxu0 0
      %2258 = vmatprep.subr.bf16.mxu0 0
      %2259 = vmatpush1.bf16.xpose.msra.mxu0 0
      %2260 = vmatprep.subr.bf16.mxu0 0
      %2261 = vmatpush1.bf16.xpose.msra.mxu0 0
      %2262 = vmatprep.subr.bf16.mxu0 0
      %2263 = vmatpush1.bf16.xpose.msra.mxu0 0
      %2264 = vmatprep.subr.bf16.mxu0 0
      %2265 = vmatpush1.bf16.xpose.msra.mxu0 0
      %2266 = vmatprep.subr.bf16.mxu0 0
      %2267 = vmatpush1.bf16.xpose.msra.mxu0 0
      %2268 = vmatprep.subr.bf16.mxu0 0
      %2269 = vmatpush1.bf16.xpose.msra.mxu0 0
      %2270 = vmatprep.subr.bf16.mxu0 0
      %2271 = vmatpush1.bf16.xpose.msra.mxu0 0
      %2272 = vmatprep.subr.bf16.mxu0 0
      %2273 = vmatpush1.bf16.xpose.msra.mxu0 0
      %2274 = vmatprep.mubr.bf16.mxu0 0
      %2275 = vmatmul.mubr.bf16.gmra.mrb[0].mxu0 %v2231
      %v2276 = vpop.f32.mrb[0].mxu0
      %v2277 = vadd.f32 0.0, %v2276
      %v2278 = vpop.f32.mrb[0].mxu0
      %v2279 = vpop.f32.mrb[0].mxu0
      %v2280 = vadd.f32 0.0, %v2279
      %v2281 = vpop.f32.mrb[0].mxu0
      %2282 = vmatprep.mubr.bf16.mxu0 0
      %2283 = vmatmul.mubr.bf16.gmra.mrb[0].mxu0 %v2234
      %v2284 = vpop.f32.mrb[0].mxu0
      %v2285 = vadd.f32 0.0, %v2284
      %v2286 = vpop.f32.mrb[0].mxu0
      %v2287 = vpop.f32.mrb[0].mxu0
      %v2288 = vpop.f32.mrb[0].mxu0
      %2289 = vdwg.mxu0
      %v2290 = vmul.f32 %v2277, 0.25
      %v2291 = vmul.f32 %v2280, 0.25
      %v2292 = vmul.f32 %v2285, 0.25
      %v2293 = vsel %vm1376, %v2290, -inf
      %2294 = vmax.xlane.f32.xlu0 %v2293
      %v2295 = vpop.xlane.xlu0 %2294
      %v2296 = vsel %vm1376, %v2291, -inf
      %2297 = vmax.xlane.f32.xlu0 %v2296
      %v2298 = vpop.xlane.xlu0 %2297
      %v2299 = vsel %vm1383, %v2292, -inf
      %2300 = vmax.xlane.f32.xlu0 %v2299
      %v2301 = vpop.xlane.xlu0 %2300
      %v2302 = vsub.f32 %v2290, %v2295
      %v2303 = vsub.f32 %v2291, %v2298
      %v2304 = vsub.f32 %v2292, %v2301
      %v2305 = vmul.f32 %v2302, 1.442695
      %v2306 = vpow.pop %v2305
      %v2307 = vmul.f32 %v2303, 1.442695
      %v2308 = vpow.pop %v2307
      %v2309 = vmul.f32 %v2304, 1.442695
      %v2310 = vpow.pop %v2309
      %v2311 = vsel %vm1376, %v2306, 0.0
      %2312 = vadd.xlane.f32.xlu0 %v2311
      %v2313 = vpop.xlane.xlu0 %2312
      %v2314 = vsel %vm1376, %v2308, 0.0
      %2315 = vadd.xlane.f32.xlu0 %v2314
      %v2316 = vpop.xlane.xlu0 %2315
      %v2317 = vsel %vm1383, %v2310, 0.0
      %2318 = vadd.xlane.f32.xlu0 %v2317
      %v2319 = vpop.xlane.xlu0 %2318
      %v2320 = vrcp.pop %v2313
      %v2321 = vmul.f32 %v2306, %v2320
      %v2322 = vrcp.pop %v2316
      %v2323 = vmul.f32 %v2308, %v2322
      %v2324 = vrcp.pop %v2319
      %v2325 = vmul.f32 %v2310, %v2324
      %v2326 = vpack.c.bf16 %v2323, %v2321
      %v2327 = vpack.c.bf16 %v2325, %v2325
      %2328 = vrot.lane.b32.xlu0 %v2222, 64
      %v2329 = vpop.permute.xlu0 %2328
      %2330 = vrot.lane.b32.xlu0 %v2223, 64
      %v2331 = vpop.permute.xlu0 %2330
      %v2334 = vsel %vm1376, %v2326, 0
      %v2337 = vsel %vm1376, %v2327, 0
      %v2340 = vand.u32 %v2331, %v1426
      %2342 = vmatprep.subr.bf16.mxu0 0
      %2343 = vmatpush1.bf16.msra.mxu0 %v2329
      %2344 = vmatprep.subr.bf16.mxu0 0
      %2345 = vmatpush1.bf16.msra.mxu0 %v2340
      %2346 = vmatprep.subr.bf16.mxu0 0
      %2347 = vmatpush1.bf16.msra.mxu0 0
      %2348 = vmatprep.subr.bf16.mxu0 0
      %2349 = vmatpush1.bf16.msra.mxu0 0
      %2350 = vmatprep.subr.bf16.mxu0 0
      %2351 = vmatpush1.bf16.msra.mxu0 0
      %2352 = vmatprep.subr.bf16.mxu0 0
      %2353 = vmatpush1.bf16.msra.mxu0 0
      %2354 = vmatprep.subr.bf16.mxu0 0
      %2355 = vmatpush1.bf16.msra.mxu0 0
      %2356 = vmatprep.subr.bf16.mxu0 0
      %2357 = vmatpush1.bf16.msra.mxu0 0
      %2358 = vmatprep.subr.bf16.mxu0 0
      %2359 = vmatpush1.bf16.msra.mxu0 0
      %2360 = vmatprep.subr.bf16.mxu0 0
      %2361 = vmatpush1.bf16.msra.mxu0 0
      %2362 = vmatprep.subr.bf16.mxu0 0
      %2363 = vmatpush1.bf16.msra.mxu0 0
      %2364 = vmatprep.subr.bf16.mxu0 0
      %2365 = vmatpush1.bf16.msra.mxu0 0
      %2366 = vmatprep.subr.bf16.mxu0 0
      %2367 = vmatpush1.bf16.msra.mxu0 0
      %2368 = vmatprep.subr.bf16.mxu0 0
      %2369 = vmatpush1.bf16.msra.mxu0 0
      %2370 = vmatprep.subr.bf16.mxu0 0
      %2371 = vmatpush1.bf16.msra.mxu0 0
      %2372 = vmatprep.subr.bf16.mxu0 0
      %2373 = vmatpush1.bf16.msra.mxu0 0
      %2374 = vmatprep.mubr.bf16.mxu0 0
      %2375 = vmatmul.mubr.bf16.gmra.mrb[0].mxu0 %v2334
      %v2376 = vpop.f32.mrb[0].mxu0
      %v2377 = vadd.f32 0.0, %v2376
      %v2378 = vpop.f32.mrb[0].mxu0
      %v2379 = vpop.f32.mrb[0].mxu0
      %v2380 = vadd.f32 0.0, %v2379
      %v2381 = vpop.f32.mrb[0].mxu0
      %2382 = vmatprep.mubr.bf16.mxu0 0
      %2383 = vmatmul.mubr.bf16.gmra.mrb[0].mxu0 %v2337
      %v2384 = vpop.f32.mrb[0].mxu0
      %v2385 = vadd.f32 0.0, %v2384
      %v2386 = vpop.f32.mrb[0].mxu0
      %v2387 = vpop.f32.mrb[0].mxu0
      %v2388 = vpop.f32.mrb[0].mxu0
      %2389 = vdwg.mxu0
      %v2390 = vpack.c.bf16 %v2380, %v2377
      %v2391 = vpack.c.bf16 %v2385, %v2385
      %2392 = vrot.lane.b32.xlu0 %v2222, 112
      %v2393 = vpop.permute.xlu0 %2392
      %2394 = vrot.lane.b32.xlu0 %v2223, 112
      %v2395 = vpop.permute.xlu0 %2394
      %2396 = vrot.lane.b32.xlu0 %v2222, 80
      %v2397 = vpop.permute.xlu0 %2396
      %2398 = vrot.lane.b32.xlu0 %v2223, 80
      %v2399 = vpop.permute.xlu0 %2398
      %v2401 = vsel %vm1312, %v2393, 0
      %v2404 = vsel %vm1312, %v2395, 0
      %v2407 = vsel %vm1312, %v2397, 0
      %v2410 = vsel %vm1312, %v2399, 0
      %2412 = vmatprep.subr.bf16.mxu0 0
      %2413 = vmatpush1.bf16.xpose.msra.mxu0 %v2407
      %2414 = vmatprep.subr.bf16.mxu0 0
      %2415 = vmatpush1.bf16.xpose.msra.mxu0 %v2410
      %2416 = vmatprep.subr.bf16.mxu0 0
      %2417 = vmatpush1.bf16.xpose.msra.mxu0 0
      %2418 = vmatprep.subr.bf16.mxu0 0
      %2419 = vmatpush1.bf16.xpose.msra.mxu0 0
      %2420 = vmatprep.subr.bf16.mxu0 0
      %2421 = vmatpush1.bf16.xpose.msra.mxu0 0
      %2422 = vmatprep.subr.bf16.mxu0 0
      %2423 = vmatpush1.bf16.xpose.msra.mxu0 0
      %2424 = vmatprep.subr.bf16.mxu0 0
      %2425 = vmatpush1.bf16.xpose.msra.mxu0 0
      %2426 = vmatprep.subr.bf16.mxu0 0
      %2427 = vmatpush1.bf16.xpose.msra.mxu0 0
      %2428 = vmatprep.subr.bf16.mxu0 0
      %2429 = vmatpush1.bf16.xpose.msra.mxu0 0
      %2430 = vmatprep.subr.bf16.mxu0 0
      %2431 = vmatpush1.bf16.xpose.msra.mxu0 0
      %2432 = vmatprep.subr.bf16.mxu0 0
      %2433 = vmatpush1.bf16.xpose.msra.mxu0 0
      %2434 = vmatprep.subr.bf16.mxu0 0
      %2435 = vmatpush1.bf16.xpose.msra.mxu0 0
      %2436 = vmatprep.subr.bf16.mxu0 0
      %2437 = vmatpush1.bf16.xpose.msra.mxu0 0
      %2438 = vmatprep.subr.bf16.mxu0 0
      %2439 = vmatpush1.bf16.xpose.msra.mxu0 0
      %2440 = vmatprep.subr.bf16.mxu0 0
      %2441 = vmatpush1.bf16.xpose.msra.mxu0 0
      %2442 = vmatprep.subr.bf16.mxu0 0
      %2443 = vmatpush1.bf16.xpose.msra.mxu0 0
      %2444 = vmatprep.mubr.bf16.mxu0 0
      %2445 = vmatmul.mubr.bf16.gmra.mrb[0].mxu0 %v2401
      %v2446 = vpop.f32.mrb[0].mxu0
      %v2447 = vadd.f32 0.0, %v2446
      %v2448 = vpop.f32.mrb[0].mxu0
      %v2449 = vpop.f32.mrb[0].mxu0
      %v2450 = vadd.f32 0.0, %v2449
      %v2451 = vpop.f32.mrb[0].mxu0
      %2452 = vmatprep.mubr.bf16.mxu0 0
      %2453 = vmatmul.mubr.bf16.gmra.mrb[0].mxu0 %v2404
      %v2454 = vpop.f32.mrb[0].mxu0
      %v2455 = vadd.f32 0.0, %v2454
      %v2456 = vpop.f32.mrb[0].mxu0
      %v2457 = vpop.f32.mrb[0].mxu0
      %v2458 = vpop.f32.mrb[0].mxu0
      %2459 = vdwg.mxu0
      %v2460 = vmul.f32 %v2447, 0.25
      %v2461 = vmul.f32 %v2450, 0.25
      %v2462 = vmul.f32 %v2455, 0.25
      %v2463 = vsel %vm1376, %v2460, -inf
      %2464 = vmax.xlane.f32.xlu0 %v2463
      %v2465 = vpop.xlane.xlu0 %2464
      %v2466 = vsel %vm1376, %v2461, -inf
      %2467 = vmax.xlane.f32.xlu0 %v2466
      %v2468 = vpop.xlane.xlu0 %2467
      %v2469 = vsel %vm1383, %v2462, -inf
      %2470 = vmax.xlane.f32.xlu0 %v2469
      %v2471 = vpop.xlane.xlu0 %2470
      %v2472 = vsub.f32 %v2460, %v2465
      %v2473 = vsub.f32 %v2461, %v2468
      %v2474 = vsub.f32 %v2462, %v2471
      %v2475 = vmul.f32 %v2472, 1.442695
      %v2476 = vpow.pop %v2475
      %v2477 = vmul.f32 %v2473, 1.442695
      %v2478 = vpow.pop %v2477
      %v2479 = vmul.f32 %v2474, 1.442695
      %v2480 = vpow.pop %v2479
      %v2481 = vsel %vm1376, %v2476, 0.0
      %2482 = vadd.xlane.f32.xlu0 %v2481
      %v2483 = vpop.xlane.xlu0 %2482
      %v2484 = vsel %vm1376, %v2478, 0.0
      %2485 = vadd.xlane.f32.xlu0 %v2484
      %v2486 = vpop.xlane.xlu0 %2485
      %v2487 = vsel %vm1383, %v2480, 0.0
      %2488 = vadd.xlane.f32.xlu0 %v2487
      %v2489 = vpop.xlane.xlu0 %2488
      %v2490 = vrcp.pop %v2483
      %v2491 = vmul.f32 %v2476, %v2490
      %v2492 = vrcp.pop %v2486
      %v2493 = vmul.f32 %v2478, %v2492
      %v2494 = vrcp.pop %v2489
      %v2495 = vmul.f32 %v2480, %v2494
      %v2496 = vpack.c.bf16 %v2493, %v2491
      %v2497 = vpack.c.bf16 %v2495, %v2495
      %2498 = vrot.lane.b32.xlu0 %v2222, 48
      %v2499 = vpop.permute.xlu0 %2498
      %2500 = vrot.lane.b32.xlu0 %v2223, 48
      %v2501 = vpop.permute.xlu0 %2500
      %v2504 = vsel %vm1376, %v2496, 0
      %v2507 = vsel %vm1376, %v2497, 0
      %v2510 = vand.u32 %v2501, %v1426
      %2512 = vmatprep.subr.bf16.mxu0 0
      %2513 = vmatpush1.bf16.msra.mxu0 %v2499
      %2514 = vmatprep.subr.bf16.mxu0 0
      %2515 = vmatpush1.bf16.msra.mxu0 %v2510
      %2516 = vmatprep.subr.bf16.mxu0 0
      %2517 = vmatpush1.bf16.msra.mxu0 0
      %2518 = vmatprep.subr.bf16.mxu0 0
      %2519 = vmatpush1.bf16.msra.mxu0 0
      %2520 = vmatprep.subr.bf16.mxu0 0
      %2521 = vmatpush1.bf16.msra.mxu0 0
      %2522 = vmatprep.subr.bf16.mxu0 0
      %2523 = vmatpush1.bf16.msra.mxu0 0
      %2524 = vmatprep.subr.bf16.mxu0 0
      %2525 = vmatpush1.bf16.msra.mxu0 0
      %2526 = vmatprep.subr.bf16.mxu0 0
      %2527 = vmatpush1.bf16.msra.mxu0 0
      %2528 = vmatprep.subr.bf16.mxu0 0
      %2529 = vmatpush1.bf16.msra.mxu0 0
      %2530 = vmatprep.subr.bf16.mxu0 0
      %2531 = vmatpush1.bf16.msra.mxu0 0
      %2532 = vmatprep.subr.bf16.mxu0 0
      %2533 = vmatpush1.bf16.msra.mxu0 0
      %2534 = vmatprep.subr.bf16.mxu0 0
      %2535 = vmatpush1.bf16.msra.mxu0 0
      %2536 = vmatprep.subr.bf16.mxu0 0
      %2537 = vmatpush1.bf16.msra.mxu0 0
      %2538 = vmatprep.subr.bf16.mxu0 0
      %2539 = vmatpush1.bf16.msra.mxu0 0
      %2540 = vmatprep.subr.bf16.mxu0 0
      %2541 = vmatpush1.bf16.msra.mxu0 0
      %2542 = vmatprep.subr.bf16.mxu0 0
      %2543 = vmatpush1.bf16.msra.mxu0 0
      %2544 = vmatprep.mubr.bf16.mxu0 0
      %2545 = vmatmul.mubr.bf16.gmra.mrb[0].mxu0 %v2504
      %v2546 = vpop.f32.mrb[0].mxu0
      %v2547 = vadd.f32 0.0, %v2546
      %v2548 = vpop.f32.mrb[0].mxu0
      %v2549 = vpop.f32.mrb[0].mxu0
      %v2550 = vadd.f32 0.0, %v2549
      %v2551 = vpop.f32.mrb[0].mxu0
      %2552 = vmatprep.mubr.bf16.mxu0 0
      %2553 = vmatmul.mubr.bf16.gmra.mrb[0].mxu0 %v2507
      %v2554 = vpop.f32.mrb[0].mxu0
      %v2555 = vadd.f32 0.0, %v2554
      %v2556 = vpop.f32.mrb[0].mxu0
      %v2557 = vpop.f32.mrb[0].mxu0
      %v2558 = vpop.f32.mrb[0].mxu0
      %2559 = vdwg.mxu0
      %v2560 = vpack.c.bf16 %v2550, %v2547
      %v2561 = vpack.c.bf16 %v2555, %v2555
      %v2564 = vunpack.c.l.b16 %v2220
      %v2565 = vunpack.c.l.b16 %v2221
      %v2566 = vpack.c.b16 %v2565, %v2564
      %v2569 = vsel %vm1312, %v2560, 0
      %v2572 = vsel %vm1312, %v2561, 0
      %2574 = vmatprep.subr.bf16.mxu0 0
      %2575 = vmatpush1.bf16.msra.mxu0 %v2566
      %2576 = vmatprep.subr.bf16.mxu0 0
      %2577 = vmatpush1.bf16.msra.mxu0 0
      %2578 = vmatprep.subr.bf16.mxu0 0
      %2579 = vmatpush1.bf16.msra.mxu0 0
      %2580 = vmatprep.subr.bf16.mxu0 0
      %2581 = vmatpush1.bf16.msra.mxu0 0
      %2582 = vmatprep.subr.bf16.mxu0 0
      %2583 = vmatpush1.bf16.msra.mxu0 0
      %2584 = vmatprep.subr.bf16.mxu0 0
      %2585 = vmatpush1.bf16.msra.mxu0 0
      %2586 = vmatprep.subr.bf16.mxu0 0
      %2587 = vmatpush1.bf16.msra.mxu0 0
      %2588 = vmatprep.subr.bf16.mxu0 0
      %2589 = vmatpush1.bf16.msra.mxu0 0
      %2590 = vmatprep.subr.bf16.mxu0 0
      %2591 = vmatpush1.bf16.msra.mxu0 0
      %2592 = vmatprep.subr.bf16.mxu0 0
      %2593 = vmatpush1.bf16.msra.mxu0 0
      %2594 = vmatprep.subr.bf16.mxu0 0
      %2595 = vmatpush1.bf16.msra.mxu0 0
      %2596 = vmatprep.subr.bf16.mxu0 0
      %2597 = vmatpush1.bf16.msra.mxu0 0
      %2598 = vmatprep.subr.bf16.mxu0 0
      %2599 = vmatpush1.bf16.msra.mxu0 0
      %2600 = vmatprep.subr.bf16.mxu0 0
      %2601 = vmatpush1.bf16.msra.mxu0 0
      %2602 = vmatprep.subr.bf16.mxu0 0
      %2603 = vmatpush1.bf16.msra.mxu0 0
      %2604 = vmatprep.subr.bf16.mxu0 0
      %2605 = vmatpush1.bf16.msra.mxu0 0
      %2606 = vmatprep.mubr.bf16.mxu0 0
      %2607 = vmatmul.mubr.bf16.gmra.mrb[0].mxu0 %v2569
      %v2608 = vpop.f32.mrb[0].mxu0
      %v2609 = vadd.f32 0.0, %v2608
      %v2610 = vpop.f32.mrb[0].mxu0
      %v2611 = vpop.f32.mrb[0].mxu0
      %v2612 = vadd.f32 0.0, %v2611
      %v2613 = vpop.f32.mrb[0].mxu0
      %2614 = vmatprep.mubr.bf16.mxu0 0
      %2615 = vmatmul.mubr.bf16.gmra.mrb[0].mxu0 %v2572
      %v2616 = vpop.f32.mrb[0].mxu0
      %v2617 = vadd.f32 0.0, %v2616
      %v2618 = vpop.f32.mrb[0].mxu0
      %v2619 = vpop.f32.mrb[0].mxu0
      %v2620 = vpop.f32.mrb[0].mxu0
      %2621 = vdwg.mxu0
      %v2624 = vunpack.c.l.b16 %v2218
      %v2625 = vunpack.c.l.b16 %v2219
      %v2626 = vpack.c.b16 %v2625, %v2624
      %v2629 = vsel %vm1312, %v2390, 0
      %v2632 = vsel %vm1312, %v2391, 0
      %2634 = vmatprep.subr.bf16.mxu0 0
      %2635 = vmatpush1.bf16.msra.mxu0 %v2626
      %2636 = vmatprep.subr.bf16.mxu0 0
      %2637 = vmatpush1.bf16.msra.mxu0 0
      %2638 = vmatprep.subr.bf16.mxu0 0
      %2639 = vmatpush1.bf16.msra.mxu0 0
      %2640 = vmatprep.subr.bf16.mxu0 0
      %2641 = vmatpush1.bf16.msra.mxu0 0
      %2642 = vmatprep.subr.bf16.mxu0 0
      %2643 = vmatpush1.bf16.msra.mxu0 0
      %2644 = vmatprep.subr.bf16.mxu0 0
      %2645 = vmatpush1.bf16.msra.mxu0 0
      %2646 = vmatprep.subr.bf16.mxu0 0
      %2647 = vmatpush1.bf16.msra.mxu0 0
      %2648 = vmatprep.subr.bf16.mxu0 0
      %2649 = vmatpush1.bf16.msra.mxu0 0
      %2650 = vmatprep.subr.bf16.mxu0 0
      %2651 = vmatpush1.bf16.msra.mxu0 0
      %2652 = vmatprep.subr.bf16.mxu0 0
      %2653 = vmatpush1.bf16.msra.mxu0 0
      %2654 = vmatprep.subr.bf16.mxu0 0
      %2655 = vmatpush1.bf16.msra.mxu0 0
      %2656 = vmatprep.subr.bf16.mxu0 0
      %2657 = vmatpush1.bf16.msra.mxu0 0
      %2658 = vmatprep.subr.bf16.mxu0 0
      %2659 = vmatpush1.bf16.msra.mxu0 0
      %2660 = vmatprep.subr.bf16.mxu0 0
      %2661 = vmatpush1.bf16.msra.mxu0 0
      %2662 = vmatprep.subr.bf16.mxu0 0
      %2663 = vmatpush1.bf16.msra.mxu0 0
      %2664 = vmatprep.subr.bf16.mxu0 0
      %2665 = vmatpush1.bf16.msra.mxu0 0
      %2666 = vmatprep.mubr.bf16.mxu0 0
      %2667 = vmatmul.mubr.bf16.gmra.mrb[0].mxu0 %v2629
      %v2668 = vpop.f32.mrb[0].mxu0
      %v2669 = vadd.f32 %v2609, %v2668
      %v2670 = vpop.f32.mrb[0].mxu0
      %v2671 = vpop.f32.mrb[0].mxu0
      %v2672 = vadd.f32 %v2612, %v2671
      %v2673 = vpop.f32.mrb[0].mxu0
      %2674 = vmatprep.mubr.bf16.mxu0 0
      %2675 = vmatmul.mubr.bf16.gmra.mrb[0].mxu0 %v2632
      %v2676 = vpop.f32.mrb[0].mxu0
      %v2677 = vadd.f32 %v2617, %v2676
      %v2678 = vpop.f32.mrb[0].mxu0
      %v2679 = vpop.f32.mrb[0].mxu0
      %v2680 = vpop.f32.mrb[0].mxu0
      %2681 = vdwg.mxu0
      %v2682 = vadd.f32 %v2072, %v2669
      %v2683 = vadd.f32 %v2073, %v2672
      %v2684 = vadd.f32 %v2074, %v2677
      %s2685 = scalar_lea.vmem %s17, 1
      %v2686 = vld [vmem:[%s2685] sm:$0x1]
      %v2688 = vlaneseq
      %v2689 = vshrl.u32 %v2688, 7
      %v2690 = vsub.s32 0, %v2689
      %v2691 = vrot.slane %v2686, %v2690
      %v2693 = vadd.f32 %v2682, %v2691
      %v2694 = vadd.f32 %v2683, %v2691
      %v2695 = vadd.f32 %v2684, %v2691
      %s2696 = scalar_lea.vmem %s19, 1
      %v2697 = vld [vmem:[%s2696] sm:$0x1]
      %s2698 = scalar_lea.vmem %s21, 1
      %v2699 = vld [vmem:[%s2698] sm:$0x1]
      %v2700 = vsel %vm1161, %v2693, 0.0
      %2701 = vadd.xlane.f32.xlu0 %v2700
      %v2702 = vpop.xlane.xlu0 %2701
      %v2703 = vsel %vm1161, %v2694, 0.0
      %2704 = vadd.xlane.f32.xlu0 %v2703
      %v2705 = vpop.xlane.xlu0 %2704
      %v2706 = vsel %vm1168, %v2695, 0.0
      %2707 = vadd.xlane.f32.xlu0 %v2706
      %v2708 = vpop.xlane.xlu0 %2707
      %v2709 = vmul.f32 %v2702, %v1172
      %v2710 = vmul.f32 %v2705, %v1172
      %v2711 = vmul.f32 %v2708, %v1172
      %v2712 = vsub.f32 %v2693, %v2709
      %v2713 = vsub.f32 %v2694, %v2710
      %v2714 = vsub.f32 %v2695, %v2711
      %v2715 = vmul.f32 %v2712, %v2712
      %v2716 = vmul.f32 %v2713, %v2713
      %v2717 = vmul.f32 %v2714, %v2714
      %v2718 = vsel %vm1161, %v2715, 0.0
      %2719 = vadd.xlane.f32.xlu0 %v2718
      %v2720 = vpop.xlane.xlu0 %2719
      %v2721 = vsel %vm1161, %v2716, 0.0
      %2722 = vadd.xlane.f32.xlu0 %v2721
      %v2723 = vpop.xlane.xlu0 %2722
      %v2724 = vsel %vm1168, %v2717, 0.0
      %2725 = vadd.xlane.f32.xlu0 %v2724
      %v2726 = vpop.xlane.xlu0 %2725
      %v2727 = vmul.f32 %v2720, %v1172
      %v2728 = vmul.f32 %v2723, %v1172
      %v2729 = vmul.f32 %v2726, %v1172
      %v2730 = vadd.f32 %v2727, 1e-06
      %v2731 = vadd.f32 %v2728, 1e-06
      %v2732 = vadd.f32 %v2729, 1e-06
      %v2733 = vrsqrt.pop %v2730
      %v2734 = vrsqrt.pop %v2731
      %v2735 = vrsqrt.pop %v2732
      %v2736 = vmul.f32 %v2712, %v2733
      %v2737 = vmul.f32 %v2713, %v2734
      %v2738 = vmul.f32 %v2714, %v2735
      %v2740 = vlaneseq
      %v2741 = vshrl.u32 %v2740, 7
      %v2742 = vsub.s32 0, %v2741
      %v2743 = vrot.slane %v2697, %v2742
      %v2745 = vmul.f32 %v2736, %v2743
      %v2746 = vmul.f32 %v2737, %v2743
      %v2747 = vmul.f32 %v2738, %v2743
      %v2749 = vlaneseq
      %v2750 = vshrl.u32 %v2749, 7
      %v2751 = vsub.s32 0, %v2750
      %v2752 = vrot.slane %v2699, %v2751
      %v2754 = vadd.f32 %v2745, %v2752
      %v2755 = vadd.f32 %v2746, %v2752
      %v2756 = vadd.f32 %v2747, %v2752
      %s2757 = scalar_lea.vmem %s23, 16
      %v2758 = vld [vmem:[%s2757] sm:$0xf]
      %v2759 = vld [vmem:[%s2757 + $0x4] sm:$0xf]
      %v2760 = vld [vmem:[%s2757 + $0x8] sm:$0xf]
      %v2761 = vld [vmem:[%s2757 + $0xc] sm:$0xf]
      %v2762 = vpack.c.bf16 %v2755, %v2754
      %v2763 = vpack.c.bf16 %v2756, %v2756
      %s2764 = scalar_lea.vmem %s25, 1
      %v2765 = vld [vmem:[%s2764] sm:$0x1]
      %v2767 = vlaneseq
      %v2768 = vshrl.u32 %v2767, 7
      %v2769 = vsub.s32 0, %v2768
      %v2770 = vrot.slane %v2765, %v2769
      %v2776 = vunpack.c.l.b16 %v2758
      %v2777 = vunpack.c.l.b16 %v2759
      %v2778 = vunpack.c.l.b16 %v2760
      %v2779 = vunpack.c.l.b16 %v2761
      %v2780 = vpack.c.b16 %v2777, %v2776
      %v2781 = vpack.c.b16 %v2779, %v2778
      %v2785 = vsel %vm1161, %v2762, 0
      %v2788 = vsel %vm1161, %v2763, 0
      %2790 = vmatprep.subr.bf16.mxu0 0
      %2791 = vmatpush1.bf16.msra.mxu0 %v2780
      %2792 = vmatprep.subr.bf16.mxu0 0
      %2793 = vmatpush1.bf16.msra.mxu0 %v2781
      %2794 = vmatprep.subr.bf16.mxu0 0
      %2795 = vmatpush1.bf16.msra.mxu0 0
      %2796 = vmatprep.subr.bf16.mxu0 0
      %2797 = vmatpush1.bf16.msra.mxu0 0
      %2798 = vmatprep.subr.bf16.mxu0 0
      %2799 = vmatpush1.bf16.msra.mxu0 0
      %2800 = vmatprep.subr.bf16.mxu0 0
      %2801 = vmatpush1.bf16.msra.mxu0 0
      %2802 = vmatprep.subr.bf16.mxu0 0
      %2803 = vmatpush1.bf16.msra.mxu0 0
      %2804 = vmatprep.subr.bf16.mxu0 0
      %2805 = vmatpush1.bf16.msra.mxu0 0
      %2806 = vmatprep.subr.bf16.mxu0 0
      %2807 = vmatpush1.bf16.msra.mxu0 0
      %2808 = vmatprep.subr.bf16.mxu0 0
      %2809 = vmatpush1.bf16.msra.mxu0 0
      %2810 = vmatprep.subr.bf16.mxu0 0
      %2811 = vmatpush1.bf16.msra.mxu0 0
      %2812 = vmatprep.subr.bf16.mxu0 0
      %2813 = vmatpush1.bf16.msra.mxu0 0
      %2814 = vmatprep.subr.bf16.mxu0 0
      %2815 = vmatpush1.bf16.msra.mxu0 0
      %2816 = vmatprep.subr.bf16.mxu0 0
      %2817 = vmatpush1.bf16.msra.mxu0 0
      %2818 = vmatprep.subr.bf16.mxu0 0
      %2819 = vmatpush1.bf16.msra.mxu0 0
      %2820 = vmatprep.subr.bf16.mxu0 0
      %2821 = vmatpush1.bf16.msra.mxu0 0
      %2822 = vmatprep.mubr.bf16.mxu0 0
      %2823 = vmatmul.mubr.bf16.gmra.mrb[0].mxu0 %v2785
      %v2824 = vpop.f32.mrb[0].mxu0
      %v2825 = vadd.f32 %v2770, %v2824
      %v2826 = vpop.f32.mrb[0].mxu0
      %v2827 = vpop.f32.mrb[0].mxu0
      %v2828 = vadd.f32 %v2770, %v2827
      %v2829 = vpop.f32.mrb[0].mxu0
      %2830 = vmatprep.mubr.bf16.mxu0 0
      %2831 = vmatmul.mubr.bf16.gmra.mrb[0].mxu0 %v2788
      %v2832 = vpop.f32.mrb[0].mxu0
      %v2833 = vadd.f32 %v2770, %v2832
      %v2834 = vpop.f32.mrb[0].mxu0
      %v2835 = vpop.f32.mrb[0].mxu0
      %v2836 = vpop.f32.mrb[0].mxu0
      %2837 = vdwg.mxu0
      %v2838 = vmul.f32 %v2825, 0.5
      %v2839 = vmul.f32 %v2828, 0.5
      %v2840 = vmul.f32 %v2833, 0.5
      %v2841 = vmul.f32 %v2825, 0.044715
      %v2842 = vmul.f32 %v2828, 0.044715
      %v2843 = vmul.f32 %v2833, 0.044715
      %v2844 = vmul.f32 %v2841, %v2825
      %v2845 = vmul.f32 %v2842, %v2828
      %v2846 = vmul.f32 %v2843, %v2833
      %v2847 = vmul.f32 %v2844, %v2825
      %v2848 = vmul.f32 %v2845, %v2828
      %v2849 = vmul.f32 %v2846, %v2833
      %v2850 = vadd.f32 %v2825, %v2847
      %v2851 = vadd.f32 %v2828, %v2848
      %v2852 = vadd.f32 %v2833, %v2849
      %v2853 = vmul.f32 %v2850, 0.7978846
      %v2854 = vmul.f32 %v2851, 0.7978846
      %v2855 = vmul.f32 %v2852, 0.7978846
      %v2856 = vtanh.pop %v2853
      %v2857 = vtanh.pop %v2854
      %v2858 = vtanh.pop %v2855
      %v2859 = vadd.f32 %v2856, 1.0
      %v2860 = vadd.f32 %v2857, 1.0
      %v2861 = vadd.f32 %v2858, 1.0
      %v2862 = vmul.f32 %v2838, %v2859
      %v2863 = vmul.f32 %v2839, %v2860
      %v2864 = vmul.f32 %v2840, %v2861
      %s2865 = scalar_lea.vmem %s27, 64
      %v2866 = vld [vmem:[%s2865] sm:$0xf]
      %v2867 = vld [vmem:[%s2865 + $0x4] sm:$0xf]
      %v2868 = vld [vmem:[%s2865 + $0x8] sm:$0xf]
      %v2869 = vld [vmem:[%s2865 + $0xc] sm:$0xf]
      %v2870 = vld [vmem:[%s2865 + $0x10] sm:$0xf]
      %v2871 = vld [vmem:[%s2865 + $0x14] sm:$0xf]
      %v2872 = vld [vmem:[%s2865 + $0x18] sm:$0xf]
      %v2873 = vld [vmem:[%s2865 + $0x1c] sm:$0xf]
      %v2874 = vld [vmem:[%s2865 + $0x20] sm:$0xf]
      %v2875 = vld [vmem:[%s2865 + $0x24] sm:$0xf]
      %v2876 = vld [vmem:[%s2865 + $0x28] sm:$0xf]
      %v2877 = vld [vmem:[%s2865 + $0x2c] sm:$0xf]
      %v2878 = vld [vmem:[%s2865 + $0x30] sm:$0xf]
      %v2879 = vld [vmem:[%s2865 + $0x34] sm:$0xf]
      %v2880 = vld [vmem:[%s2865 + $0x38] sm:$0xf]
      %v2881 = vld [vmem:[%s2865 + $0x3c] sm:$0xf]
      %v2882 = vpack.c.bf16 %v2863, %v2862
      %v2883 = vpack.c.bf16 %v2864, %v2864
      %v2900 = vunpack.c.l.b16 %v2866
      %v2901 = vunpack.c.l.b16 %v2867
      %v2902 = vunpack.c.l.b16 %v2868
      %v2903 = vunpack.c.l.b16 %v2869
      %v2904 = vunpack.c.l.b16 %v2870
      %v2905 = vunpack.c.l.b16 %v2871
      %v2906 = vunpack.c.l.b16 %v2872
      %v2907 = vunpack.c.l.b16 %v2873
      %v2908 = vunpack.c.l.b16 %v2874
      %v2909 = vunpack.c.l.b16 %v2875
      %v2910 = vunpack.c.l.b16 %v2876
      %v2911 = vunpack.c.l.b16 %v2877
      %v2912 = vunpack.c.l.b16 %v2878
      %v2913 = vunpack.c.l.b16 %v2879
      %v2914 = vunpack.c.l.b16 %v2880
      %v2915 = vunpack.c.l.b16 %v2881
      %v2916 = vpack.c.b16 %v2901, %v2900
      %v2917 = vpack.c.b16 %v2903, %v2902
      %v2918 = vpack.c.b16 %v2905, %v2904
      %v2919 = vpack.c.b16 %v2907, %v2906
      %v2920 = vpack.c.b16 %v2909, %v2908
      %v2921 = vpack.c.b16 %v2911, %v2910
      %v2922 = vpack.c.b16 %v2913, %v2912
      %v2923 = vpack.c.b16 %v2915, %v2914
      %2932 = vmatprep.subr.bf16.mxu0 0
      %2933 = vmatpush1.bf16.msra.mxu0 %v2916
      %2934 = vmatprep.subr.bf16.mxu0 0
      %2935 = vmatpush1.bf16.msra.mxu0 %v2917
      %2936 = vmatprep.subr.bf16.mxu0 0
      %2937 = vmatpush1.bf16.msra.mxu0 %v2918
      %2938 = vmatprep.subr.bf16.mxu0 0
      %2939 = vmatpush1.bf16.msra.mxu0 %v2919
      %2940 = vmatprep.subr.bf16.mxu0 0
      %2941 = vmatpush1.bf16.msra.mxu0 %v2920
      %2942 = vmatprep.subr.bf16.mxu0 0
      %2943 = vmatpush1.bf16.msra.mxu0 %v2921
      %2944 = vmatprep.subr.bf16.mxu0 0
      %2945 = vmatpush1.bf16.msra.mxu0 %v2922
      %2946 = vmatprep.subr.bf16.mxu0 0
      %2947 = vmatpush1.bf16.msra.mxu0 %v2923
      %2948 = vmatprep.subr.bf16.mxu0 0
      %2949 = vmatpush1.bf16.msra.mxu0 0
      %2950 = vmatprep.subr.bf16.mxu0 0
      %2951 = vmatpush1.bf16.msra.mxu0 0
      %2952 = vmatprep.subr.bf16.mxu0 0
      %2953 = vmatpush1.bf16.msra.mxu0 0
      %2954 = vmatprep.subr.bf16.mxu0 0
      %2955 = vmatpush1.bf16.msra.mxu0 0
      %2956 = vmatprep.subr.bf16.mxu0 0
      %2957 = vmatpush1.bf16.msra.mxu0 0
      %2958 = vmatprep.subr.bf16.mxu0 0
      %2959 = vmatpush1.bf16.msra.mxu0 0
      %2960 = vmatprep.subr.bf16.mxu0 0
      %2961 = vmatpush1.bf16.msra.mxu0 0
      %2962 = vmatprep.subr.bf16.mxu0 0
      %2963 = vmatpush1.bf16.msra.mxu0 0
      %2964 = vmatprep.mubr.bf16.mxu0 0
      %2965 = vmatmul.mubr.bf16.gmra.mrb[0].mxu0 %v2882
      %v2966 = vpop.f32.mrb[0].mxu0
      %v2967 = vadd.f32 0.0, %v2966
      %v2968 = vpop.f32.mrb[0].mxu0
      %v2969 = vpop.f32.mrb[0].mxu0
      %v2970 = vadd.f32 0.0, %v2969
      %v2971 = vpop.f32.mrb[0].mxu0
      %2972 = vmatprep.mubr.bf16.mxu0 0
      %2973 = vmatmul.mubr.bf16.gmra.mrb[0].mxu0 %v2883
      %v2974 = vpop.f32.mrb[0].mxu0
      %v2975 = vadd.f32 0.0, %v2974
      %v2976 = vpop.f32.mrb[0].mxu0
      %v2977 = vpop.f32.mrb[0].mxu0
      %v2978 = vpop.f32.mrb[0].mxu0
      %2979 = vdwg.mxu0
      %v2980 = vadd.f32 %v2693, %v2967
      %v2981 = vadd.f32 %v2694, %v2970
      %v2982 = vadd.f32 %v2695, %v2975
      %s2983 = scalar_lea.vmem %s29, 1
      %v2984 = vld [vmem:[%s2983] sm:$0x1]
      %v2986 = vlaneseq
      %v2987 = vshrl.u32 %v2986, 7
      %v2988 = vsub.s32 0, %v2987
      %v2989 = vrot.slane %v2984, %v2988
      %v2991 = vadd.f32 %v2980, %v2989
      %v2992 = vadd.f32 %v2981, %v2989
      %v2993 = vadd.f32 %v2982, %v2989
      %v2994 = vld [vmem:[%s31] sm:$0x1]
      %v2995 = vld [vmem:[%s33] sm:$0x1]
      %v2996 = vsel %vm1161, %v2991, 0.0
      %2997 = vadd.xlane.f32.xlu0 %v2996
      %v2998 = vpop.xlane.xlu0 %2997
      %v2999 = vsel %vm1161, %v2992, 0.0
      %3000 = vadd.xlane.f32.xlu0 %v2999
      %v3001 = vpop.xlane.xlu0 %3000
      %v3002 = vsel %vm1168, %v2993, 0.0
      %3003 = vadd.xlane.f32.xlu0 %v3002
      %v3004 = vpop.xlane.xlu0 %3003
      %v3005 = vmul.f32 %v2998, %v1172
      %v3006 = vmul.f32 %v3001, %v1172
      %v3007 = vmul.f32 %v3004, %v1172
      %v3008 = vsub.f32 %v2991, %v3005
      %v3009 = vsub.f32 %v2992, %v3006
      %v3010 = vsub.f32 %v2993, %v3007
      %v3011 = vmul.f32 %v3008, %v3008
      %v3012 = vmul.f32 %v3009, %v3009
      %v3013 = vmul.f32 %v3010, %v3010
      %v3014 = vsel %vm1161, %v3011, 0.0
      %3015 = vadd.xlane.f32.xlu0 %v3014
      %v3016 = vpop.xlane.xlu0 %3015
      %v3017 = vsel %vm1161, %v3012, 0.0
      %3018 = vadd.xlane.f32.xlu0 %v3017
      %v3019 = vpop.xlane.xlu0 %3018
      %v3020 = vsel %vm1168, %v3013, 0.0
      %3021 = vadd.xlane.f32.xlu0 %v3020
      %v3022 = vpop.xlane.xlu0 %3021
      %v3023 = vmul.f32 %v3016, %v1172
      %v3024 = vmul.f32 %v3019, %v1172
      %v3025 = vmul.f32 %v3022, %v1172
      %v3026 = vadd.f32 %v3023, 1e-06
      %v3027 = vadd.f32 %v3024, 1e-06
      %v3028 = vadd.f32 %v3025, 1e-06
      %v3029 = vrsqrt.pop %v3026
      %v3030 = vrsqrt.pop %v3027
      %v3031 = vrsqrt.pop %v3028
      %v3032 = vmul.f32 %v3008, %v3029
      %v3033 = vmul.f32 %v3009, %v3030
      %v3034 = vmul.f32 %v3010, %v3031
      %v3036 = vlaneseq
      %v3037 = vshrl.u32 %v3036, 7
      %v3038 = vsub.s32 0, %v3037
      %v3039 = vrot.slane %v2994, %v3038
      %v3041 = vmul.f32 %v3032, %v3039
      %v3042 = vmul.f32 %v3033, %v3039
      %v3043 = vmul.f32 %v3034, %v3039
      %v3045 = vlaneseq
      %v3046 = vshrl.u32 %v3045, 7
      %v3047 = vsub.s32 0, %v3046
      %v3048 = vrot.slane %v2995, %v3047
      %v3050 = vadd.f32 %v3041, %v3048
      %v3051 = vadd.f32 %v3042, %v3048
      %v3052 = vadd.f32 %v3043, %v3048
      %v3053 = vld [vmem:[%s35] sm:$0xf]
      %v3054 = vld [vmem:[%s35 + $0x4] sm:$0xf]
      %v3055 = vld [vmem:[%s35 + $0x8] sm:$0xf]
      %v3056 = vld [vmem:[%s35 + $0xc] sm:$0xf]
      %v3057 = vpack.c.bf16 %v3051, %v3050
      %v3058 = vpack.c.bf16 %v3052, %v3052
      %v3059 = vld [vmem:[%s37] sm:$0xff]
      %v3060 = vld [vmem:[%s37 + $0x8] sm:$0xff]
      %v3061 = vld [vmem:[%s37 + $0x10] sm:$0x1]
      %v3066 = vunpack.c.l.b16 %v3053
      %v3067 = vunpack.c.l.b16 %v3054
      %v3068 = vunpack.c.l.b16 %v3055
      %v3069 = vunpack.c.l.b16 %v3056
      %v3070 = vpack.c.b16 %v3067, %v3066
      %v3071 = vpack.c.b16 %v3069, %v3068
      %v3075 = vsel %vm1161, %v3057, 0
      %v3078 = vsel %vm1161, %v3058, 0
      %3080 = vmatprep.subr.bf16.mxu0 0
      %3081 = vmatpush1.bf16.msra.mxu0 %v3070
      %3082 = vmatprep.subr.bf16.mxu0 0
      %3083 = vmatpush1.bf16.msra.mxu0 %v3071
      %3084 = vmatprep.subr.bf16.mxu0 0
      %3085 = vmatpush1.bf16.msra.mxu0 0
      %3086 = vmatprep.subr.bf16.mxu0 0
      %3087 = vmatpush1.bf16.msra.mxu0 0
      %3088 = vmatprep.subr.bf16.mxu0 0
      %3089 = vmatpush1.bf16.msra.mxu0 0
      %3090 = vmatprep.subr.bf16.mxu0 0
      %3091 = vmatpush1.bf16.msra.mxu0 0
      %3092 = vmatprep.subr.bf16.mxu0 0
      %3093 = vmatpush1.bf16.msra.mxu0 0
      %3094 = vmatprep.subr.bf16.mxu0 0
      %3095 = vmatpush1.bf16.msra.mxu0 0
      %3096 = vmatprep.subr.bf16.mxu0 0
      %3097 = vmatpush1.bf16.msra.mxu0 0
      %3098 = vmatprep.subr.bf16.mxu0 0
      %3099 = vmatpush1.bf16.msra.mxu0 0
      %3100 = vmatprep.subr.bf16.mxu0 0
      %3101 = vmatpush1.bf16.msra.mxu0 0
      %3102 = vmatprep.subr.bf16.mxu0 0
      %3103 = vmatpush1.bf16.msra.mxu0 0
      %3104 = vmatprep.subr.bf16.mxu0 0
      %3105 = vmatpush1.bf16.msra.mxu0 0
      %3106 = vmatprep.subr.bf16.mxu0 0
      %3107 = vmatpush1.bf16.msra.mxu0 0
      %3108 = vmatprep.subr.bf16.mxu0 0
      %3109 = vmatpush1.bf16.msra.mxu0 0
      %3110 = vmatprep.subr.bf16.mxu0 0
      %3111 = vmatpush1.bf16.msra.mxu0 0
      %3112 = vmatprep.mubr.bf16.mxu0 0
      %3113 = vmatmul.mubr.bf16.gmra.mrb[0].mxu0 %v3075
      %v3114 = vpop.f32.mrb[0].mxu0
      %v3115 = vadd.f32 %v3059, %v3114
      %v3116 = vpop.f32.mrb[0].mxu0
      %v3117 = vpop.f32.mrb[0].mxu0
      %v3118 = vadd.f32 %v3060, %v3117
      %v3119 = vpop.f32.mrb[0].mxu0
      %3120 = vmatprep.mubr.bf16.mxu0 0
      %3121 = vmatmul.mubr.bf16.gmra.mrb[0].mxu0 %v3078
      %v3122 = vpop.f32.mrb[0].mxu0
      %v3123 = vadd.f32 %v3061, %v3122
      %v3124 = vpop.f32.mrb[0].mxu0
      %v3125 = vpop.f32.mrb[0].mxu0
      %v3126 = vpop.f32.mrb[0].mxu0
      %3127 = vdwg.mxu0
      %v3128 = vld [vmem:[%s39] sm:$0x1]
      %v3129 = vld [vmem:[%s41] sm:$0x1]
      %v3130 = vsel %vm1161, %v3115, 0.0
      %3131 = vadd.xlane.f32.xlu0 %v3130
      %v3132 = vpop.xlane.xlu0 %3131
      %v3133 = vsel %vm1161, %v3118, 0.0
      %3134 = vadd.xlane.f32.xlu0 %v3133
      %v3135 = vpop.xlane.xlu0 %3134
      %v3136 = vsel %vm1168, %v3123, 0.0
      %3137 = vadd.xlane.f32.xlu0 %v3136
      %v3138 = vpop.xlane.xlu0 %3137
      %v3139 = vmul.f32 %v3132, %v1172
      %v3140 = vmul.f32 %v3135, %v1172
      %v3141 = vmul.f32 %v3138, %v1172
      %v3142 = vsub.f32 %v3115, %v3139
      %v3143 = vsub.f32 %v3118, %v3140
      %v3144 = vsub.f32 %v3123, %v3141
      %v3145 = vmul.f32 %v3142, %v3142
      %v3146 = vmul.f32 %v3143, %v3143
      %v3147 = vmul.f32 %v3144, %v3144
      %v3148 = vsel %vm1161, %v3145, 0.0
      %3149 = vadd.xlane.f32.xlu0 %v3148
      %v3150 = vpop.xlane.xlu0 %3149
      %v3151 = vsel %vm1161, %v3146, 0.0
      %3152 = vadd.xlane.f32.xlu0 %v3151
      %v3153 = vpop.xlane.xlu0 %3152
      %v3154 = vsel %vm1168, %v3147, 0.0
      %3155 = vadd.xlane.f32.xlu0 %v3154
      %v3156 = vpop.xlane.xlu0 %3155
      %v3157 = vmul.f32 %v3150, %v1172
      %v3158 = vmul.f32 %v3153, %v1172
      %v3159 = vmul.f32 %v3156, %v1172
      %v3160 = vadd.f32 %v3157, 1e-06
      %v3161 = vadd.f32 %v3158, 1e-06
      %v3162 = vadd.f32 %v3159, 1e-06
      %v3163 = vrsqrt.pop %v3160
      %v3164 = vrsqrt.pop %v3161
      %v3165 = vrsqrt.pop %v3162
      %v3166 = vmul.f32 %v3142, %v3163
      %v3167 = vmul.f32 %v3143, %v3164
      %v3168 = vmul.f32 %v3144, %v3165
      %v3170 = vlaneseq
      %v3171 = vshrl.u32 %v3170, 7
      %v3172 = vsub.s32 0, %v3171
      %v3173 = vrot.slane %v3128, %v3172
      %v3175 = vmul.f32 %v3166, %v3173
      %v3176 = vmul.f32 %v3167, %v3173
      %v3177 = vmul.f32 %v3168, %v3173
      %v3179 = vlaneseq
      %v3180 = vshrl.u32 %v3179, 7
      %v3181 = vsub.s32 0, %v3180
      %v3182 = vrot.slane %v3129, %v3181
      %v3184 = vadd.f32 %v3175, %v3182
      %v3185 = vadd.f32 %v3176, %v3182
      %v3186 = vadd.f32 %v3177, %v3182
      %v3187 = vld [vmem:[%s43] sm:$0xf]
      %v3188 = vld [vmem:[%s43 + $0x4] sm:$0xf]
      %v3189 = vld [vmem:[%s43 + $0x8] sm:$0xf]
      %v3190 = vld [vmem:[%s43 + $0xc] sm:$0xf]
      %v3191 = vpack.c.bf16 %v3185, %v3184
      %v3192 = vpack.c.bf16 %v3186, %v3186
      %v3193 = vld [vmem:[%s45] sm:$0x1]
      %v3195 = vlaneseq
      %v3196 = vshrl.u32 %v3195, 7
      %v3197 = vsub.s32 0, %v3196
      %v3198 = vrot.slane %v3193, %v3197
      %v3204 = vunpack.c.l.b16 %v3187
      %v3205 = vunpack.c.l.b16 %v3188
      %v3206 = vunpack.c.l.b16 %v3189
      %v3207 = vunpack.c.l.b16 %v3190
      %v3208 = vpack.c.b16 %v3205, %v3204
      %v3209 = vpack.c.b16 %v3207, %v3206
      %v3213 = vsel %vm1161, %v3191, 0
      %v3216 = vsel %vm1161, %v3192, 0
      %3218 = vmatprep.subr.bf16.mxu0 0
      %3219 = vmatpush1.bf16.msra.mxu0 %v3208
      %3220 = vmatprep.subr.bf16.mxu0 0
      %3221 = vmatpush1.bf16.msra.mxu0 %v3209
      %3222 = vmatprep.subr.bf16.mxu0 0
      %3223 = vmatpush1.bf16.msra.mxu0 0
      %3224 = vmatprep.subr.bf16.mxu0 0
      %3225 = vmatpush1.bf16.msra.mxu0 0
      %3226 = vmatprep.subr.bf16.mxu0 0
      %3227 = vmatpush1.bf16.msra.mxu0 0
      %3228 = vmatprep.subr.bf16.mxu0 0
      %3229 = vmatpush1.bf16.msra.mxu0 0
      %3230 = vmatprep.subr.bf16.mxu0 0
      %3231 = vmatpush1.bf16.msra.mxu0 0
      %3232 = vmatprep.subr.bf16.mxu0 0
      %3233 = vmatpush1.bf16.msra.mxu0 0
      %3234 = vmatprep.subr.bf16.mxu0 0
      %3235 = vmatpush1.bf16.msra.mxu0 0
      %3236 = vmatprep.subr.bf16.mxu0 0
      %3237 = vmatpush1.bf16.msra.mxu0 0
      %3238 = vmatprep.subr.bf16.mxu0 0
      %3239 = vmatpush1.bf16.msra.mxu0 0
      %3240 = vmatprep.subr.bf16.mxu0 0
      %3241 = vmatpush1.bf16.msra.mxu0 0
      %3242 = vmatprep.subr.bf16.mxu0 0
      %3243 = vmatpush1.bf16.msra.mxu0 0
      %3244 = vmatprep.subr.bf16.mxu0 0
      %3245 = vmatpush1.bf16.msra.mxu0 0
      %3246 = vmatprep.subr.bf16.mxu0 0
      %3247 = vmatpush1.bf16.msra.mxu0 0
      %3248 = vmatprep.subr.bf16.mxu0 0
      %3249 = vmatpush1.bf16.msra.mxu0 0
      %3250 = vmatprep.mubr.bf16.mxu0 0
      %3251 = vmatmul.mubr.bf16.gmra.mrb[0].mxu0 %v3213
      %v3252 = vpop.f32.mrb[0].mxu0
      %v3253 = vadd.f32 %v3198, %v3252
      %v3254 = vpop.f32.mrb[0].mxu0
      %v3255 = vpop.f32.mrb[0].mxu0
      %v3256 = vadd.f32 %v3198, %v3255
      %v3257 = vpop.f32.mrb[0].mxu0
      %3258 = vmatprep.mubr.bf16.mxu0 0
      %3259 = vmatmul.mubr.bf16.gmra.mrb[0].mxu0 %v3216
      %v3260 = vpop.f32.mrb[0].mxu0
      %v3261 = vadd.f32 %v3198, %v3260
      %v3262 = vpop.f32.mrb[0].mxu0
      %v3263 = vpop.f32.mrb[0].mxu0
      %v3264 = vpop.f32.mrb[0].mxu0
      %3265 = vdwg.mxu0
      %v3266 = vld [vmem:[%s47] sm:$0xf]
      %v3267 = vld [vmem:[%s47 + $0x4] sm:$0xf]
      %v3268 = vld [vmem:[%s47 + $0x8] sm:$0xf]
      %v3269 = vld [vmem:[%s47 + $0xc] sm:$0xf]
      %v3270 = vpack.c.bf16 %v3256, %v3253
      %v3271 = vpack.c.bf16 %v3261, %v3261
      %3274 = vrot.lane.b32.xlu0 %v3270, 96
      %v3275 = vpop.permute.xlu0 %3274
      %3276 = vrot.lane.b32.xlu0 %v3271, 96
      %v3277 = vpop.permute.xlu0 %3276
      %v3279 = vsel %vm1312, %v3270, 0
      %v3282 = vsel %vm1312, %v3271, 0
      %v3285 = vsel %vm1312, %v3275, 0
      %v3288 = vsel %vm1312, %v3277, 0
      %3290 = vmatprep.subr.bf16.mxu0 0
      %3291 = vmatpush1.bf16.xpose.msra.mxu0 %v3285
      %3292 = vmatprep.subr.bf16.mxu0 0
      %3293 = vmatpush1.bf16.xpose.msra.mxu0 %v3288
      %3294 = vmatprep.subr.bf16.mxu0 0
      %3295 = vmatpush1.bf16.xpose.msra.mxu0 0
      %3296 = vmatprep.subr.bf16.mxu0 0
      %3297 = vmatpush1.bf16.xpose.msra.mxu0 0
      %3298 = vmatprep.subr.bf16.mxu0 0
      %3299 = vmatpush1.bf16.xpose.msra.mxu0 0
      %3300 = vmatprep.subr.bf16.mxu0 0
      %3301 = vmatpush1.bf16.xpose.msra.mxu0 0
      %3302 = vmatprep.subr.bf16.mxu0 0
      %3303 = vmatpush1.bf16.xpose.msra.mxu0 0
      %3304 = vmatprep.subr.bf16.mxu0 0
      %3305 = vmatpush1.bf16.xpose.msra.mxu0 0
      %3306 = vmatprep.subr.bf16.mxu0 0
      %3307 = vmatpush1.bf16.xpose.msra.mxu0 0
      %3308 = vmatprep.subr.bf16.mxu0 0
      %3309 = vmatpush1.bf16.xpose.msra.mxu0 0
      %3310 = vmatprep.subr.bf16.mxu0 0
      %3311 = vmatpush1.bf16.xpose.msra.mxu0 0
      %3312 = vmatprep.subr.bf16.mxu0 0
      %3313 = vmatpush1.bf16.xpose.msra.mxu0 0
      %3314 = vmatprep.subr.bf16.mxu0 0
      %3315 = vmatpush1.bf16.xpose.msra.mxu0 0
      %3316 = vmatprep.subr.bf16.mxu0 0
      %3317 = vmatpush1.bf16.xpose.msra.mxu0 0
      %3318 = vmatprep.subr.bf16.mxu0 0
      %3319 = vmatpush1.bf16.xpose.msra.mxu0 0
      %3320 = vmatprep.subr.bf16.mxu0 0
      %3321 = vmatpush1.bf16.xpose.msra.mxu0 0
      %3322 = vmatprep.mubr.bf16.mxu0 0
      %3323 = vmatmul.mubr.bf16.gmra.mrb[0].mxu0 %v3279
      %v3324 = vpop.f32.mrb[0].mxu0
      %v3325 = vadd.f32 0.0, %v3324
      %v3326 = vpop.f32.mrb[0].mxu0
      %v3327 = vpop.f32.mrb[0].mxu0
      %v3328 = vadd.f32 0.0, %v3327
      %v3329 = vpop.f32.mrb[0].mxu0
      %3330 = vmatprep.mubr.bf16.mxu0 0
      %3331 = vmatmul.mubr.bf16.gmra.mrb[0].mxu0 %v3282
      %v3332 = vpop.f32.mrb[0].mxu0
      %v3333 = vadd.f32 0.0, %v3332
      %v3334 = vpop.f32.mrb[0].mxu0
      %v3335 = vpop.f32.mrb[0].mxu0
      %v3336 = vpop.f32.mrb[0].mxu0
      %3337 = vdwg.mxu0
      %v3338 = vmul.f32 %v3325, 0.25
      %v3339 = vmul.f32 %v3328, 0.25
      %v3340 = vmul.f32 %v3333, 0.25
      %v3341 = vsel %vm1376, %v3338, -inf
      %3342 = vmax.xlane.f32.xlu0 %v3341
      %v3343 = vpop.xlane.xlu0 %3342
      %v3344 = vsel %vm1376, %v3339, -inf
      %3345 = vmax.xlane.f32.xlu0 %v3344
      %v3346 = vpop.xlane.xlu0 %3345
      %v3347 = vsel %vm1383, %v3340, -inf
      %3348 = vmax.xlane.f32.xlu0 %v3347
      %v3349 = vpop.xlane.xlu0 %3348
      %v3350 = vsub.f32 %v3338, %v3343
      %v3351 = vsub.f32 %v3339, %v3346
      %v3352 = vsub.f32 %v3340, %v3349
      %v3353 = vmul.f32 %v3350, 1.442695
      %v3354 = vpow.pop %v3353
      %v3355 = vmul.f32 %v3351, 1.442695
      %v3356 = vpow.pop %v3355
      %v3357 = vmul.f32 %v3352, 1.442695
      %v3358 = vpow.pop %v3357
      %v3359 = vsel %vm1376, %v3354, 0.0
      %3360 = vadd.xlane.f32.xlu0 %v3359
      %v3361 = vpop.xlane.xlu0 %3360
      %v3362 = vsel %vm1376, %v3356, 0.0
      %3363 = vadd.xlane.f32.xlu0 %v3362
      %v3364 = vpop.xlane.xlu0 %3363
      %v3365 = vsel %vm1383, %v3358, 0.0
      %3366 = vadd.xlane.f32.xlu0 %v3365
      %v3367 = vpop.xlane.xlu0 %3366
      %v3368 = vrcp.pop %v3361
      %v3369 = vmul.f32 %v3354, %v3368
      %v3370 = vrcp.pop %v3364
      %v3371 = vmul.f32 %v3356, %v3370
      %v3372 = vrcp.pop %v3367
      %v3373 = vmul.f32 %v3358, %v3372
      %v3374 = vpack.c.bf16 %v3371, %v3369
      %v3375 = vpack.c.bf16 %v3373, %v3373
      %3376 = vrot.lane.b32.xlu0 %v3270, 64
      %v3377 = vpop.permute.xlu0 %3376
      %3378 = vrot.lane.b32.xlu0 %v3271, 64
      %v3379 = vpop.permute.xlu0 %3378
      %v3382 = vsel %vm1376, %v3374, 0
      %v3385 = vsel %vm1376, %v3375, 0
      %v3388 = vand.u32 %v3379, %v1426
      %3390 = vmatprep.subr.bf16.mxu0 0
      %3391 = vmatpush1.bf16.msra.mxu0 %v3377
      %3392 = vmatprep.subr.bf16.mxu0 0
      %3393 = vmatpush1.bf16.msra.mxu0 %v3388
      %3394 = vmatprep.subr.bf16.mxu0 0
      %3395 = vmatpush1.bf16.msra.mxu0 0
      %3396 = vmatprep.subr.bf16.mxu0 0
      %3397 = vmatpush1.bf16.msra.mxu0 0
      %3398 = vmatprep.subr.bf16.mxu0 0
      %3399 = vmatpush1.bf16.msra.mxu0 0
      %3400 = vmatprep.subr.bf16.mxu0 0
      %3401 = vmatpush1.bf16.msra.mxu0 0
      %3402 = vmatprep.subr.bf16.mxu0 0
      %3403 = vmatpush1.bf16.msra.mxu0 0
      %3404 = vmatprep.subr.bf16.mxu0 0
      %3405 = vmatpush1.bf16.msra.mxu0 0
      %3406 = vmatprep.subr.bf16.mxu0 0
      %3407 = vmatpush1.bf16.msra.mxu0 0
      %3408 = vmatprep.subr.bf16.mxu0 0
      %3409 = vmatpush1.bf16.msra.mxu0 0
      %3410 = vmatprep.subr.bf16.mxu0 0
      %3411 = vmatpush1.bf16.msra.mxu0 0
      %3412 = vmatprep.subr.bf16.mxu0 0
      %3413 = vmatpush1.bf16.msra.mxu0 0
      %3414 = vmatprep.subr.bf16.mxu0 0
      %3415 = vmatpush1.bf16.msra.mxu0 0
      %3416 = vmatprep.subr.bf16.mxu0 0
      %3417 = vmatpush1.bf16.msra.mxu0 0
      %3418 = vmatprep.subr.bf16.mxu0 0
      %3419 = vmatpush1.bf16.msra.mxu0 0
      %3420 = vmatprep.subr.bf16.mxu0 0
      %3421 = vmatpush1.bf16.msra.mxu0 0
      %3422 = vmatprep.mubr.bf16.mxu0 0
      %3423 = vmatmul.mubr.bf16.gmra.mrb[0].mxu0 %v3382
      %v3424 = vpop.f32.mrb[0].mxu0
      %v3425 = vadd.f32 0.0, %v3424
      %v3426 = vpop.f32.mrb[0].mxu0
      %v3427 = vpop.f32.mrb[0].mxu0
      %v3428 = vadd.f32 0.0, %v3427
      %v3429 = vpop.f32.mrb[0].mxu0
      %3430 = vmatprep.mubr.bf16.mxu0 0
      %3431 = vmatmul.mubr.bf16.gmra.mrb[0].mxu0 %v3385
      %v3432 = vpop.f32.mrb[0].mxu0
      %v3433 = vadd.f32 0.0, %v3432
      %v3434 = vpop.f32.mrb[0].mxu0
      %v3435 = vpop.f32.mrb[0].mxu0
      %v3436 = vpop.f32.mrb[0].mxu0
      %3437 = vdwg.mxu0
      %v3438 = vpack.c.bf16 %v3428, %v3425
      %v3439 = vpack.c.bf16 %v3433, %v3433
      %3440 = vrot.lane.b32.xlu0 %v3270, 112
      %v3441 = vpop.permute.xlu0 %3440
      %3442 = vrot.lane.b32.xlu0 %v3271, 112
      %v3443 = vpop.permute.xlu0 %3442
      %3444 = vrot.lane.b32.xlu0 %v3270, 80
      %v3445 = vpop.permute.xlu0 %3444
      %3446 = vrot.lane.b32.xlu0 %v3271, 80
      %v3447 = vpop.permute.xlu0 %3446
      %v3449 = vsel %vm1312, %v3441, 0
      %v3452 = vsel %vm1312, %v3443, 0
      %v3455 = vsel %vm1312, %v3445, 0
      %v3458 = vsel %vm1312, %v3447, 0
      %3460 = vmatprep.subr.bf16.mxu0 0
      %3461 = vmatpush1.bf16.xpose.msra.mxu0 %v3455
      %3462 = vmatprep.subr.bf16.mxu0 0
      %3463 = vmatpush1.bf16.xpose.msra.mxu0 %v3458
      %3464 = vmatprep.subr.bf16.mxu0 0
      %3465 = vmatpush1.bf16.xpose.msra.mxu0 0
      %3466 = vmatprep.subr.bf16.mxu0 0
      %3467 = vmatpush1.bf16.xpose.msra.mxu0 0
      %3468 = vmatprep.subr.bf16.mxu0 0
      %3469 = vmatpush1.bf16.xpose.msra.mxu0 0
      %3470 = vmatprep.subr.bf16.mxu0 0
      %3471 = vmatpush1.bf16.xpose.msra.mxu0 0
      %3472 = vmatprep.subr.bf16.mxu0 0
      %3473 = vmatpush1.bf16.xpose.msra.mxu0 0
      %3474 = vmatprep.subr.bf16.mxu0 0
      %3475 = vmatpush1.bf16.xpose.msra.mxu0 0
      %3476 = vmatprep.subr.bf16.mxu0 0
      %3477 = vmatpush1.bf16.xpose.msra.mxu0 0
      %3478 = vmatprep.subr.bf16.mxu0 0
      %3479 = vmatpush1.bf16.xpose.msra.mxu0 0
      %3480 = vmatprep.subr.bf16.mxu0 0
      %3481 = vmatpush1.bf16.xpose.msra.mxu0 0
      %3482 = vmatprep.subr.bf16.mxu0 0
      %3483 = vmatpush1.bf16.xpose.msra.mxu0 0
      %3484 = vmatprep.subr.bf16.mxu0 0
      %3485 = vmatpush1.bf16.xpose.msra.mxu0 0
      %3486 = vmatprep.subr.bf16.mxu0 0
      %3487 = vmatpush1.bf16.xpose.msra.mxu0 0
      %3488 = vmatprep.subr.bf16.mxu0 0
      %3489 = vmatpush1.bf16.xpose.msra.mxu0 0
      %3490 = vmatprep.subr.bf16.mxu0 0
      %3491 = vmatpush1.bf16.xpose.msra.mxu0 0
      %3492 = vmatprep.mubr.bf16.mxu0 0
      %3493 = vmatmul.mubr.bf16.gmra.mrb[0].mxu0 %v3449
      %v3494 = vpop.f32.mrb[0].mxu0
      %v3495 = vadd.f32 0.0, %v3494
      %v3496 = vpop.f32.mrb[0].mxu0
      %v3497 = vpop.f32.mrb[0].mxu0
      %v3498 = vadd.f32 0.0, %v3497
      %v3499 = vpop.f32.mrb[0].mxu0
      %3500 = vmatprep.mubr.bf16.mxu0 0
      %3501 = vmatmul.mubr.bf16.gmra.mrb[0].mxu0 %v3452
      %v3502 = vpop.f32.mrb[0].mxu0
      %v3503 = vadd.f32 0.0, %v3502
      %v3504 = vpop.f32.mrb[0].mxu0
      %v3505 = vpop.f32.mrb[0].mxu0
      %v3506 = vpop.f32.mrb[0].mxu0
      %3507 = vdwg.mxu0
      %v3508 = vmul.f32 %v3495, 0.25
      %v3509 = vmul.f32 %v3498, 0.25
      %v3510 = vmul.f32 %v3503, 0.25
      %v3511 = vsel %vm1376, %v3508, -inf
      %3512 = vmax.xlane.f32.xlu0 %v3511
      %v3513 = vpop.xlane.xlu0 %3512
      %v3514 = vsel %vm1376, %v3509, -inf
      %3515 = vmax.xlane.f32.xlu0 %v3514
      %v3516 = vpop.xlane.xlu0 %3515
      %v3517 = vsel %vm1383, %v3510, -inf
      %3518 = vmax.xlane.f32.xlu0 %v3517
      %v3519 = vpop.xlane.xlu0 %3518
      %v3520 = vsub.f32 %v3508, %v3513
      %v3521 = vsub.f32 %v3509, %v3516
      %v3522 = vsub.f32 %v3510, %v3519
      %v3523 = vmul.f32 %v3520, 1.442695
      %v3524 = vpow.pop %v3523
      %v3525 = vmul.f32 %v3521, 1.442695
      %v3526 = vpow.pop %v3525
      %v3527 = vmul.f32 %v3522, 1.442695
      %v3528 = vpow.pop %v3527
      %v3529 = vsel %vm1376, %v3524, 0.0
      %3530 = vadd.xlane.f32.xlu0 %v3529
      %v3531 = vpop.xlane.xlu0 %3530
      %v3532 = vsel %vm1376, %v3526, 0.0
      %3533 = vadd.xlane.f32.xlu0 %v3532
      %v3534 = vpop.xlane.xlu0 %3533
      %v3535 = vsel %vm1383, %v3528, 0.0
      %3536 = vadd.xlane.f32.xlu0 %v3535
      %v3537 = vpop.xlane.xlu0 %3536
      %v3538 = vrcp.pop %v3531
      %v3539 = vmul.f32 %v3524, %v3538
      %v3540 = vrcp.pop %v3534
      %v3541 = vmul.f32 %v3526, %v3540
      %v3542 = vrcp.pop %v3537
      %v3543 = vmul.f32 %v3528, %v3542
      %v3544 = vpack.c.bf16 %v3541, %v3539
      %v3545 = vpack.c.bf16 %v3543, %v3543
      %3546 = vrot.lane.b32.xlu0 %v3270, 48
      %v3547 = vpop.permute.xlu0 %3546
      %3548 = vrot.lane.b32.xlu0 %v3271, 48
      %v3549 = vpop.permute.xlu0 %3548
      %v3552 = vsel %vm1376, %v3544, 0
      %v3555 = vsel %vm1376, %v3545, 0
      %v3558 = vand.u32 %v3549, %v1426
      %3560 = vmatprep.subr.bf16.mxu0 0
      %3561 = vmatpush1.bf16.msra.mxu0 %v3547
      %3562 = vmatprep.subr.bf16.mxu0 0
      %3563 = vmatpush1.bf16.msra.mxu0 %v3558
      %3564 = vmatprep.subr.bf16.mxu0 0
      %3565 = vmatpush1.bf16.msra.mxu0 0
      %3566 = vmatprep.subr.bf16.mxu0 0
      %3567 = vmatpush1.bf16.msra.mxu0 0
      %3568 = vmatprep.subr.bf16.mxu0 0
      %3569 = vmatpush1.bf16.msra.mxu0 0
      %3570 = vmatprep.subr.bf16.mxu0 0
      %3571 = vmatpush1.bf16.msra.mxu0 0
      %3572 = vmatprep.subr.bf16.mxu0 0
      %3573 = vmatpush1.bf16.msra.mxu0 0
      %3574 = vmatprep.subr.bf16.mxu0 0
      %3575 = vmatpush1.bf16.msra.mxu0 0
      %3576 = vmatprep.subr.bf16.mxu0 0
      %3577 = vmatpush1.bf16.msra.mxu0 0
      %3578 = vmatprep.subr.bf16.mxu0 0
      %3579 = vmatpush1.bf16.msra.mxu0 0
      %3580 = vmatprep.subr.bf16.mxu0 0
      %3581 = vmatpush1.bf16.msra.mxu0 0
      %3582 = vmatprep.subr.bf16.mxu0 0
      %3583 = vmatpush1.bf16.msra.mxu0 0
      %3584 = vmatprep.subr.bf16.mxu0 0
      %3585 = vmatpush1.bf16.msra.mxu0 0
      %3586 = vmatprep.subr.bf16.mxu0 0
      %3587 = vmatpush1.bf16.msra.mxu0 0
      %3588 = vmatprep.subr.bf16.mxu0 0
      %3589 = vmatpush1.bf16.msra.mxu0 0
      %3590 = vmatprep.subr.bf16.mxu0 0
      %3591 = vmatpush1.bf16.msra.mxu0 0
      %3592 = vmatprep.mubr.bf16.mxu0 0
      %3593 = vmatmul.mubr.bf16.gmra.mrb[0].mxu0 %v3552
      %v3594 = vpop.f32.mrb[0].mxu0
      %v3595 = vadd.f32 0.0, %v3594
      %v3596 = vpop.f32.mrb[0].mxu0
      %v3597 = vpop.f32.mrb[0].mxu0
      %v3598 = vadd.f32 0.0, %v3597
      %v3599 = vpop.f32.mrb[0].mxu0
      %3600 = vmatprep.mubr.bf16.mxu0 0
      %3601 = vmatmul.mubr.bf16.gmra.mrb[0].mxu0 %v3555
      %v3602 = vpop.f32.mrb[0].mxu0
      %v3603 = vadd.f32 0.0, %v3602
      %v3604 = vpop.f32.mrb[0].mxu0
      %v3605 = vpop.f32.mrb[0].mxu0
      %v3606 = vpop.f32.mrb[0].mxu0
      %3607 = vdwg.mxu0
      %v3608 = vpack.c.bf16 %v3598, %v3595
      %v3609 = vpack.c.bf16 %v3603, %v3603
      %v3612 = vunpack.c.l.b16 %v3268
      %v3613 = vunpack.c.l.b16 %v3269
      %v3614 = vpack.c.b16 %v3613, %v3612
      %v3617 = vsel %vm1312, %v3608, 0
      %v3620 = vsel %vm1312, %v3609, 0
      %3622 = vmatprep.subr.bf16.mxu0 0
      %3623 = vmatpush1.bf16.msra.mxu0 %v3614
      %3624 = vmatprep.subr.bf16.mxu0 0
      %3625 = vmatpush1.bf16.msra.mxu0 0
      %3626 = vmatprep.subr.bf16.mxu0 0
      %3627 = vmatpush1.bf16.msra.mxu0 0
      %3628 = vmatprep.subr.bf16.mxu0 0
      %3629 = vmatpush1.bf16.msra.mxu0 0
      %3630 = vmatprep.subr.bf16.mxu0 0
      %3631 = vmatpush1.bf16.msra.mxu0 0
      %3632 = vmatprep.subr.bf16.mxu0 0
      %3633 = vmatpush1.bf16.msra.mxu0 0
      %3634 = vmatprep.subr.bf16.mxu0 0
      %3635 = vmatpush1.bf16.msra.mxu0 0
      %3636 = vmatprep.subr.bf16.mxu0 0
      %3637 = vmatpush1.bf16.msra.mxu0 0
      %3638 = vmatprep.subr.bf16.mxu0 0
      %3639 = vmatpush1.bf16.msra.mxu0 0
      %3640 = vmatprep.subr.bf16.mxu0 0
      %3641 = vmatpush1.bf16.msra.mxu0 0
      %3642 = vmatprep.subr.bf16.mxu0 0
      %3643 = vmatpush1.bf16.msra.mxu0 0
      %3644 = vmatprep.subr.bf16.mxu0 0
      %3645 = vmatpush1.bf16.msra.mxu0 0
      %3646 = vmatprep.subr.bf16.mxu0 0
      %3647 = vmatpush1.bf16.msra.mxu0 0
      %3648 = vmatprep.subr.bf16.mxu0 0
      %3649 = vmatpush1.bf16.msra.mxu0 0
      %3650 = vmatprep.subr.bf16.mxu0 0
      %3651 = vmatpush1.bf16.msra.mxu0 0
      %3652 = vmatprep.subr.bf16.mxu0 0
      %3653 = vmatpush1.bf16.msra.mxu0 0
      %3654 = vmatprep.mubr.bf16.mxu0 0
      %3655 = vmatmul.mubr.bf16.gmra.mrb[0].mxu0 %v3617
      %v3656 = vpop.f32.mrb[0].mxu0
      %v3657 = vadd.f32 0.0, %v3656
      %v3658 = vpop.f32.mrb[0].mxu0
      %v3659 = vpop.f32.mrb[0].mxu0
      %v3660 = vadd.f32 0.0, %v3659
      %v3661 = vpop.f32.mrb[0].mxu0
      %3662 = vmatprep.mubr.bf16.mxu0 0
      %3663 = vmatmul.mubr.bf16.gmra.mrb[0].mxu0 %v3620
      %v3664 = vpop.f32.mrb[0].mxu0
      %v3665 = vadd.f32 0.0, %v3664
      %v3666 = vpop.f32.mrb[0].mxu0
      %v3667 = vpop.f32.mrb[0].mxu0
      %v3668 = vpop.f32.mrb[0].mxu0
      %3669 = vdwg.mxu0
      %v3672 = vunpack.c.l.b16 %v3266
      %v3673 = vunpack.c.l.b16 %v3267
      %v3674 = vpack.c.b16 %v3673, %v3672
      %v3677 = vsel %vm1312, %v3438, 0
      %v3680 = vsel %vm1312, %v3439, 0
      %3682 = vmatprep.subr.bf16.mxu0 0
      %3683 = vmatpush1.bf16.msra.mxu0 %v3674
      %3684 = vmatprep.subr.bf16.mxu0 0
      %3685 = vmatpush1.bf16.msra.mxu0 0
      %3686 = vmatprep.subr.bf16.mxu0 0
      %3687 = vmatpush1.bf16.msra.mxu0 0
      %3688 = vmatprep.subr.bf16.mxu0 0
      %3689 = vmatpush1.bf16.msra.mxu0 0
      %3690 = vmatprep.subr.bf16.mxu0 0
      %3691 = vmatpush1.bf16.msra.mxu0 0
      %3692 = vmatprep.subr.bf16.mxu0 0
      %3693 = vmatpush1.bf16.msra.mxu0 0
      %3694 = vmatprep.subr.bf16.mxu0 0
      %3695 = vmatpush1.bf16.msra.mxu0 0
      %3696 = vmatprep.subr.bf16.mxu0 0
      %3697 = vmatpush1.bf16.msra.mxu0 0
      %3698 = vmatprep.subr.bf16.mxu0 0
      %3699 = vmatpush1.bf16.msra.mxu0 0
      %3700 = vmatprep.subr.bf16.mxu0 0
      %3701 = vmatpush1.bf16.msra.mxu0 0
      %3702 = vmatprep.subr.bf16.mxu0 0
      %3703 = vmatpush1.bf16.msra.mxu0 0
      %3704 = vmatprep.subr.bf16.mxu0 0
      %3705 = vmatpush1.bf16.msra.mxu0 0
      %3706 = vmatprep.subr.bf16.mxu0 0
      %3707 = vmatpush1.bf16.msra.mxu0 0
      %3708 = vmatprep.subr.bf16.mxu0 0
      %3709 = vmatpush1.bf16.msra.mxu0 0
      %3710 = vmatprep.subr.bf16.mxu0 0
      %3711 = vmatpush1.bf16.msra.mxu0 0
      %3712 = vmatprep.subr.bf16.mxu0 0
      %3713 = vmatpush1.bf16.msra.mxu0 0
      %3714 = vmatprep.mubr.bf16.mxu0 0
      %3715 = vmatmul.mubr.bf16.gmra.mrb[0].mxu0 %v3677
      %v3716 = vpop.f32.mrb[0].mxu0
      %v3717 = vadd.f32 %v3657, %v3716
      %v3718 = vpop.f32.mrb[0].mxu0
      %v3719 = vpop.f32.mrb[0].mxu0
      %v3720 = vadd.f32 %v3660, %v3719
      %v3721 = vpop.f32.mrb[0].mxu0
      %3722 = vmatprep.mubr.bf16.mxu0 0
      %3723 = vmatmul.mubr.bf16.gmra.mrb[0].mxu0 %v3680
      %v3724 = vpop.f32.mrb[0].mxu0
      %v3725 = vadd.f32 %v3665, %v3724
      %v3726 = vpop.f32.mrb[0].mxu0
      %v3727 = vpop.f32.mrb[0].mxu0
      %v3728 = vpop.f32.mrb[0].mxu0
      %3729 = vdwg.mxu0
      %v3730 = vadd.f32 %v3115, %v3717
      %v3731 = vadd.f32 %v3118, %v3720
      %v3732 = vadd.f32 %v3123, %v3725
      %v3733 = vld [vmem:[%s49] sm:$0x1]
      %v3735 = vlaneseq
      %v3736 = vshrl.u32 %v3735, 7
      %v3737 = vsub.s32 0, %v3736
      %v3738 = vrot.slane %v3733, %v3737
      %v3740 = vadd.f32 %v3730, %v3738
      %v3741 = vadd.f32 %v3731, %v3738
      %v3742 = vadd.f32 %v3732, %v3738
      %v3743 = vld [vmem:[%s51] sm:$0x1]
      %v3744 = vld [vmem:[%s53] sm:$0x1]
      %v3745 = vsel %vm1161, %v3740, 0.0
      %3746 = vadd.xlane.f32.xlu0 %v3745
      %v3747 = vpop.xlane.xlu0 %3746
      %v3748 = vsel %vm1161, %v3741, 0.0
      %3749 = vadd.xlane.f32.xlu0 %v3748
      %v3750 = vpop.xlane.xlu0 %3749
      %v3751 = vsel %vm1168, %v3742, 0.0
      %3752 = vadd.xlane.f32.xlu0 %v3751
      %v3753 = vpop.xlane.xlu0 %3752
      %v3754 = vmul.f32 %v3747, %v1172
      %v3755 = vmul.f32 %v3750, %v1172
      %v3756 = vmul.f32 %v3753, %v1172
      %v3757 = vsub.f32 %v3740, %v3754
      %v3758 = vsub.f32 %v3741, %v3755
      %v3759 = vsub.f32 %v3742, %v3756
      %v3760 = vmul.f32 %v3757, %v3757
      %v3761 = vmul.f32 %v3758, %v3758
      %v3762 = vmul.f32 %v3759, %v3759
      %v3763 = vsel %vm1161, %v3760, 0.0
      %3764 = vadd.xlane.f32.xlu0 %v3763
      %v3765 = vpop.xlane.xlu0 %3764
      %v3766 = vsel %vm1161, %v3761, 0.0
      %3767 = vadd.xlane.f32.xlu0 %v3766
      %v3768 = vpop.xlane.xlu0 %3767
      %v3769 = vsel %vm1168, %v3762, 0.0
      %3770 = vadd.xlane.f32.xlu0 %v3769
      %v3771 = vpop.xlane.xlu0 %3770
      %v3772 = vmul.f32 %v3765, %v1172
      %v3773 = vmul.f32 %v3768, %v1172
      %v3774 = vmul.f32 %v3771, %v1172
      %v3775 = vadd.f32 %v3772, 1e-06
      %v3776 = vadd.f32 %v3773, 1e-06
      %v3777 = vadd.f32 %v3774, 1e-06
      %v3778 = vrsqrt.pop %v3775
      %v3779 = vrsqrt.pop %v3776
      %v3780 = vrsqrt.pop %v3777
      %v3781 = vmul.f32 %v3757, %v3778
      %v3782 = vmul.f32 %v3758, %v3779
      %v3783 = vmul.f32 %v3759, %v3780
      %v3785 = vlaneseq
      %v3786 = vshrl.u32 %v3785, 7
      %v3787 = vsub.s32 0, %v3786
      %v3788 = vrot.slane %v3743, %v3787
      %v3790 = vmul.f32 %v3781, %v3788
      %v3791 = vmul.f32 %v3782, %v3788
      %v3792 = vmul.f32 %v3783, %v3788
      %v3794 = vlaneseq
      %v3795 = vshrl.u32 %v3794, 7
      %v3796 = vsub.s32 0, %v3795
      %v3797 = vrot.slane %v3744, %v3796
      %v3799 = vadd.f32 %v3790, %v3797
      %v3800 = vadd.f32 %v3791, %v3797
      %v3801 = vadd.f32 %v3792, %v3797
      %v3802 = vld [vmem:[%s55] sm:$0xf]
      %v3803 = vld [vmem:[%s55 + $0x4] sm:$0xf]
      %v3804 = vld [vmem:[%s55 + $0x8] sm:$0xf]
      %v3805 = vld [vmem:[%s55 + $0xc] sm:$0xf]
      %v3806 = vpack.c.bf16 %v3800, %v3799
      %v3807 = vpack.c.bf16 %v3801, %v3801
      %v3808 = vld [vmem:[%s57] sm:$0x1]
      %v3810 = vlaneseq
      %v3811 = vshrl.u32 %v3810, 7
      %v3812 = vsub.s32 0, %v3811
      %v3813 = vrot.slane %v3808, %v3812
      %v3819 = vunpack.c.l.b16 %v3802
      %v3820 = vunpack.c.l.b16 %v3803
      %v3821 = vunpack.c.l.b16 %v3804
      %v3822 = vunpack.c.l.b16 %v3805
      %v3823 = vpack.c.b16 %v3820, %v3819
      %v3824 = vpack.c.b16 %v3822, %v3821
      %v3828 = vsel %vm1161, %v3806, 0
      %v3831 = vsel %vm1161, %v3807, 0
      %3833 = vmatprep.subr.bf16.mxu0 0
      %3834 = vmatpush1.bf16.msra.mxu0 %v3823
      %3835 = vmatprep.subr.bf16.mxu0 0
      %3836 = vmatpush1.bf16.msra.mxu0 %v3824
      %3837 = vmatprep.subr.bf16.mxu0 0
      %3838 = vmatpush1.bf16.msra.mxu0 0
      %3839 = vmatprep.subr.bf16.mxu0 0
      %3840 = vmatpush1.bf16.msra.mxu0 0
      %3841 = vmatprep.subr.bf16.mxu0 0
      %3842 = vmatpush1.bf16.msra.mxu0 0
      %3843 = vmatprep.subr.bf16.mxu0 0
      %3844 = vmatpush1.bf16.msra.mxu0 0
      %3845 = vmatprep.subr.bf16.mxu0 0
      %3846 = vmatpush1.bf16.msra.mxu0 0
      %3847 = vmatprep.subr.bf16.mxu0 0
      %3848 = vmatpush1.bf16.msra.mxu0 0
      %3849 = vmatprep.subr.bf16.mxu0 0
      %3850 = vmatpush1.bf16.msra.mxu0 0
      %3851 = vmatprep.subr.bf16.mxu0 0
      %3852 = vmatpush1.bf16.msra.mxu0 0
      %3853 = vmatprep.subr.bf16.mxu0 0
      %3854 = vmatpush1.bf16.msra.mxu0 0
      %3855 = vmatprep.subr.bf16.mxu0 0
      %3856 = vmatpush1.bf16.msra.mxu0 0
      %3857 = vmatprep.subr.bf16.mxu0 0
      %3858 = vmatpush1.bf16.msra.mxu0 0
      %3859 = vmatprep.subr.bf16.mxu0 0
      %3860 = vmatpush1.bf16.msra.mxu0 0
      %3861 = vmatprep.subr.bf16.mxu0 0
      %3862 = vmatpush1.bf16.msra.mxu0 0
      %3863 = vmatprep.subr.bf16.mxu0 0
      %3864 = vmatpush1.bf16.msra.mxu0 0
      %3865 = vmatprep.mubr.bf16.mxu0 0
      %3866 = vmatmul.mubr.bf16.gmra.mrb[0].mxu0 %v3828
      %v3867 = vpop.f32.mrb[0].mxu0
      %v3868 = vadd.f32 %v3813, %v3867
      %v3869 = vpop.f32.mrb[0].mxu0
      %v3870 = vpop.f32.mrb[0].mxu0
      %v3871 = vadd.f32 %v3813, %v3870
      %v3872 = vpop.f32.mrb[0].mxu0
      %3873 = vmatprep.mubr.bf16.mxu0 0
      %3874 = vmatmul.mubr.bf16.gmra.mrb[0].mxu0 %v3831
      %v3875 = vpop.f32.mrb[0].mxu0
      %v3876 = vadd.f32 %v3813, %v3875
      %v3877 = vpop.f32.mrb[0].mxu0
      %v3878 = vpop.f32.mrb[0].mxu0
      %v3879 = vpop.f32.mrb[0].mxu0
      %3880 = vdwg.mxu0
      %v3881 = vmul.f32 %v3868, 0.5
      %v3882 = vmul.f32 %v3871, 0.5
      %v3883 = vmul.f32 %v3876, 0.5
      %v3884 = vmul.f32 %v3868, 0.044715
      %v3885 = vmul.f32 %v3871, 0.044715
      %v3886 = vmul.f32 %v3876, 0.044715
      %v3887 = vmul.f32 %v3884, %v3868
      %v3888 = vmul.f32 %v3885, %v3871
      %v3889 = vmul.f32 %v3886, %v3876
      %v3890 = vmul.f32 %v3887, %v3868
      %v3891 = vmul.f32 %v3888, %v3871
      %v3892 = vmul.f32 %v3889, %v3876
      %v3893 = vadd.f32 %v3868, %v3890
      %v3894 = vadd.f32 %v3871, %v3891
      %v3895 = vadd.f32 %v3876, %v3892
      %v3896 = vmul.f32 %v3893, 0.7978846
      %v3897 = vmul.f32 %v3894, 0.7978846
      %v3898 = vmul.f32 %v3895, 0.7978846
      %v3899 = vtanh.pop %v3896
      %v3900 = vtanh.pop %v3897
      %v3901 = vtanh.pop %v3898
      %v3902 = vadd.f32 %v3899, 1.0
      %v3903 = vadd.f32 %v3900, 1.0
      %v3904 = vadd.f32 %v3901, 1.0
      %v3905 = vmul.f32 %v3881, %v3902
      %v3906 = vmul.f32 %v3882, %v3903
      %v3907 = vmul.f32 %v3883, %v3904
      %v3908 = vld [vmem:[%s59] sm:$0xf]
      %v3909 = vld [vmem:[%s59 + $0x4] sm:$0xf]
      %v3910 = vld [vmem:[%s59 + $0x8] sm:$0xf]
      %v3911 = vld [vmem:[%s59 + $0xc] sm:$0xf]
      %v3912 = vld [vmem:[%s59 + $0x10] sm:$0xf]
      %v3913 = vld [vmem:[%s59 + $0x14] sm:$0xf]
      %v3914 = vld [vmem:[%s59 + $0x18] sm:$0xf]
      %v3915 = vld [vmem:[%s59 + $0x1c] sm:$0xf]
      %v3916 = vld [vmem:[%s59 + $0x20] sm:$0xf]
      %v3917 = vld [vmem:[%s59 + $0x24] sm:$0xf]
      %v3918 = vld [vmem:[%s59 + $0x28] sm:$0xf]
      %v3919 = vld [vmem:[%s59 + $0x2c] sm:$0xf]
      %v3920 = vld [vmem:[%s59 + $0x30] sm:$0xf]
      %v3921 = vld [vmem:[%s59 + $0x34] sm:$0xf]
      %v3922 = vld [vmem:[%s59 + $0x38] sm:$0xf]
      %v3923 = vld [vmem:[%s59 + $0x3c] sm:$0xf]
      %v3924 = vpack.c.bf16 %v3906, %v3905
      %v3925 = vpack.c.bf16 %v3907, %v3907
      %v3942 = vunpack.c.l.b16 %v3908
      %v3943 = vunpack.c.l.b16 %v3909
      %v3944 = vunpack.c.l.b16 %v3910
      %v3945 = vunpack.c.l.b16 %v3911
      %v3946 = vunpack.c.l.b16 %v3912
      %v3947 = vunpack.c.l.b16 %v3913
      %v3948 = vunpack.c.l.b16 %v3914
      %v3949 = vunpack.c.l.b16 %v3915
      %v3950 = vunpack.c.l.b16 %v3916
      %v3951 = vunpack.c.l.b16 %v3917
      %v3952 = vunpack.c.l.b16 %v3918
      %v3953 = vunpack.c.l.b16 %v3919
      %v3954 = vunpack.c.l.b16 %v3920
      %v3955 = vunpack.c.l.b16 %v3921
      %v3956 = vunpack.c.l.b16 %v3922
      %v3957 = vunpack.c.l.b16 %v3923
      %v3958 = vpack.c.b16 %v3943, %v3942
      %v3959 = vpack.c.b16 %v3945, %v3944
      %v3960 = vpack.c.b16 %v3947, %v3946
      %v3961 = vpack.c.b16 %v3949, %v3948
      %v3962 = vpack.c.b16 %v3951, %v3950
      %v3963 = vpack.c.b16 %v3953, %v3952
      %v3964 = vpack.c.b16 %v3955, %v3954
      %v3965 = vpack.c.b16 %v3957, %v3956
      %3974 = vmatprep.subr.bf16.mxu0 0
      %3975 = vmatpush1.bf16.msra.mxu0 %v3958
      %3976 = vmatprep.subr.bf16.mxu0 0
      %3977 = vmatpush1.bf16.msra.mxu0 %v3959
      %3978 = vmatprep.subr.bf16.mxu0 0
      %3979 = vmatpush1.bf16.msra.mxu0 %v3960
      %3980 = vmatprep.subr.bf16.mxu0 0
      %3981 = vmatpush1.bf16.msra.mxu0 %v3961
      %3982 = vmatprep.subr.bf16.mxu0 0
      %3983 = vmatpush1.bf16.msra.mxu0 %v3962
      %3984 = vmatprep.subr.bf16.mxu0 0
      %3985 = vmatpush1.bf16.msra.mxu0 %v3963
      %3986 = vmatprep.subr.bf16.mxu0 0
      %3987 = vmatpush1.bf16.msra.mxu0 %v3964
      %3988 = vmatprep.subr.bf16.mxu0 0
      %3989 = vmatpush1.bf16.msra.mxu0 %v3965
      %3990 = vmatprep.subr.bf16.mxu0 0
      %3991 = vmatpush1.bf16.msra.mxu0 0
      %3992 = vmatprep.subr.bf16.mxu0 0
      %3993 = vmatpush1.bf16.msra.mxu0 0
      %3994 = vmatprep.subr.bf16.mxu0 0
      %3995 = vmatpush1.bf16.msra.mxu0 0
      %3996 = vmatprep.subr.bf16.mxu0 0
      %3997 = vmatpush1.bf16.msra.mxu0 0
      %3998 = vmatprep.subr.bf16.mxu0 0
      %3999 = vmatpush1.bf16.msra.mxu0 0
      %4000 = vmatprep.subr.bf16.mxu0 0
      %4001 = vmatpush1.bf16.msra.mxu0 0
      %4002 = vmatprep.subr.bf16.mxu0 0
      %4003 = vmatpush1.bf16.msra.mxu0 0
      %4004 = vmatprep.subr.bf16.mxu0 0
      %4005 = vmatpush1.bf16.msra.mxu0 0
      %4006 = vmatprep.mubr.bf16.mxu0 0
      %4007 = vmatmul.mubr.bf16.gmra.mrb[0].mxu0 %v3924
      %v4008 = vpop.f32.mrb[0].mxu0
      %v4009 = vadd.f32 0.0, %v4008
      %v4010 = vpop.f32.mrb[0].mxu0
      %v4011 = vpop.f32.mrb[0].mxu0
      %v4012 = vadd.f32 0.0, %v4011
      %v4013 = vpop.f32.mrb[0].mxu0
      %4014 = vmatprep.mubr.bf16.mxu0 0
      %4015 = vmatmul.mubr.bf16.gmra.mrb[0].mxu0 %v3925
      %v4016 = vpop.f32.mrb[0].mxu0
      %v4017 = vadd.f32 0.0, %v4016
      %v4018 = vpop.f32.mrb[0].mxu0
      %v4019 = vpop.f32.mrb[0].mxu0
      %v4020 = vpop.f32.mrb[0].mxu0
      %4021 = vdwg.mxu0
      %v4022 = vadd.f32 %v3740, %v4009
      %v4023 = vadd.f32 %v3741, %v4012
      %v4024 = vadd.f32 %v3742, %v4017
      %v4025 = vld [vmem:[%s61] sm:$0x1]
      %v4027 = vlaneseq
      %v4028 = vshrl.u32 %v4027, 7
      %v4029 = vsub.s32 0, %v4028
      %v4030 = vrot.slane %v4025, %v4029
      %v4032 = vadd.f32 %v4022, %v4030
      %v4033 = vadd.f32 %v4023, %v4030
      %v4034 = vadd.f32 %v4024, %v4030
      %v4035 = vld [vmem:[%s63] sm:$0x1]
      %v4036 = vld [vmem:[%s65] sm:$0x1]
      %v4037 = vsel %vm1161, %v4032, 0.0
      %4038 = vadd.xlane.f32.xlu0 %v4037
      %v4039 = vpop.xlane.xlu0 %4038
      %v4040 = vsel %vm1161, %v4033, 0.0
      %4041 = vadd.xlane.f32.xlu0 %v4040
      %v4042 = vpop.xlane.xlu0 %4041
      %v4043 = vsel %vm1168, %v4034, 0.0
      %4044 = vadd.xlane.f32.xlu0 %v4043
      %v4045 = vpop.xlane.xlu0 %4044
      %v4046 = vmul.f32 %v4039, %v1172
      %v4047 = vmul.f32 %v4042, %v1172
      %v4048 = vmul.f32 %v4045, %v1172
      %v4049 = vsub.f32 %v4032, %v4046
      %v4050 = vsub.f32 %v4033, %v4047
      %v4051 = vsub.f32 %v4034, %v4048
      %v4052 = vmul.f32 %v4049, %v4049
      %v4053 = vmul.f32 %v4050, %v4050
      %v4054 = vmul.f32 %v4051, %v4051
      %v4055 = vsel %vm1161, %v4052, 0.0
      %4056 = vadd.xlane.f32.xlu0 %v4055
      %v4057 = vpop.xlane.xlu0 %4056
      %v4058 = vsel %vm1161, %v4053, 0.0
      %4059 = vadd.xlane.f32.xlu0 %v4058
      %v4060 = vpop.xlane.xlu0 %4059
      %v4061 = vsel %vm1168, %v4054, 0.0
      %4062 = vadd.xlane.f32.xlu0 %v4061
      %v4063 = vpop.xlane.xlu0 %4062
      %v4064 = vmul.f32 %v4057, %v1172
      %v4065 = vmul.f32 %v4060, %v1172
      %v4066 = vmul.f32 %v4063, %v1172
      %v4067 = vadd.f32 %v4064, 1e-06
      %v4068 = vadd.f32 %v4065, 1e-06
      %v4069 = vadd.f32 %v4066, 1e-06
      %v4070 = vrsqrt.pop %v4067
      %v4071 = vrsqrt.pop %v4068
      %v4072 = vrsqrt.pop %v4069
      %v4073 = vmul.f32 %v4049, %v4070
      %v4074 = vmul.f32 %v4050, %v4071
      %v4075 = vmul.f32 %v4051, %v4072
      %v4077 = vlaneseq
      %v4078 = vshrl.u32 %v4077, 7
      %v4079 = vsub.s32 0, %v4078
      %v4080 = vrot.slane %v4035, %v4079
      %v4082 = vmul.f32 %v4073, %v4080
      %v4083 = vmul.f32 %v4074, %v4080
      %v4084 = vmul.f32 %v4075, %v4080
      %v4086 = vlaneseq
      %v4087 = vshrl.u32 %v4086, 7
      %v4088 = vsub.s32 0, %v4087
      %v4089 = vrot.slane %v4036, %v4088
      %v4091 = vadd.f32 %v4082, %v4089
      %v4092 = vadd.f32 %v4083, %v4089
      %v4093 = vadd.f32 %v4084, %v4089
      %v4094 = vld [vmem:[%s67] sm:$0xf]
      %v4095 = vld [vmem:[%s67 + $0x4] sm:$0xf]
      %v4096 = vld [vmem:[%s67 + $0x8] sm:$0xf]
      %v4097 = vld [vmem:[%s67 + $0xc] sm:$0xf]
      %v4098 = vpack.c.bf16 %v4092, %v4091
      %v4099 = vpack.c.bf16 %v4093, %v4093
      %v4100 = vld [vmem:[%s69] sm:$0x1]
      %v4102 = vlaneseq
      %v4103 = vshrl.u32 %v4102, 7
      %v4104 = vsub.s32 0, %v4103
      %v4105 = vrot.slane %v4100, %v4104
      %v4111 = vunpack.c.l.b16 %v4094
      %v4112 = vunpack.c.l.b16 %v4095
      %v4113 = vunpack.c.l.b16 %v4096
      %v4114 = vunpack.c.l.b16 %v4097
      %v4115 = vpack.c.b16 %v4112, %v4111
      %v4116 = vpack.c.b16 %v4114, %v4113
      %v4120 = vsel %vm1161, %v4098, 0
      %v4123 = vsel %vm1161, %v4099, 0
      %4125 = vmatprep.subr.bf16.mxu0 0
      %4126 = vmatpush1.bf16.msra.mxu0 %v4115
      %4127 = vmatprep.subr.bf16.mxu0 0
      %4128 = vmatpush1.bf16.msra.mxu0 %v4116
      %4129 = vmatprep.subr.bf16.mxu0 0
      %4130 = vmatpush1.bf16.msra.mxu0 0
      %4131 = vmatprep.subr.bf16.mxu0 0
      %4132 = vmatpush1.bf16.msra.mxu0 0
      %4133 = vmatprep.subr.bf16.mxu0 0
      %4134 = vmatpush1.bf16.msra.mxu0 0
      %4135 = vmatprep.subr.bf16.mxu0 0
      %4136 = vmatpush1.bf16.msra.mxu0 0
      %4137 = vmatprep.subr.bf16.mxu0 0
      %4138 = vmatpush1.bf16.msra.mxu0 0
      %4139 = vmatprep.subr.bf16.mxu0 0
      %4140 = vmatpush1.bf16.msra.mxu0 0
      %4141 = vmatprep.subr.bf16.mxu0 0
      %4142 = vmatpush1.bf16.msra.mxu0 0
      %4143 = vmatprep.subr.bf16.mxu0 0
      %4144 = vmatpush1.bf16.msra.mxu0 0
      %4145 = vmatprep.subr.bf16.mxu0 0
      %4146 = vmatpush1.bf16.msra.mxu0 0
      %4147 = vmatprep.subr.bf16.mxu0 0
      %4148 = vmatpush1.bf16.msra.mxu0 0
      %4149 = vmatprep.subr.bf16.mxu0 0
      %4150 = vmatpush1.bf16.msra.mxu0 0
      %4151 = vmatprep.subr.bf16.mxu0 0
      %4152 = vmatpush1.bf16.msra.mxu0 0
      %4153 = vmatprep.subr.bf16.mxu0 0
      %4154 = vmatpush1.bf16.msra.mxu0 0
      %4155 = vmatprep.subr.bf16.mxu0 0
      %4156 = vmatpush1.bf16.msra.mxu0 0
      %4157 = vmatprep.mubr.bf16.mxu0 0
      %4158 = vmatmul.mubr.bf16.gmra.mrb[0].mxu0 %v4120
      %v4159 = vpop.f32.mrb[0].mxu0
      %v4160 = vadd.f32 %v4105, %v4159
      %v4161 = vpop.f32.mrb[0].mxu0
      %v4162 = vpop.f32.mrb[0].mxu0
      %v4163 = vadd.f32 %v4105, %v4162
      %v4164 = vpop.f32.mrb[0].mxu0
      %4165 = vmatprep.mubr.bf16.mxu0 0
      %4166 = vmatmul.mubr.bf16.gmra.mrb[0].mxu0 %v4123
      %v4167 = vpop.f32.mrb[0].mxu0
      %v4168 = vadd.f32 %v4105, %v4167
      %v4169 = vpop.f32.mrb[0].mxu0
      %v4170 = vpop.f32.mrb[0].mxu0
      %v4171 = vpop.f32.mrb[0].mxu0
      %4172 = vdwg.mxu0
      %vm4173 = vcmask 392193
      %4174 = vst.msk [vmem:[%s1070 - $0x1] sm:$0xfe] %vm4173, %v4160
      %4175 = vst.msk [vmem:[%s1070 + $0x7] sm:$0xff] %vm1104, %v4163
      %vm4176 = vcmask 385024
      %4177 = vst.msk [vmem:[%s1070 + $0xf] sm:$0x1] %vm4176, %v4168
      %p4178 = scmp.lt.s32.totalorder %s82, 1
      %s4179 = scalar_select %p4178, %s82, 1
      %s4180 = smul.addr %s4179, 2
      %s4181 = smul.addr %s4180, 8
      %s4182 = scalar_lea.vmem %s71, %s4181
      // Predicated region
      $region161: #{mae_super_resolution_forward.4} parent=159 // pred_check
        %p4183 = pneg %p840
      $region162: #{mae_super_resolution_forward.4} parent=159 // pred_check_branch
        %4185 = sbr.rel (%p4183) target = $region164
      $region163: #{mae_super_resolution_forward.4} parent=159 // pred_region
        _
      $region164: #{mae_super_resolution_forward.4} parent=159 // pred_fallthru
        _
    $region160: #{mae_super_resolution_forward.4} parent=5 // pred_fallthru
      _
    %p4186 = scmp.le.s32.totalorder 2, %s77
    // Predicated region
    $region165: #{mae_super_resolution_forward.4} parent=5 // pred_check
      %p4187 = pneg %p4186
    $region166: #{mae_super_resolution_forward.4} parent=5 // pred_check_branch
      %4189 = sbr.rel (%p4187) target = $region168
    $region167: #{mae_super_resolution_forward.4} parent=5 // pred_region
      %s4190 = ssub.s32 %s77, 2
      // Predicated region
      $region169: #{mae_super_resolution_forward.4} parent=167 // pred_check
        %p4191 = pneg %p846
      $region170: #{mae_super_resolution_forward.4} parent=167 // pred_check_branch
        %4193 = sbr.rel (%p4191) target = $region172
      $region171: #{mae_super_resolution_forward.4} parent=167 // pred_region
        %p4194 = scmp.lt.s32.totalorder %s83, 1
        %s4195 = scalar_select %p4194, %s83, 1
        %s4196 = smul.addr %s4195, 2
        %s4197 = smul.addr %s4196, 8
        %s4198 = scalar_lea.vmem %s71, %s4197
      $region172: #{mae_super_resolution_forward.4} parent=167 // pred_fallthru
        _
    $region168: #{mae_super_resolution_forward.4} parent=5 // pred_fallthru
      _
  $region6: #{mae_super_resolution_forward.4} parent=0 // loop_footer
    %s81 = sadd.s32 1, %s77
  $region7: #{mae_super_resolution_forward.4} parent=0 // loop_footer_branch
    %76 = sbr.rel target = $region3
  $region8: #{mae_super_resolution_forward.4} parent=0 // loop_exit
    _

</llo_original>
